<compile_context>
chip_gen: v6e
topology: v6e:2x2x1
jax: 0.10.0
libtpu: 0.0.40
codegen_flags: <defaults>
</compile_context>

<pallas_src>
import jax
import jax.numpy as jnp
from jax import lax
from jax.experimental import pallas as pl
from jax.experimental.pallas import tpu as pltpu


# ------------------------------- helpers ----------------------------------- #

def _round_up(n, m):
    return ((n + m - 1) // m) * m


def _pad_axis(a, axis, target):
    pad = target - a.shape[axis]
    if pad == 0:
        return a
    cfg = [(0, 0)] * a.ndim
    cfg[axis] = (0, pad)
    return jnp.pad(a, cfg)


def _nbytes(a):
    return int(a.size) * a.dtype.itemsize


def _tile_rows(m, tm_max):
    """Pick a row-tile TM (multiple of 8) and padded row count Mp (multiple of TM)."""
    mp8 = _round_up(m, 8)
    if mp8 <= tm_max:
        return mp8, mp8
    return tm_max, _round_up(m, tm_max)


# ----------------------------- Pallas kernels ------------------------------ #

def conv_pool_relu_kernel(p_ref, w_ref, b_ref, o_ref):
    # p_ref: (4, TM, K) pool-member-major patch rows (bf16)
    # w_ref: (K, Cout) bf16 (resident); b_ref: (1, Cout) f32 (resident)
    # o_ref: (TM, Cout) = relu(max over 4 pool members of (patch @ w) + bias)
    w = w_ref[...]
    m = jnp.dot(p_ref[0], w, preferred_element_type=jnp.float32)
    for i in range(1, 4):
        m = jnp.maximum(m, jnp.dot(p_ref[i], w, preferred_element_type=jnp.float32))
    o_ref[...] = jnp.maximum(m + b_ref[...], 0.0).astype(o_ref.dtype)


def conv_pool_relu(patches_pm, w_mat, bias_2d, *, tm, out_dtype=jnp.bfloat16):
    """patches_pm: (4, Mp, K) pool-member-major (Mp multiple of tm, tm mult of 8).
    Returns (Mp, Cout) = relu(maxpool2(conv) + bias), rows ordered (b, ph, pw)."""
    _, Mp, K = patches_pm.shape
    Cout = w_mat.shape[1]
    assert Mp % tm == 0 and tm % 8 == 0
    cost = pl.CostEstimate(
        flops=2 * 4 * Mp * K * Cout,
        transcendentals=0,
        bytes_accessed=_nbytes(patches_pm) + _nbytes(w_mat) + _nbytes(bias_2d)
        + Mp * Cout * jnp.dtype(out_dtype).itemsize,
    )
    return pl.pallas_call(
        conv_pool_relu_kernel,
        out_shape=jax.ShapeDtypeStruct((Mp, Cout), out_dtype),
        grid_spec=pltpu.PrefetchScalarGridSpec(
            num_scalar_prefetch=0,
            grid=(Mp // tm,),
            in_specs=[
                pl.BlockSpec((4, tm, K), lambda i: (0, i, 0)),   # patch M-tile (pipelined)
                pl.BlockSpec((K, Cout), lambda i: (0, 0)),       # weights resident
                pl.BlockSpec((1, Cout), lambda i: (0, 0)),       # bias resident
            ],
            out_specs=pl.BlockSpec((tm, Cout), lambda i: (i, 0)),
        ),
        compiler_params=pltpu.CompilerParams(
            dimension_semantics=("parallel",),
            vmem_limit_bytes=32 * 1024 * 1024),
        cost_estimate=cost,
    )(patches_pm, w_mat, bias_2d)


def mlp_log_softmax_kernel(x_ref, w1_ref, b1_ref, w2_ref, b2_ref, o_ref, acc_ref):
    # Grid: (batch tiles [parallel], fc1-K tiles [arbitrary]). acc_ref: (TB, Np) f32.
    k = pl.program_id(1)

    @pl.when(k == 0)
    def _():
        acc_ref[...] = jnp.zeros_like(acc_ref)

    acc_ref[...] += jnp.dot(x_ref[...], w1_ref[...],
                            preferred_element_type=jnp.float32)

    @pl.when(k == pl.num_programs(1) - 1)
    def _():
        h = jnp.maximum(acc_ref[...] + b1_ref[...], 0.0)          # f32 (TB, Np)
        z = jnp.dot(h.astype(w2_ref.dtype), w2_ref[...],
                    preferred_element_type=jnp.float32) + b2_ref[...]
        m = jnp.max(z, axis=-1, keepdims=True)
        lse = jnp.log(jnp.sum(jnp.exp(z - m), axis=-1, keepdims=True)) + m
        o_ref[...] = z - lse


def mlp_log_softmax(x, w1, b1_2d, w2, b2_2d, *, tk=896, tb_max=256):
    """x: (B, Kp) bf16, w1: (Kp, Np) bf16, w2: (Np, C) bf16; biases f32 (1, .)."""
    B, Kp = x.shape
    Np = w1.shape[1]
    C = w2.shape[1]
    assert Kp % tk == 0
    kt = Kp // tk
    if B <= tb_max:
        tb, Bp = B, B
    else:
        tb = tb_max
        Bp = _round_up(B, tb)
        x = _pad_axis(x, 0, Bp)
    nb = Bp // tb
    cost = pl.CostEstimate(
        flops=2 * Bp * Kp * Np + 2 * Bp * Np * C,
        transcendentals=Bp * (C + 1),
        bytes_accessed=(_nbytes(x) + nb * _nbytes(w1) + _nbytes(b1_2d)
                        + _nbytes(w2) + _nbytes(b2_2d) + Bp * C * 4),
    )
    out = pl.pallas_call(
        mlp_log_softmax_kernel,
        out_shape=jax.ShapeDtypeStruct((Bp, C), jnp.float32),
        grid_spec=pltpu.PrefetchScalarGridSpec(
            num_scalar_prefetch=0,
            grid=(nb, kt),
            in_specs=[
                pl.BlockSpec((tb, tk), lambda b, k: (b, k)),      # x tile
                pl.BlockSpec((tk, Np), lambda b, k: (k, 0)),      # w1 K-tile (pipelined)
                pl.BlockSpec((1, Np), lambda b, k: (0, 0)),       # b1 resident
                pl.BlockSpec((Np, C), lambda b, k: (0, 0)),       # w2 resident
                pl.BlockSpec((1, C), lambda b, k: (0, 0)),        # b2 resident
            ],
            out_specs=pl.BlockSpec((tb, C), lambda b, k: (b, 0)),
            scratch_shapes=[pltpu.VMEM((tb, Np), jnp.float32)],
        ),
        compiler_params=pltpu.CompilerParams(
            dimension_semantics=("parallel", "arbitrary"),
            vmem_limit_bytes=32 * 1024 * 1024),
        cost_estimate=cost,
    )(x, w1, b1_2d, w2, b2_2d)
    return out[:B]


# ------------------------------- glue (JAX) -------------------------------- #

def im2col_pooled_nhwc(x_nhwc, ksz=5, pad=2):
    """NHWC (B,H,W,C) -> (4, B*(H//2)*(W//2), C*ksz*ksz) patches grouped by 2x2
    pool-window member; K ordered (c, kh, kw) to match the OIHW weight reshape."""
    B, H, W, C = x_nhwc.shape
    xp = jnp.pad(x_nhwc, ((0, 0), (pad, pad), (pad, pad), (0, 0)))
    cols = [xp[:, kh:kh + H, kw:kw + W, :] for kh in range(ksz) for kw in range(ksz)]
    p = jnp.stack(cols, axis=-1)                                  # (B,H,W,C,ksz*ksz)
    K = C * ksz * ksz
    p = p.reshape(B, H, W, K)
    ph, pw = H // 2, W // 2
    p = p.reshape(B, ph, 2, pw, 2, K)
    p = p.transpose(2, 4, 0, 1, 3, 5).reshape(4, B * ph * pw, K)  # (dh*2+dw, b*ph*pw, K)
    return p


@jax.jit
def simple_cnn_forward(x, params):
    B = x.shape[0]
    x_nhwc = x.transpose(0, 2, 3, 1).astype(jnp.bfloat16)         # (B, 28, 28, 1) bf16

    # conv1(1->32, 5x5, pad 2) + maxpool2 + relu   (bf16 MXU feeds, f32 epilogue)
    p1 = im2col_pooled_nhwc(x_nhwc)                               # (4, B*196, 25)
    M1 = B * 14 * 14
    tm1, M1p = _tile_rows(M1, 2048)
    p1 = _pad_axis(_pad_axis(p1, 1, M1p), 2, 32)                  # K padded 25 -> 32
    w1m = _pad_axis(params["conv1_w"].reshape(32, -1).T, 0, 32).astype(jnp.bfloat16)
    y1 = conv_pool_relu(p1, w1m, params["conv1_b"][None, :], tm=tm1)   # (M1p, 32) bf16
    y1 = y1[:M1].reshape(B, 14, 14, 32)                           # NHWC bf16

    # conv2(32->64, 5x5, pad 2) + maxpool2 + relu
    # TODO(synk): in-kernel im2col (halo DMA + shifted-slice matmuls) to avoid the
    # 25x-inflated patch slab round-trip through HBM at large batch.
    p2 = im2col_pooled_nhwc(y1)                                   # (4, B*49, 800) bf16
    M2 = B * 7 * 7
    tm2, M2p = _tile_rows(M2, 512)
    p2 = _pad_axis(_pad_axis(p2, 1, M2p), 2, 1024)                # K padded 800 -> 1024
    w2m = _pad_axis(params["conv2_w"].reshape(64, -1).T, 0, 1024).astype(jnp.bfloat16)
    y2 = conv_pool_relu(p2, w2m, params["conv2_b"][None, :], tm=tm2)   # (M2p, 64) bf16
    y2 = y2[:M2].reshape(B, 7, 7, 64)                             # NHWC bf16

    # flatten in PyTorch NCHW order (C, H, W); pad features 3136 -> 3584 (= 4*896)
    feat = y2.transpose(0, 3, 1, 2).reshape(B, 7 * 7 * 64)        # bf16
    feat = _pad_axis(feat, 1, 3584)

    # fc1 + relu + fc2 + log_softmax, fused & K-pipelined; hidden padded 1000 -> 1024
    fc1_w = _pad_axis(_pad_axis(params["fc1_w"].T, 0, 3584), 1, 1024).astype(jnp.bfloat16)
    fc1_b = _pad_axis(params["fc1_b"], 0, 1024)[None, :]          # (1, 1024) f32
    fc2_w = _pad_axis(params["fc2_w"].T, 0, 1024).astype(jnp.bfloat16)  # (1024, 10)
    fc2_b = params["fc2_b"][None, :]                              # (1, 10) f32
    return mlp_log_softmax(feat, fc1_w, fc1_b, fc2_w, fc2_b, tk=896)


def reference_forward(x, params):
    """Pure-JAX f32 reference mirroring the PyTorch forward."""
    dn = ("NCHW", "OIHW", "NCHW")
    B = x.shape[0]
    y = lax.conv_general_dilated(x, params["conv1_w"], (1, 1), ((2, 2), (2, 2)),
                                 dimension_numbers=dn) + params["conv1_b"][None, :, None, None]
    y = y.reshape(B, 32, 14, 2, 14, 2).max(axis=(3, 5))
    y = jnp.maximum(y, 0.0)
    y = lax.conv_general_dilated(y, params["conv2_w"], (1, 1), ((2, 2), (2, 2)),
                                 dimension_numbers=dn) + params["conv2_b"][None, :, None, None]
    y = y.reshape(B, 64, 7, 2, 7, 2).max(axis=(3, 5))
    y = jnp.maximum(y, 0.0)
    feat = y.reshape(B, 7 * 7 * 64)
    h = jnp.maximum(feat @ params["fc1_w"].T + params["fc1_b"], 0.0)
    z = h @ params["fc2_w"].T + params["fc2_b"]
    return jax.nn.log_softmax(z, axis=1)


def init_params(key):
    ks = jax.random.split(key, 8)
    return {
        "conv1_w": 0.10 * jax.random.normal(ks[0], (32, 1, 5, 5), jnp.float32),
        "conv1_b": 0.10 * jax.random.normal(ks[1], (32,), jnp.float32),
        "conv2_w": 0.03 * jax.random.normal(ks[2], (64, 32, 5, 5), jnp.float32),
        "conv2_b": 0.10 * jax.random.normal(ks[3], (64,), jnp.float32),
        "fc1_w": 0.02 * jax.random.normal(ks[4], (1000, 7 * 7 * 64), jnp.float32),
        "fc1_b": 0.10 * jax.random.normal(ks[5], (1000,), jnp.float32),
        "fc2_w": 0.05 * jax.random.normal(ks[6], (10, 1000), jnp.float32),
        "fc2_b": 0.10 * jax.random.normal(ks[7], (10,), jnp.float32),
    }


if __name__ == "__main__":
    key = jax.random.PRNGKey(0)
    kx, kp = jax.random.split(key)
    # 28x28 single-channel input is implied by fc1's 7*7*64 in_features.
    x = jax.random.normal(kx, (2, 1, 28, 28), jnp.float32)
    params = init_params(kp)

    out = simple_cnn_forward(x, params)
    out = jax.block_until_ready(out)

    ref = reference_forward(x, params)
    assert out.shape == (2, 10)
    assert bool(jnp.all(jnp.isfinite(out)))
    assert bool(jnp.allclose(out, ref, atol=3e-2, rtol=3e-2))
    assert bool(jnp.allclose(jnp.exp(out).sum(axis=1), 1.0, atol=1e-3))  # valid log-probs
    print("KERNEL_OK")
</pallas_src>

<mosaic_0001>
module attributes {stable_mosaic.version = 11 : i64} {
  func.func @conv_pool_relu_kernel(%arg0: i32, %arg1: memref<4x392x32xbf16, #tpu.memory_space<vmem>>, %arg2: memref<32x32xbf16, #tpu.memory_space<vmem>>, %arg3: memref<1x32xf32, #tpu.memory_space<vmem>>, %arg4: memref<392x32xbf16, #tpu.memory_space<vmem>>) attributes {dimension_semantics = [#tpu.dimension_semantics<parallel>], iteration_bounds = array<i64: 1>, scalar_prefetch = 0 : i64, scratch_operands = 0 : i64, tpu.core_type = #tpu.core_type<tc>, window_params = [{transform_indices = @transform_0, window_bounds = array<i64: 4, 392, 32>}, {pipeline_mode = #tpu.pipeline_mode<synchronous>, transform_indices = @transform_1, window_bounds = array<i64: 32, 32>}, {pipeline_mode = #tpu.pipeline_mode<synchronous>, transform_indices = @transform_2, window_bounds = array<i64: 1, 32>}, {transform_indices = @transform_3, window_bounds = array<i64: 392, 32>}]} {
    %c0 = arith.constant 0 : index
    %c0_0 = arith.constant 0 : index
    %0 = vector.load %arg2[%c0, %c0_0] : memref<32x32xbf16, #tpu.memory_space<vmem>>, vector<32x32xbf16>
    %c0_1 = arith.constant 0 : index
    %c0_2 = arith.constant 0 : index
    %c0_3 = arith.constant 0 : index
    %1 = vector.load %arg1[%c0_1, %c0_2, %c0_3] : memref<4x392x32xbf16, #tpu.memory_space<vmem>>, vector<1x392x32xbf16>
    %2 = vector.shape_cast %1 : vector<1x392x32xbf16> to vector<392x32xbf16>
    %cst = arith.constant dense<0.000000e+00> : vector<392x32xf32>
    %3 = tpu.matmul %2, %0, %cst {dimension_numbers = #tpu.dot_dimension_numbers<[1], [0], [0], [1], [0, 0, 1, 1], [], []>} : vector<392x32xbf16>, vector<32x32xbf16>, vector<392x32xf32> -> vector<392x32xf32>
    %c1 = arith.constant 1 : index
    %c0_4 = arith.constant 0 : index
    %c0_5 = arith.constant 0 : index
    %4 = vector.load %arg1[%c1, %c0_4, %c0_5] : memref<4x392x32xbf16, #tpu.memory_space<vmem>>, vector<1x392x32xbf16>
    %5 = vector.shape_cast %4 : vector<1x392x32xbf16> to vector<392x32xbf16>
    %cst_6 = arith.constant dense<0.000000e+00> : vector<392x32xf32>
    %6 = tpu.matmul %5, %0, %cst_6 {dimension_numbers = #tpu.dot_dimension_numbers<[1], [0], [0], [1], [0, 0, 1, 1], [], []>} : vector<392x32xbf16>, vector<32x32xbf16>, vector<392x32xf32> -> vector<392x32xf32>
    %7 = arith.maximumf %3, %6 : vector<392x32xf32>
    %c2 = arith.constant 2 : index
    %c0_7 = arith.constant 0 : index
    %c0_8 = arith.constant 0 : index
    %8 = vector.load %arg1[%c2, %c0_7, %c0_8] : memref<4x392x32xbf16, #tpu.memory_space<vmem>>, vector<1x392x32xbf16>
    %9 = vector.shape_cast %8 : vector<1x392x32xbf16> to vector<392x32xbf16>
    %cst_9 = arith.constant dense<0.000000e+00> : vector<392x32xf32>
    %10 = tpu.matmul %9, %0, %cst_9 {dimension_numbers = #tpu.dot_dimension_numbers<[1], [0], [0], [1], [0, 0, 1, 1], [], []>} : vector<392x32xbf16>, vector<32x32xbf16>, vector<392x32xf32> -> vector<392x32xf32>
    %11 = arith.maximumf %7, %10 : vector<392x32xf32>
    %c3 = arith.constant 3 : index
    %c0_10 = arith.constant 0 : index
    %c0_11 = arith.constant 0 : index
    %12 = vector.load %arg1[%c3, %c0_10, %c0_11] : memref<4x392x32xbf16, #tpu.memory_space<vmem>>, vector<1x392x32xbf16>
    %13 = vector.shape_cast %12 : vector<1x392x32xbf16> to vector<392x32xbf16>
    %cst_12 = arith.constant dense<0.000000e+00> : vector<392x32xf32>
    %14 = tpu.matmul %13, %0, %cst_12 {dimension_numbers = #tpu.dot_dimension_numbers<[1], [0], [0], [1], [0, 0, 1, 1], [], []>} : vector<392x32xbf16>, vector<32x32xbf16>, vector<392x32xf32> -> vector<392x32xf32>
    %15 = arith.maximumf %11, %14 : vector<392x32xf32>
    %c0_13 = arith.constant 0 : index
    %c0_14 = arith.constant 0 : index
    %16 = vector.load %arg3[%c0_13, %c0_14] : memref<1x32xf32, #tpu.memory_space<vmem>>, vector<1x32xf32>
    %17 = vector.broadcast %16 : vector<1x32xf32> to vector<392x32xf32>
    %18 = arith.addf %15, %17 : vector<392x32xf32>
    %cst_15 = arith.constant 0.000000e+00 : f32
    %19 = vector.broadcast %cst_15 : f32 to vector<392x32xf32>
    %20 = arith.maximumf %18, %19 : vector<392x32xf32>
    %21 = arith.truncf %20 : vector<392x32xf32> to vector<392x32xbf16>
    %c0_16 = arith.constant 0 : index
    %c0_17 = arith.constant 0 : index
    %22 = vector.load %arg4[%c0_16, %c0_17] : memref<392x32xbf16, #tpu.memory_space<vmem>>, vector<392x32xbf16>
    tpu.vector_store %arg4[%c0_16, %c0_17], %21 {strides = array<i32>} : memref<392x32xbf16, #tpu.memory_space<vmem>>, vector<392x32xbf16>,
    return
  }
  func.func @transform_0(%arg0: i32) -> (i32, i32, i32) {
    %c0_i32 = arith.constant 0 : i32
    %c0_i32_0 = arith.constant 0 : i32
    %c0_i32_1 = arith.constant 0 : i32
    return %c0_i32, %arg0, %c0_i32_0 : i32, i32, i32
  }
  func.func @transform_1(%arg0: i32) -> (i32, i32) {
    %c0_i32 = arith.constant 0 : i32
    %c0_i32_0 = arith.constant 0 : i32
    %c0_i32_1 = arith.constant 0 : i32
    return %c0_i32, %c0_i32_0 : i32, i32
  }
  func.func @transform_2(%arg0: i32) -> (i32, i32) {
    %c0_i32 = arith.constant 0 : i32
    %c0_i32_0 = arith.constant 0 : i32
    %c0_i32_1 = arith.constant 0 : i32
    return %c0_i32, %c0_i32_0 : i32, i32
  }
  func.func @transform_3(%arg0: i32) -> (i32, i32) {
    %c0_i32 = arith.constant 0 : i32
    %c0_i32_0 = arith.constant 0 : i32
    return %arg0, %c0_i32 : i32, i32
  }
}

module attributes {stable_mosaic.version = 11 : i64} {
  func.func @conv_pool_relu_kernel(%arg0: i32, %arg1: memref<4x104x1024xbf16, #tpu.memory_space<vmem>>, %arg2: memref<1024x64xbf16, #tpu.memory_space<vmem>>, %arg3: memref<1x64xf32, #tpu.memory_space<vmem>>, %arg4: memref<104x64xbf16, #tpu.memory_space<vmem>>) attributes {dimension_semantics = [#tpu.dimension_semantics<parallel>], iteration_bounds = array<i64: 1>, scalar_prefetch = 0 : i64, scratch_operands = 0 : i64, tpu.core_type = #tpu.core_type<tc>, window_params = [{transform_indices = @transform_0, window_bounds = array<i64: 4, 104, 1024>}, {pipeline_mode = #tpu.pipeline_mode<synchronous>, transform_indices = @transform_1, window_bounds = array<i64: 1024, 64>}, {pipeline_mode = #tpu.pipeline_mode<synchronous>, transform_indices = @transform_2, window_bounds = array<i64: 1, 64>}, {transform_indices = @transform_3, window_bounds = array<i64: 104, 64>}]} {
    %c0 = arith.constant 0 : index
    %c0_0 = arith.constant 0 : index
    %0 = vector.load %arg2[%c0, %c0_0] : memref<1024x64xbf16, #tpu.memory_space<vmem>>, vector<1024x64xbf16>
    %c0_1 = arith.constant 0 : index
    %c0_2 = arith.constant 0 : index
    %c0_3 = arith.constant 0 : index
    %1 = vector.load %arg1[%c0_1, %c0_2, %c0_3] : memref<4x104x1024xbf16, #tpu.memory_space<vmem>>, vector<1x104x1024xbf16>
    %2 = vector.shape_cast %1 : vector<1x104x1024xbf16> to vector<104x1024xbf16>
    %cst = arith.constant dense<0.000000e+00> : vector<104x64xf32>
    %3 = tpu.matmul %2, %0, %cst {dimension_numbers = #tpu.dot_dimension_numbers<[1], [0], [0], [1], [0, 0, 1, 1], [], []>} : vector<104x1024xbf16>, vector<1024x64xbf16>, vector<104x64xf32> -> vector<104x64xf32>
    %c1 = arith.constant 1 : index
    %c0_4 = arith.constant 0 : index
    %c0_5 = arith.constant 0 : index
    %4 = vector.load %arg1[%c1, %c0_4, %c0_5] : memref<4x104x1024xbf16, #tpu.memory_space<vmem>>, vector<1x104x1024xbf16>
    %5 = vector.shape_cast %4 : vector<1x104x1024xbf16> to vector<104x1024xbf16>
    %cst_6 = arith.constant dense<0.000000e+00> : vector<104x64xf32>
    %6 = tpu.matmul %5, %0, %cst_6 {dimension_numbers = #tpu.dot_dimension_numbers<[1], [0], [0], [1], [0, 0, 1, 1], [], []>} : vector<104x1024xbf16>, vector<1024x64xbf16>, vector<104x64xf32> -> vector<104x64xf32>
    %7 = arith.maximumf %3, %6 : vector<104x64xf32>
    %c2 = arith.constant 2 : index
    %c0_7 = arith.constant 0 : index
    %c0_8 = arith.constant 0 : index
    %8 = vector.load %arg1[%c2, %c0_7, %c0_8] : memref<4x104x1024xbf16, #tpu.memory_space<vmem>>, vector<1x104x1024xbf16>
    %9 = vector.shape_cast %8 : vector<1x104x1024xbf16> to vector<104x1024xbf16>
    %cst_9 = arith.constant dense<0.000000e+00> : vector<104x64xf32>
    %10 = tpu.matmul %9, %0, %cst_9 {dimension_numbers = #tpu.dot_dimension_numbers<[1], [0], [0], [1], [0, 0, 1, 1], [], []>} : vector<104x1024xbf16>, vector<1024x64xbf16>, vector<104x64xf32> -> vector<104x64xf32>
    %11 = arith.maximumf %7, %10 : vector<104x64xf32>
    %c3 = arith.constant 3 : index
    %c0_10 = arith.constant 0 : index
    %c0_11 = arith.constant 0 : index
    %12 = vector.load %arg1[%c3, %c0_10, %c0_11] : memref<4x104x1024xbf16, #tpu.memory_space<vmem>>, vector<1x104x1024xbf16>
    %13 = vector.shape_cast %12 : vector<1x104x1024xbf16> to vector<104x1024xbf16>
    %cst_12 = arith.constant dense<0.000000e+00> : vector<104x64xf32>
    %14 = tpu.matmul %13, %0, %cst_12 {dimension_numbers = #tpu.dot_dimension_numbers<[1], [0], [0], [1], [0, 0, 1, 1], [], []>} : vector<104x1024xbf16>, vector<1024x64xbf16>, vector<104x64xf32> -> vector<104x64xf32>
    %15 = arith.maximumf %11, %14 : vector<104x64xf32>
    %c0_13 = arith.constant 0 : index
    %c0_14 = arith.constant 0 : index
    %16 = vector.load %arg3[%c0_13, %c0_14] : memref<1x64xf32, #tpu.memory_space<vmem>>, vector<1x64xf32>
    %17 = vector.broadcast %16 : vector<1x64xf32> to vector<104x64xf32>
    %18 = arith.addf %15, %17 : vector<104x64xf32>
    %cst_15 = arith.constant 0.000000e+00 : f32
    %19 = vector.broadcast %cst_15 : f32 to vector<104x64xf32>
    %20 = arith.maximumf %18, %19 : vector<104x64xf32>
    %21 = arith.truncf %20 : vector<104x64xf32> to vector<104x64xbf16>
    %c0_16 = arith.constant 0 : index
    %c0_17 = arith.constant 0 : index
    %22 = vector.load %arg4[%c0_16, %c0_17] : memref<104x64xbf16, #tpu.memory_space<vmem>>, vector<104x64xbf16>
    tpu.vector_store %arg4[%c0_16, %c0_17], %21 {strides = array<i32>} : memref<104x64xbf16, #tpu.memory_space<vmem>>, vector<104x64xbf16>,
    return
  }
  func.func @transform_0(%arg0: i32) -> (i32, i32, i32) {
    %c0_i32 = arith.constant 0 : i32
    %c0_i32_0 = arith.constant 0 : i32
    %c0_i32_1 = arith.constant 0 : i32
    return %c0_i32, %arg0, %c0_i32_0 : i32, i32, i32
  }
  func.func @transform_1(%arg0: i32) -> (i32, i32) {
    %c0_i32 = arith.constant 0 : i32
    %c0_i32_0 = arith.constant 0 : i32
    %c0_i32_1 = arith.constant 0 : i32
    return %c0_i32, %c0_i32_0 : i32, i32
  }
  func.func @transform_2(%arg0: i32) -> (i32, i32) {
    %c0_i32 = arith.constant 0 : i32
    %c0_i32_0 = arith.constant 0 : i32
    %c0_i32_1 = arith.constant 0 : i32
    return %c0_i32, %c0_i32_0 : i32, i32
  }
  func.func @transform_3(%arg0: i32) -> (i32, i32) {
    %c0_i32 = arith.constant 0 : i32
    %c0_i32_0 = arith.constant 0 : i32
    return %arg0, %c0_i32 : i32, i32
  }
}

module attributes {stable_mosaic.version = 11 : i64} {
  func.func @mlp_log_softmax_kernel(%arg0: i32, %arg1: i32, %arg2: memref<2x896xbf16, #tpu.memory_space<vmem>>, %arg3: memref<896x1024xbf16, #tpu.memory_space<vmem>>, %arg4: memref<1x1024xf32, #tpu.memory_space<vmem>>, %arg5: memref<1024x10xbf16, #tpu.memory_space<vmem>>, %arg6: memref<1x10xf32, #tpu.memory_space<vmem>>, %arg7: memref<2x10xf32, #tpu.memory_space<vmem>>, %arg8: memref<2x1024xf32, #tpu.memory_space<vmem>>) attributes {dimension_semantics = [#tpu.dimension_semantics<parallel>, #tpu.dimension_semantics<arbitrary>], iteration_bounds = array<i64: 1, 4>, scalar_prefetch = 0 : i64, scratch_operands = 1 : i64, tpu.core_type = #tpu.core_type<tc>, window_params = [{transform_indices = @transform_0, window_bounds = array<i64: 2, 896>}, {transform_indices = @transform_1, window_bounds = array<i64: 896, 1024>}, {pipeline_mode = #tpu.pipeline_mode<synchronous>, transform_indices = @transform_2, window_bounds = array<i64: 1, 1024>}, {pipeline_mode = #tpu.pipeline_mode<synchronous>, transform_indices = @transform_3, window_bounds = array<i64: 1024, 10>}, {pipeline_mode = #tpu.pipeline_mode<synchronous>, transform_indices = @transform_4, window_bounds = array<i64: 1, 10>}, {transform_indices = @transform_5, window_bounds = array<i64: 2, 10>}]} {
    %c0_i32 = arith.constant 0 : i32
    %0 = arith.cmpi eq, %arg1, %c0_i32 : i32
    %1 = arith.extui %0 : i1 to i32
    %c0_i32_0 = arith.constant 0 : i32
    %2 = arith.cmpi ne, %1, %c0_i32_0 : i32
    scf.if %2 {
      %cst_9 = arith.constant 0.000000e+00 : f32
      %12 = vector.broadcast %cst_9 : f32 to vector<2x1024xf32>
      %c0_10 = arith.constant 0 : index
      %c0_11 = arith.constant 0 : index
      %13 = vector.load %arg8[%c0_10, %c0_11] : memref<2x1024xf32, #tpu.memory_space<vmem>>, vector<2x1024xf32>
      tpu.vector_store %arg8[%c0_10, %c0_11], %12 {strides = array<i32>} : memref<2x1024xf32, #tpu.memory_space<vmem>>, vector<2x1024xf32>,
    } else {
    }
    %c0 = arith.constant 0 : index
    %c0_1 = arith.constant 0 : index
    %3 = vector.load %arg8[%c0, %c0_1] : memref<2x1024xf32, #tpu.memory_space<vmem>>, vector<2x1024xf32>
    %c0_2 = arith.constant 0 : index
    %c0_3 = arith.constant 0 : index
    %4 = vector.load %arg2[%c0_2, %c0_3] : memref<2x896xbf16, #tpu.memory_space<vmem>>, vector<2x896xbf16>
    %c0_4 = arith.constant 0 : index
    %c0_5 = arith.constant 0 : index
    %5 = vector.load %arg3[%c0_4, %c0_5] : memref<896x1024xbf16, #tpu.memory_space<vmem>>, vector<896x1024xbf16>
    %cst = arith.constant dense<0.000000e+00> : vector<2x1024xf32>
    %6 = tpu.matmul %4, %5, %cst {dimension_numbers = #tpu.dot_dimension_numbers<[1], [0], [0], [1], [0, 0, 1, 1], [], []>} : vector<2x896xbf16>, vector<896x1024xbf16>, vector<2x1024xf32> -> vector<2x1024xf32>
    %7 = arith.addf %3, %6 : vector<2x1024xf32>
    %c0_6 = arith.constant 0 : index
    %c0_7 = arith.constant 0 : index
    %8 = vector.load %arg8[%c0_6, %c0_7] : memref<2x1024xf32, #tpu.memory_space<vmem>>, vector<2x1024xf32>
    tpu.vector_store %arg8[%c0_6, %c0_7], %7 {strides = array<i32>} : memref<2x1024xf32, #tpu.memory_space<vmem>>, vector<2x1024xf32>,
    %c3_i32 = arith.constant 3 : i32
    %9 = arith.cmpi eq, %arg1, %c3_i32 : i32
    %10 = arith.extui %9 : i1 to i32
    %c0_i32_8 = arith.constant 0 : i32
    %11 = arith.cmpi ne, %10, %c0_i32_8 : i32
    scf.if %11 {
      %c0_9 = arith.constant 0 : index
      %c0_10 = arith.constant 0 : index
      %12 = vector.load %arg8[%c0_9, %c0_10] : memref<2x1024xf32, #tpu.memory_space<vmem>>, vector<2x1024xf32>
      %c0_11 = arith.constant 0 : index
      %c0_12 = arith.constant 0 : index
      %13 = vector.load %arg4[%c0_11, %c0_12] : memref<1x1024xf32, #tpu.memory_space<vmem>>, vector<1x1024xf32>
      %14 = vector.broadcast %13 : vector<1x1024xf32> to vector<2x1024xf32>
      %15 = arith.addf %12, %14 : vector<2x1024xf32>
      %cst_13 = arith.constant 0.000000e+00 : f32
      %16 = vector.broadcast %cst_13 : f32 to vector<2x1024xf32>
      %17 = arith.maximumf %15, %16 : vector<2x1024xf32>
      %18 = arith.truncf %17 : vector<2x1024xf32> to vector<2x1024xbf16>
      %c0_14 = arith.constant 0 : index
      %c0_15 = arith.constant 0 : index
      %19 = vector.load %arg5[%c0_14, %c0_15] : memref<1024x10xbf16, #tpu.memory_space<vmem>>, vector<1024x10xbf16>
      %cst_16 = arith.constant dense<0.000000e+00> : vector<2x10xf32>
      %20 = tpu.matmul %18, %19, %cst_16 {dimension_numbers = #tpu.dot_dimension_numbers<[1], [0], [0], [1], [0, 0, 1, 1], [], []>} : vector<2x1024xbf16>, vector<1024x10xbf16>, vector<2x10xf32> -> vector<2x10xf32>
      %c0_17 = arith.constant 0 : index
      %c0_18 = arith.constant 0 : index
      %21 = vector.load %arg6[%c0_17, %c0_18] : memref<1x10xf32, #tpu.memory_space<vmem>>, vector<1x10xf32>
      %22 = vector.broadcast %21 : vector<1x10xf32> to vector<2x10xf32>
      %23 = arith.addf %20, %22 : vector<2x10xf32>
      %cst_19 = arith.constant dense<0xFF800000> : vector<2xf32>
      %24 = vector.multi_reduction <maximumf>, %23, %cst_19 [1] : vector<2x10xf32> to vector<2xf32>
      %25 = vector.shape_cast %24 : vector<2xf32> to vector<2x1xf32>
      %26 = vector.broadcast %25 : vector<2x1xf32> to vector<2x10xf32>
      %27 = arith.subf %23, %26 : vector<2x10xf32>
      %28 = math.exp %27 : vector<2x10xf32>
      %cst_20 = arith.constant dense<0.000000e+00> : vector<2xf32>
      %29 = vector.multi_reduction <add>, %28, %cst_20 [1] : vector<2x10xf32> to vector<2xf32>
      %30 = vector.shape_cast %29 : vector<2xf32> to vector<2x1xf32>
      %31 = math.log %30 : vector<2x1xf32>
      %32 = arith.addf %31, %25 : vector<2x1xf32>
      %33 = vector.broadcast %32 : vector<2x1xf32> to vector<2x10xf32>
      %34 = arith.subf %23, %33 : vector<2x10xf32>
      %c0_21 = arith.constant 0 : index
      %c0_22 = arith.constant 0 : index
      %35 = vector.load %arg7[%c0_21, %c0_22] : memref<2x10xf32, #tpu.memory_space<vmem>>, vector<2x10xf32>
      tpu.vector_store %arg7[%c0_21, %c0_22], %34 {strides = array<i32>} : memref<2x10xf32, #tpu.memory_space<vmem>>, vector<2x10xf32>,
    } else {
    }
    return
  }
  func.func @transform_0(%arg0: i32, %arg1: i32) -> (i32, i32) {
    %c0_i32 = arith.constant 0 : i32
    return %arg0, %arg1 : i32, i32
  }
  func.func @transform_1(%arg0: i32, %arg1: i32) -> (i32, i32) {
    %c0_i32 = arith.constant 0 : i32
    %c0_i32_0 = arith.constant 0 : i32
    return %arg1, %c0_i32 : i32, i32
  }
  func.func @transform_2(%arg0: i32, %arg1: i32) -> (i32, i32) {
    %c0_i32 = arith.constant 0 : i32
    %c0_i32_0 = arith.constant 0 : i32
    %c0_i32_1 = arith.constant 0 : i32
    return %c0_i32, %c0_i32_0 : i32, i32
  }
  func.func @transform_3(%arg0: i32, %arg1: i32) -> (i32, i32) {
    %c0_i32 = arith.constant 0 : i32
    %c0_i32_0 = arith.constant 0 : i32
    %c0_i32_1 = arith.constant 0 : i32
    return %c0_i32, %c0_i32_0 : i32, i32
  }
  func.func @transform_4(%arg0: i32, %arg1: i32) -> (i32, i32) {
    %c0_i32 = arith.constant 0 : i32
    %c0_i32_0 = arith.constant 0 : i32
    %c0_i32_1 = arith.constant 0 : i32
    return %c0_i32, %c0_i32_0 : i32, i32
  }
  func.func @transform_5(%arg0: i32, %arg1: i32) -> (i32, i32) {
    %c0_i32 = arith.constant 0 : i32
    %c0_i32_0 = arith.constant 0 : i32
    return %arg0, %c0_i32 : i32, i32
  }
}

</mosaic_0001>

<llo_original>
// kernel: simple_cnn_forward.3
$region0: #{simple_cnn_forward.3}
  #allocation0 [shape = 'u32[]', space=smem, size = 0x4, offset = 0x4, fixed_abs, tag = 'smem constant byte address 0x4 - core index']
  #allocation1 [shape = 'u32[144,128]{1,0:T(1,128)}', space=vmem, size = 0x12000, scoped, tag = 'internal scratch']
  %s0 = inlined_call_operand.vmem [shape: bf16[4,392,32], index: 0, kind: input, shape index: {}]
  %s1 = inlined_call_operand.vmem [shape: bf16[32,32], index: 1, kind: input, shape index: {}]
  %s2 = inlined_call_operand.vmem [shape: f32[1,32], index: 2, kind: input, shape index: {}]
  %s3 = inlined_call_operand.vmem [shape: bf16[392,32], index: 3, kind: output, shape index: {}]
  %s4 = sld [smem:[#allocation0]]
  $region22: #{simple_cnn_forward.3} parent=0
    _
  %s6 = ssub.s32 1, %s4
  %s7 = scalar_select 0, %s6, %s4
  // Predicated region
  $region2: #{simple_cnn_forward.3} parent=0 // pred_check
    _
  $region3: #{simple_cnn_forward.3} parent=0 // pred_check_branch
    %9 = sbr.rel (0) target = $region5
  $region4: #{simple_cnn_forward.3} parent=0 // pred_region
    _
  $region5: #{simple_cnn_forward.3} parent=0 // pred_fallthru
    _
  // Predicated region
  $region6: #{simple_cnn_forward.3} parent=0 // pred_check
    _
  $region7: #{simple_cnn_forward.3} parent=0 // pred_check_branch
    %11 = sbr.rel (0) target = $region9
  $region8: #{simple_cnn_forward.3} parent=0 // pred_region
    _
  $region9: #{simple_cnn_forward.3} parent=0 // pred_fallthru
    _
  // Predicated region
  $region10: #{simple_cnn_forward.3} parent=0 // pred_check
    _
  $region11: #{simple_cnn_forward.3} parent=0 // pred_check_branch
    %13 = sbr.rel (0) target = $region13
  $region12: #{simple_cnn_forward.3} parent=0 // pred_region
    _
  $region13: #{simple_cnn_forward.3} parent=0 // pred_fallthru
    _
  %v15 = vld [vmem:[%s1] sm:$0xf]
  %v16 = vld [vmem:[%s1 + $0x4] sm:$0xf]
  %v17 = vld [vmem:[%s1 + $0x8] sm:$0xf]
  %v18 = vld [vmem:[%s1 + $0xc] sm:$0xf]
  %v19 = vld [vmem:[%s0] sm:$0xf]
  %v20 = vld [vmem:[%s0 + $0x4] sm:$0xf]
  %v21 = vld [vmem:[%s0 + $0x8] sm:$0xf]
  %v22 = vld [vmem:[%s0 + $0xc] sm:$0xf]
  %v23 = vld [vmem:[%s0 + $0x10] sm:$0xf]
  %v24 = vld [vmem:[%s0 + $0x14] sm:$0xf]
  %v25 = vld [vmem:[%s0 + $0x18] sm:$0xf]
  %v26 = vld [vmem:[%s0 + $0x1c] sm:$0xf]
  %v27 = vld [vmem:[%s0 + $0x20] sm:$0xf]
  %v28 = vld [vmem:[%s0 + $0x24] sm:$0xf]
  %v29 = vld [vmem:[%s0 + $0x28] sm:$0xf]
  %v30 = vld [vmem:[%s0 + $0x2c] sm:$0xf]
  %v31 = vld [vmem:[%s0 + $0x30] sm:$0xf]
  %v32 = vld [vmem:[%s0 + $0x34] sm:$0xf]
  %v33 = vld [vmem:[%s0 + $0x38] sm:$0xf]
  %v34 = vld [vmem:[%s0 + $0x3c] sm:$0xf]
  %v35 = vld [vmem:[%s0 + $0x40] sm:$0xf]
  %v36 = vld [vmem:[%s0 + $0x44] sm:$0xf]
  %v37 = vld [vmem:[%s0 + $0x48] sm:$0xf]
  %v38 = vld [vmem:[%s0 + $0x4c] sm:$0xf]
  %v39 = vld [vmem:[%s0 + $0x50] sm:$0xf]
  %v40 = vld [vmem:[%s0 + $0x54] sm:$0xf]
  %v41 = vld [vmem:[%s0 + $0x58] sm:$0xf]
  %v42 = vld [vmem:[%s0 + $0x5c] sm:$0xf]
  %v43 = vld [vmem:[%s0 + $0x60] sm:$0xf]
  %v44 = vld [vmem:[%s0 + $0x64] sm:$0xf]
  %v45 = vld [vmem:[%s0 + $0x68] sm:$0xf]
  %v46 = vld [vmem:[%s0 + $0x6c] sm:$0xf]
  %v47 = vld [vmem:[%s0 + $0x70] sm:$0xf]
  %v48 = vld [vmem:[%s0 + $0x74] sm:$0xf]
  %v49 = vld [vmem:[%s0 + $0x78] sm:$0xf]
  %v50 = vld [vmem:[%s0 + $0x7c] sm:$0xf]
  %v51 = vld [vmem:[%s0 + $0x80] sm:$0xf]
  %v52 = vld [vmem:[%s0 + $0x84] sm:$0xf]
  %v53 = vld [vmem:[%s0 + $0x88] sm:$0xf]
  %v54 = vld [vmem:[%s0 + $0x8c] sm:$0xf]
  %v55 = vld [vmem:[%s0 + $0x90] sm:$0xf]
  %v56 = vld [vmem:[%s0 + $0x94] sm:$0xf]
  %v57 = vld [vmem:[%s0 + $0x98] sm:$0xf]
  %v58 = vld [vmem:[%s0 + $0x9c] sm:$0xf]
  %v59 = vld [vmem:[%s0 + $0xa0] sm:$0xf]
  %v60 = vld [vmem:[%s0 + $0xa4] sm:$0xf]
  %v61 = vld [vmem:[%s0 + $0xa8] sm:$0xf]
  %v62 = vld [vmem:[%s0 + $0xac] sm:$0xf]
  %v63 = vld [vmem:[%s0 + $0xb0] sm:$0xf]
  %v64 = vld [vmem:[%s0 + $0xb4] sm:$0xf]
  %v65 = vld [vmem:[%s0 + $0xb8] sm:$0xf]
  %v66 = vld [vmem:[%s0 + $0xbc] sm:$0xf]
  %v67 = vld [vmem:[%s0 + $0xc0] sm:$0xf]
  %v117 = vunpack.c.l.b16 %v19
  %v118 = vunpack.c.l.b16 %v20
  %v119 = vunpack.c.l.b16 %v21
  %v120 = vunpack.c.l.b16 %v22
  %v121 = vunpack.c.l.b16 %v23
  %v122 = vunpack.c.l.b16 %v24
  %v123 = vunpack.c.l.b16 %v25
  %v124 = vunpack.c.l.b16 %v26
  %v125 = vunpack.c.l.b16 %v27
  %v126 = vunpack.c.l.b16 %v28
  %v127 = vunpack.c.l.b16 %v29
  %v128 = vunpack.c.l.b16 %v30
  %v129 = vunpack.c.l.b16 %v31
  %v130 = vunpack.c.l.b16 %v32
  %v131 = vunpack.c.l.b16 %v33
  %v132 = vunpack.c.l.b16 %v34
  %v133 = vunpack.c.l.b16 %v35
  %v134 = vunpack.c.l.b16 %v36
  %v135 = vunpack.c.l.b16 %v37
  %v136 = vunpack.c.l.b16 %v38
  %v137 = vunpack.c.l.b16 %v39
  %v138 = vunpack.c.l.b16 %v40
  %v139 = vunpack.c.l.b16 %v41
  %v140 = vunpack.c.l.b16 %v42
  %v141 = vunpack.c.l.b16 %v43
  %v142 = vunpack.c.l.b16 %v44
  %v143 = vunpack.c.l.b16 %v45
  %v144 = vunpack.c.l.b16 %v46
  %v145 = vunpack.c.l.b16 %v47
  %v146 = vunpack.c.l.b16 %v48
  %v147 = vunpack.c.l.b16 %v49
  %v148 = vunpack.c.l.b16 %v50
  %v149 = vunpack.c.l.b16 %v51
  %v150 = vunpack.c.l.b16 %v52
  %v151 = vunpack.c.l.b16 %v53
  %v152 = vunpack.c.l.b16 %v54
  %v153 = vunpack.c.l.b16 %v55
  %v154 = vunpack.c.l.b16 %v56
  %v155 = vunpack.c.l.b16 %v57
  %v156 = vunpack.c.l.b16 %v58
  %v157 = vunpack.c.l.b16 %v59
  %v158 = vunpack.c.l.b16 %v60
  %v159 = vunpack.c.l.b16 %v61
  %v160 = vunpack.c.l.b16 %v62
  %v161 = vunpack.c.l.b16 %v63
  %v162 = vunpack.c.l.b16 %v64
  %v163 = vunpack.c.l.b16 %v65
  %v164 = vunpack.c.l.b16 %v66
  %v165 = vunpack.c.l.b16 %v67
  %v166 = vpack.c.b16 %v118, %v117
  %v167 = vpack.c.b16 %v120, %v119
  %v168 = vpack.c.b16 %v122, %v121
  %v169 = vpack.c.b16 %v124, %v123
  %v170 = vpack.c.b16 %v126, %v125
  %v171 = vpack.c.b16 %v128, %v127
  %v172 = vpack.c.b16 %v130, %v129
  %v173 = vpack.c.b16 %v132, %v131
  %v174 = vpack.c.b16 %v134, %v133
  %v175 = vpack.c.b16 %v136, %v135
  %v176 = vpack.c.b16 %v138, %v137
  %v177 = vpack.c.b16 %v140, %v139
  %v178 = vpack.c.b16 %v142, %v141
  %v179 = vpack.c.b16 %v144, %v143
  %v180 = vpack.c.b16 %v146, %v145
  %v181 = vpack.c.b16 %v148, %v147
  %v182 = vpack.c.b16 %v150, %v149
  %v183 = vpack.c.b16 %v152, %v151
  %v184 = vpack.c.b16 %v154, %v153
  %v185 = vpack.c.b16 %v156, %v155
  %v186 = vpack.c.b16 %v158, %v157
  %v187 = vpack.c.b16 %v160, %v159
  %v188 = vpack.c.b16 %v162, %v161
  %v189 = vpack.c.b16 %v164, %v163
  %v190 = vpack.c.b16 %v165, %v165
  %v195 = vunpack.c.l.b16 %v15
  %v196 = vunpack.c.l.b16 %v16
  %v197 = vunpack.c.l.b16 %v17
  %v198 = vunpack.c.l.b16 %v18
  %v199 = vpack.c.b16 %v196, %v195
  %v200 = vpack.c.b16 %v198, %v197
  %vm203 = vcmask 261120
  %v205 = vsel %vm203, %v166, 0
  %v208 = vsel %vm203, %v167, 0
  %v211 = vsel %vm203, %v168, 0
  %v214 = vsel %vm203, %v169, 0
  %v217 = vsel %vm203, %v170, 0
  %v220 = vsel %vm203, %v171, 0
  %v223 = vsel %vm203, %v172, 0
  %v226 = vsel %vm203, %v173, 0
  %v229 = vsel %vm203, %v174, 0
  %v232 = vsel %vm203, %v175, 0
  %v235 = vsel %vm203, %v176, 0
  %v238 = vsel %vm203, %v177, 0
  %v241 = vsel %vm203, %v178, 0
  %v244 = vsel %vm203, %v179, 0
  %v247 = vsel %vm203, %v180, 0
  %v250 = vsel %vm203, %v181, 0
  %v253 = vsel %vm203, %v182, 0
  %v256 = vsel %vm203, %v183, 0
  %v259 = vsel %vm203, %v184, 0
  %v262 = vsel %vm203, %v185, 0
  %v265 = vsel %vm203, %v186, 0
  %v268 = vsel %vm203, %v187, 0
  %v271 = vsel %vm203, %v188, 0
  %v274 = vsel %vm203, %v189, 0
  %v277 = vsel %vm203, %v190, 0
  %279 = vmatprep.subr.bf16.mxu0 0
  %280 = vmatpush1.bf16.msra.mxu0 0
  %281 = vmatprep.subr.bf16.mxu0 0
  %282 = vmatpush1.bf16.msra.mxu0 0
  %283 = vmatprep.subr.bf16.mxu0 0
  %284 = vmatpush1.bf16.msra.mxu0 0
  %285 = vmatprep.subr.bf16.mxu0 0
  %286 = vmatpush1.bf16.msra.mxu0 0
  %287 = vmatprep.subr.bf16.mxu0 0
  %288 = vmatpush1.bf16.msra.mxu0 0
  %289 = vmatprep.subr.bf16.mxu0 0
  %290 = vmatpush1.bf16.msra.mxu0 0
  %291 = vmatprep.subr.bf16.mxu0 0
  %292 = vmatpush1.bf16.msra.mxu0 %v200
  %293 = vmatprep.subr.bf16.mxu0 0
  %294 = vmatpush1.bf16.msra.mxu0 %v199
  %295 = vmatprep.subr.bf16.mxu0 0
  %296 = vmatpush2.bf16.msra.mxu0 0
  %297 = vmatprep.subr.bf16.mxu0 0
  %298 = vmatpush2.bf16.msra.mxu0 0
  %299 = vmatprep.subr.bf16.mxu0 0
  %300 = vmatpush2.bf16.msra.mxu0 0
  %301 = vmatprep.subr.bf16.mxu0 0
  %302 = vmatpush2.bf16.msra.mxu0 0
  %303 = vmatprep.subr.bf16.mxu0 0
  %304 = vmatpush2.bf16.msra.mxu0 0
  %305 = vmatprep.subr.bf16.mxu0 0
  %306 = vmatpush2.bf16.msra.mxu0 0
  %307 = vmatprep.subr.bf16.mxu0 0
  %308 = vmatpush2.bf16.msra.mxu0 0
  %309 = vmatprep.subr.bf16.mxu0 0
  %310 = vmatpush2.bf16.msra.mxu0 0
  %311 = vmatprep.mubr.bf16.mxu0 0
  %312 = vmatmul.mubr.bf16.gmra.mxu0 %v205
  %v313 = vpop.f32.mrf.mxu0
  %v314 = vadd.f32 0.0, %v313
  %v315 = vpop.f32.mrf.mxu0
  %v316 = vpop.f32.mrf.mxu0
  %v317 = vadd.f32 0.0, %v316
  %v318 = vpop.f32.mrf.mxu0
  %319 = vmatprep.mubr.bf16.mxu0 0
  %320 = vmatmul.mubr.bf16.gmra.mxu0 %v208
  %v321 = vpop.f32.mrf.mxu0
  %v322 = vadd.f32 0.0, %v321
  %v323 = vpop.f32.mrf.mxu0
  %v324 = vpop.f32.mrf.mxu0
  %v325 = vadd.f32 0.0, %v324
  %v326 = vpop.f32.mrf.mxu0
  %327 = vmatprep.mubr.bf16.mxu0 0
  %328 = vmatmul.mubr.bf16.gmra.mxu0 %v211
  %v329 = vpop.f32.mrf.mxu0
  %v330 = vadd.f32 0.0, %v329
  %v331 = vpop.f32.mrf.mxu0
  %v332 = vpop.f32.mrf.mxu0
  %v333 = vadd.f32 0.0, %v332
  %v334 = vpop.f32.mrf.mxu0
  %335 = vmatprep.mubr.bf16.mxu0 0
  %336 = vmatmul.mubr.bf16.gmra.mxu0 %v214
  %v337 = vpop.f32.mrf.mxu0
  %v338 = vadd.f32 0.0, %v337
  %v339 = vpop.f32.mrf.mxu0
  %v340 = vpop.f32.mrf.mxu0
  %v341 = vadd.f32 0.0, %v340
  %v342 = vpop.f32.mrf.mxu0
  %343 = vmatprep.mubr.bf16.mxu0 0
  %344 = vmatmul.mubr.bf16.gmra.mxu0 %v217
  %v345 = vpop.f32.mrf.mxu0
  %v346 = vadd.f32 0.0, %v345
  %v347 = vpop.f32.mrf.mxu0
  %v348 = vpop.f32.mrf.mxu0
  %v349 = vadd.f32 0.0, %v348
  %v350 = vpop.f32.mrf.mxu0
  %351 = vmatprep.mubr.bf16.mxu0 0
  %352 = vmatmul.mubr.bf16.gmra.mxu0 %v220
  %v353 = vpop.f32.mrf.mxu0
  %v354 = vadd.f32 0.0, %v353
  %v355 = vpop.f32.mrf.mxu0
  %v356 = vpop.f32.mrf.mxu0
  %v357 = vadd.f32 0.0, %v356
  %v358 = vpop.f32.mrf.mxu0
  %359 = vmatprep.mubr.bf16.mxu0 0
  %360 = vmatmul.mubr.bf16.gmra.mxu0 %v223
  %v361 = vpop.f32.mrf.mxu0
  %v362 = vadd.f32 0.0, %v361
  %v363 = vpop.f32.mrf.mxu0
  %v364 = vpop.f32.mrf.mxu0
  %v365 = vadd.f32 0.0, %v364
  %v366 = vpop.f32.mrf.mxu0
  %367 = vmatprep.mubr.bf16.mxu0 0
  %368 = vmatmul.mubr.bf16.gmra.mxu0 %v226
  %v369 = vpop.f32.mrf.mxu0
  %v370 = vadd.f32 0.0, %v369
  %v371 = vpop.f32.mrf.mxu0
  %v372 = vpop.f32.mrf.mxu0
  %v373 = vadd.f32 0.0, %v372
  %v374 = vpop.f32.mrf.mxu0
  %375 = vmatprep.mubr.bf16.mxu0 0
  %376 = vmatmul.mubr.bf16.gmra.mxu0 %v229
  %v377 = vpop.f32.mrf.mxu0
  %v378 = vadd.f32 0.0, %v377
  %v379 = vpop.f32.mrf.mxu0
  %v380 = vpop.f32.mrf.mxu0
  %v381 = vadd.f32 0.0, %v380
  %v382 = vpop.f32.mrf.mxu0
  %383 = vmatprep.mubr.bf16.mxu0 0
  %384 = vmatmul.mubr.bf16.gmra.mxu0 %v232
  %v385 = vpop.f32.mrf.mxu0
  %v386 = vadd.f32 0.0, %v385
  %v387 = vpop.f32.mrf.mxu0
  %v388 = vpop.f32.mrf.mxu0
  %v389 = vadd.f32 0.0, %v388
  %v390 = vpop.f32.mrf.mxu0
  %391 = vmatprep.mubr.bf16.mxu0 0
  %392 = vmatmul.mubr.bf16.gmra.mxu0 %v235
  %v393 = vpop.f32.mrf.mxu0
  %v394 = vadd.f32 0.0, %v393
  %v395 = vpop.f32.mrf.mxu0
  %v396 = vpop.f32.mrf.mxu0
  %v397 = vadd.f32 0.0, %v396
  %v398 = vpop.f32.mrf.mxu0
  %399 = vmatprep.mubr.bf16.mxu0 0
  %400 = vmatmul.mubr.bf16.gmra.mxu0 %v238
  %v401 = vpop.f32.mrf.mxu0
  %v402 = vadd.f32 0.0, %v401
  %v403 = vpop.f32.mrf.mxu0
  %v404 = vpop.f32.mrf.mxu0
  %v405 = vadd.f32 0.0, %v404
  %v406 = vpop.f32.mrf.mxu0
  %407 = vmatprep.mubr.bf16.mxu0 0
  %408 = vmatmul.mubr.bf16.gmra.mxu0 %v241
  %v409 = vpop.f32.mrf.mxu0
  %v410 = vadd.f32 0.0, %v409
  %v411 = vpop.f32.mrf.mxu0
  %v412 = vpop.f32.mrf.mxu0
  %v413 = vadd.f32 0.0, %v412
  %v414 = vpop.f32.mrf.mxu0
  %415 = vmatprep.mubr.bf16.mxu0 0
  %416 = vmatmul.mubr.bf16.gmra.mxu0 %v244
  %v417 = vpop.f32.mrf.mxu0
  %v418 = vadd.f32 0.0, %v417
  %v419 = vpop.f32.mrf.mxu0
  %v420 = vpop.f32.mrf.mxu0
  %v421 = vadd.f32 0.0, %v420
  %v422 = vpop.f32.mrf.mxu0
  %423 = vmatprep.mubr.bf16.mxu0 0
  %424 = vmatmul.mubr.bf16.gmra.mxu0 %v247
  %v425 = vpop.f32.mrf.mxu0
  %v426 = vadd.f32 0.0, %v425
  %v427 = vpop.f32.mrf.mxu0
  %v428 = vpop.f32.mrf.mxu0
  %v429 = vadd.f32 0.0, %v428
  %v430 = vpop.f32.mrf.mxu0
  %431 = vmatprep.mubr.bf16.mxu0 0
  %432 = vmatmul.mubr.bf16.gmra.mxu0 %v250
  %v433 = vpop.f32.mrf.mxu0
  %v434 = vadd.f32 0.0, %v433
  %v435 = vpop.f32.mrf.mxu0
  %v436 = vpop.f32.mrf.mxu0
  %v437 = vadd.f32 0.0, %v436
  %v438 = vpop.f32.mrf.mxu0
  %439 = vmatprep.mubr.bf16.mxu0 0
  %440 = vmatmul.mubr.bf16.gmra.mxu0 %v253
  %v441 = vpop.f32.mrf.mxu0
  %v442 = vadd.f32 0.0, %v441
  %v443 = vpop.f32.mrf.mxu0
  %v444 = vpop.f32.mrf.mxu0
  %v445 = vadd.f32 0.0, %v444
  %v446 = vpop.f32.mrf.mxu0
  %447 = vmatprep.mubr.bf16.mxu0 0
  %448 = vmatmul.mubr.bf16.gmra.mxu0 %v256
  %v449 = vpop.f32.mrf.mxu0
  %v450 = vadd.f32 0.0, %v449
  %v451 = vpop.f32.mrf.mxu0
  %v452 = vpop.f32.mrf.mxu0
  %v453 = vadd.f32 0.0, %v452
  %v454 = vpop.f32.mrf.mxu0
  %455 = vmatprep.mubr.bf16.mxu0 0
  %456 = vmatmul.mubr.bf16.gmra.mxu0 %v259
  %v457 = vpop.f32.mrf.mxu0
  %v458 = vadd.f32 0.0, %v457
  %v459 = vpop.f32.mrf.mxu0
  %v460 = vpop.f32.mrf.mxu0
  %v461 = vadd.f32 0.0, %v460
  %v462 = vpop.f32.mrf.mxu0
  %463 = vmatprep.mubr.bf16.mxu0 0
  %464 = vmatmul.mubr.bf16.gmra.mxu0 %v262
  %v465 = vpop.f32.mrf.mxu0
  %v466 = vadd.f32 0.0, %v465
  %v467 = vpop.f32.mrf.mxu0
  %v468 = vpop.f32.mrf.mxu0
  %v469 = vadd.f32 0.0, %v468
  %v470 = vpop.f32.mrf.mxu0
  %471 = vmatprep.mubr.bf16.mxu0 0
  %472 = vmatmul.mubr.bf16.gmra.mxu0 %v265
  %v473 = vpop.f32.mrf.mxu0
  %v474 = vadd.f32 0.0, %v473
  %v475 = vpop.f32.mrf.mxu0
  %v476 = vpop.f32.mrf.mxu0
  %v477 = vadd.f32 0.0, %v476
  %v478 = vpop.f32.mrf.mxu0
  %479 = vmatprep.mubr.bf16.mxu0 0
  %480 = vmatmul.mubr.bf16.gmra.mxu0 %v268
  %v481 = vpop.f32.mrf.mxu0
  %v482 = vadd.f32 0.0, %v481
  %v483 = vpop.f32.mrf.mxu0
  %v484 = vpop.f32.mrf.mxu0
  %v485 = vadd.f32 0.0, %v484
  %v486 = vpop.f32.mrf.mxu0
  %487 = vmatprep.mubr.bf16.mxu0 0
  %488 = vmatmul.mubr.bf16.gmra.mxu0 %v271
  %v489 = vpop.f32.mrf.mxu0
  %v490 = vadd.f32 0.0, %v489
  %v491 = vpop.f32.mrf.mxu0
  %v492 = vpop.f32.mrf.mxu0
  %v493 = vadd.f32 0.0, %v492
  %v494 = vpop.f32.mrf.mxu0
  %495 = vmatprep.mubr.bf16.mxu0 0
  %496 = vmatmul.mubr.bf16.gmra.mxu0 %v274
  %v497 = vpop.f32.mrf.mxu0
  %v498 = vadd.f32 0.0, %v497
  %v499 = vpop.f32.mrf.mxu0
  %v500 = vpop.f32.mrf.mxu0
  %v501 = vadd.f32 0.0, %v500
  %v502 = vpop.f32.mrf.mxu0
  %503 = vmatprep.mubr.bf16.mxu0 0
  %504 = vmatmul.mubr.bf16.gmra.mxu0 %v277
  %v505 = vpop.f32.mrf.mxu0
  %v506 = vadd.f32 0.0, %v505
  %v507 = vpop.f32.mrf.mxu0
  %v508 = vpop.f32.mrf.mxu0
  %v509 = vpop.f32.mrf.mxu0
  %510 = vdwg.mxu0
  %s511 = scalar_lea.vmem %s0, 196
  %v512 = vld [vmem:[%s511] sm:$0xf]
  %v513 = vld [vmem:[%s511 + $0x4] sm:$0xf]
  %v514 = vld [vmem:[%s511 + $0x8] sm:$0xf]
  %v515 = vld [vmem:[%s511 + $0xc] sm:$0xf]
  %v516 = vld [vmem:[%s511 + $0x10] sm:$0xf]
  %v517 = vld [vmem:[%s511 + $0x14] sm:$0xf]
  %v518 = vld [vmem:[%s511 + $0x18] sm:$0xf]
  %v519 = vld [vmem:[%s511 + $0x1c] sm:$0xf]
  %v520 = vld [vmem:[%s511 + $0x20] sm:$0xf]
  %v521 = vld [vmem:[%s511 + $0x24] sm:$0xf]
  %v522 = vld [vmem:[%s511 + $0x28] sm:$0xf]
  %v523 = vld [vmem:[%s511 + $0x2c] sm:$0xf]
  %v524 = vld [vmem:[%s511 + $0x30] sm:$0xf]
  %v525 = vld [vmem:[%s511 + $0x34] sm:$0xf]
  %v526 = vld [vmem:[%s511 + $0x38] sm:$0xf]
  %v527 = vld [vmem:[%s511 + $0x3c] sm:$0xf]
  %v528 = vld [vmem:[%s511 + $0x40] sm:$0xf]
  %v529 = vld [vmem:[%s511 + $0x44] sm:$0xf]
  %v530 = vld [vmem:[%s511 + $0x48] sm:$0xf]
  %v531 = vld [vmem:[%s511 + $0x4c] sm:$0xf]
  %v532 = vld [vmem:[%s511 + $0x50] sm:$0xf]
  %v533 = vld [vmem:[%s511 + $0x54] sm:$0xf]
  %v534 = vld [vmem:[%s511 + $0x58] sm:$0xf]
  %v535 = vld [vmem:[%s511 + $0x5c] sm:$0xf]
  %v536 = vld [vmem:[%s511 + $0x60] sm:$0xf]
  %v537 = vld [vmem:[%s511 + $0x64] sm:$0xf]
  %v538 = vld [vmem:[%s511 + $0x68] sm:$0xf]
  %v539 = vld [vmem:[%s511 + $0x6c] sm:$0xf]
  %v540 = vld [vmem:[%s511 + $0x70] sm:$0xf]
  %v541 = vld [vmem:[%s511 + $0x74] sm:$0xf]
  %v542 = vld [vmem:[%s511 + $0x78] sm:$0xf]
  %v543 = vld [vmem:[%s511 + $0x7c] sm:$0xf]
  %v544 = vld [vmem:[%s511 + $0x80] sm:$0xf]
  %v545 = vld [vmem:[%s511 + $0x84] sm:$0xf]
  %v546 = vld [vmem:[%s511 + $0x88] sm:$0xf]
  %v547 = vld [vmem:[%s511 + $0x8c] sm:$0xf]
  %v548 = vld [vmem:[%s511 + $0x90] sm:$0xf]
  %v549 = vld [vmem:[%s511 + $0x94] sm:$0xf]
  %v550 = vld [vmem:[%s511 + $0x98] sm:$0xf]
  %v551 = vld [vmem:[%s511 + $0x9c] sm:$0xf]
  %v552 = vld [vmem:[%s511 + $0xa0] sm:$0xf]
  %v553 = vld [vmem:[%s511 + $0xa4] sm:$0xf]
  %v554 = vld [vmem:[%s511 + $0xa8] sm:$0xf]
  %v555 = vld [vmem:[%s511 + $0xac] sm:$0xf]
  %v556 = vld [vmem:[%s511 + $0xb0] sm:$0xf]
  %v557 = vld [vmem:[%s511 + $0xb4] sm:$0xf]
  %v558 = vld [vmem:[%s511 + $0xb8] sm:$0xf]
  %v559 = vld [vmem:[%s511 + $0xbc] sm:$0xf]
  %v560 = vld [vmem:[%s511 + $0xc0] sm:$0xf]
  %v610 = vunpack.c.l.b16 %v512
  %v611 = vunpack.c.l.b16 %v513
  %v612 = vunpack.c.l.b16 %v514
  %v613 = vunpack.c.l.b16 %v515
  %v614 = vunpack.c.l.b16 %v516
  %v615 = vunpack.c.l.b16 %v517
  %v616 = vunpack.c.l.b16 %v518
  %v617 = vunpack.c.l.b16 %v519
  %v618 = vunpack.c.l.b16 %v520
  %v619 = vunpack.c.l.b16 %v521
  %v620 = vunpack.c.l.b16 %v522
  %v621 = vunpack.c.l.b16 %v523
  %v622 = vunpack.c.l.b16 %v524
  %v623 = vunpack.c.l.b16 %v525
  %v624 = vunpack.c.l.b16 %v526
  %v625 = vunpack.c.l.b16 %v527
  %v626 = vunpack.c.l.b16 %v528
  %v627 = vunpack.c.l.b16 %v529
  %v628 = vunpack.c.l.b16 %v530
  %v629 = vunpack.c.l.b16 %v531
  %v630 = vunpack.c.l.b16 %v532
  %v631 = vunpack.c.l.b16 %v533
  %v632 = vunpack.c.l.b16 %v534
  %v633 = vunpack.c.l.b16 %v535
  %v634 = vunpack.c.l.b16 %v536
  %v635 = vunpack.c.l.b16 %v537
  %v636 = vunpack.c.l.b16 %v538
  %v637 = vunpack.c.l.b16 %v539
  %v638 = vunpack.c.l.b16 %v540
  %v639 = vunpack.c.l.b16 %v541
  %v640 = vunpack.c.l.b16 %v542
  %v641 = vunpack.c.l.b16 %v543
  %v642 = vunpack.c.l.b16 %v544
  %v643 = vunpack.c.l.b16 %v545
  %v644 = vunpack.c.l.b16 %v546
  %v645 = vunpack.c.l.b16 %v547
  %v646 = vunpack.c.l.b16 %v548
  %v647 = vunpack.c.l.b16 %v549
  %v648 = vunpack.c.l.b16 %v550
  %v649 = vunpack.c.l.b16 %v551
  %v650 = vunpack.c.l.b16 %v552
  %v651 = vunpack.c.l.b16 %v553
  %v652 = vunpack.c.l.b16 %v554
  %v653 = vunpack.c.l.b16 %v555
  %v654 = vunpack.c.l.b16 %v556
  %v655 = vunpack.c.l.b16 %v557
  %v656 = vunpack.c.l.b16 %v558
  %v657 = vunpack.c.l.b16 %v559
  %v658 = vunpack.c.l.b16 %v560
  %v659 = vpack.c.b16 %v611, %v610
  %v660 = vpack.c.b16 %v613, %v612
  %v661 = vpack.c.b16 %v615, %v614
  %v662 = vpack.c.b16 %v617, %v616
  %v663 = vpack.c.b16 %v619, %v618
  %v664 = vpack.c.b16 %v621, %v620
  %v665 = vpack.c.b16 %v623, %v622
  %v666 = vpack.c.b16 %v625, %v624
  %v667 = vpack.c.b16 %v627, %v626
  %v668 = vpack.c.b16 %v629, %v628
  %v669 = vpack.c.b16 %v631, %v630
  %v670 = vpack.c.b16 %v633, %v632
  %v671 = vpack.c.b16 %v635, %v634
  %v672 = vpack.c.b16 %v637, %v636
  %v673 = vpack.c.b16 %v639, %v638
  %v674 = vpack.c.b16 %v641, %v640
  %v675 = vpack.c.b16 %v643, %v642
  %v676 = vpack.c.b16 %v645, %v644
  %v677 = vpack.c.b16 %v647, %v646
  %v678 = vpack.c.b16 %v649, %v648
  %v679 = vpack.c.b16 %v651, %v650
  %v680 = vpack.c.b16 %v653, %v652
  %v681 = vpack.c.b16 %v655, %v654
  %v682 = vpack.c.b16 %v657, %v656
  %v683 = vpack.c.b16 %v658, %v658
  %v685 = vsel %vm203, %v659, 0
  %v688 = vsel %vm203, %v660, 0
  %v691 = vsel %vm203, %v661, 0
  %v694 = vsel %vm203, %v662, 0
  %v697 = vsel %vm203, %v663, 0
  %v700 = vsel %vm203, %v664, 0
  %v703 = vsel %vm203, %v665, 0
  %v706 = vsel %vm203, %v666, 0
  %v709 = vsel %vm203, %v667, 0
  %v712 = vsel %vm203, %v668, 0
  %v715 = vsel %vm203, %v669, 0
  %v718 = vsel %vm203, %v670, 0
  %v721 = vsel %vm203, %v671, 0
  %v724 = vsel %vm203, %v672, 0
  %v727 = vsel %vm203, %v673, 0
  %v730 = vsel %vm203, %v674, 0
  %v733 = vsel %vm203, %v675, 0
  %v736 = vsel %vm203, %v676, 0
  %v739 = vsel %vm203, %v677, 0
  %v742 = vsel %vm203, %v678, 0
  %v745 = vsel %vm203, %v679, 0
  %v748 = vsel %vm203, %v680, 0
  %v751 = vsel %vm203, %v681, 0
  %v754 = vsel %vm203, %v682, 0
  %v757 = vsel %vm203, %v683, 0
  %759 = vmatprep.subr.bf16.mxu0 0
  %760 = vmatpush1.bf16.msra.mxu0 0
  %761 = vmatprep.subr.bf16.mxu0 0
  %762 = vmatpush1.bf16.msra.mxu0 0
  %763 = vmatprep.subr.bf16.mxu0 0
  %764 = vmatpush1.bf16.msra.mxu0 0
  %765 = vmatprep.subr.bf16.mxu0 0
  %766 = vmatpush1.bf16.msra.mxu0 0
  %767 = vmatprep.subr.bf16.mxu0 0
  %768 = vmatpush1.bf16.msra.mxu0 0
  %769 = vmatprep.subr.bf16.mxu0 0
  %770 = vmatpush1.bf16.msra.mxu0 0
  %771 = vmatprep.subr.bf16.mxu0 0
  %772 = vmatpush1.bf16.msra.mxu0 %v200
  %773 = vmatprep.subr.bf16.mxu0 0
  %774 = vmatpush1.bf16.msra.mxu0 %v199
  %775 = vmatprep.subr.bf16.mxu0 0
  %776 = vmatpush2.bf16.msra.mxu0 0
  %777 = vmatprep.subr.bf16.mxu0 0
  %778 = vmatpush2.bf16.msra.mxu0 0
  %779 = vmatprep.subr.bf16.mxu0 0
  %780 = vmatpush2.bf16.msra.mxu0 0
  %781 = vmatprep.subr.bf16.mxu0 0
  %782 = vmatpush2.bf16.msra.mxu0 0
  %783 = vmatprep.subr.bf16.mxu0 0
  %784 = vmatpush2.bf16.msra.mxu0 0
  %785 = vmatprep.subr.bf16.mxu0 0
  %786 = vmatpush2.bf16.msra.mxu0 0
  %787 = vmatprep.subr.bf16.mxu0 0
  %788 = vmatpush2.bf16.msra.mxu0 0
  %789 = vmatprep.subr.bf16.mxu0 0
  %790 = vmatpush2.bf16.msra.mxu0 0
  %791 = vmatprep.mubr.bf16.mxu0 0
  %792 = vmatmul.mubr.bf16.gmra.mxu0 %v685
  %v793 = vpop.f32.mrf.mxu0
  %v794 = vadd.f32 0.0, %v793
  %v795 = vpop.f32.mrf.mxu0
  %v796 = vpop.f32.mrf.mxu0
  %v797 = vadd.f32 0.0, %v796
  %v798 = vpop.f32.mrf.mxu0
  %799 = vmatprep.mubr.bf16.mxu0 0
  %800 = vmatmul.mubr.bf16.gmra.mxu0 %v688
  %v801 = vpop.f32.mrf.mxu0
  %v802 = vadd.f32 0.0, %v801
  %v803 = vpop.f32.mrf.mxu0
  %v804 = vpop.f32.mrf.mxu0
  %v805 = vadd.f32 0.0, %v804
  %v806 = vpop.f32.mrf.mxu0
  %807 = vmatprep.mubr.bf16.mxu0 0
  %808 = vmatmul.mubr.bf16.gmra.mxu0 %v691
  %v809 = vpop.f32.mrf.mxu0
  %v810 = vadd.f32 0.0, %v809
  %v811 = vpop.f32.mrf.mxu0
  %v812 = vpop.f32.mrf.mxu0
  %v813 = vadd.f32 0.0, %v812
  %v814 = vpop.f32.mrf.mxu0
  %815 = vmatprep.mubr.bf16.mxu0 0
  %816 = vmatmul.mubr.bf16.gmra.mxu0 %v694
  %v817 = vpop.f32.mrf.mxu0
  %v818 = vadd.f32 0.0, %v817
  %v819 = vpop.f32.mrf.mxu0
  %v820 = vpop.f32.mrf.mxu0
  %v821 = vadd.f32 0.0, %v820
  %v822 = vpop.f32.mrf.mxu0
  %823 = vmatprep.mubr.bf16.mxu0 0
  %824 = vmatmul.mubr.bf16.gmra.mxu0 %v697
  %v825 = vpop.f32.mrf.mxu0
  %v826 = vadd.f32 0.0, %v825
  %v827 = vpop.f32.mrf.mxu0
  %v828 = vpop.f32.mrf.mxu0
  %v829 = vadd.f32 0.0, %v828
  %v830 = vpop.f32.mrf.mxu0
  %831 = vmatprep.mubr.bf16.mxu0 0
  %832 = vmatmul.mubr.bf16.gmra.mxu0 %v700
  %v833 = vpop.f32.mrf.mxu0
  %v834 = vadd.f32 0.0, %v833
  %v835 = vpop.f32.mrf.mxu0
  %v836 = vpop.f32.mrf.mxu0
  %v837 = vadd.f32 0.0, %v836
  %v838 = vpop.f32.mrf.mxu0
  %839 = vmatprep.mubr.bf16.mxu0 0
  %840 = vmatmul.mubr.bf16.gmra.mxu0 %v703
  %v841 = vpop.f32.mrf.mxu0
  %v842 = vadd.f32 0.0, %v841
  %v843 = vpop.f32.mrf.mxu0
  %v844 = vpop.f32.mrf.mxu0
  %v845 = vadd.f32 0.0, %v844
  %v846 = vpop.f32.mrf.mxu0
  %847 = vmatprep.mubr.bf16.mxu0 0
  %848 = vmatmul.mubr.bf16.gmra.mxu0 %v706
  %v849 = vpop.f32.mrf.mxu0
  %v850 = vadd.f32 0.0, %v849
  %v851 = vpop.f32.mrf.mxu0
  %v852 = vpop.f32.mrf.mxu0
  %v853 = vadd.f32 0.0, %v852
  %v854 = vpop.f32.mrf.mxu0
  %855 = vmatprep.mubr.bf16.mxu0 0
  %856 = vmatmul.mubr.bf16.gmra.mxu0 %v709
  %v857 = vpop.f32.mrf.mxu0
  %v858 = vadd.f32 0.0, %v857
  %v859 = vpop.f32.mrf.mxu0
  %v860 = vpop.f32.mrf.mxu0
  %v861 = vadd.f32 0.0, %v860
  %v862 = vpop.f32.mrf.mxu0
  %863 = vmatprep.mubr.bf16.mxu0 0
  %864 = vmatmul.mubr.bf16.gmra.mxu0 %v712
  %v865 = vpop.f32.mrf.mxu0
  %v866 = vadd.f32 0.0, %v865
  %v867 = vpop.f32.mrf.mxu0
  %v868 = vpop.f32.mrf.mxu0
  %v869 = vadd.f32 0.0, %v868
  %v870 = vpop.f32.mrf.mxu0
  %871 = vmatprep.mubr.bf16.mxu0 0
  %872 = vmatmul.mubr.bf16.gmra.mxu0 %v715
  %v873 = vpop.f32.mrf.mxu0
  %v874 = vadd.f32 0.0, %v873
  %v875 = vpop.f32.mrf.mxu0
  %v876 = vpop.f32.mrf.mxu0
  %v877 = vadd.f32 0.0, %v876
  %v878 = vpop.f32.mrf.mxu0
  %879 = vmatprep.mubr.bf16.mxu0 0
  %880 = vmatmul.mubr.bf16.gmra.mxu0 %v718
  %v881 = vpop.f32.mrf.mxu0
  %v882 = vadd.f32 0.0, %v881
  %v883 = vpop.f32.mrf.mxu0
  %v884 = vpop.f32.mrf.mxu0
  %v885 = vadd.f32 0.0, %v884
  %v886 = vpop.f32.mrf.mxu0
  %887 = vmatprep.mubr.bf16.mxu0 0
  %888 = vmatmul.mubr.bf16.gmra.mxu0 %v721
  %v889 = vpop.f32.mrf.mxu0
  %v890 = vadd.f32 0.0, %v889
  %v891 = vpop.f32.mrf.mxu0
  %v892 = vpop.f32.mrf.mxu0
  %v893 = vadd.f32 0.0, %v892
  %v894 = vpop.f32.mrf.mxu0
  %895 = vmatprep.mubr.bf16.mxu0 0
  %896 = vmatmul.mubr.bf16.gmra.mxu0 %v724
  %v897 = vpop.f32.mrf.mxu0
  %v898 = vadd.f32 0.0, %v897
  %v899 = vpop.f32.mrf.mxu0
  %v900 = vpop.f32.mrf.mxu0
  %v901 = vadd.f32 0.0, %v900
  %v902 = vpop.f32.mrf.mxu0
  %903 = vmatprep.mubr.bf16.mxu0 0
  %904 = vmatmul.mubr.bf16.gmra.mxu0 %v727
  %v905 = vpop.f32.mrf.mxu0
  %v906 = vadd.f32 0.0, %v905
  %v907 = vpop.f32.mrf.mxu0
  %v908 = vpop.f32.mrf.mxu0
  %v909 = vadd.f32 0.0, %v908
  %v910 = vpop.f32.mrf.mxu0
  %911 = vmatprep.mubr.bf16.mxu0 0
  %912 = vmatmul.mubr.bf16.gmra.mxu0 %v730
  %v913 = vpop.f32.mrf.mxu0
  %v914 = vadd.f32 0.0, %v913
  %v915 = vpop.f32.mrf.mxu0
  %v916 = vpop.f32.mrf.mxu0
  %v917 = vadd.f32 0.0, %v916
  %v918 = vpop.f32.mrf.mxu0
  %919 = vmatprep.mubr.bf16.mxu0 0
  %920 = vmatmul.mubr.bf16.gmra.mxu0 %v733
  %v921 = vpop.f32.mrf.mxu0
  %v922 = vadd.f32 0.0, %v921
  %v923 = vpop.f32.mrf.mxu0
  %v924 = vpop.f32.mrf.mxu0
  %v925 = vadd.f32 0.0, %v924
  %v926 = vpop.f32.mrf.mxu0
  %927 = vmatprep.mubr.bf16.mxu0 0
  %928 = vmatmul.mubr.bf16.gmra.mxu0 %v736
  %v929 = vpop.f32.mrf.mxu0
  %v930 = vadd.f32 0.0, %v929
  %v931 = vpop.f32.mrf.mxu0
  %v932 = vpop.f32.mrf.mxu0
  %v933 = vadd.f32 0.0, %v932
  %v934 = vpop.f32.mrf.mxu0
  %935 = vmatprep.mubr.bf16.mxu0 0
  %936 = vmatmul.mubr.bf16.gmra.mxu0 %v739
  %v937 = vpop.f32.mrf.mxu0
  %v938 = vadd.f32 0.0, %v937
  %v939 = vpop.f32.mrf.mxu0
  %v940 = vpop.f32.mrf.mxu0
  %v941 = vadd.f32 0.0, %v940
  %v942 = vpop.f32.mrf.mxu0
  %943 = vmatprep.mubr.bf16.mxu0 0
  %944 = vmatmul.mubr.bf16.gmra.mxu0 %v742
  %v945 = vpop.f32.mrf.mxu0
  %v946 = vadd.f32 0.0, %v945
  %v947 = vpop.f32.mrf.mxu0
  %v948 = vpop.f32.mrf.mxu0
  %v949 = vadd.f32 0.0, %v948
  %v950 = vpop.f32.mrf.mxu0
  %951 = vmatprep.mubr.bf16.mxu0 0
  %952 = vmatmul.mubr.bf16.gmra.mxu0 %v745
  %v953 = vpop.f32.mrf.mxu0
  %v954 = vadd.f32 0.0, %v953
  %v955 = vpop.f32.mrf.mxu0
  %v956 = vpop.f32.mrf.mxu0
  %v957 = vadd.f32 0.0, %v956
  %v958 = vpop.f32.mrf.mxu0
  %959 = vmatprep.mubr.bf16.mxu0 0
  %960 = vmatmul.mubr.bf16.gmra.mxu0 %v748
  %v961 = vpop.f32.mrf.mxu0
  %v962 = vadd.f32 0.0, %v961
  %v963 = vpop.f32.mrf.mxu0
  %v964 = vpop.f32.mrf.mxu0
  %v965 = vadd.f32 0.0, %v964
  %v966 = vpop.f32.mrf.mxu0
  %967 = vmatprep.mubr.bf16.mxu0 0
  %968 = vmatmul.mubr.bf16.gmra.mxu0 %v751
  %v969 = vpop.f32.mrf.mxu0
  %v970 = vadd.f32 0.0, %v969
  %v971 = vpop.f32.mrf.mxu0
  %v972 = vpop.f32.mrf.mxu0
  %v973 = vadd.f32 0.0, %v972
  %v974 = vpop.f32.mrf.mxu0
  %975 = vmatprep.mubr.bf16.mxu0 0
  %976 = vmatmul.mubr.bf16.gmra.mxu0 %v754
  %v977 = vpop.f32.mrf.mxu0
  %v978 = vadd.f32 0.0, %v977
  %v979 = vpop.f32.mrf.mxu0
  %v980 = vpop.f32.mrf.mxu0
  %v981 = vadd.f32 0.0, %v980
  %v982 = vpop.f32.mrf.mxu0
  %983 = vmatprep.mubr.bf16.mxu0 0
  %984 = vmatmul.mubr.bf16.gmra.mxu0 %v757
  %v985 = vpop.f32.mrf.mxu0
  %v986 = vadd.f32 0.0, %v985
  %v987 = vpop.f32.mrf.mxu0
  %v988 = vpop.f32.mrf.mxu0
  %v989 = vpop.f32.mrf.mxu0
  %990 = vdwg.mxu0
  %v991 = vmax.f32 %v314, %v794
  %v992 = vmax.f32 %v317, %v797
  %v993 = vmax.f32 %v322, %v802
  %v994 = vmax.f32 %v325, %v805
  %v995 = vmax.f32 %v330, %v810
  %v996 = vmax.f32 %v333, %v813
  %v997 = vmax.f32 %v338, %v818
  %v998 = vmax.f32 %v341, %v821
  %v999 = vmax.f32 %v346, %v826
  %v1000 = vmax.f32 %v349, %v829
  %v1001 = vmax.f32 %v354, %v834
  %v1002 = vmax.f32 %v357, %v837
  %v1003 = vmax.f32 %v362, %v842
  %v1004 = vmax.f32 %v365, %v845
  %v1005 = vmax.f32 %v370, %v850
  %v1006 = vmax.f32 %v373, %v853
  %v1007 = vmax.f32 %v378, %v858
  %v1008 = vmax.f32 %v381, %v861
  %v1009 = vmax.f32 %v386, %v866
  %v1010 = vmax.f32 %v389, %v869
  %v1011 = vmax.f32 %v394, %v874
  %v1012 = vmax.f32 %v397, %v877
  %v1013 = vmax.f32 %v402, %v882
  %v1014 = vmax.f32 %v405, %v885
  %v1015 = vmax.f32 %v410, %v890
  %v1016 = vmax.f32 %v413, %v893
  %v1017 = vmax.f32 %v418, %v898
  %v1018 = vmax.f32 %v421, %v901
  %v1019 = vmax.f32 %v426, %v906
  %v1020 = vmax.f32 %v429, %v909
  %v1021 = vmax.f32 %v434, %v914
  %v1022 = vmax.f32 %v437, %v917
  %v1023 = vmax.f32 %v442, %v922
  %v1024 = vmax.f32 %v445, %v925
  %v1025 = vmax.f32 %v450, %v930
  %v1026 = vmax.f32 %v453, %v933
  %v1027 = vmax.f32 %v458, %v938
  %v1028 = vmax.f32 %v461, %v941
  %v1029 = vmax.f32 %v466, %v946
  %v1030 = vmax.f32 %v469, %v949
  %v1031 = vmax.f32 %v474, %v954
  %v1032 = vmax.f32 %v477, %v957
  %v1033 = vmax.f32 %v482, %v962
  %v1034 = vmax.f32 %v485, %v965
  %v1035 = vmax.f32 %v490, %v970
  %v1036 = vmax.f32 %v493, %v973
  %v1037 = vmax.f32 %v498, %v978
  %v1038 = vmax.f32 %v501, %v981
  %v1039 = vmax.f32 %v506, %v986
  %s1040 = scalar_lea.vmem %s0, 392
  %v1041 = vld [vmem:[%s1040] sm:$0xf]
  %v1042 = vld [vmem:[%s1040 + $0x4] sm:$0xf]
  %v1043 = vld [vmem:[%s1040 + $0x8] sm:$0xf]
  %v1044 = vld [vmem:[%s1040 + $0xc] sm:$0xf]
  %v1045 = vld [vmem:[%s1040 + $0x10] sm:$0xf]
  %v1046 = vld [vmem:[%s1040 + $0x14] sm:$0xf]
  %v1047 = vld [vmem:[%s1040 + $0x18] sm:$0xf]
  %v1048 = vld [vmem:[%s1040 + $0x1c] sm:$0xf]
  %v1049 = vld [vmem:[%s1040 + $0x20] sm:$0xf]
  %v1050 = vld [vmem:[%s1040 + $0x24] sm:$0xf]
  %v1051 = vld [vmem:[%s1040 + $0x28] sm:$0xf]
  %v1052 = vld [vmem:[%s1040 + $0x2c] sm:$0xf]
  %v1053 = vld [vmem:[%s1040 + $0x30] sm:$0xf]
  %v1054 = vld [vmem:[%s1040 + $0x34] sm:$0xf]
  %v1055 = vld [vmem:[%s1040 + $0x38] sm:$0xf]
  %v1056 = vld [vmem:[%s1040 + $0x3c] sm:$0xf]
  %v1057 = vld [vmem:[%s1040 + $0x40] sm:$0xf]
  %v1058 = vld [vmem:[%s1040 + $0x44] sm:$0xf]
  %v1059 = vld [vmem:[%s1040 + $0x48] sm:$0xf]
  %v1060 = vld [vmem:[%s1040 + $0x4c] sm:$0xf]
  %v1061 = vld [vmem:[%s1040 + $0x50] sm:$0xf]
  %v1062 = vld [vmem:[%s1040 + $0x54] sm:$0xf]
  %v1063 = vld [vmem:[%s1040 + $0x58] sm:$0xf]
  %v1064 = vld [vmem:[%s1040 + $0x5c] sm:$0xf]
  %v1065 = vld [vmem:[%s1040 + $0x60] sm:$0xf]
  %v1066 = vld [vmem:[%s1040 + $0x64] sm:$0xf]
  %v1067 = vld [vmem:[%s1040 + $0x68] sm:$0xf]
  %v1068 = vld [vmem:[%s1040 + $0x6c] sm:$0xf]
  %v1069 = vld [vmem:[%s1040 + $0x70] sm:$0xf]
  %v1070 = vld [vmem:[%s1040 + $0x74] sm:$0xf]
  %v1071 = vld [vmem:[%s1040 + $0x78] sm:$0xf]
  %v1072 = vld [vmem:[%s1040 + $0x7c] sm:$0xf]
  %v1073 = vld [vmem:[%s1040 + $0x80] sm:$0xf]
  %v1074 = vld [vmem:[%s1040 + $0x84] sm:$0xf]
  %v1075 = vld [vmem:[%s1040 + $0x88] sm:$0xf]
  %v1076 = vld [vmem:[%s1040 + $0x8c] sm:$0xf]
  %v1077 = vld [vmem:[%s1040 + $0x90] sm:$0xf]
  %v1078 = vld [vmem:[%s1040 + $0x94] sm:$0xf]
  %v1079 = vld [vmem:[%s1040 + $0x98] sm:$0xf]
  %v1080 = vld [vmem:[%s1040 + $0x9c] sm:$0xf]
  %v1081 = vld [vmem:[%s1040 + $0xa0] sm:$0xf]
  %v1082 = vld [vmem:[%s1040 + $0xa4] sm:$0xf]
  %v1083 = vld [vmem:[%s1040 + $0xa8] sm:$0xf]
  %v1084 = vld [vmem:[%s1040 + $0xac] sm:$0xf]
  %v1085 = vld [vmem:[%s1040 + $0xb0] sm:$0xf]
  %v1086 = vld [vmem:[%s1040 + $0xb4] sm:$0xf]
  %v1087 = vld [vmem:[%s1040 + $0xb8] sm:$0xf]
  %v1088 = vld [vmem:[%s1040 + $0xbc] sm:$0xf]
  %v1089 = vld [vmem:[%s1040 + $0xc0] sm:$0xf]
  %v1139 = vunpack.c.l.b16 %v1041
  %v1140 = vunpack.c.l.b16 %v1042
  %v1141 = vunpack.c.l.b16 %v1043
  %v1142 = vunpack.c.l.b16 %v1044
  %v1143 = vunpack.c.l.b16 %v1045
  %v1144 = vunpack.c.l.b16 %v1046
  %v1145 = vunpack.c.l.b16 %v1047
  %v1146 = vunpack.c.l.b16 %v1048
  %v1147 = vunpack.c.l.b16 %v1049
  %v1148 = vunpack.c.l.b16 %v1050
  %v1149 = vunpack.c.l.b16 %v1051
  %v1150 = vunpack.c.l.b16 %v1052
  %v1151 = vunpack.c.l.b16 %v1053
  %v1152 = vunpack.c.l.b16 %v1054
  %v1153 = vunpack.c.l.b16 %v1055
  %v1154 = vunpack.c.l.b16 %v1056
  %v1155 = vunpack.c.l.b16 %v1057
  %v1156 = vunpack.c.l.b16 %v1058
  %v1157 = vunpack.c.l.b16 %v1059
  %v1158 = vunpack.c.l.b16 %v1060
  %v1159 = vunpack.c.l.b16 %v1061
  %v1160 = vunpack.c.l.b16 %v1062
  %v1161 = vunpack.c.l.b16 %v1063
  %v1162 = vunpack.c.l.b16 %v1064
  %v1163 = vunpack.c.l.b16 %v1065
  %v1164 = vunpack.c.l.b16 %v1066
  %v1165 = vunpack.c.l.b16 %v1067
  %v1166 = vunpack.c.l.b16 %v1068
  %v1167 = vunpack.c.l.b16 %v1069
  %v1168 = vunpack.c.l.b16 %v1070
  %v1169 = vunpack.c.l.b16 %v1071
  %v1170 = vunpack.c.l.b16 %v1072
  %v1171 = vunpack.c.l.b16 %v1073
  %v1172 = vunpack.c.l.b16 %v1074
  %v1173 = vunpack.c.l.b16 %v1075
  %v1174 = vunpack.c.l.b16 %v1076
  %v1175 = vunpack.c.l.b16 %v1077
  %v1176 = vunpack.c.l.b16 %v1078
  %v1177 = vunpack.c.l.b16 %v1079
  %v1178 = vunpack.c.l.b16 %v1080
  %v1179 = vunpack.c.l.b16 %v1081
  %v1180 = vunpack.c.l.b16 %v1082
  %v1181 = vunpack.c.l.b16 %v1083
  %v1182 = vunpack.c.l.b16 %v1084
  %v1183 = vunpack.c.l.b16 %v1085
  %v1184 = vunpack.c.l.b16 %v1086
  %v1185 = vunpack.c.l.b16 %v1087
  %v1186 = vunpack.c.l.b16 %v1088
  %v1187 = vunpack.c.l.b16 %v1089
  %v1188 = vpack.c.b16 %v1140, %v1139
  %v1189 = vpack.c.b16 %v1142, %v1141
  %v1190 = vpack.c.b16 %v1144, %v1143
  %v1191 = vpack.c.b16 %v1146, %v1145
  %v1192 = vpack.c.b16 %v1148, %v1147
  %v1193 = vpack.c.b16 %v1150, %v1149
  %v1194 = vpack.c.b16 %v1152, %v1151
  %v1195 = vpack.c.b16 %v1154, %v1153
  %v1196 = vpack.c.b16 %v1156, %v1155
  %v1197 = vpack.c.b16 %v1158, %v1157
  %v1198 = vpack.c.b16 %v1160, %v1159
  %v1199 = vpack.c.b16 %v1162, %v1161
  %v1200 = vpack.c.b16 %v1164, %v1163
  %v1201 = vpack.c.b16 %v1166, %v1165
  %v1202 = vpack.c.b16 %v1168, %v1167
  %v1203 = vpack.c.b16 %v1170, %v1169
  %v1204 = vpack.c.b16 %v1172, %v1171
  %v1205 = vpack.c.b16 %v1174, %v1173
  %v1206 = vpack.c.b16 %v1176, %v1175
  %v1207 = vpack.c.b16 %v1178, %v1177
  %v1208 = vpack.c.b16 %v1180, %v1179
  %v1209 = vpack.c.b16 %v1182, %v1181
  %v1210 = vpack.c.b16 %v1184, %v1183
  %v1211 = vpack.c.b16 %v1186, %v1185
  %v1212 = vpack.c.b16 %v1187, %v1187
  %v1214 = vsel %vm203, %v1188, 0
  %v1217 = vsel %vm203, %v1189, 0
  %v1220 = vsel %vm203, %v1190, 0
  %v1223 = vsel %vm203, %v1191, 0
  %v1226 = vsel %vm203, %v1192, 0
  %v1229 = vsel %vm203, %v1193, 0
  %v1232 = vsel %vm203, %v1194, 0
  %v1235 = vsel %vm203, %v1195, 0
  %v1238 = vsel %vm203, %v1196, 0
  %v1241 = vsel %vm203, %v1197, 0
  %v1244 = vsel %vm203, %v1198, 0
  %v1247 = vsel %vm203, %v1199, 0
  %v1250 = vsel %vm203, %v1200, 0
  %v1253 = vsel %vm203, %v1201, 0
  %v1256 = vsel %vm203, %v1202, 0
  %v1259 = vsel %vm203, %v1203, 0
  %v1262 = vsel %vm203, %v1204, 0
  %v1265 = vsel %vm203, %v1205, 0
  %v1268 = vsel %vm203, %v1206, 0
  %v1271 = vsel %vm203, %v1207, 0
  %v1274 = vsel %vm203, %v1208, 0
  %v1277 = vsel %vm203, %v1209, 0
  %v1280 = vsel %vm203, %v1210, 0
  %v1283 = vsel %vm203, %v1211, 0
  %v1286 = vsel %vm203, %v1212, 0
  %1288 = vmatprep.subr.bf16.mxu0 0
  %1289 = vmatpush1.bf16.msra.mxu0 0
  %1290 = vmatprep.subr.bf16.mxu0 0
  %1291 = vmatpush1.bf16.msra.mxu0 0
  %1292 = vmatprep.subr.bf16.mxu0 0
  %1293 = vmatpush1.bf16.msra.mxu0 0
  %1294 = vmatprep.subr.bf16.mxu0 0
  %1295 = vmatpush1.bf16.msra.mxu0 0
  %1296 = vmatprep.subr.bf16.mxu0 0
  %1297 = vmatpush1.bf16.msra.mxu0 0
  %1298 = vmatprep.subr.bf16.mxu0 0
  %1299 = vmatpush1.bf16.msra.mxu0 0
  %1300 = vmatprep.subr.bf16.mxu0 0
  %1301 = vmatpush1.bf16.msra.mxu0 %v200
  %1302 = vmatprep.subr.bf16.mxu0 0
  %1303 = vmatpush1.bf16.msra.mxu0 %v199
  %1304 = vmatprep.subr.bf16.mxu0 0
  %1305 = vmatpush2.bf16.msra.mxu0 0
  %1306 = vmatprep.subr.bf16.mxu0 0
  %1307 = vmatpush2.bf16.msra.mxu0 0
  %1308 = vmatprep.subr.bf16.mxu0 0
  %1309 = vmatpush2.bf16.msra.mxu0 0
  %1310 = vmatprep.subr.bf16.mxu0 0
  %1311 = vmatpush2.bf16.msra.mxu0 0
  %1312 = vmatprep.subr.bf16.mxu0 0
  %1313 = vmatpush2.bf16.msra.mxu0 0
  %1314 = vmatprep.subr.bf16.mxu0 0
  %1315 = vmatpush2.bf16.msra.mxu0 0
  %1316 = vmatprep.subr.bf16.mxu0 0
  %1317 = vmatpush2.bf16.msra.mxu0 0
  %1318 = vmatprep.subr.bf16.mxu0 0
  %1319 = vmatpush2.bf16.msra.mxu0 0
  %1320 = vmatprep.mubr.bf16.mxu0 0
  %1321 = vmatmul.mubr.bf16.gmra.mxu0 %v1214
  %v1322 = vpop.f32.mrf.mxu0
  %v1323 = vadd.f32 0.0, %v1322
  %v1324 = vpop.f32.mrf.mxu0
  %v1325 = vpop.f32.mrf.mxu0
  %v1326 = vadd.f32 0.0, %v1325
  %v1327 = vpop.f32.mrf.mxu0
  %1328 = vmatprep.mubr.bf16.mxu0 0
  %1329 = vmatmul.mubr.bf16.gmra.mxu0 %v1217
  %v1330 = vpop.f32.mrf.mxu0
  %v1331 = vadd.f32 0.0, %v1330
  %v1332 = vpop.f32.mrf.mxu0
  %v1333 = vpop.f32.mrf.mxu0
  %v1334 = vadd.f32 0.0, %v1333
  %v1335 = vpop.f32.mrf.mxu0
  %1336 = vmatprep.mubr.bf16.mxu0 0
  %1337 = vmatmul.mubr.bf16.gmra.mxu0 %v1220
  %v1338 = vpop.f32.mrf.mxu0
  %v1339 = vadd.f32 0.0, %v1338
  %v1340 = vpop.f32.mrf.mxu0
  %v1341 = vpop.f32.mrf.mxu0
  %v1342 = vadd.f32 0.0, %v1341
  %v1343 = vpop.f32.mrf.mxu0
  %1344 = vmatprep.mubr.bf16.mxu0 0
  %1345 = vmatmul.mubr.bf16.gmra.mxu0 %v1223
  %v1346 = vpop.f32.mrf.mxu0
  %v1347 = vadd.f32 0.0, %v1346
  %v1348 = vpop.f32.mrf.mxu0
  %v1349 = vpop.f32.mrf.mxu0
  %v1350 = vadd.f32 0.0, %v1349
  %v1351 = vpop.f32.mrf.mxu0
  %1352 = vmatprep.mubr.bf16.mxu0 0
  %1353 = vmatmul.mubr.bf16.gmra.mxu0 %v1226
  %v1354 = vpop.f32.mrf.mxu0
  %v1355 = vadd.f32 0.0, %v1354
  %v1356 = vpop.f32.mrf.mxu0
  %v1357 = vpop.f32.mrf.mxu0
  %v1358 = vadd.f32 0.0, %v1357
  %v1359 = vpop.f32.mrf.mxu0
  %1360 = vmatprep.mubr.bf16.mxu0 0
  %1361 = vmatmul.mubr.bf16.gmra.mxu0 %v1229
  %v1362 = vpop.f32.mrf.mxu0
  %v1363 = vadd.f32 0.0, %v1362
  %v1364 = vpop.f32.mrf.mxu0
  %v1365 = vpop.f32.mrf.mxu0
  %v1366 = vadd.f32 0.0, %v1365
  %v1367 = vpop.f32.mrf.mxu0
  %1368 = vmatprep.mubr.bf16.mxu0 0
  %1369 = vmatmul.mubr.bf16.gmra.mxu0 %v1232
  %v1370 = vpop.f32.mrf.mxu0
  %v1371 = vadd.f32 0.0, %v1370
  %v1372 = vpop.f32.mrf.mxu0
  %v1373 = vpop.f32.mrf.mxu0
  %v1374 = vadd.f32 0.0, %v1373
  %v1375 = vpop.f32.mrf.mxu0
  %1376 = vmatprep.mubr.bf16.mxu0 0
  %1377 = vmatmul.mubr.bf16.gmra.mxu0 %v1235
  %v1378 = vpop.f32.mrf.mxu0
  %v1379 = vadd.f32 0.0, %v1378
  %v1380 = vpop.f32.mrf.mxu0
  %v1381 = vpop.f32.mrf.mxu0
  %v1382 = vadd.f32 0.0, %v1381
  %v1383 = vpop.f32.mrf.mxu0
  %1384 = vmatprep.mubr.bf16.mxu0 0
  %1385 = vmatmul.mubr.bf16.gmra.mxu0 %v1238
  %v1386 = vpop.f32.mrf.mxu0
  %v1387 = vadd.f32 0.0, %v1386
  %v1388 = vpop.f32.mrf.mxu0
  %v1389 = vpop.f32.mrf.mxu0
  %v1390 = vadd.f32 0.0, %v1389
  %v1391 = vpop.f32.mrf.mxu0
  %1392 = vmatprep.mubr.bf16.mxu0 0
  %1393 = vmatmul.mubr.bf16.gmra.mxu0 %v1241
  %v1394 = vpop.f32.mrf.mxu0
  %v1395 = vadd.f32 0.0, %v1394
  %v1396 = vpop.f32.mrf.mxu0
  %v1397 = vpop.f32.mrf.mxu0
  %v1398 = vadd.f32 0.0, %v1397
  %v1399 = vpop.f32.mrf.mxu0
  %1400 = vmatprep.mubr.bf16.mxu0 0
  %1401 = vmatmul.mubr.bf16.gmra.mxu0 %v1244
  %v1402 = vpop.f32.mrf.mxu0
  %v1403 = vadd.f32 0.0, %v1402
  %v1404 = vpop.f32.mrf.mxu0
  %v1405 = vpop.f32.mrf.mxu0
  %v1406 = vadd.f32 0.0, %v1405
  %v1407 = vpop.f32.mrf.mxu0
  %1408 = vmatprep.mubr.bf16.mxu0 0
  %1409 = vmatmul.mubr.bf16.gmra.mxu0 %v1247
  %v1410 = vpop.f32.mrf.mxu0
  %v1411 = vadd.f32 0.0, %v1410
  %v1412 = vpop.f32.mrf.mxu0
  %v1413 = vpop.f32.mrf.mxu0
  %v1414 = vadd.f32 0.0, %v1413
  %v1415 = vpop.f32.mrf.mxu0
  %1416 = vmatprep.mubr.bf16.mxu0 0
  %1417 = vmatmul.mubr.bf16.gmra.mxu0 %v1250
  %v1418 = vpop.f32.mrf.mxu0
  %v1419 = vadd.f32 0.0, %v1418
  %v1420 = vpop.f32.mrf.mxu0
  %v1421 = vpop.f32.mrf.mxu0
  %v1422 = vadd.f32 0.0, %v1421
  %v1423 = vpop.f32.mrf.mxu0
  %1424 = vmatprep.mubr.bf16.mxu0 0
  %1425 = vmatmul.mubr.bf16.gmra.mxu0 %v1253
  %v1426 = vpop.f32.mrf.mxu0
  %v1427 = vadd.f32 0.0, %v1426
  %v1428 = vpop.f32.mrf.mxu0
  %v1429 = vpop.f32.mrf.mxu0
  %v1430 = vadd.f32 0.0, %v1429
  %v1431 = vpop.f32.mrf.mxu0
  %1432 = vmatprep.mubr.bf16.mxu0 0
  %1433 = vmatmul.mubr.bf16.gmra.mxu0 %v1256
  %v1434 = vpop.f32.mrf.mxu0
  %v1435 = vadd.f32 0.0, %v1434
  %v1436 = vpop.f32.mrf.mxu0
  %v1437 = vpop.f32.mrf.mxu0
  %v1438 = vadd.f32 0.0, %v1437
  %v1439 = vpop.f32.mrf.mxu0
  %1440 = vmatprep.mubr.bf16.mxu0 0
  %1441 = vmatmul.mubr.bf16.gmra.mxu0 %v1259
  %v1442 = vpop.f32.mrf.mxu0
  %v1443 = vadd.f32 0.0, %v1442
  %v1444 = vpop.f32.mrf.mxu0
  %v1445 = vpop.f32.mrf.mxu0
  %v1446 = vadd.f32 0.0, %v1445
  %v1447 = vpop.f32.mrf.mxu0
  %1448 = vmatprep.mubr.bf16.mxu0 0
  %1449 = vmatmul.mubr.bf16.gmra.mxu0 %v1262
  %v1450 = vpop.f32.mrf.mxu0
  %v1451 = vadd.f32 0.0, %v1450
  %v1452 = vpop.f32.mrf.mxu0
  %v1453 = vpop.f32.mrf.mxu0
  %v1454 = vadd.f32 0.0, %v1453
  %v1455 = vpop.f32.mrf.mxu0
  %1456 = vmatprep.mubr.bf16.mxu0 0
  %1457 = vmatmul.mubr.bf16.gmra.mxu0 %v1265
  %v1458 = vpop.f32.mrf.mxu0
  %v1459 = vadd.f32 0.0, %v1458
  %v1460 = vpop.f32.mrf.mxu0
  %v1461 = vpop.f32.mrf.mxu0
  %v1462 = vadd.f32 0.0, %v1461
  %v1463 = vpop.f32.mrf.mxu0
  %1464 = vmatprep.mubr.bf16.mxu0 0
  %1465 = vmatmul.mubr.bf16.gmra.mxu0 %v1268
  %v1466 = vpop.f32.mrf.mxu0
  %v1467 = vadd.f32 0.0, %v1466
  %v1468 = vpop.f32.mrf.mxu0
  %v1469 = vpop.f32.mrf.mxu0
  %v1470 = vadd.f32 0.0, %v1469
  %v1471 = vpop.f32.mrf.mxu0
  %1472 = vmatprep.mubr.bf16.mxu0 0
  %1473 = vmatmul.mubr.bf16.gmra.mxu0 %v1271
  %v1474 = vpop.f32.mrf.mxu0
  %v1475 = vadd.f32 0.0, %v1474
  %v1476 = vpop.f32.mrf.mxu0
  %v1477 = vpop.f32.mrf.mxu0
  %v1478 = vadd.f32 0.0, %v1477
  %v1479 = vpop.f32.mrf.mxu0
  %1480 = vmatprep.mubr.bf16.mxu0 0
  %1481 = vmatmul.mubr.bf16.gmra.mxu0 %v1274
  %v1482 = vpop.f32.mrf.mxu0
  %v1483 = vadd.f32 0.0, %v1482
  %v1484 = vpop.f32.mrf.mxu0
  %v1485 = vpop.f32.mrf.mxu0
  %v1486 = vadd.f32 0.0, %v1485
  %v1487 = vpop.f32.mrf.mxu0
  %1488 = vmatprep.mubr.bf16.mxu0 0
  %1489 = vmatmul.mubr.bf16.gmra.mxu0 %v1277
  %v1490 = vpop.f32.mrf.mxu0
  %v1491 = vadd.f32 0.0, %v1490
  %v1492 = vpop.f32.mrf.mxu0
  %v1493 = vpop.f32.mrf.mxu0
  %v1494 = vadd.f32 0.0, %v1493
  %v1495 = vpop.f32.mrf.mxu0
  %1496 = vmatprep.mubr.bf16.mxu0 0
  %1497 = vmatmul.mubr.bf16.gmra.mxu0 %v1280
  %v1498 = vpop.f32.mrf.mxu0
  %v1499 = vadd.f32 0.0, %v1498
  %v1500 = vpop.f32.mrf.mxu0
  %v1501 = vpop.f32.mrf.mxu0
  %v1502 = vadd.f32 0.0, %v1501
  %v1503 = vpop.f32.mrf.mxu0
  %1504 = vmatprep.mubr.bf16.mxu0 0
  %1505 = vmatmul.mubr.bf16.gmra.mxu0 %v1283
  %v1506 = vpop.f32.mrf.mxu0
  %v1507 = vadd.f32 0.0, %v1506
  %v1508 = vpop.f32.mrf.mxu0
  %v1509 = vpop.f32.mrf.mxu0
  %v1510 = vadd.f32 0.0, %v1509
  %v1511 = vpop.f32.mrf.mxu0
  %1512 = vmatprep.mubr.bf16.mxu0 0
  %1513 = vmatmul.mubr.bf16.gmra.mxu0 %v1286
  %v1514 = vpop.f32.mrf.mxu0
  %v1515 = vadd.f32 0.0, %v1514
  %v1516 = vpop.f32.mrf.mxu0
  %v1517 = vpop.f32.mrf.mxu0
  %v1518 = vpop.f32.mrf.mxu0
  %1519 = vdwg.mxu0
  %v1520 = vmax.f32 %v991, %v1323
  %v1521 = vmax.f32 %v992, %v1326
  %v1522 = vmax.f32 %v993, %v1331
  %v1523 = vmax.f32 %v994, %v1334
  %v1524 = vmax.f32 %v995, %v1339
  %v1525 = vmax.f32 %v996, %v1342
  %v1526 = vmax.f32 %v997, %v1347
  %v1527 = vmax.f32 %v998, %v1350
  %v1528 = vmax.f32 %v999, %v1355
  %v1529 = vmax.f32 %v1000, %v1358
  %v1530 = vmax.f32 %v1001, %v1363
  %v1531 = vmax.f32 %v1002, %v1366
  %v1532 = vmax.f32 %v1003, %v1371
  %v1533 = vmax.f32 %v1004, %v1374
  %v1534 = vmax.f32 %v1005, %v1379
  %v1535 = vmax.f32 %v1006, %v1382
  %v1536 = vmax.f32 %v1007, %v1387
  %v1537 = vmax.f32 %v1008, %v1390
  %v1538 = vmax.f32 %v1009, %v1395
  %v1539 = vmax.f32 %v1010, %v1398
  %v1540 = vmax.f32 %v1011, %v1403
  %v1541 = vmax.f32 %v1012, %v1406
  %v1542 = vmax.f32 %v1013, %v1411
  %v1543 = vmax.f32 %v1014, %v1414
  %v1544 = vmax.f32 %v1015, %v1419
  %v1545 = vmax.f32 %v1016, %v1422
  %v1546 = vmax.f32 %v1017, %v1427
  %v1547 = vmax.f32 %v1018, %v1430
  %v1548 = vmax.f32 %v1019, %v1435
  %v1549 = vmax.f32 %v1020, %v1438
  %v1550 = vmax.f32 %v1021, %v1443
  %v1551 = vmax.f32 %v1022, %v1446
  %v1552 = vmax.f32 %v1023, %v1451
  %v1553 = vmax.f32 %v1024, %v1454
  %v1554 = vmax.f32 %v1025, %v1459
  %v1555 = vmax.f32 %v1026, %v1462
  %v1556 = vmax.f32 %v1027, %v1467
  %v1557 = vmax.f32 %v1028, %v1470
  %v1558 = vmax.f32 %v1029, %v1475
  %v1559 = vmax.f32 %v1030, %v1478
  %v1560 = vmax.f32 %v1031, %v1483
  %v1561 = vmax.f32 %v1032, %v1486
  %v1562 = vmax.f32 %v1033, %v1491
  %v1563 = vmax.f32 %v1034, %v1494
  %v1564 = vmax.f32 %v1035, %v1499
  %v1565 = vmax.f32 %v1036, %v1502
  %v1566 = vmax.f32 %v1037, %v1507
  %v1567 = vmax.f32 %v1038, %v1510
  %v1568 = vmax.f32 %v1039, %v1515
  %s1569 = scalar_lea.vmem %s0, 588
  %v1570 = vld [vmem:[%s1569] sm:$0xf]
  %v1571 = vld [vmem:[%s1569 + $0x4] sm:$0xf]
  %v1572 = vld [vmem:[%s1569 + $0x8] sm:$0xf]
  %v1573 = vld [vmem:[%s1569 + $0xc] sm:$0xf]
  %v1574 = vld [vmem:[%s1569 + $0x10] sm:$0xf]
  %v1575 = vld [vmem:[%s1569 + $0x14] sm:$0xf]
  %v1576 = vld [vmem:[%s1569 + $0x18] sm:$0xf]
  %v1577 = vld [vmem:[%s1569 + $0x1c] sm:$0xf]
  %v1578 = vld [vmem:[%s1569 + $0x20] sm:$0xf]
  %v1579 = vld [vmem:[%s1569 + $0x24] sm:$0xf]
  %v1580 = vld [vmem:[%s1569 + $0x28] sm:$0xf]
  %v1581 = vld [vmem:[%s1569 + $0x2c] sm:$0xf]
  %v1582 = vld [vmem:[%s1569 + $0x30] sm:$0xf]
  %v1583 = vld [vmem:[%s1569 + $0x34] sm:$0xf]
  %v1584 = vld [vmem:[%s1569 + $0x38] sm:$0xf]
  %v1585 = vld [vmem:[%s1569 + $0x3c] sm:$0xf]
  %v1586 = vld [vmem:[%s1569 + $0x40] sm:$0xf]
  %v1587 = vld [vmem:[%s1569 + $0x44] sm:$0xf]
  %v1588 = vld [vmem:[%s1569 + $0x48] sm:$0xf]
  %v1589 = vld [vmem:[%s1569 + $0x4c] sm:$0xf]
  %v1590 = vld [vmem:[%s1569 + $0x50] sm:$0xf]
  %v1591 = vld [vmem:[%s1569 + $0x54] sm:$0xf]
  %v1592 = vld [vmem:[%s1569 + $0x58] sm:$0xf]
  %v1593 = vld [vmem:[%s1569 + $0x5c] sm:$0xf]
  %v1594 = vld [vmem:[%s1569 + $0x60] sm:$0xf]
  %v1595 = vld [vmem:[%s1569 + $0x64] sm:$0xf]
  %v1596 = vld [vmem:[%s1569 + $0x68] sm:$0xf]
  %v1597 = vld [vmem:[%s1569 + $0x6c] sm:$0xf]
  %v1598 = vld [vmem:[%s1569 + $0x70] sm:$0xf]
  %v1599 = vld [vmem:[%s1569 + $0x74] sm:$0xf]
  %v1600 = vld [vmem:[%s1569 + $0x78] sm:$0xf]
  %v1601 = vld [vmem:[%s1569 + $0x7c] sm:$0xf]
  %v1602 = vld [vmem:[%s1569 + $0x80] sm:$0xf]
  %v1603 = vld [vmem:[%s1569 + $0x84] sm:$0xf]
  %v1604 = vld [vmem:[%s1569 + $0x88] sm:$0xf]
  %v1605 = vld [vmem:[%s1569 + $0x8c] sm:$0xf]
  %v1606 = vld [vmem:[%s1569 + $0x90] sm:$0xf]
  %v1607 = vld [vmem:[%s1569 + $0x94] sm:$0xf]
  %v1608 = vld [vmem:[%s1569 + $0x98] sm:$0xf]
  %v1609 = vld [vmem:[%s1569 + $0x9c] sm:$0xf]
  %v1610 = vld [vmem:[%s1569 + $0xa0] sm:$0xf]
  %v1611 = vld [vmem:[%s1569 + $0xa4] sm:$0xf]
  %v1612 = vld [vmem:[%s1569 + $0xa8] sm:$0xf]
  %v1613 = vld [vmem:[%s1569 + $0xac] sm:$0xf]
  %v1614 = vld [vmem:[%s1569 + $0xb0] sm:$0xf]
  %v1615 = vld [vmem:[%s1569 + $0xb4] sm:$0xf]
  %v1616 = vld [vmem:[%s1569 + $0xb8] sm:$0xf]
  %v1617 = vld [vmem:[%s1569 + $0xbc] sm:$0xf]
  %v1618 = vld [vmem:[%s1569 + $0xc0] sm:$0xf]
  %v1668 = vunpack.c.l.b16 %v1570
  %v1669 = vunpack.c.l.b16 %v1571
  %v1670 = vunpack.c.l.b16 %v1572
  %v1671 = vunpack.c.l.b16 %v1573
  %v1672 = vunpack.c.l.b16 %v1574
  %v1673 = vunpack.c.l.b16 %v1575
  %v1674 = vunpack.c.l.b16 %v1576
  %v1675 = vunpack.c.l.b16 %v1577
  %v1676 = vunpack.c.l.b16 %v1578
  %v1677 = vunpack.c.l.b16 %v1579
  %v1678 = vunpack.c.l.b16 %v1580
  %v1679 = vunpack.c.l.b16 %v1581
  %v1680 = vunpack.c.l.b16 %v1582
  %v1681 = vunpack.c.l.b16 %v1583
  %v1682 = vunpack.c.l.b16 %v1584
  %v1683 = vunpack.c.l.b16 %v1585
  %v1684 = vunpack.c.l.b16 %v1586
  %v1685 = vunpack.c.l.b16 %v1587
  %v1686 = vunpack.c.l.b16 %v1588
  %v1687 = vunpack.c.l.b16 %v1589
  %v1688 = vunpack.c.l.b16 %v1590
  %v1689 = vunpack.c.l.b16 %v1591
  %v1690 = vunpack.c.l.b16 %v1592
  %v1691 = vunpack.c.l.b16 %v1593
  %v1692 = vunpack.c.l.b16 %v1594
  %v1693 = vunpack.c.l.b16 %v1595
  %v1694 = vunpack.c.l.b16 %v1596
  %v1695 = vunpack.c.l.b16 %v1597
  %v1696 = vunpack.c.l.b16 %v1598
  %v1697 = vunpack.c.l.b16 %v1599
  %v1698 = vunpack.c.l.b16 %v1600
  %v1699 = vunpack.c.l.b16 %v1601
  %v1700 = vunpack.c.l.b16 %v1602
  %v1701 = vunpack.c.l.b16 %v1603
  %v1702 = vunpack.c.l.b16 %v1604
  %v1703 = vunpack.c.l.b16 %v1605
  %v1704 = vunpack.c.l.b16 %v1606
  %v1705 = vunpack.c.l.b16 %v1607
  %v1706 = vunpack.c.l.b16 %v1608
  %v1707 = vunpack.c.l.b16 %v1609
  %v1708 = vunpack.c.l.b16 %v1610
  %v1709 = vunpack.c.l.b16 %v1611
  %v1710 = vunpack.c.l.b16 %v1612
  %v1711 = vunpack.c.l.b16 %v1613
  %v1712 = vunpack.c.l.b16 %v1614
  %v1713 = vunpack.c.l.b16 %v1615
  %v1714 = vunpack.c.l.b16 %v1616
  %v1715 = vunpack.c.l.b16 %v1617
  %v1716 = vunpack.c.l.b16 %v1618
  %v1717 = vpack.c.b16 %v1669, %v1668
  %v1718 = vpack.c.b16 %v1671, %v1670
  %v1719 = vpack.c.b16 %v1673, %v1672
  %v1720 = vpack.c.b16 %v1675, %v1674
  %v1721 = vpack.c.b16 %v1677, %v1676
  %v1722 = vpack.c.b16 %v1679, %v1678
  %v1723 = vpack.c.b16 %v1681, %v1680
  %v1724 = vpack.c.b16 %v1683, %v1682
  %v1725 = vpack.c.b16 %v1685, %v1684
  %v1726 = vpack.c.b16 %v1687, %v1686
  %v1727 = vpack.c.b16 %v1689, %v1688
  %v1728 = vpack.c.b16 %v1691, %v1690
  %v1729 = vpack.c.b16 %v1693, %v1692
  %v1730 = vpack.c.b16 %v1695, %v1694
  %v1731 = vpack.c.b16 %v1697, %v1696
  %v1732 = vpack.c.b16 %v1699, %v1698
  %v1733 = vpack.c.b16 %v1701, %v1700
  %v1734 = vpack.c.b16 %v1703, %v1702
  %v1735 = vpack.c.b16 %v1705, %v1704
  %v1736 = vpack.c.b16 %v1707, %v1706
  %v1737 = vpack.c.b16 %v1709, %v1708
  %v1738 = vpack.c.b16 %v1711, %v1710
  %v1739 = vpack.c.b16 %v1713, %v1712
  %v1740 = vpack.c.b16 %v1715, %v1714
  %v1741 = vpack.c.b16 %v1716, %v1716
  %v1743 = vsel %vm203, %v1717, 0
  %v1746 = vsel %vm203, %v1718, 0
  %v1749 = vsel %vm203, %v1719, 0
  %v1752 = vsel %vm203, %v1720, 0
  %v1755 = vsel %vm203, %v1721, 0
  %v1758 = vsel %vm203, %v1722, 0
  %v1761 = vsel %vm203, %v1723, 0
  %v1764 = vsel %vm203, %v1724, 0
  %v1767 = vsel %vm203, %v1725, 0
  %v1770 = vsel %vm203, %v1726, 0
  %v1773 = vsel %vm203, %v1727, 0
  %v1776 = vsel %vm203, %v1728, 0
  %v1779 = vsel %vm203, %v1729, 0
  %v1782 = vsel %vm203, %v1730, 0
  %v1785 = vsel %vm203, %v1731, 0
  %v1788 = vsel %vm203, %v1732, 0
  %v1791 = vsel %vm203, %v1733, 0
  %v1794 = vsel %vm203, %v1734, 0
  %v1797 = vsel %vm203, %v1735, 0
  %v1800 = vsel %vm203, %v1736, 0
  %v1803 = vsel %vm203, %v1737, 0
  %v1806 = vsel %vm203, %v1738, 0
  %v1809 = vsel %vm203, %v1739, 0
  %v1812 = vsel %vm203, %v1740, 0
  %v1815 = vsel %vm203, %v1741, 0
  %1817 = vmatprep.subr.bf16.mxu0 0
  %1818 = vmatpush1.bf16.msra.mxu0 0
  %1819 = vmatprep.subr.bf16.mxu0 0
  %1820 = vmatpush1.bf16.msra.mxu0 0
  %1821 = vmatprep.subr.bf16.mxu0 0
  %1822 = vmatpush1.bf16.msra.mxu0 0
  %1823 = vmatprep.subr.bf16.mxu0 0
  %1824 = vmatpush1.bf16.msra.mxu0 0
  %1825 = vmatprep.subr.bf16.mxu0 0
  %1826 = vmatpush1.bf16.msra.mxu0 0
  %1827 = vmatprep.subr.bf16.mxu0 0
  %1828 = vmatpush1.bf16.msra.mxu0 0
  %1829 = vmatprep.subr.bf16.mxu0 0
  %1830 = vmatpush1.bf16.msra.mxu0 %v200
  %1831 = vmatprep.subr.bf16.mxu0 0
  %1832 = vmatpush1.bf16.msra.mxu0 %v199
  %1833 = vmatprep.subr.bf16.mxu0 0
  %1834 = vmatpush2.bf16.msra.mxu0 0
  %1835 = vmatprep.subr.bf16.mxu0 0
  %1836 = vmatpush2.bf16.msra.mxu0 0
  %1837 = vmatprep.subr.bf16.mxu0 0
  %1838 = vmatpush2.bf16.msra.mxu0 0
  %1839 = vmatprep.subr.bf16.mxu0 0
  %1840 = vmatpush2.bf16.msra.mxu0 0
  %1841 = vmatprep.subr.bf16.mxu0 0
  %1842 = vmatpush2.bf16.msra.mxu0 0
  %1843 = vmatprep.subr.bf16.mxu0 0
  %1844 = vmatpush2.bf16.msra.mxu0 0
  %1845 = vmatprep.subr.bf16.mxu0 0
  %1846 = vmatpush2.bf16.msra.mxu0 0
  %1847 = vmatprep.subr.bf16.mxu0 0
  %1848 = vmatpush2.bf16.msra.mxu0 0
  %1849 = vmatprep.mubr.bf16.mxu0 0
  %1850 = vmatmul.mubr.bf16.gmra.mxu0 %v1743
  %v1851 = vpop.f32.mrf.mxu0
  %v1852 = vadd.f32 0.0, %v1851
  %v1853 = vpop.f32.mrf.mxu0
  %v1854 = vpop.f32.mrf.mxu0
  %v1855 = vadd.f32 0.0, %v1854
  %v1856 = vpop.f32.mrf.mxu0
  %1857 = vmatprep.mubr.bf16.mxu0 0
  %1858 = vmatmul.mubr.bf16.gmra.mxu0 %v1746
  %v1859 = vpop.f32.mrf.mxu0
  %v1860 = vadd.f32 0.0, %v1859
  %v1861 = vpop.f32.mrf.mxu0
  %v1862 = vpop.f32.mrf.mxu0
  %v1863 = vadd.f32 0.0, %v1862
  %v1864 = vpop.f32.mrf.mxu0
  %1865 = vmatprep.mubr.bf16.mxu0 0
  %1866 = vmatmul.mubr.bf16.gmra.mxu0 %v1749
  %v1867 = vpop.f32.mrf.mxu0
  %v1868 = vadd.f32 0.0, %v1867
  %v1869 = vpop.f32.mrf.mxu0
  %v1870 = vpop.f32.mrf.mxu0
  %v1871 = vadd.f32 0.0, %v1870
  %v1872 = vpop.f32.mrf.mxu0
  %1873 = vmatprep.mubr.bf16.mxu0 0
  %1874 = vmatmul.mubr.bf16.gmra.mxu0 %v1752
  %v1875 = vpop.f32.mrf.mxu0
  %v1876 = vadd.f32 0.0, %v1875
  %v1877 = vpop.f32.mrf.mxu0
  %v1878 = vpop.f32.mrf.mxu0
  %v1879 = vadd.f32 0.0, %v1878
  %v1880 = vpop.f32.mrf.mxu0
  %1881 = vmatprep.mubr.bf16.mxu0 0
  %1882 = vmatmul.mubr.bf16.gmra.mxu0 %v1755
  %v1883 = vpop.f32.mrf.mxu0
  %v1884 = vadd.f32 0.0, %v1883
  %v1885 = vpop.f32.mrf.mxu0
  %v1886 = vpop.f32.mrf.mxu0
  %v1887 = vadd.f32 0.0, %v1886
  %v1888 = vpop.f32.mrf.mxu0
  %1889 = vmatprep.mubr.bf16.mxu0 0
  %1890 = vmatmul.mubr.bf16.gmra.mxu0 %v1758
  %v1891 = vpop.f32.mrf.mxu0
  %v1892 = vadd.f32 0.0, %v1891
  %v1893 = vpop.f32.mrf.mxu0
  %v1894 = vpop.f32.mrf.mxu0
  %v1895 = vadd.f32 0.0, %v1894
  %v1896 = vpop.f32.mrf.mxu0
  %1897 = vmatprep.mubr.bf16.mxu0 0
  %1898 = vmatmul.mubr.bf16.gmra.mxu0 %v1761
  %v1899 = vpop.f32.mrf.mxu0
  %v1900 = vadd.f32 0.0, %v1899
  %v1901 = vpop.f32.mrf.mxu0
  %v1902 = vpop.f32.mrf.mxu0
  %v1903 = vadd.f32 0.0, %v1902
  %v1904 = vpop.f32.mrf.mxu0
  %1905 = vmatprep.mubr.bf16.mxu0 0
  %1906 = vmatmul.mubr.bf16.gmra.mxu0 %v1764
  %v1907 = vpop.f32.mrf.mxu0
  %v1908 = vadd.f32 0.0, %v1907
  %v1909 = vpop.f32.mrf.mxu0
  %v1910 = vpop.f32.mrf.mxu0
  %v1911 = vadd.f32 0.0, %v1910
  %v1912 = vpop.f32.mrf.mxu0
  %1913 = vmatprep.mubr.bf16.mxu0 0
  %1914 = vmatmul.mubr.bf16.gmra.mxu0 %v1767
  %v1915 = vpop.f32.mrf.mxu0
  %v1916 = vadd.f32 0.0, %v1915
  %v1917 = vpop.f32.mrf.mxu0
  %v1918 = vpop.f32.mrf.mxu0
  %v1919 = vadd.f32 0.0, %v1918
  %v1920 = vpop.f32.mrf.mxu0
  %1921 = vmatprep.mubr.bf16.mxu0 0
  %1922 = vmatmul.mubr.bf16.gmra.mxu0 %v1770
  %v1923 = vpop.f32.mrf.mxu0
  %v1924 = vadd.f32 0.0, %v1923
  %v1925 = vpop.f32.mrf.mxu0
  %v1926 = vpop.f32.mrf.mxu0
  %v1927 = vadd.f32 0.0, %v1926
  %v1928 = vpop.f32.mrf.mxu0
  %1929 = vmatprep.mubr.bf16.mxu0 0
  %1930 = vmatmul.mubr.bf16.gmra.mxu0 %v1773
  %v1931 = vpop.f32.mrf.mxu0
  %v1932 = vadd.f32 0.0, %v1931
  %v1933 = vpop.f32.mrf.mxu0
  %v1934 = vpop.f32.mrf.mxu0
  %v1935 = vadd.f32 0.0, %v1934
  %v1936 = vpop.f32.mrf.mxu0
  %1937 = vmatprep.mubr.bf16.mxu0 0
  %1938 = vmatmul.mubr.bf16.gmra.mxu0 %v1776
  %v1939 = vpop.f32.mrf.mxu0
  %v1940 = vadd.f32 0.0, %v1939
  %v1941 = vpop.f32.mrf.mxu0
  %v1942 = vpop.f32.mrf.mxu0
  %v1943 = vadd.f32 0.0, %v1942
  %v1944 = vpop.f32.mrf.mxu0
  %1945 = vmatprep.mubr.bf16.mxu0 0
  %1946 = vmatmul.mubr.bf16.gmra.mxu0 %v1779
  %v1947 = vpop.f32.mrf.mxu0
  %v1948 = vadd.f32 0.0, %v1947
  %v1949 = vpop.f32.mrf.mxu0
  %v1950 = vpop.f32.mrf.mxu0
  %v1951 = vadd.f32 0.0, %v1950
  %v1952 = vpop.f32.mrf.mxu0
  %1953 = vmatprep.mubr.bf16.mxu0 0
  %1954 = vmatmul.mubr.bf16.gmra.mxu0 %v1782
  %v1955 = vpop.f32.mrf.mxu0
  %v1956 = vadd.f32 0.0, %v1955
  %v1957 = vpop.f32.mrf.mxu0
  %v1958 = vpop.f32.mrf.mxu0
  %v1959 = vadd.f32 0.0, %v1958
  %v1960 = vpop.f32.mrf.mxu0
  %1961 = vmatprep.mubr.bf16.mxu0 0
  %1962 = vmatmul.mubr.bf16.gmra.mxu0 %v1785
  %v1963 = vpop.f32.mrf.mxu0
  %v1964 = vadd.f32 0.0, %v1963
  %v1965 = vpop.f32.mrf.mxu0
  %v1966 = vpop.f32.mrf.mxu0
  %v1967 = vadd.f32 0.0, %v1966
  %v1968 = vpop.f32.mrf.mxu0
  %1969 = vmatprep.mubr.bf16.mxu0 0
  %1970 = vmatmul.mubr.bf16.gmra.mxu0 %v1788
  %v1971 = vpop.f32.mrf.mxu0
  %v1972 = vadd.f32 0.0, %v1971
  %v1973 = vpop.f32.mrf.mxu0
  %v1974 = vpop.f32.mrf.mxu0
  %v1975 = vadd.f32 0.0, %v1974
  %v1976 = vpop.f32.mrf.mxu0
  %1977 = vmatprep.mubr.bf16.mxu0 0
  %1978 = vmatmul.mubr.bf16.gmra.mxu0 %v1791
  %v1979 = vpop.f32.mrf.mxu0
  %v1980 = vadd.f32 0.0, %v1979
  %v1981 = vpop.f32.mrf.mxu0
  %v1982 = vpop.f32.mrf.mxu0
  %v1983 = vadd.f32 0.0, %v1982
  %v1984 = vpop.f32.mrf.mxu0
  %1985 = vmatprep.mubr.bf16.mxu0 0
  %1986 = vmatmul.mubr.bf16.gmra.mxu0 %v1794
  %v1987 = vpop.f32.mrf.mxu0
  %v1988 = vadd.f32 0.0, %v1987
  %v1989 = vpop.f32.mrf.mxu0
  %v1990 = vpop.f32.mrf.mxu0
  %v1991 = vadd.f32 0.0, %v1990
  %v1992 = vpop.f32.mrf.mxu0
  %1993 = vmatprep.mubr.bf16.mxu0 0
  %1994 = vmatmul.mubr.bf16.gmra.mxu0 %v1797
  %v1995 = vpop.f32.mrf.mxu0
  %v1996 = vadd.f32 0.0, %v1995
  %v1997 = vpop.f32.mrf.mxu0
  %v1998 = vpop.f32.mrf.mxu0
  %v1999 = vadd.f32 0.0, %v1998
  %v2000 = vpop.f32.mrf.mxu0
  %2001 = vmatprep.mubr.bf16.mxu0 0
  %2002 = vmatmul.mubr.bf16.gmra.mxu0 %v1800
  %v2003 = vpop.f32.mrf.mxu0
  %v2004 = vadd.f32 0.0, %v2003
  %v2005 = vpop.f32.mrf.mxu0
  %v2006 = vpop.f32.mrf.mxu0
  %v2007 = vadd.f32 0.0, %v2006
  %v2008 = vpop.f32.mrf.mxu0
  %2009 = vmatprep.mubr.bf16.mxu0 0
  %2010 = vmatmul.mubr.bf16.gmra.mxu0 %v1803
  %v2011 = vpop.f32.mrf.mxu0
  %v2012 = vadd.f32 0.0, %v2011
  %v2013 = vpop.f32.mrf.mxu0
  %v2014 = vpop.f32.mrf.mxu0
  %v2015 = vadd.f32 0.0, %v2014
  %v2016 = vpop.f32.mrf.mxu0
  %2017 = vmatprep.mubr.bf16.mxu0 0
  %2018 = vmatmul.mubr.bf16.gmra.mxu0 %v1806
  %v2019 = vpop.f32.mrf.mxu0
  %v2020 = vadd.f32 0.0, %v2019
  %v2021 = vpop.f32.mrf.mxu0
  %v2022 = vpop.f32.mrf.mxu0
  %v2023 = vadd.f32 0.0, %v2022
  %v2024 = vpop.f32.mrf.mxu0
  %2025 = vmatprep.mubr.bf16.mxu0 0
  %2026 = vmatmul.mubr.bf16.gmra.mxu0 %v1809
  %v2027 = vpop.f32.mrf.mxu0
  %v2028 = vadd.f32 0.0, %v2027
  %v2029 = vpop.f32.mrf.mxu0
  %v2030 = vpop.f32.mrf.mxu0
  %v2031 = vadd.f32 0.0, %v2030
  %v2032 = vpop.f32.mrf.mxu0
  %2033 = vmatprep.mubr.bf16.mxu0 0
  %2034 = vmatmul.mubr.bf16.gmra.mxu0 %v1812
  %v2035 = vpop.f32.mrf.mxu0
  %v2036 = vadd.f32 0.0, %v2035
  %v2037 = vpop.f32.mrf.mxu0
  %v2038 = vpop.f32.mrf.mxu0
  %v2039 = vadd.f32 0.0, %v2038
  %v2040 = vpop.f32.mrf.mxu0
  %2041 = vmatprep.mubr.bf16.mxu0 0
  %2042 = vmatmul.mubr.bf16.gmra.mxu0 %v1815
  %v2043 = vpop.f32.mrf.mxu0
  %v2044 = vadd.f32 0.0, %v2043
  %v2045 = vpop.f32.mrf.mxu0
  %v2046 = vpop.f32.mrf.mxu0
  %v2047 = vpop.f32.mrf.mxu0
  %2048 = vdwg.mxu0
  %v2049 = vmax.f32 %v1520, %v1852
  %v2050 = vmax.f32 %v1521, %v1855
  %v2051 = vmax.f32 %v1522, %v1860
  %v2052 = vmax.f32 %v1523, %v1863
  %v2053 = vmax.f32 %v1524, %v1868
  %v2054 = vmax.f32 %v1525, %v1871
  %v2055 = vmax.f32 %v1526, %v1876
  %v2056 = vmax.f32 %v1527, %v1879
  %v2057 = vmax.f32 %v1528, %v1884
  %v2058 = vmax.f32 %v1529, %v1887
  %v2059 = vmax.f32 %v1530, %v1892
  %v2060 = vmax.f32 %v1531, %v1895
  %v2061 = vmax.f32 %v1532, %v1900
  %v2062 = vmax.f32 %v1533, %v1903
  %v2063 = vmax.f32 %v1534, %v1908
  %v2064 = vmax.f32 %v1535, %v1911
  %v2065 = vmax.f32 %v1536, %v1916
  %v2066 = vmax.f32 %v1537, %v1919
  %v2067 = vmax.f32 %v1538, %v1924
  %v2068 = vmax.f32 %v1539, %v1927
  %v2069 = vmax.f32 %v1540, %v1932
  %v2070 = vmax.f32 %v1541, %v1935
  %v2071 = vmax.f32 %v1542, %v1940
  %v2072 = vmax.f32 %v1543, %v1943
  %v2073 = vmax.f32 %v1544, %v1948
  %v2074 = vmax.f32 %v1545, %v1951
  %v2075 = vmax.f32 %v1546, %v1956
  %v2076 = vmax.f32 %v1547, %v1959
  %v2077 = vmax.f32 %v1548, %v1964
  %v2078 = vmax.f32 %v1549, %v1967
  %v2079 = vmax.f32 %v1550, %v1972
  %v2080 = vmax.f32 %v1551, %v1975
  %v2081 = vmax.f32 %v1552, %v1980
  %v2082 = vmax.f32 %v1553, %v1983
  %v2083 = vmax.f32 %v1554, %v1988
  %v2084 = vmax.f32 %v1555, %v1991
  %v2085 = vmax.f32 %v1556, %v1996
  %v2086 = vmax.f32 %v1557, %v1999
  %v2087 = vmax.f32 %v1558, %v2004
  %v2088 = vmax.f32 %v1559, %v2007
  %v2089 = vmax.f32 %v1560, %v2012
  %v2090 = vmax.f32 %v1561, %v2015
  %v2091 = vmax.f32 %v1562, %v2020
  %v2092 = vmax.f32 %v1563, %v2023
  %v2093 = vmax.f32 %v1564, %v2028
  %v2094 = vmax.f32 %v1565, %v2031
  %v2095 = vmax.f32 %v1566, %v2036
  %v2096 = vmax.f32 %v1567, %v2039
  %v2097 = vmax.f32 %v1568, %v2044
  %v2098 = vld [vmem:[%s2] sm:$0x1]
  %v2100 = vlaneseq
  %v2101 = vshrl.u32 %v2100, 7
  %v2102 = vsub.s32 0, %v2101
  %v2103 = vrot.slane %v2098, %v2102
  %v2105 = vadd.f32 %v2049, %v2103
  %v2106 = vadd.f32 %v2050, %v2103
  %v2107 = vadd.f32 %v2051, %v2103
  %v2108 = vadd.f32 %v2052, %v2103
  %v2109 = vadd.f32 %v2053, %v2103
  %v2110 = vadd.f32 %v2054, %v2103
  %v2111 = vadd.f32 %v2055, %v2103
  %v2112 = vadd.f32 %v2056, %v2103
  %v2113 = vadd.f32 %v2057, %v2103
  %v2114 = vadd.f32 %v2058, %v2103
  %v2115 = vadd.f32 %v2059, %v2103
  %v2116 = vadd.f32 %v2060, %v2103
  %v2117 = vadd.f32 %v2061, %v2103
  %v2118 = vadd.f32 %v2062, %v2103
  %v2119 = vadd.f32 %v2063, %v2103
  %v2120 = vadd.f32 %v2064, %v2103
  %v2121 = vadd.f32 %v2065, %v2103
  %v2122 = vadd.f32 %v2066, %v2103
  %v2123 = vadd.f32 %v2067, %v2103
  %v2124 = vadd.f32 %v2068, %v2103
  %v2125 = vadd.f32 %v2069, %v2103
  %v2126 = vadd.f32 %v2070, %v2103
  %v2127 = vadd.f32 %v2071, %v2103
  %v2128 = vadd.f32 %v2072, %v2103
  %v2129 = vadd.f32 %v2073, %v2103
  %v2130 = vadd.f32 %v2074, %v2103
  %v2131 = vadd.f32 %v2075, %v2103
  %v2132 = vadd.f32 %v2076, %v2103
  %v2133 = vadd.f32 %v2077, %v2103
  %v2134 = vadd.f32 %v2078, %v2103
  %v2135 = vadd.f32 %v2079, %v2103
  %v2136 = vadd.f32 %v2080, %v2103
  %v2137 = vadd.f32 %v2081, %v2103
  %v2138 = vadd.f32 %v2082, %v2103
  %v2139 = vadd.f32 %v2083, %v2103
  %v2140 = vadd.f32 %v2084, %v2103
  %v2141 = vadd.f32 %v2085, %v2103
  %v2142 = vadd.f32 %v2086, %v2103
  %v2143 = vadd.f32 %v2087, %v2103
  %v2144 = vadd.f32 %v2088, %v2103
  %v2145 = vadd.f32 %v2089, %v2103
  %v2146 = vadd.f32 %v2090, %v2103
  %v2147 = vadd.f32 %v2091, %v2103
  %v2148 = vadd.f32 %v2092, %v2103
  %v2149 = vadd.f32 %v2093, %v2103
  %v2150 = vadd.f32 %v2094, %v2103
  %v2151 = vadd.f32 %v2095, %v2103
  %v2152 = vadd.f32 %v2096, %v2103
  %v2153 = vadd.f32 %v2097, %v2103
  %v2154 = vmax.f32 %v2105, 0.0
  %v2155 = vmax.f32 %v2106, 0.0
  %v2156 = vmax.f32 %v2107, 0.0
  %v2157 = vmax.f32 %v2108, 0.0
  %v2158 = vmax.f32 %v2109, 0.0
  %v2159 = vmax.f32 %v2110, 0.0
  %v2160 = vmax.f32 %v2111, 0.0
  %v2161 = vmax.f32 %v2112, 0.0
  %v2162 = vmax.f32 %v2113, 0.0
  %v2163 = vmax.f32 %v2114, 0.0
  %v2164 = vmax.f32 %v2115, 0.0
  %v2165 = vmax.f32 %v2116, 0.0
  %v2166 = vmax.f32 %v2117, 0.0
  %v2167 = vmax.f32 %v2118, 0.0
  %v2168 = vmax.f32 %v2119, 0.0
  %v2169 = vmax.f32 %v2120, 0.0
  %v2170 = vmax.f32 %v2121, 0.0
  %v2171 = vmax.f32 %v2122, 0.0
  %v2172 = vmax.f32 %v2123, 0.0
  %v2173 = vmax.f32 %v2124, 0.0
  %v2174 = vmax.f32 %v2125, 0.0
  %v2175 = vmax.f32 %v2126, 0.0
  %v2176 = vmax.f32 %v2127, 0.0
  %v2177 = vmax.f32 %v2128, 0.0
  %v2178 = vmax.f32 %v2129, 0.0
  %v2179 = vmax.f32 %v2130, 0.0
  %v2180 = vmax.f32 %v2131, 0.0
  %v2181 = vmax.f32 %v2132, 0.0
  %v2182 = vmax.f32 %v2133, 0.0
  %v2183 = vmax.f32 %v2134, 0.0
  %v2184 = vmax.f32 %v2135, 0.0
  %v2185 = vmax.f32 %v2136, 0.0
  %v2186 = vmax.f32 %v2137, 0.0
  %v2187 = vmax.f32 %v2138, 0.0
  %v2188 = vmax.f32 %v2139, 0.0
  %v2189 = vmax.f32 %v2140, 0.0
  %v2190 = vmax.f32 %v2141, 0.0
  %v2191 = vmax.f32 %v2142, 0.0
  %v2192 = vmax.f32 %v2143, 0.0
  %v2193 = vmax.f32 %v2144, 0.0
  %v2194 = vmax.f32 %v2145, 0.0
  %v2195 = vmax.f32 %v2146, 0.0
  %v2196 = vmax.f32 %v2147, 0.0
  %v2197 = vmax.f32 %v2148, 0.0
  %v2198 = vmax.f32 %v2149, 0.0
  %v2199 = vmax.f32 %v2150, 0.0
  %v2200 = vmax.f32 %v2151, 0.0
  %v2201 = vmax.f32 %v2152, 0.0
  %v2202 = vmax.f32 %v2153, 0.0
  %v2203 = vpack.c.bf16 %v2155, %v2154
  %v2204 = vpack.c.bf16 %v2157, %v2156
  %v2205 = vpack.c.bf16 %v2159, %v2158
  %v2206 = vpack.c.bf16 %v2161, %v2160
  %v2207 = vpack.c.bf16 %v2163, %v2162
  %v2208 = vpack.c.bf16 %v2165, %v2164
  %v2209 = vpack.c.bf16 %v2167, %v2166
  %v2210 = vpack.c.bf16 %v2169, %v2168
  %v2211 = vpack.c.bf16 %v2171, %v2170
  %v2212 = vpack.c.bf16 %v2173, %v2172
  %v2213 = vpack.c.bf16 %v2175, %v2174
  %v2214 = vpack.c.bf16 %v2177, %v2176
  %v2215 = vpack.c.bf16 %v2179, %v2178
  %v2216 = vpack.c.bf16 %v2181, %v2180
  %v2217 = vpack.c.bf16 %v2183, %v2182
  %v2218 = vpack.c.bf16 %v2185, %v2184
  %v2219 = vpack.c.bf16 %v2187, %v2186
  %v2220 = vpack.c.bf16 %v2189, %v2188
  %v2221 = vpack.c.bf16 %v2191, %v2190
  %v2222 = vpack.c.bf16 %v2193, %v2192
  %v2223 = vpack.c.bf16 %v2195, %v2194
  %v2224 = vpack.c.bf16 %v2197, %v2196
  %v2225 = vpack.c.bf16 %v2199, %v2198
  %v2226 = vpack.c.bf16 %v2201, %v2200
  %v2227 = vpack.c.bf16 %v2202, %v2202
  %v2253 = vunpack.c.l.b16 %v2203
  %v2254 = vunpack.c.h.b16 %v2203
  %v2255 = vunpack.c.l.b16 %v2204
  %v2256 = vunpack.c.h.b16 %v2204
  %v2257 = vunpack.c.l.b16 %v2205
  %v2258 = vunpack.c.h.b16 %v2205
  %v2259 = vunpack.c.l.b16 %v2206
  %v2260 = vunpack.c.h.b16 %v2206
  %v2261 = vunpack.c.l.b16 %v2207
  %v2262 = vunpack.c.h.b16 %v2207
  %v2263 = vunpack.c.l.b16 %v2208
  %v2264 = vunpack.c.h.b16 %v2208
  %v2265 = vunpack.c.l.b16 %v2209
  %v2266 = vunpack.c.h.b16 %v2209
  %v2267 = vunpack.c.l.b16 %v2210
  %v2268 = vunpack.c.h.b16 %v2210
  %v2269 = vunpack.c.l.b16 %v2211
  %v2270 = vunpack.c.h.b16 %v2211
  %v2271 = vunpack.c.l.b16 %v2212
  %v2272 = vunpack.c.h.b16 %v2212
  %v2273 = vunpack.c.l.b16 %v2213
  %v2274 = vunpack.c.h.b16 %v2213
  %v2275 = vunpack.c.l.b16 %v2214
  %v2276 = vunpack.c.h.b16 %v2214
  %v2277 = vunpack.c.l.b16 %v2215
  %v2278 = vunpack.c.h.b16 %v2215
  %v2279 = vunpack.c.l.b16 %v2216
  %v2280 = vunpack.c.h.b16 %v2216
  %v2281 = vunpack.c.l.b16 %v2217
  %v2282 = vunpack.c.h.b16 %v2217
  %v2283 = vunpack.c.l.b16 %v2218
  %v2284 = vunpack.c.h.b16 %v2218
  %v2285 = vunpack.c.l.b16 %v2219
  %v2286 = vunpack.c.h.b16 %v2219
  %v2287 = vunpack.c.l.b16 %v2220
  %v2288 = vunpack.c.h.b16 %v2220
  %v2289 = vunpack.c.l.b16 %v2221
  %v2290 = vunpack.c.h.b16 %v2221
  %v2291 = vunpack.c.l.b16 %v2222
  %v2292 = vunpack.c.h.b16 %v2222
  %v2293 = vunpack.c.l.b16 %v2223
  %v2294 = vunpack.c.h.b16 %v2223
  %v2295 = vunpack.c.l.b16 %v2224
  %v2296 = vunpack.c.h.b16 %v2224
  %v2297 = vunpack.c.l.b16 %v2225
  %v2298 = vunpack.c.h.b16 %v2225
  %v2299 = vunpack.c.l.b16 %v2226
  %v2300 = vunpack.c.h.b16 %v2226
  %v2301 = vunpack.c.l.b16 %v2227
  %v2302 = vpack.c.b16 %v2253, %v2253
  %v2303 = vpack.c.b16 %v2254, %v2254
  %v2304 = vpack.c.b16 %v2255, %v2255
  %v2305 = vpack.c.b16 %v2256, %v2256
  %v2306 = vpack.c.b16 %v2257, %v2257
  %v2307 = vpack.c.b16 %v2258, %v2258
  %v2308 = vpack.c.b16 %v2259, %v2259
  %v2309 = vpack.c.b16 %v2260, %v2260
  %v2310 = vpack.c.b16 %v2261, %v2261
  %v2311 = vpack.c.b16 %v2262, %v2262
  %v2312 = vpack.c.b16 %v2263, %v2263
  %v2313 = vpack.c.b16 %v2264, %v2264
  %v2314 = vpack.c.b16 %v2265, %v2265
  %v2315 = vpack.c.b16 %v2266, %v2266
  %v2316 = vpack.c.b16 %v2267, %v2267
  %v2317 = vpack.c.b16 %v2268, %v2268
  %v2318 = vpack.c.b16 %v2269, %v2269
  %v2319 = vpack.c.b16 %v2270, %v2270
  %v2320 = vpack.c.b16 %v2271, %v2271
  %v2321 = vpack.c.b16 %v2272, %v2272
  %v2322 = vpack.c.b16 %v2273, %v2273
  %v2323 = vpack.c.b16 %v2274, %v2274
  %v2324 = vpack.c.b16 %v2275, %v2275
  %v2325 = vpack.c.b16 %v2276, %v2276
  %v2326 = vpack.c.b16 %v2277, %v2277
  %v2327 = vpack.c.b16 %v2278, %v2278
  %v2328 = vpack.c.b16 %v2279, %v2279
  %v2329 = vpack.c.b16 %v2280, %v2280
  %v2330 = vpack.c.b16 %v2281, %v2281
  %v2331 = vpack.c.b16 %v2282, %v2282
  %v2332 = vpack.c.b16 %v2283, %v2283
  %v2333 = vpack.c.b16 %v2284, %v2284
  %v2334 = vpack.c.b16 %v2285, %v2285
  %v2335 = vpack.c.b16 %v2286, %v2286
  %v2336 = vpack.c.b16 %v2287, %v2287
  %v2337 = vpack.c.b16 %v2288, %v2288
  %v2338 = vpack.c.b16 %v2289, %v2289
  %v2339 = vpack.c.b16 %v2290, %v2290
  %v2340 = vpack.c.b16 %v2291, %v2291
  %v2341 = vpack.c.b16 %v2292, %v2292
  %v2342 = vpack.c.b16 %v2293, %v2293
  %v2343 = vpack.c.b16 %v2294, %v2294
  %v2344 = vpack.c.b16 %v2295, %v2295
  %v2345 = vpack.c.b16 %v2296, %v2296
  %v2346 = vpack.c.b16 %v2297, %v2297
  %v2347 = vpack.c.b16 %v2298, %v2298
  %v2348 = vpack.c.b16 %v2299, %v2299
  %v2349 = vpack.c.b16 %v2300, %v2300
  %v2350 = vpack.c.b16 %v2301, %v2301
  %vm2400 = vcmask 257024
  %2401 = vst.msk [vmem:[%s3] sm:$0xf] %vm2400, %v2302
  %2402 = vst.msk [vmem:[%s3 + $0x4] sm:$0xf] %vm2400, %v2303
  %2403 = vst.msk [vmem:[%s3 + $0x8] sm:$0xf] %vm2400, %v2304
  %2404 = vst.msk [vmem:[%s3 + $0xc] sm:$0xf] %vm2400, %v2305
  %2405 = vst.msk [vmem:[%s3 + $0x10] sm:$0xf] %vm2400, %v2306
  %2406 = vst.msk [vmem:[%s3 + $0x14] sm:$0xf] %vm2400, %v2307
  %2407 = vst.msk [vmem:[%s3 + $0x18] sm:$0xf] %vm2400, %v2308
  %2408 = vst.msk [vmem:[%s3 + $0x1c] sm:$0xf] %vm2400, %v2309
  %2409 = vst.msk [vmem:[%s3 + $0x20] sm:$0xf] %vm2400, %v2310
  %2410 = vst.msk [vmem:[%s3 + $0x24] sm:$0xf] %vm2400, %v2311
  %2411 = vst.msk [vmem:[%s3 + $0x28] sm:$0xf] %vm2400, %v2312
  %2412 = vst.msk [vmem:[%s3 + $0x2c] sm:$0xf] %vm2400, %v2313
  %2413 = vst.msk [vmem:[%s3 + $0x30] sm:$0xf] %vm2400, %v2314
  %2414 = vst.msk [vmem:[%s3 + $0x34] sm:$0xf] %vm2400, %v2315
  %2415 = vst.msk [vmem:[%s3 + $0x38] sm:$0xf] %vm2400, %v2316
  %2416 = vst.msk [vmem:[%s3 + $0x3c] sm:$0xf] %vm2400, %v2317
  %2417 = vst.msk [vmem:[%s3 + $0x40] sm:$0xf] %vm2400, %v2318
  %2418 = vst.msk [vmem:[%s3 + $0x44] sm:$0xf] %vm2400, %v2319
  %2419 = vst.msk [vmem:[%s3 + $0x48] sm:$0xf] %vm2400, %v2320
  %2420 = vst.msk [vmem:[%s3 + $0x4c] sm:$0xf] %vm2400, %v2321
  %2421 = vst.msk [vmem:[%s3 + $0x50] sm:$0xf] %vm2400, %v2322
  %2422 = vst.msk [vmem:[%s3 + $0x54] sm:$0xf] %vm2400, %v2323
  %2423 = vst.msk [vmem:[%s3 + $0x58] sm:$0xf] %vm2400, %v2324
  %2424 = vst.msk [vmem:[%s3 + $0x5c] sm:$0xf] %vm2400, %v2325
  %2425 = vst.msk [vmem:[%s3 + $0x60] sm:$0xf] %vm2400, %v2326
  %2426 = vst.msk [vmem:[%s3 + $0x64] sm:$0xf] %vm2400, %v2327
  %2427 = vst.msk [vmem:[%s3 + $0x68] sm:$0xf] %vm2400, %v2328
  %2428 = vst.msk [vmem:[%s3 + $0x6c] sm:$0xf] %vm2400, %v2329
  %2429 = vst.msk [vmem:[%s3 + $0x70] sm:$0xf] %vm2400, %v2330
  %2430 = vst.msk [vmem:[%s3 + $0x74] sm:$0xf] %vm2400, %v2331
  %2431 = vst.msk [vmem:[%s3 + $0x78] sm:$0xf] %vm2400, %v2332
  %2432 = vst.msk [vmem:[%s3 + $0x7c] sm:$0xf] %vm2400, %v2333
  %2433 = vst.msk [vmem:[%s3 + $0x80] sm:$0xf] %vm2400, %v2334
  %2434 = vst.msk [vmem:[%s3 + $0x84] sm:$0xf] %vm2400, %v2335
  %2435 = vst.msk [vmem:[%s3 + $0x88] sm:$0xf] %vm2400, %v2336
  %2436 = vst.msk [vmem:[%s3 + $0x8c] sm:$0xf] %vm2400, %v2337
  %2437 = vst.msk [vmem:[%s3 + $0x90] sm:$0xf] %vm2400, %v2338
  %2438 = vst.msk [vmem:[%s3 + $0x94] sm:$0xf] %vm2400, %v2339
  %2439 = vst.msk [vmem:[%s3 + $0x98] sm:$0xf] %vm2400, %v2340
  %2440 = vst.msk [vmem:[%s3 + $0x9c] sm:$0xf] %vm2400, %v2341
  %2441 = vst.msk [vmem:[%s3 + $0xa0] sm:$0xf] %vm2400, %v2342
  %2442 = vst.msk [vmem:[%s3 + $0xa4] sm:$0xf] %vm2400, %v2343
  %2443 = vst.msk [vmem:[%s3 + $0xa8] sm:$0xf] %vm2400, %v2344
  %2444 = vst.msk [vmem:[%s3 + $0xac] sm:$0xf] %vm2400, %v2345
  %2445 = vst.msk [vmem:[%s3 + $0xb0] sm:$0xf] %vm2400, %v2346
  %2446 = vst.msk [vmem:[%s3 + $0xb4] sm:$0xf] %vm2400, %v2347
  %2447 = vst.msk [vmem:[%s3 + $0xb8] sm:$0xf] %vm2400, %v2348
  %2448 = vst.msk [vmem:[%s3 + $0xbc] sm:$0xf] %vm2400, %v2349
  %2449 = vst.msk [vmem:[%s3 + $0xc0] sm:$0xf] %vm2400, %v2350
  // Predicated region
  $region14: #{simple_cnn_forward.3} parent=0 // pred_check
    _
  $region15: #{simple_cnn_forward.3} parent=0 // pred_check_branch
    %2451 = sbr.rel (0) target = $region17
  $region16: #{simple_cnn_forward.3} parent=0 // pred_region
    _
  $region17: #{simple_cnn_forward.3} parent=0 // pred_fallthru
    _
  // Predicated region
  $region18: #{simple_cnn_forward.3} parent=0 // pred_check
    _
  $region19: #{simple_cnn_forward.3} parent=0 // pred_check_branch
    %2453 = sbr.rel (0) target = $region21
  $region20: #{simple_cnn_forward.3} parent=0 // pred_region
    _
  $region21: #{simple_cnn_forward.3} parent=0 // pred_fallthru
    _

// kernel: simple_cnn_forward.4
$region0: #{simple_cnn_forward.4}
  #allocation0 [shape = 'u32[]', space=smem, size = 0x4, offset = 0x4, fixed_abs, tag = 'smem constant byte address 0x4 - core index']
  #allocation1 [shape = 'u32[144,128]{1,0:T(1,128)}', space=vmem, size = 0x12000, scoped, tag = 'internal scratch']
  %s0 = inlined_call_operand.vmem [shape: bf16[4,104,1024], index: 0, kind: input, shape index: {}]
  %s1 = inlined_call_operand.vmem [shape: bf16[1024,64], index: 1, kind: input, shape index: {}]
  %s2 = inlined_call_operand.vmem [shape: f32[1,64], index: 2, kind: input, shape index: {}]
  %s3 = inlined_call_operand.vmem [shape: bf16[104,64], index: 3, kind: output, shape index: {}]
  %s4 = sld [smem:[#allocation0]]
  $region22: #{simple_cnn_forward.4} parent=0
    _
  %s6 = ssub.s32 1, %s4
  %s7 = scalar_select 0, %s6, %s4
  // Predicated region
  $region2: #{simple_cnn_forward.4} parent=0 // pred_check
    _
  $region3: #{simple_cnn_forward.4} parent=0 // pred_check_branch
    %9 = sbr.rel (0) target = $region5
  $region4: #{simple_cnn_forward.4} parent=0 // pred_region
    _
  $region5: #{simple_cnn_forward.4} parent=0 // pred_fallthru
    _
  // Predicated region
  $region6: #{simple_cnn_forward.4} parent=0 // pred_check
    _
  $region7: #{simple_cnn_forward.4} parent=0 // pred_check_branch
    %11 = sbr.rel (0) target = $region9
  $region8: #{simple_cnn_forward.4} parent=0 // pred_region
    _
  $region9: #{simple_cnn_forward.4} parent=0 // pred_fallthru
    _
  // Predicated region
  $region10: #{simple_cnn_forward.4} parent=0 // pred_check
    _
  $region11: #{simple_cnn_forward.4} parent=0 // pred_check_branch
    %13 = sbr.rel (0) target = $region13
  $region12: #{simple_cnn_forward.4} parent=0 // pred_region
    _
  $region13: #{simple_cnn_forward.4} parent=0 // pred_fallthru
    _
  %v15 = vld [vmem:[%s1] sm:$0xf]
  %v16 = vld [vmem:[%s1 + $0x4] sm:$0xf]
  %v17 = vld [vmem:[%s1 + $0x8] sm:$0xf]
  %v18 = vld [vmem:[%s1 + $0xc] sm:$0xf]
  %v19 = vld [vmem:[%s1 + $0x10] sm:$0xf]
  %v20 = vld [vmem:[%s1 + $0x14] sm:$0xf]
  %v21 = vld [vmem:[%s1 + $0x18] sm:$0xf]
  %v22 = vld [vmem:[%s1 + $0x1c] sm:$0xf]
  %v23 = vld [vmem:[%s1 + $0x20] sm:$0xf]
  %v24 = vld [vmem:[%s1 + $0x24] sm:$0xf]
  %v25 = vld [vmem:[%s1 + $0x28] sm:$0xf]
  %v26 = vld [vmem:[%s1 + $0x2c] sm:$0xf]
  %v27 = vld [vmem:[%s1 + $0x30] sm:$0xf]
  %v28 = vld [vmem:[%s1 + $0x34] sm:$0xf]
  %v29 = vld [vmem:[%s1 + $0x38] sm:$0xf]
  %v30 = vld [vmem:[%s1 + $0x3c] sm:$0xf]
  %v31 = vld [vmem:[%s1 + $0x40] sm:$0xf]
  %v32 = vld [vmem:[%s1 + $0x44] sm:$0xf]
  %v33 = vld [vmem:[%s1 + $0x48] sm:$0xf]
  %v34 = vld [vmem:[%s1 + $0x4c] sm:$0xf]
  %v35 = vld [vmem:[%s1 + $0x50] sm:$0xf]
  %v36 = vld [vmem:[%s1 + $0x54] sm:$0xf]
  %v37 = vld [vmem:[%s1 + $0x58] sm:$0xf]
  %v38 = vld [vmem:[%s1 + $0x5c] sm:$0xf]
  %v39 = vld [vmem:[%s1 + $0x60] sm:$0xf]
  %v40 = vld [vmem:[%s1 + $0x64] sm:$0xf]
  %v41 = vld [vmem:[%s1 + $0x68] sm:$0xf]
  %v42 = vld [vmem:[%s1 + $0x6c] sm:$0xf]
  %v43 = vld [vmem:[%s1 + $0x70] sm:$0xf]
  %v44 = vld [vmem:[%s1 + $0x74] sm:$0xf]
  %v45 = vld [vmem:[%s1 + $0x78] sm:$0xf]
  %v46 = vld [vmem:[%s1 + $0x7c] sm:$0xf]
  %v47 = vld [vmem:[%s1 + $0x80] sm:$0xf]
  %v48 = vld [vmem:[%s1 + $0x84] sm:$0xf]
  %v49 = vld [vmem:[%s1 + $0x88] sm:$0xf]
  %v50 = vld [vmem:[%s1 + $0x8c] sm:$0xf]
  %v51 = vld [vmem:[%s1 + $0x90] sm:$0xf]
  %v52 = vld [vmem:[%s1 + $0x94] sm:$0xf]
  %v53 = vld [vmem:[%s1 + $0x98] sm:$0xf]
  %v54 = vld [vmem:[%s1 + $0x9c] sm:$0xf]
  %v55 = vld [vmem:[%s1 + $0xa0] sm:$0xf]
  %v56 = vld [vmem:[%s1 + $0xa4] sm:$0xf]
  %v57 = vld [vmem:[%s1 + $0xa8] sm:$0xf]
  %v58 = vld [vmem:[%s1 + $0xac] sm:$0xf]
  %v59 = vld [vmem:[%s1 + $0xb0] sm:$0xf]
  %v60 = vld [vmem:[%s1 + $0xb4] sm:$0xf]
  %v61 = vld [vmem:[%s1 + $0xb8] sm:$0xf]
  %v62 = vld [vmem:[%s1 + $0xbc] sm:$0xf]
  %v63 = vld [vmem:[%s1 + $0xc0] sm:$0xf]
  %v64 = vld [vmem:[%s1 + $0xc4] sm:$0xf]
  %v65 = vld [vmem:[%s1 + $0xc8] sm:$0xf]
  %v66 = vld [vmem:[%s1 + $0xcc] sm:$0xf]
  %v67 = vld [vmem:[%s1 + $0xd0] sm:$0xf]
  %v68 = vld [vmem:[%s1 + $0xd4] sm:$0xf]
  %v69 = vld [vmem:[%s1 + $0xd8] sm:$0xf]
  %v70 = vld [vmem:[%s1 + $0xdc] sm:$0xf]
  %v71 = vld [vmem:[%s1 + $0xe0] sm:$0xf]
  %v72 = vld [vmem:[%s1 + $0xe4] sm:$0xf]
  %v73 = vld [vmem:[%s1 + $0xe8] sm:$0xf]
  %v74 = vld [vmem:[%s1 + $0xec] sm:$0xf]
  %v75 = vld [vmem:[%s1 + $0xf0] sm:$0xf]
  %v76 = vld [vmem:[%s1 + $0xf4] sm:$0xf]
  %v77 = vld [vmem:[%s1 + $0xf8] sm:$0xf]
  %v78 = vld [vmem:[%s1 + $0xfc] sm:$0xf]
  %v79 = vld [vmem:[%s1 + $0x100] sm:$0xf]
  %v80 = vld [vmem:[%s1 + $0x104] sm:$0xf]
  %v81 = vld [vmem:[%s1 + $0x108] sm:$0xf]
  %v82 = vld [vmem:[%s1 + $0x10c] sm:$0xf]
  %v83 = vld [vmem:[%s1 + $0x110] sm:$0xf]
  %v84 = vld [vmem:[%s1 + $0x114] sm:$0xf]
  %v85 = vld [vmem:[%s1 + $0x118] sm:$0xf]
  %v86 = vld [vmem:[%s1 + $0x11c] sm:$0xf]
  %v87 = vld [vmem:[%s1 + $0x120] sm:$0xf]
  %v88 = vld [vmem:[%s1 + $0x124] sm:$0xf]
  %v89 = vld [vmem:[%s1 + $0x128] sm:$0xf]
  %v90 = vld [vmem:[%s1 + $0x12c] sm:$0xf]
  %v91 = vld [vmem:[%s1 + $0x130] sm:$0xf]
  %v92 = vld [vmem:[%s1 + $0x134] sm:$0xf]
  %v93 = vld [vmem:[%s1 + $0x138] sm:$0xf]
  %v94 = vld [vmem:[%s1 + $0x13c] sm:$0xf]
  %v95 = vld [vmem:[%s1 + $0x140] sm:$0xf]
  %v96 = vld [vmem:[%s1 + $0x144] sm:$0xf]
  %v97 = vld [vmem:[%s1 + $0x148] sm:$0xf]
  %v98 = vld [vmem:[%s1 + $0x14c] sm:$0xf]
  %v99 = vld [vmem:[%s1 + $0x150] sm:$0xf]
  %v100 = vld [vmem:[%s1 + $0x154] sm:$0xf]
  %v101 = vld [vmem:[%s1 + $0x158] sm:$0xf]
  %v102 = vld [vmem:[%s1 + $0x15c] sm:$0xf]
  %v103 = vld [vmem:[%s1 + $0x160] sm:$0xf]
  %v104 = vld [vmem:[%s1 + $0x164] sm:$0xf]
  %v105 = vld [vmem:[%s1 + $0x168] sm:$0xf]
  %v106 = vld [vmem:[%s1 + $0x16c] sm:$0xf]
  %v107 = vld [vmem:[%s1 + $0x170] sm:$0xf]
  %v108 = vld [vmem:[%s1 + $0x174] sm:$0xf]
  %v109 = vld [vmem:[%s1 + $0x178] sm:$0xf]
  %v110 = vld [vmem:[%s1 + $0x17c] sm:$0xf]
  %v111 = vld [vmem:[%s1 + $0x180] sm:$0xf]
  %v112 = vld [vmem:[%s1 + $0x184] sm:$0xf]
  %v113 = vld [vmem:[%s1 + $0x188] sm:$0xf]
  %v114 = vld [vmem:[%s1 + $0x18c] sm:$0xf]
  %v115 = vld [vmem:[%s1 + $0x190] sm:$0xf]
  %v116 = vld [vmem:[%s1 + $0x194] sm:$0xf]
  %v117 = vld [vmem:[%s1 + $0x198] sm:$0xf]
  %v118 = vld [vmem:[%s1 + $0x19c] sm:$0xf]
  %v119 = vld [vmem:[%s1 + $0x1a0] sm:$0xf]
  %v120 = vld [vmem:[%s1 + $0x1a4] sm:$0xf]
  %v121 = vld [vmem:[%s1 + $0x1a8] sm:$0xf]
  %v122 = vld [vmem:[%s1 + $0x1ac] sm:$0xf]
  %v123 = vld [vmem:[%s1 + $0x1b0] sm:$0xf]
  %v124 = vld [vmem:[%s1 + $0x1b4] sm:$0xf]
  %v125 = vld [vmem:[%s1 + $0x1b8] sm:$0xf]
  %v126 = vld [vmem:[%s1 + $0x1bc] sm:$0xf]
  %v127 = vld [vmem:[%s1 + $0x1c0] sm:$0xf]
  %v128 = vld [vmem:[%s1 + $0x1c4] sm:$0xf]
  %v129 = vld [vmem:[%s1 + $0x1c8] sm:$0xf]
  %v130 = vld [vmem:[%s1 + $0x1cc] sm:$0xf]
  %v131 = vld [vmem:[%s1 + $0x1d0] sm:$0xf]
  %v132 = vld [vmem:[%s1 + $0x1d4] sm:$0xf]
  %v133 = vld [vmem:[%s1 + $0x1d8] sm:$0xf]
  %v134 = vld [vmem:[%s1 + $0x1dc] sm:$0xf]
  %v135 = vld [vmem:[%s1 + $0x1e0] sm:$0xf]
  %v136 = vld [vmem:[%s1 + $0x1e4] sm:$0xf]
  %v137 = vld [vmem:[%s1 + $0x1e8] sm:$0xf]
  %v138 = vld [vmem:[%s1 + $0x1ec] sm:$0xf]
  %v139 = vld [vmem:[%s1 + $0x1f0] sm:$0xf]
  %v140 = vld [vmem:[%s1 + $0x1f4] sm:$0xf]
  %v141 = vld [vmem:[%s1 + $0x1f8] sm:$0xf]
  %v142 = vld [vmem:[%s1 + $0x1fc] sm:$0xf]
  %v143 = vld [vmem:[%s0] sm:$0xff]
  %v144 = vld [vmem:[%s0 + $0x8] sm:$0xff]
  %v145 = vld [vmem:[%s0 + $0x10] sm:$0xff]
  %v146 = vld [vmem:[%s0 + $0x18] sm:$0xff]
  %v147 = vld [vmem:[%s0 + $0x20] sm:$0xff]
  %v148 = vld [vmem:[%s0 + $0x28] sm:$0xff]
  %v149 = vld [vmem:[%s0 + $0x30] sm:$0xff]
  %v150 = vld [vmem:[%s0 + $0x38] sm:$0xff]
  %v151 = vld [vmem:[%s0 + $0x40] sm:$0xff]
  %v152 = vld [vmem:[%s0 + $0x48] sm:$0xff]
  %v153 = vld [vmem:[%s0 + $0x50] sm:$0xff]
  %v154 = vld [vmem:[%s0 + $0x58] sm:$0xff]
  %v155 = vld [vmem:[%s0 + $0x60] sm:$0xff]
  %v156 = vld [vmem:[%s0 + $0x68] sm:$0xff]
  %v157 = vld [vmem:[%s0 + $0x70] sm:$0xff]
  %v158 = vld [vmem:[%s0 + $0x78] sm:$0xff]
  %v159 = vld [vmem:[%s0 + $0x80] sm:$0xff]
  %v160 = vld [vmem:[%s0 + $0x88] sm:$0xff]
  %v161 = vld [vmem:[%s0 + $0x90] sm:$0xff]
  %v162 = vld [vmem:[%s0 + $0x98] sm:$0xff]
  %v163 = vld [vmem:[%s0 + $0xa0] sm:$0xff]
  %v164 = vld [vmem:[%s0 + $0xa8] sm:$0xff]
  %v165 = vld [vmem:[%s0 + $0xb0] sm:$0xff]
  %v166 = vld [vmem:[%s0 + $0xb8] sm:$0xff]
  %v167 = vld [vmem:[%s0 + $0xc0] sm:$0xff]
  %v168 = vld [vmem:[%s0 + $0xc8] sm:$0xff]
  %v169 = vld [vmem:[%s0 + $0xd0] sm:$0xff]
  %v170 = vld [vmem:[%s0 + $0xd8] sm:$0xff]
  %v171 = vld [vmem:[%s0 + $0xe0] sm:$0xff]
  %v172 = vld [vmem:[%s0 + $0xe8] sm:$0xff]
  %v173 = vld [vmem:[%s0 + $0xf0] sm:$0xff]
  %v174 = vld [vmem:[%s0 + $0xf8] sm:$0xff]
  %v175 = vld [vmem:[%s0 + $0x100] sm:$0xff]
  %v176 = vld [vmem:[%s0 + $0x108] sm:$0xff]
  %v177 = vld [vmem:[%s0 + $0x110] sm:$0xff]
  %v178 = vld [vmem:[%s0 + $0x118] sm:$0xff]
  %v179 = vld [vmem:[%s0 + $0x120] sm:$0xff]
  %v180 = vld [vmem:[%s0 + $0x128] sm:$0xff]
  %v181 = vld [vmem:[%s0 + $0x130] sm:$0xff]
  %v182 = vld [vmem:[%s0 + $0x138] sm:$0xff]
  %v183 = vld [vmem:[%s0 + $0x140] sm:$0xff]
  %v184 = vld [vmem:[%s0 + $0x148] sm:$0xff]
  %v185 = vld [vmem:[%s0 + $0x150] sm:$0xff]
  %v186 = vld [vmem:[%s0 + $0x158] sm:$0xff]
  %v187 = vld [vmem:[%s0 + $0x160] sm:$0xff]
  %v188 = vld [vmem:[%s0 + $0x168] sm:$0xff]
  %v189 = vld [vmem:[%s0 + $0x170] sm:$0xff]
  %v190 = vld [vmem:[%s0 + $0x178] sm:$0xff]
  %v191 = vld [vmem:[%s0 + $0x180] sm:$0xff]
  %v192 = vld [vmem:[%s0 + $0x188] sm:$0xff]
  %v193 = vld [vmem:[%s0 + $0x190] sm:$0xff]
  %v194 = vld [vmem:[%s0 + $0x198] sm:$0xff]
  %v247 = vunpack.c.l.b16 %v143
  %v248 = vunpack.c.h.b16 %v143
  %v249 = vunpack.c.l.b16 %v144
  %v250 = vunpack.c.h.b16 %v144
  %v251 = vunpack.c.l.b16 %v145
  %v252 = vunpack.c.h.b16 %v145
  %v253 = vunpack.c.l.b16 %v146
  %v254 = vunpack.c.h.b16 %v146
  %v255 = vunpack.c.l.b16 %v147
  %v256 = vunpack.c.h.b16 %v147
  %v257 = vunpack.c.l.b16 %v148
  %v258 = vunpack.c.h.b16 %v148
  %v259 = vunpack.c.l.b16 %v149
  %v260 = vunpack.c.h.b16 %v149
  %v261 = vunpack.c.l.b16 %v150
  %v262 = vunpack.c.h.b16 %v150
  %v263 = vunpack.c.l.b16 %v151
  %v264 = vunpack.c.h.b16 %v151
  %v265 = vunpack.c.l.b16 %v152
  %v266 = vunpack.c.h.b16 %v152
  %v267 = vunpack.c.l.b16 %v153
  %v268 = vunpack.c.h.b16 %v153
  %v269 = vunpack.c.l.b16 %v154
  %v270 = vunpack.c.h.b16 %v154
  %v271 = vunpack.c.l.b16 %v155
  %v272 = vunpack.c.h.b16 %v155
  %v273 = vunpack.c.l.b16 %v156
  %v274 = vunpack.c.h.b16 %v156
  %v275 = vunpack.c.l.b16 %v157
  %v276 = vunpack.c.h.b16 %v157
  %v277 = vunpack.c.l.b16 %v158
  %v278 = vunpack.c.h.b16 %v158
  %v279 = vunpack.c.l.b16 %v159
  %v280 = vunpack.c.h.b16 %v159
  %v281 = vunpack.c.l.b16 %v160
  %v282 = vunpack.c.h.b16 %v160
  %v283 = vunpack.c.l.b16 %v161
  %v284 = vunpack.c.h.b16 %v161
  %v285 = vunpack.c.l.b16 %v162
  %v286 = vunpack.c.h.b16 %v162
  %v287 = vunpack.c.l.b16 %v163
  %v288 = vunpack.c.h.b16 %v163
  %v289 = vunpack.c.l.b16 %v164
  %v290 = vunpack.c.h.b16 %v164
  %v291 = vunpack.c.l.b16 %v165
  %v292 = vunpack.c.h.b16 %v165
  %v293 = vunpack.c.l.b16 %v166
  %v294 = vunpack.c.h.b16 %v166
  %v295 = vunpack.c.l.b16 %v167
  %v296 = vunpack.c.h.b16 %v167
  %v297 = vunpack.c.l.b16 %v168
  %v298 = vunpack.c.h.b16 %v168
  %v299 = vunpack.c.l.b16 %v169
  %v300 = vunpack.c.h.b16 %v169
  %v301 = vunpack.c.l.b16 %v170
  %v302 = vunpack.c.h.b16 %v170
  %v303 = vunpack.c.l.b16 %v171
  %v304 = vunpack.c.h.b16 %v171
  %v305 = vunpack.c.l.b16 %v172
  %v306 = vunpack.c.h.b16 %v172
  %v307 = vunpack.c.l.b16 %v173
  %v308 = vunpack.c.h.b16 %v173
  %v309 = vunpack.c.l.b16 %v174
  %v310 = vunpack.c.h.b16 %v174
  %v311 = vunpack.c.l.b16 %v175
  %v312 = vunpack.c.h.b16 %v175
  %v313 = vunpack.c.l.b16 %v176
  %v314 = vunpack.c.h.b16 %v176
  %v315 = vunpack.c.l.b16 %v177
  %v316 = vunpack.c.h.b16 %v177
  %v317 = vunpack.c.l.b16 %v178
  %v318 = vunpack.c.h.b16 %v178
  %v319 = vunpack.c.l.b16 %v179
  %v320 = vunpack.c.h.b16 %v179
  %v321 = vunpack.c.l.b16 %v180
  %v322 = vunpack.c.h.b16 %v180
  %v323 = vunpack.c.l.b16 %v181
  %v324 = vunpack.c.h.b16 %v181
  %v325 = vunpack.c.l.b16 %v182
  %v326 = vunpack.c.h.b16 %v182
  %v327 = vunpack.c.l.b16 %v183
  %v328 = vunpack.c.h.b16 %v183
  %v329 = vunpack.c.l.b16 %v184
  %v330 = vunpack.c.h.b16 %v184
  %v331 = vunpack.c.l.b16 %v185
  %v332 = vunpack.c.h.b16 %v185
  %v333 = vunpack.c.l.b16 %v186
  %v334 = vunpack.c.h.b16 %v186
  %v335 = vunpack.c.l.b16 %v187
  %v336 = vunpack.c.h.b16 %v187
  %v337 = vunpack.c.l.b16 %v188
  %v338 = vunpack.c.h.b16 %v188
  %v339 = vunpack.c.l.b16 %v189
  %v340 = vunpack.c.h.b16 %v189
  %v341 = vunpack.c.l.b16 %v190
  %v342 = vunpack.c.h.b16 %v190
  %v343 = vunpack.c.l.b16 %v191
  %v344 = vunpack.c.h.b16 %v191
  %v345 = vunpack.c.l.b16 %v192
  %v346 = vunpack.c.h.b16 %v192
  %v347 = vunpack.c.l.b16 %v193
  %v348 = vunpack.c.h.b16 %v193
  %v349 = vunpack.c.l.b16 %v194
  %v350 = vunpack.c.h.b16 %v194
  %v351 = vpack.c.b16 %v255, %v247
  %v352 = vpack.c.b16 %v256, %v248
  %v353 = vpack.c.b16 %v257, %v249
  %v354 = vpack.c.b16 %v258, %v250
  %v355 = vpack.c.b16 %v259, %v251
  %v356 = vpack.c.b16 %v260, %v252
  %v357 = vpack.c.b16 %v261, %v253
  %v358 = vpack.c.b16 %v262, %v254
  %v359 = vpack.c.b16 %v271, %v263
  %v360 = vpack.c.b16 %v272, %v264
  %v361 = vpack.c.b16 %v273, %v265
  %v362 = vpack.c.b16 %v274, %v266
  %v363 = vpack.c.b16 %v275, %v267
  %v364 = vpack.c.b16 %v276, %v268
  %v365 = vpack.c.b16 %v277, %v269
  %v366 = vpack.c.b16 %v278, %v270
  %v367 = vpack.c.b16 %v287, %v279
  %v368 = vpack.c.b16 %v288, %v280
  %v369 = vpack.c.b16 %v289, %v281
  %v370 = vpack.c.b16 %v290, %v282
  %v371 = vpack.c.b16 %v291, %v283
  %v372 = vpack.c.b16 %v292, %v284
  %v373 = vpack.c.b16 %v293, %v285
  %v374 = vpack.c.b16 %v294, %v286
  %v375 = vpack.c.b16 %v303, %v295
  %v376 = vpack.c.b16 %v304, %v296
  %v377 = vpack.c.b16 %v305, %v297
  %v378 = vpack.c.b16 %v306, %v298
  %v379 = vpack.c.b16 %v307, %v299
  %v380 = vpack.c.b16 %v308, %v300
  %v381 = vpack.c.b16 %v309, %v301
  %v382 = vpack.c.b16 %v310, %v302
  %v383 = vpack.c.b16 %v319, %v311
  %v384 = vpack.c.b16 %v320, %v312
  %v385 = vpack.c.b16 %v321, %v313
  %v386 = vpack.c.b16 %v322, %v314
  %v387 = vpack.c.b16 %v323, %v315
  %v388 = vpack.c.b16 %v324, %v316
  %v389 = vpack.c.b16 %v325, %v317
  %v390 = vpack.c.b16 %v326, %v318
  %v391 = vpack.c.b16 %v335, %v327
  %v392 = vpack.c.b16 %v336, %v328
  %v393 = vpack.c.b16 %v337, %v329
  %v394 = vpack.c.b16 %v338, %v330
  %v395 = vpack.c.b16 %v339, %v331
  %v396 = vpack.c.b16 %v340, %v332
  %v397 = vpack.c.b16 %v341, %v333
  %v398 = vpack.c.b16 %v342, %v334
  %v399 = vpack.c.b16 %v343, %v343
  %v400 = vpack.c.b16 %v344, %v344
  %v401 = vpack.c.b16 %v345, %v345
  %v402 = vpack.c.b16 %v346, %v346
  %v403 = vpack.c.b16 %v347, %v347
  %v404 = vpack.c.b16 %v348, %v348
  %v405 = vpack.c.b16 %v349, %v349
  %v406 = vpack.c.b16 %v350, %v350
  %v591 = vunpack.c.l.b16 %v15
  %v592 = vunpack.c.l.b16 %v16
  %v593 = vunpack.c.l.b16 %v17
  %v594 = vunpack.c.l.b16 %v18
  %v595 = vunpack.c.l.b16 %v19
  %v596 = vunpack.c.l.b16 %v20
  %v597 = vunpack.c.l.b16 %v21
  %v598 = vunpack.c.l.b16 %v22
  %v599 = vunpack.c.l.b16 %v23
  %v600 = vunpack.c.l.b16 %v24
  %v601 = vunpack.c.l.b16 %v25
  %v602 = vunpack.c.l.b16 %v26
  %v603 = vunpack.c.l.b16 %v27
  %v604 = vunpack.c.l.b16 %v28
  %v605 = vunpack.c.l.b16 %v29
  %v606 = vunpack.c.l.b16 %v30
  %v607 = vunpack.c.l.b16 %v31
  %v608 = vunpack.c.l.b16 %v32
  %v609 = vunpack.c.l.b16 %v33
  %v610 = vunpack.c.l.b16 %v34
  %v611 = vunpack.c.l.b16 %v35
  %v612 = vunpack.c.l.b16 %v36
  %v613 = vunpack.c.l.b16 %v37
  %v614 = vunpack.c.l.b16 %v38
  %v615 = vunpack.c.l.b16 %v39
  %v616 = vunpack.c.l.b16 %v40
  %v617 = vunpack.c.l.b16 %v41
  %v618 = vunpack.c.l.b16 %v42
  %v619 = vunpack.c.l.b16 %v43
  %v620 = vunpack.c.l.b16 %v44
  %v621 = vunpack.c.l.b16 %v45
  %v622 = vunpack.c.l.b16 %v46
  %v623 = vunpack.c.l.b16 %v47
  %v624 = vunpack.c.l.b16 %v48
  %v625 = vunpack.c.l.b16 %v49
  %v626 = vunpack.c.l.b16 %v50
  %v627 = vunpack.c.l.b16 %v51
  %v628 = vunpack.c.l.b16 %v52
  %v629 = vunpack.c.l.b16 %v53
  %v630 = vunpack.c.l.b16 %v54
  %v631 = vunpack.c.l.b16 %v55
  %v632 = vunpack.c.l.b16 %v56
  %v633 = vunpack.c.l.b16 %v57
  %v634 = vunpack.c.l.b16 %v58
  %v635 = vunpack.c.l.b16 %v59
  %v636 = vunpack.c.l.b16 %v60
  %v637 = vunpack.c.l.b16 %v61
  %v638 = vunpack.c.l.b16 %v62
  %v639 = vunpack.c.l.b16 %v63
  %v640 = vunpack.c.l.b16 %v64
  %v641 = vunpack.c.l.b16 %v65
  %v642 = vunpack.c.l.b16 %v66
  %v643 = vunpack.c.l.b16 %v67
  %v644 = vunpack.c.l.b16 %v68
  %v645 = vunpack.c.l.b16 %v69
  %v646 = vunpack.c.l.b16 %v70
  %v647 = vunpack.c.l.b16 %v71
  %v648 = vunpack.c.l.b16 %v72
  %v649 = vunpack.c.l.b16 %v73
  %v650 = vunpack.c.l.b16 %v74
  %v651 = vunpack.c.l.b16 %v75
  %v652 = vunpack.c.l.b16 %v76
  %v653 = vunpack.c.l.b16 %v77
  %v654 = vunpack.c.l.b16 %v78
  %v655 = vunpack.c.l.b16 %v79
  %v656 = vunpack.c.l.b16 %v80
  %v657 = vunpack.c.l.b16 %v81
  %v658 = vunpack.c.l.b16 %v82
  %v659 = vunpack.c.l.b16 %v83
  %v660 = vunpack.c.l.b16 %v84
  %v661 = vunpack.c.l.b16 %v85
  %v662 = vunpack.c.l.b16 %v86
  %v663 = vunpack.c.l.b16 %v87
  %v664 = vunpack.c.l.b16 %v88
  %v665 = vunpack.c.l.b16 %v89
  %v666 = vunpack.c.l.b16 %v90
  %v667 = vunpack.c.l.b16 %v91
  %v668 = vunpack.c.l.b16 %v92
  %v669 = vunpack.c.l.b16 %v93
  %v670 = vunpack.c.l.b16 %v94
  %v671 = vunpack.c.l.b16 %v95
  %v672 = vunpack.c.l.b16 %v96
  %v673 = vunpack.c.l.b16 %v97
  %v674 = vunpack.c.l.b16 %v98
  %v675 = vunpack.c.l.b16 %v99
  %v676 = vunpack.c.l.b16 %v100
  %v677 = vunpack.c.l.b16 %v101
  %v678 = vunpack.c.l.b16 %v102
  %v679 = vunpack.c.l.b16 %v103
  %v680 = vunpack.c.l.b16 %v104
  %v681 = vunpack.c.l.b16 %v105
  %v682 = vunpack.c.l.b16 %v106
  %v683 = vunpack.c.l.b16 %v107
  %v684 = vunpack.c.l.b16 %v108
  %v685 = vunpack.c.l.b16 %v109
  %v686 = vunpack.c.l.b16 %v110
  %v687 = vunpack.c.l.b16 %v111
  %v688 = vunpack.c.l.b16 %v112
  %v689 = vunpack.c.l.b16 %v113
  %v690 = vunpack.c.l.b16 %v114
  %v691 = vunpack.c.l.b16 %v115
  %v692 = vunpack.c.l.b16 %v116
  %v693 = vunpack.c.l.b16 %v117
  %v694 = vunpack.c.l.b16 %v118
  %v695 = vunpack.c.l.b16 %v119
  %v696 = vunpack.c.l.b16 %v120
  %v697 = vunpack.c.l.b16 %v121
  %v698 = vunpack.c.l.b16 %v122
  %v699 = vunpack.c.l.b16 %v123
  %v700 = vunpack.c.l.b16 %v124
  %v701 = vunpack.c.l.b16 %v125
  %v702 = vunpack.c.l.b16 %v126
  %v703 = vunpack.c.l.b16 %v127
  %v704 = vunpack.c.l.b16 %v128
  %v705 = vunpack.c.l.b16 %v129
  %v706 = vunpack.c.l.b16 %v130
  %v707 = vunpack.c.l.b16 %v131
  %v708 = vunpack.c.l.b16 %v132
  %v709 = vunpack.c.l.b16 %v133
  %v710 = vunpack.c.l.b16 %v134
  %v711 = vunpack.c.l.b16 %v135
  %v712 = vunpack.c.l.b16 %v136
  %v713 = vunpack.c.l.b16 %v137
  %v714 = vunpack.c.l.b16 %v138
  %v715 = vunpack.c.l.b16 %v139
  %v716 = vunpack.c.l.b16 %v140
  %v717 = vunpack.c.l.b16 %v141
  %v718 = vunpack.c.l.b16 %v142
  %v719 = vpack.c.b16 %v592, %v591
  %v720 = vpack.c.b16 %v594, %v593
  %v721 = vpack.c.b16 %v596, %v595
  %v722 = vpack.c.b16 %v598, %v597
  %v723 = vpack.c.b16 %v600, %v599
  %v724 = vpack.c.b16 %v602, %v601
  %v725 = vpack.c.b16 %v604, %v603
  %v726 = vpack.c.b16 %v606, %v605
  %v727 = vpack.c.b16 %v608, %v607
  %v728 = vpack.c.b16 %v610, %v609
  %v729 = vpack.c.b16 %v612, %v611
  %v730 = vpack.c.b16 %v614, %v613
  %v731 = vpack.c.b16 %v616, %v615
  %v732 = vpack.c.b16 %v618, %v617
  %v733 = vpack.c.b16 %v620, %v619
  %v734 = vpack.c.b16 %v622, %v621
  %v735 = vpack.c.b16 %v624, %v623
  %v736 = vpack.c.b16 %v626, %v625
  %v737 = vpack.c.b16 %v628, %v627
  %v738 = vpack.c.b16 %v630, %v629
  %v739 = vpack.c.b16 %v632, %v631
  %v740 = vpack.c.b16 %v634, %v633
  %v741 = vpack.c.b16 %v636, %v635
  %v742 = vpack.c.b16 %v638, %v637
  %v743 = vpack.c.b16 %v640, %v639
  %v744 = vpack.c.b16 %v642, %v641
  %v745 = vpack.c.b16 %v644, %v643
  %v746 = vpack.c.b16 %v646, %v645
  %v747 = vpack.c.b16 %v648, %v647
  %v748 = vpack.c.b16 %v650, %v649
  %v749 = vpack.c.b16 %v652, %v651
  %v750 = vpack.c.b16 %v654, %v653
  %v751 = vpack.c.b16 %v656, %v655
  %v752 = vpack.c.b16 %v658, %v657
  %v753 = vpack.c.b16 %v660, %v659
  %v754 = vpack.c.b16 %v662, %v661
  %v755 = vpack.c.b16 %v664, %v663
  %v756 = vpack.c.b16 %v666, %v665
  %v757 = vpack.c.b16 %v668, %v667
  %v758 = vpack.c.b16 %v670, %v669
  %v759 = vpack.c.b16 %v672, %v671
  %v760 = vpack.c.b16 %v674, %v673
  %v761 = vpack.c.b16 %v676, %v675
  %v762 = vpack.c.b16 %v678, %v677
  %v763 = vpack.c.b16 %v680, %v679
  %v764 = vpack.c.b16 %v682, %v681
  %v765 = vpack.c.b16 %v684, %v683
  %v766 = vpack.c.b16 %v686, %v685
  %v767 = vpack.c.b16 %v688, %v687
  %v768 = vpack.c.b16 %v690, %v689
  %v769 = vpack.c.b16 %v692, %v691
  %v770 = vpack.c.b16 %v694, %v693
  %v771 = vpack.c.b16 %v696, %v695
  %v772 = vpack.c.b16 %v698, %v697
  %v773 = vpack.c.b16 %v700, %v699
  %v774 = vpack.c.b16 %v702, %v701
  %v775 = vpack.c.b16 %v704, %v703
  %v776 = vpack.c.b16 %v706, %v705
  %v777 = vpack.c.b16 %v708, %v707
  %v778 = vpack.c.b16 %v710, %v709
  %v779 = vpack.c.b16 %v712, %v711
  %v780 = vpack.c.b16 %v714, %v713
  %v781 = vpack.c.b16 %v716, %v715
  %v782 = vpack.c.b16 %v718, %v717
  %847 = vmatprep.subr.bf16.mxu0 0
  %848 = vmatpush1.bf16.msra.mxu0 %v726
  %849 = vmatprep.subr.bf16.mxu0 0
  %850 = vmatpush1.bf16.msra.mxu0 %v725
  %851 = vmatprep.subr.bf16.mxu0 0
  %852 = vmatpush1.bf16.msra.mxu0 %v724
  %853 = vmatprep.subr.bf16.mxu0 0
  %854 = vmatpush1.bf16.msra.mxu0 %v723
  %855 = vmatprep.subr.bf16.mxu0 0
  %856 = vmatpush1.bf16.msra.mxu0 %v722
  %857 = vmatprep.subr.bf16.mxu0 0
  %858 = vmatpush1.bf16.msra.mxu0 %v721
  %859 = vmatprep.subr.bf16.mxu0 0
  %860 = vmatpush1.bf16.msra.mxu0 %v720
  %861 = vmatprep.subr.bf16.mxu0 0
  %862 = vmatpush1.bf16.msra.mxu0 %v719
  %863 = vmatprep.subr.bf16.mxu0 0
  %864 = vmatpush2.bf16.msra.mxu0 %v734
  %865 = vmatprep.subr.bf16.mxu0 0
  %866 = vmatpush2.bf16.msra.mxu0 %v733
  %867 = vmatprep.subr.bf16.mxu0 0
  %868 = vmatpush2.bf16.msra.mxu0 %v732
  %869 = vmatprep.subr.bf16.mxu0 0
  %870 = vmatpush2.bf16.msra.mxu0 %v731
  %871 = vmatprep.subr.bf16.mxu0 0
  %872 = vmatpush2.bf16.msra.mxu0 %v730
  %873 = vmatprep.subr.bf16.mxu0 0
  %874 = vmatpush2.bf16.msra.mxu0 %v729
  %875 = vmatprep.subr.bf16.mxu0 0
  %876 = vmatpush2.bf16.msra.mxu0 %v728
  %877 = vmatprep.subr.bf16.mxu0 0
  %878 = vmatpush2.bf16.msra.mxu0 %v727
  %879 = vmatprep.mubr.bf16.mxu0 %v352
  %880 = vmatmul.mubr.bf16.gmra.mxu0 %v351
  %v881 = vpop.f32.mrf.mxu0
  %v882 = vadd.f32 0.0, %v881
  %v883 = vpop.f32.mrf.mxu0
  %v884 = vpop.f32.mrf.mxu0
  %v885 = vadd.f32 0.0, %v884
  %v886 = vpop.f32.mrf.mxu0
  %887 = vmatprep.mubr.bf16.mxu0 %v360
  %888 = vmatmul.mubr.bf16.gmra.mxu0 %v359
  %v889 = vpop.f32.mrf.mxu0
  %v890 = vadd.f32 0.0, %v889
  %v891 = vpop.f32.mrf.mxu0
  %v892 = vpop.f32.mrf.mxu0
  %v893 = vadd.f32 0.0, %v892
  %v894 = vpop.f32.mrf.mxu0
  %895 = vmatprep.mubr.bf16.mxu0 %v368
  %896 = vmatmul.mubr.bf16.gmra.mxu0 %v367
  %v897 = vpop.f32.mrf.mxu0
  %v898 = vadd.f32 0.0, %v897
  %v899 = vpop.f32.mrf.mxu0
  %v900 = vpop.f32.mrf.mxu0
  %v901 = vadd.f32 0.0, %v900
  %v902 = vpop.f32.mrf.mxu0
  %903 = vmatprep.mubr.bf16.mxu0 %v376
  %904 = vmatmul.mubr.bf16.gmra.mxu0 %v375
  %v905 = vpop.f32.mrf.mxu0
  %v906 = vadd.f32 0.0, %v905
  %v907 = vpop.f32.mrf.mxu0
  %v908 = vpop.f32.mrf.mxu0
  %v909 = vadd.f32 0.0, %v908
  %v910 = vpop.f32.mrf.mxu0
  %911 = vmatprep.mubr.bf16.mxu0 %v384
  %912 = vmatmul.mubr.bf16.gmra.mxu0 %v383
  %v913 = vpop.f32.mrf.mxu0
  %v914 = vadd.f32 0.0, %v913
  %v915 = vpop.f32.mrf.mxu0
  %v916 = vpop.f32.mrf.mxu0
  %v917 = vadd.f32 0.0, %v916
  %v918 = vpop.f32.mrf.mxu0
  %919 = vmatprep.mubr.bf16.mxu0 %v392
  %920 = vmatmul.mubr.bf16.gmra.mxu0 %v391
  %v921 = vpop.f32.mrf.mxu0
  %v922 = vadd.f32 0.0, %v921
  %v923 = vpop.f32.mrf.mxu0
  %v924 = vpop.f32.mrf.mxu0
  %v925 = vadd.f32 0.0, %v924
  %v926 = vpop.f32.mrf.mxu0
  %927 = vmatprep.mubr.bf16.mxu0 %v400
  %928 = vmatmul.mubr.bf16.gmra.mxu0 %v399
  %v929 = vpop.f32.mrf.mxu0
  %v930 = vadd.f32 0.0, %v929
  %v931 = vpop.f32.mrf.mxu0
  %v932 = vpop.f32.mrf.mxu0
  %v933 = vpop.f32.mrf.mxu0
  %934 = vdwg.mxu0
  %935 = vmatprep.subr.bf16.mxu0 0
  %936 = vmatpush1.bf16.msra.mxu0 %v742
  %937 = vmatprep.subr.bf16.mxu0 0
  %938 = vmatpush1.bf16.msra.mxu0 %v741
  %939 = vmatprep.subr.bf16.mxu0 0
  %940 = vmatpush1.bf16.msra.mxu0 %v740
  %941 = vmatprep.subr.bf16.mxu0 0
  %942 = vmatpush1.bf16.msra.mxu0 %v739
  %943 = vmatprep.subr.bf16.mxu0 0
  %944 = vmatpush1.bf16.msra.mxu0 %v738
  %945 = vmatprep.subr.bf16.mxu0 0
  %946 = vmatpush1.bf16.msra.mxu0 %v737
  %947 = vmatprep.subr.bf16.mxu0 0
  %948 = vmatpush1.bf16.msra.mxu0 %v736
  %949 = vmatprep.subr.bf16.mxu0 0
  %950 = vmatpush1.bf16.msra.mxu0 %v735
  %951 = vmatprep.subr.bf16.mxu0 0
  %952 = vmatpush2.bf16.msra.mxu0 %v750
  %953 = vmatprep.subr.bf16.mxu0 0
  %954 = vmatpush2.bf16.msra.mxu0 %v749
  %955 = vmatprep.subr.bf16.mxu0 0
  %956 = vmatpush2.bf16.msra.mxu0 %v748
  %957 = vmatprep.subr.bf16.mxu0 0
  %958 = vmatpush2.bf16.msra.mxu0 %v747
  %959 = vmatprep.subr.bf16.mxu0 0
  %960 = vmatpush2.bf16.msra.mxu0 %v746
  %961 = vmatprep.subr.bf16.mxu0 0
  %962 = vmatpush2.bf16.msra.mxu0 %v745
  %963 = vmatprep.subr.bf16.mxu0 0
  %964 = vmatpush2.bf16.msra.mxu0 %v744
  %965 = vmatprep.subr.bf16.mxu0 0
  %966 = vmatpush2.bf16.msra.mxu0 %v743
  %967 = vmatprep.mubr.bf16.mxu0 %v354
  %968 = vmatmul.mubr.bf16.gmra.mxu0 %v353
  %v969 = vpop.f32.mrf.mxu0
  %v970 = vadd.f32 %v882, %v969
  %v971 = vpop.f32.mrf.mxu0
  %v972 = vpop.f32.mrf.mxu0
  %v973 = vadd.f32 %v885, %v972
  %v974 = vpop.f32.mrf.mxu0
  %975 = vmatprep.mubr.bf16.mxu0 %v362
  %976 = vmatmul.mubr.bf16.gmra.mxu0 %v361
  %v977 = vpop.f32.mrf.mxu0
  %v978 = vadd.f32 %v890, %v977
  %v979 = vpop.f32.mrf.mxu0
  %v980 = vpop.f32.mrf.mxu0
  %v981 = vadd.f32 %v893, %v980
  %v982 = vpop.f32.mrf.mxu0
  %983 = vmatprep.mubr.bf16.mxu0 %v370
  %984 = vmatmul.mubr.bf16.gmra.mxu0 %v369
  %v985 = vpop.f32.mrf.mxu0
  %v986 = vadd.f32 %v898, %v985
  %v987 = vpop.f32.mrf.mxu0
  %v988 = vpop.f32.mrf.mxu0
  %v989 = vadd.f32 %v901, %v988
  %v990 = vpop.f32.mrf.mxu0
  %991 = vmatprep.mubr.bf16.mxu0 %v378
  %992 = vmatmul.mubr.bf16.gmra.mxu0 %v377
  %v993 = vpop.f32.mrf.mxu0
  %v994 = vadd.f32 %v906, %v993
  %v995 = vpop.f32.mrf.mxu0
  %v996 = vpop.f32.mrf.mxu0
  %v997 = vadd.f32 %v909, %v996
  %v998 = vpop.f32.mrf.mxu0
  %999 = vmatprep.mubr.bf16.mxu0 %v386
  %1000 = vmatmul.mubr.bf16.gmra.mxu0 %v385
  %v1001 = vpop.f32.mrf.mxu0
  %v1002 = vadd.f32 %v914, %v1001
  %v1003 = vpop.f32.mrf.mxu0
  %v1004 = vpop.f32.mrf.mxu0
  %v1005 = vadd.f32 %v917, %v1004
  %v1006 = vpop.f32.mrf.mxu0
  %1007 = vmatprep.mubr.bf16.mxu0 %v394
  %1008 = vmatmul.mubr.bf16.gmra.mxu0 %v393
  %v1009 = vpop.f32.mrf.mxu0
  %v1010 = vadd.f32 %v922, %v1009
  %v1011 = vpop.f32.mrf.mxu0
  %v1012 = vpop.f32.mrf.mxu0
  %v1013 = vadd.f32 %v925, %v1012
  %v1014 = vpop.f32.mrf.mxu0
  %1015 = vmatprep.mubr.bf16.mxu0 %v402
  %1016 = vmatmul.mubr.bf16.gmra.mxu0 %v401
  %v1017 = vpop.f32.mrf.mxu0
  %v1018 = vadd.f32 %v930, %v1017
  %v1019 = vpop.f32.mrf.mxu0
  %v1020 = vpop.f32.mrf.mxu0
  %v1021 = vpop.f32.mrf.mxu0
  %1022 = vdwg.mxu0
  %1023 = vmatprep.subr.bf16.mxu0 0
  %1024 = vmatpush1.bf16.msra.mxu0 %v758
  %1025 = vmatprep.subr.bf16.mxu0 0
  %1026 = vmatpush1.bf16.msra.mxu0 %v757
  %1027 = vmatprep.subr.bf16.mxu0 0
  %1028 = vmatpush1.bf16.msra.mxu0 %v756
  %1029 = vmatprep.subr.bf16.mxu0 0
  %1030 = vmatpush1.bf16.msra.mxu0 %v755
  %1031 = vmatprep.subr.bf16.mxu0 0
  %1032 = vmatpush1.bf16.msra.mxu0 %v754
  %1033 = vmatprep.subr.bf16.mxu0 0
  %1034 = vmatpush1.bf16.msra.mxu0 %v753
  %1035 = vmatprep.subr.bf16.mxu0 0
  %1036 = vmatpush1.bf16.msra.mxu0 %v752
  %1037 = vmatprep.subr.bf16.mxu0 0
  %1038 = vmatpush1.bf16.msra.mxu0 %v751
  %1039 = vmatprep.subr.bf16.mxu0 0
  %1040 = vmatpush2.bf16.msra.mxu0 %v766
  %1041 = vmatprep.subr.bf16.mxu0 0
  %1042 = vmatpush2.bf16.msra.mxu0 %v765
  %1043 = vmatprep.subr.bf16.mxu0 0
  %1044 = vmatpush2.bf16.msra.mxu0 %v764
  %1045 = vmatprep.subr.bf16.mxu0 0
  %1046 = vmatpush2.bf16.msra.mxu0 %v763
  %1047 = vmatprep.subr.bf16.mxu0 0
  %1048 = vmatpush2.bf16.msra.mxu0 %v762
  %1049 = vmatprep.subr.bf16.mxu0 0
  %1050 = vmatpush2.bf16.msra.mxu0 %v761
  %1051 = vmatprep.subr.bf16.mxu0 0
  %1052 = vmatpush2.bf16.msra.mxu0 %v760
  %1053 = vmatprep.subr.bf16.mxu0 0
  %1054 = vmatpush2.bf16.msra.mxu0 %v759
  %1055 = vmatprep.mubr.bf16.mxu0 %v356
  %1056 = vmatmul.mubr.bf16.gmra.mxu0 %v355
  %v1057 = vpop.f32.mrf.mxu0
  %v1058 = vadd.f32 %v970, %v1057
  %v1059 = vpop.f32.mrf.mxu0
  %v1060 = vpop.f32.mrf.mxu0
  %v1061 = vadd.f32 %v973, %v1060
  %v1062 = vpop.f32.mrf.mxu0
  %1063 = vmatprep.mubr.bf16.mxu0 %v364
  %1064 = vmatmul.mubr.bf16.gmra.mxu0 %v363
  %v1065 = vpop.f32.mrf.mxu0
  %v1066 = vadd.f32 %v978, %v1065
  %v1067 = vpop.f32.mrf.mxu0
  %v1068 = vpop.f32.mrf.mxu0
  %v1069 = vadd.f32 %v981, %v1068
  %v1070 = vpop.f32.mrf.mxu0
  %1071 = vmatprep.mubr.bf16.mxu0 %v372
  %1072 = vmatmul.mubr.bf16.gmra.mxu0 %v371
  %v1073 = vpop.f32.mrf.mxu0
  %v1074 = vadd.f32 %v986, %v1073
  %v1075 = vpop.f32.mrf.mxu0
  %v1076 = vpop.f32.mrf.mxu0
  %v1077 = vadd.f32 %v989, %v1076
  %v1078 = vpop.f32.mrf.mxu0
  %1079 = vmatprep.mubr.bf16.mxu0 %v380
  %1080 = vmatmul.mubr.bf16.gmra.mxu0 %v379
  %v1081 = vpop.f32.mrf.mxu0
  %v1082 = vadd.f32 %v994, %v1081
  %v1083 = vpop.f32.mrf.mxu0
  %v1084 = vpop.f32.mrf.mxu0
  %v1085 = vadd.f32 %v997, %v1084
  %v1086 = vpop.f32.mrf.mxu0
  %1087 = vmatprep.mubr.bf16.mxu0 %v388
  %1088 = vmatmul.mubr.bf16.gmra.mxu0 %v387
  %v1089 = vpop.f32.mrf.mxu0
  %v1090 = vadd.f32 %v1002, %v1089
  %v1091 = vpop.f32.mrf.mxu0
  %v1092 = vpop.f32.mrf.mxu0
  %v1093 = vadd.f32 %v1005, %v1092
  %v1094 = vpop.f32.mrf.mxu0
  %1095 = vmatprep.mubr.bf16.mxu0 %v396
  %1096 = vmatmul.mubr.bf16.gmra.mxu0 %v395
  %v1097 = vpop.f32.mrf.mxu0
  %v1098 = vadd.f32 %v1010, %v1097
  %v1099 = vpop.f32.mrf.mxu0
  %v1100 = vpop.f32.mrf.mxu0
  %v1101 = vadd.f32 %v1013, %v1100
  %v1102 = vpop.f32.mrf.mxu0
  %1103 = vmatprep.mubr.bf16.mxu0 %v404
  %1104 = vmatmul.mubr.bf16.gmra.mxu0 %v403
  %v1105 = vpop.f32.mrf.mxu0
  %v1106 = vadd.f32 %v1018, %v1105
  %v1107 = vpop.f32.mrf.mxu0
  %v1108 = vpop.f32.mrf.mxu0
  %v1109 = vpop.f32.mrf.mxu0
  %1110 = vdwg.mxu0
  %1111 = vmatprep.subr.bf16.mxu0 0
  %1112 = vmatpush1.bf16.msra.mxu0 %v774
  %1113 = vmatprep.subr.bf16.mxu0 0
  %1114 = vmatpush1.bf16.msra.mxu0 %v773
  %1115 = vmatprep.subr.bf16.mxu0 0
  %1116 = vmatpush1.bf16.msra.mxu0 %v772
  %1117 = vmatprep.subr.bf16.mxu0 0
  %1118 = vmatpush1.bf16.msra.mxu0 %v771
  %1119 = vmatprep.subr.bf16.mxu0 0
  %1120 = vmatpush1.bf16.msra.mxu0 %v770
  %1121 = vmatprep.subr.bf16.mxu0 0
  %1122 = vmatpush1.bf16.msra.mxu0 %v769
  %1123 = vmatprep.subr.bf16.mxu0 0
  %1124 = vmatpush1.bf16.msra.mxu0 %v768
  %1125 = vmatprep.subr.bf16.mxu0 0
  %1126 = vmatpush1.bf16.msra.mxu0 %v767
  %1127 = vmatprep.subr.bf16.mxu0 0
  %1128 = vmatpush2.bf16.msra.mxu0 %v782
  %1129 = vmatprep.subr.bf16.mxu0 0
  %1130 = vmatpush2.bf16.msra.mxu0 %v781
  %1131 = vmatprep.subr.bf16.mxu0 0
  %1132 = vmatpush2.bf16.msra.mxu0 %v780
  %1133 = vmatprep.subr.bf16.mxu0 0
  %1134 = vmatpush2.bf16.msra.mxu0 %v779
  %1135 = vmatprep.subr.bf16.mxu0 0
  %1136 = vmatpush2.bf16.msra.mxu0 %v778
  %1137 = vmatprep.subr.bf16.mxu0 0
  %1138 = vmatpush2.bf16.msra.mxu0 %v777
  %1139 = vmatprep.subr.bf16.mxu0 0
  %1140 = vmatpush2.bf16.msra.mxu0 %v776
  %1141 = vmatprep.subr.bf16.mxu0 0
  %1142 = vmatpush2.bf16.msra.mxu0 %v775
  %1143 = vmatprep.mubr.bf16.mxu0 %v358
  %1144 = vmatmul.mubr.bf16.gmra.mxu0 %v357
  %v1145 = vpop.f32.mrf.mxu0
  %v1146 = vadd.f32 %v1058, %v1145
  %v1147 = vpop.f32.mrf.mxu0
  %v1148 = vpop.f32.mrf.mxu0
  %v1149 = vadd.f32 %v1061, %v1148
  %v1150 = vpop.f32.mrf.mxu0
  %1151 = vmatprep.mubr.bf16.mxu0 %v366
  %1152 = vmatmul.mubr.bf16.gmra.mxu0 %v365
  %v1153 = vpop.f32.mrf.mxu0
  %v1154 = vadd.f32 %v1066, %v1153
  %v1155 = vpop.f32.mrf.mxu0
  %v1156 = vpop.f32.mrf.mxu0
  %v1157 = vadd.f32 %v1069, %v1156
  %v1158 = vpop.f32.mrf.mxu0
  %1159 = vmatprep.mubr.bf16.mxu0 %v374
  %1160 = vmatmul.mubr.bf16.gmra.mxu0 %v373
  %v1161 = vpop.f32.mrf.mxu0
  %v1162 = vadd.f32 %v1074, %v1161
  %v1163 = vpop.f32.mrf.mxu0
  %v1164 = vpop.f32.mrf.mxu0
  %v1165 = vadd.f32 %v1077, %v1164
  %v1166 = vpop.f32.mrf.mxu0
  %1167 = vmatprep.mubr.bf16.mxu0 %v382
  %1168 = vmatmul.mubr.bf16.gmra.mxu0 %v381
  %v1169 = vpop.f32.mrf.mxu0
  %v1170 = vadd.f32 %v1082, %v1169
  %v1171 = vpop.f32.mrf.mxu0
  %v1172 = vpop.f32.mrf.mxu0
  %v1173 = vadd.f32 %v1085, %v1172
  %v1174 = vpop.f32.mrf.mxu0
  %1175 = vmatprep.mubr.bf16.mxu0 %v390
  %1176 = vmatmul.mubr.bf16.gmra.mxu0 %v389
  %v1177 = vpop.f32.mrf.mxu0
  %v1178 = vadd.f32 %v1090, %v1177
  %v1179 = vpop.f32.mrf.mxu0
  %v1180 = vpop.f32.mrf.mxu0
  %v1181 = vadd.f32 %v1093, %v1180
  %v1182 = vpop.f32.mrf.mxu0
  %1183 = vmatprep.mubr.bf16.mxu0 %v398
  %1184 = vmatmul.mubr.bf16.gmra.mxu0 %v397
  %v1185 = vpop.f32.mrf.mxu0
  %v1186 = vadd.f32 %v1098, %v1185
  %v1187 = vpop.f32.mrf.mxu0
  %v1188 = vpop.f32.mrf.mxu0
  %v1189 = vadd.f32 %v1101, %v1188
  %v1190 = vpop.f32.mrf.mxu0
  %1191 = vmatprep.mubr.bf16.mxu0 %v406
  %1192 = vmatmul.mubr.bf16.gmra.mxu0 %v405
  %v1193 = vpop.f32.mrf.mxu0
  %v1194 = vadd.f32 %v1106, %v1193
  %v1195 = vpop.f32.mrf.mxu0
  %v1196 = vpop.f32.mrf.mxu0
  %v1197 = vpop.f32.mrf.mxu0
  %1198 = vdwg.mxu0
  %s1199 = scalar_lea.vmem %s0, 416
  %v1200 = vld [vmem:[%s1199] sm:$0xff]
  %v1201 = vld [vmem:[%s1199 + $0x8] sm:$0xff]
  %v1202 = vld [vmem:[%s1199 + $0x10] sm:$0xff]
  %v1203 = vld [vmem:[%s1199 + $0x18] sm:$0xff]
  %v1204 = vld [vmem:[%s1199 + $0x20] sm:$0xff]
  %v1205 = vld [vmem:[%s1199 + $0x28] sm:$0xff]
  %v1206 = vld [vmem:[%s1199 + $0x30] sm:$0xff]
  %v1207 = vld [vmem:[%s1199 + $0x38] sm:$0xff]
  %v1208 = vld [vmem:[%s1199 + $0x40] sm:$0xff]
  %v1209 = vld [vmem:[%s1199 + $0x48] sm:$0xff]
  %v1210 = vld [vmem:[%s1199 + $0x50] sm:$0xff]
  %v1211 = vld [vmem:[%s1199 + $0x58] sm:$0xff]
  %v1212 = vld [vmem:[%s1199 + $0x60] sm:$0xff]
  %v1213 = vld [vmem:[%s1199 + $0x68] sm:$0xff]
  %v1214 = vld [vmem:[%s1199 + $0x70] sm:$0xff]
  %v1215 = vld [vmem:[%s1199 + $0x78] sm:$0xff]
  %v1216 = vld [vmem:[%s1199 + $0x80] sm:$0xff]
  %v1217 = vld [vmem:[%s1199 + $0x88] sm:$0xff]
  %v1218 = vld [vmem:[%s1199 + $0x90] sm:$0xff]
  %v1219 = vld [vmem:[%s1199 + $0x98] sm:$0xff]
  %v1220 = vld [vmem:[%s1199 + $0xa0] sm:$0xff]
  %v1221 = vld [vmem:[%s1199 + $0xa8] sm:$0xff]
  %v1222 = vld [vmem:[%s1199 + $0xb0] sm:$0xff]
  %v1223 = vld [vmem:[%s1199 + $0xb8] sm:$0xff]
  %v1224 = vld [vmem:[%s1199 + $0xc0] sm:$0xff]
  %v1225 = vld [vmem:[%s1199 + $0xc8] sm:$0xff]
  %v1226 = vld [vmem:[%s1199 + $0xd0] sm:$0xff]
  %v1227 = vld [vmem:[%s1199 + $0xd8] sm:$0xff]
  %v1228 = vld [vmem:[%s1199 + $0xe0] sm:$0xff]
  %v1229 = vld [vmem:[%s1199 + $0xe8] sm:$0xff]
  %v1230 = vld [vmem:[%s1199 + $0xf0] sm:$0xff]
  %v1231 = vld [vmem:[%s1199 + $0xf8] sm:$0xff]
  %v1232 = vld [vmem:[%s1199 + $0x100] sm:$0xff]
  %v1233 = vld [vmem:[%s1199 + $0x108] sm:$0xff]
  %v1234 = vld [vmem:[%s1199 + $0x110] sm:$0xff]
  %v1235 = vld [vmem:[%s1199 + $0x118] sm:$0xff]
  %v1236 = vld [vmem:[%s1199 + $0x120] sm:$0xff]
  %v1237 = vld [vmem:[%s1199 + $0x128] sm:$0xff]
  %v1238 = vld [vmem:[%s1199 + $0x130] sm:$0xff]
  %v1239 = vld [vmem:[%s1199 + $0x138] sm:$0xff]
  %v1240 = vld [vmem:[%s1199 + $0x140] sm:$0xff]
  %v1241 = vld [vmem:[%s1199 + $0x148] sm:$0xff]
  %v1242 = vld [vmem:[%s1199 + $0x150] sm:$0xff]
  %v1243 = vld [vmem:[%s1199 + $0x158] sm:$0xff]
  %v1244 = vld [vmem:[%s1199 + $0x160] sm:$0xff]
  %v1245 = vld [vmem:[%s1199 + $0x168] sm:$0xff]
  %v1246 = vld [vmem:[%s1199 + $0x170] sm:$0xff]
  %v1247 = vld [vmem:[%s1199 + $0x178] sm:$0xff]
  %v1248 = vld [vmem:[%s1199 + $0x180] sm:$0xff]
  %v1249 = vld [vmem:[%s1199 + $0x188] sm:$0xff]
  %v1250 = vld [vmem:[%s1199 + $0x190] sm:$0xff]
  %v1251 = vld [vmem:[%s1199 + $0x198] sm:$0xff]
  %v1304 = vunpack.c.l.b16 %v1200
  %v1305 = vunpack.c.h.b16 %v1200
  %v1306 = vunpack.c.l.b16 %v1201
  %v1307 = vunpack.c.h.b16 %v1201
  %v1308 = vunpack.c.l.b16 %v1202
  %v1309 = vunpack.c.h.b16 %v1202
  %v1310 = vunpack.c.l.b16 %v1203
  %v1311 = vunpack.c.h.b16 %v1203
  %v1312 = vunpack.c.l.b16 %v1204
  %v1313 = vunpack.c.h.b16 %v1204
  %v1314 = vunpack.c.l.b16 %v1205
  %v1315 = vunpack.c.h.b16 %v1205
  %v1316 = vunpack.c.l.b16 %v1206
  %v1317 = vunpack.c.h.b16 %v1206
  %v1318 = vunpack.c.l.b16 %v1207
  %v1319 = vunpack.c.h.b16 %v1207
  %v1320 = vunpack.c.l.b16 %v1208
  %v1321 = vunpack.c.h.b16 %v1208
  %v1322 = vunpack.c.l.b16 %v1209
  %v1323 = vunpack.c.h.b16 %v1209
  %v1324 = vunpack.c.l.b16 %v1210
  %v1325 = vunpack.c.h.b16 %v1210
  %v1326 = vunpack.c.l.b16 %v1211
  %v1327 = vunpack.c.h.b16 %v1211
  %v1328 = vunpack.c.l.b16 %v1212
  %v1329 = vunpack.c.h.b16 %v1212
  %v1330 = vunpack.c.l.b16 %v1213
  %v1331 = vunpack.c.h.b16 %v1213
  %v1332 = vunpack.c.l.b16 %v1214
  %v1333 = vunpack.c.h.b16 %v1214
  %v1334 = vunpack.c.l.b16 %v1215
  %v1335 = vunpack.c.h.b16 %v1215
  %v1336 = vunpack.c.l.b16 %v1216
  %v1337 = vunpack.c.h.b16 %v1216
  %v1338 = vunpack.c.l.b16 %v1217
  %v1339 = vunpack.c.h.b16 %v1217
  %v1340 = vunpack.c.l.b16 %v1218
  %v1341 = vunpack.c.h.b16 %v1218
  %v1342 = vunpack.c.l.b16 %v1219
  %v1343 = vunpack.c.h.b16 %v1219
  %v1344 = vunpack.c.l.b16 %v1220
  %v1345 = vunpack.c.h.b16 %v1220
  %v1346 = vunpack.c.l.b16 %v1221
  %v1347 = vunpack.c.h.b16 %v1221
  %v1348 = vunpack.c.l.b16 %v1222
  %v1349 = vunpack.c.h.b16 %v1222
  %v1350 = vunpack.c.l.b16 %v1223
  %v1351 = vunpack.c.h.b16 %v1223
  %v1352 = vunpack.c.l.b16 %v1224
  %v1353 = vunpack.c.h.b16 %v1224
  %v1354 = vunpack.c.l.b16 %v1225
  %v1355 = vunpack.c.h.b16 %v1225
  %v1356 = vunpack.c.l.b16 %v1226
  %v1357 = vunpack.c.h.b16 %v1226
  %v1358 = vunpack.c.l.b16 %v1227
  %v1359 = vunpack.c.h.b16 %v1227
  %v1360 = vunpack.c.l.b16 %v1228
  %v1361 = vunpack.c.h.b16 %v1228
  %v1362 = vunpack.c.l.b16 %v1229
  %v1363 = vunpack.c.h.b16 %v1229
  %v1364 = vunpack.c.l.b16 %v1230
  %v1365 = vunpack.c.h.b16 %v1230
  %v1366 = vunpack.c.l.b16 %v1231
  %v1367 = vunpack.c.h.b16 %v1231
  %v1368 = vunpack.c.l.b16 %v1232
  %v1369 = vunpack.c.h.b16 %v1232
  %v1370 = vunpack.c.l.b16 %v1233
  %v1371 = vunpack.c.h.b16 %v1233
  %v1372 = vunpack.c.l.b16 %v1234
  %v1373 = vunpack.c.h.b16 %v1234
  %v1374 = vunpack.c.l.b16 %v1235
  %v1375 = vunpack.c.h.b16 %v1235
  %v1376 = vunpack.c.l.b16 %v1236
  %v1377 = vunpack.c.h.b16 %v1236
  %v1378 = vunpack.c.l.b16 %v1237
  %v1379 = vunpack.c.h.b16 %v1237
  %v1380 = vunpack.c.l.b16 %v1238
  %v1381 = vunpack.c.h.b16 %v1238
  %v1382 = vunpack.c.l.b16 %v1239
  %v1383 = vunpack.c.h.b16 %v1239
  %v1384 = vunpack.c.l.b16 %v1240
  %v1385 = vunpack.c.h.b16 %v1240
  %v1386 = vunpack.c.l.b16 %v1241
  %v1387 = vunpack.c.h.b16 %v1241
  %v1388 = vunpack.c.l.b16 %v1242
  %v1389 = vunpack.c.h.b16 %v1242
  %v1390 = vunpack.c.l.b16 %v1243
  %v1391 = vunpack.c.h.b16 %v1243
  %v1392 = vunpack.c.l.b16 %v1244
  %v1393 = vunpack.c.h.b16 %v1244
  %v1394 = vunpack.c.l.b16 %v1245
  %v1395 = vunpack.c.h.b16 %v1245
  %v1396 = vunpack.c.l.b16 %v1246
  %v1397 = vunpack.c.h.b16 %v1246
  %v1398 = vunpack.c.l.b16 %v1247
  %v1399 = vunpack.c.h.b16 %v1247
  %v1400 = vunpack.c.l.b16 %v1248
  %v1401 = vunpack.c.h.b16 %v1248
  %v1402 = vunpack.c.l.b16 %v1249
  %v1403 = vunpack.c.h.b16 %v1249
  %v1404 = vunpack.c.l.b16 %v1250
  %v1405 = vunpack.c.h.b16 %v1250
  %v1406 = vunpack.c.l.b16 %v1251
  %v1407 = vunpack.c.h.b16 %v1251
  %v1408 = vpack.c.b16 %v1312, %v1304
  %v1409 = vpack.c.b16 %v1313, %v1305
  %v1410 = vpack.c.b16 %v1314, %v1306
  %v1411 = vpack.c.b16 %v1315, %v1307
  %v1412 = vpack.c.b16 %v1316, %v1308
  %v1413 = vpack.c.b16 %v1317, %v1309
  %v1414 = vpack.c.b16 %v1318, %v1310
  %v1415 = vpack.c.b16 %v1319, %v1311
  %v1416 = vpack.c.b16 %v1328, %v1320
  %v1417 = vpack.c.b16 %v1329, %v1321
  %v1418 = vpack.c.b16 %v1330, %v1322
  %v1419 = vpack.c.b16 %v1331, %v1323
  %v1420 = vpack.c.b16 %v1332, %v1324
  %v1421 = vpack.c.b16 %v1333, %v1325
  %v1422 = vpack.c.b16 %v1334, %v1326
  %v1423 = vpack.c.b16 %v1335, %v1327
  %v1424 = vpack.c.b16 %v1344, %v1336
  %v1425 = vpack.c.b16 %v1345, %v1337
  %v1426 = vpack.c.b16 %v1346, %v1338
  %v1427 = vpack.c.b16 %v1347, %v1339
  %v1428 = vpack.c.b16 %v1348, %v1340
  %v1429 = vpack.c.b16 %v1349, %v1341
  %v1430 = vpack.c.b16 %v1350, %v1342
  %v1431 = vpack.c.b16 %v1351, %v1343
  %v1432 = vpack.c.b16 %v1360, %v1352
  %v1433 = vpack.c.b16 %v1361, %v1353
  %v1434 = vpack.c.b16 %v1362, %v1354
  %v1435 = vpack.c.b16 %v1363, %v1355
  %v1436 = vpack.c.b16 %v1364, %v1356
  %v1437 = vpack.c.b16 %v1365, %v1357
  %v1438 = vpack.c.b16 %v1366, %v1358
  %v1439 = vpack.c.b16 %v1367, %v1359
  %v1440 = vpack.c.b16 %v1376, %v1368
  %v1441 = vpack.c.b16 %v1377, %v1369
  %v1442 = vpack.c.b16 %v1378, %v1370
  %v1443 = vpack.c.b16 %v1379, %v1371
  %v1444 = vpack.c.b16 %v1380, %v1372
  %v1445 = vpack.c.b16 %v1381, %v1373
  %v1446 = vpack.c.b16 %v1382, %v1374
  %v1447 = vpack.c.b16 %v1383, %v1375
  %v1448 = vpack.c.b16 %v1392, %v1384
  %v1449 = vpack.c.b16 %v1393, %v1385
  %v1450 = vpack.c.b16 %v1394, %v1386
  %v1451 = vpack.c.b16 %v1395, %v1387
  %v1452 = vpack.c.b16 %v1396, %v1388
  %v1453 = vpack.c.b16 %v1397, %v1389
  %v1454 = vpack.c.b16 %v1398, %v1390
  %v1455 = vpack.c.b16 %v1399, %v1391
  %v1456 = vpack.c.b16 %v1400, %v1400
  %v1457 = vpack.c.b16 %v1401, %v1401
  %v1458 = vpack.c.b16 %v1402, %v1402
  %v1459 = vpack.c.b16 %v1403, %v1403
  %v1460 = vpack.c.b16 %v1404, %v1404
  %v1461 = vpack.c.b16 %v1405, %v1405
  %v1462 = vpack.c.b16 %v1406, %v1406
  %v1463 = vpack.c.b16 %v1407, %v1407
  %1520 = vmatprep.subr.bf16.mxu0 0
  %1521 = vmatpush1.bf16.msra.mxu0 %v726
  %1522 = vmatprep.subr.bf16.mxu0 0
  %1523 = vmatpush1.bf16.msra.mxu0 %v725
  %1524 = vmatprep.subr.bf16.mxu0 0
  %1525 = vmatpush1.bf16.msra.mxu0 %v724
  %1526 = vmatprep.subr.bf16.mxu0 0
  %1527 = vmatpush1.bf16.msra.mxu0 %v723
  %1528 = vmatprep.subr.bf16.mxu0 0
  %1529 = vmatpush1.bf16.msra.mxu0 %v722
  %1530 = vmatprep.subr.bf16.mxu0 0
  %1531 = vmatpush1.bf16.msra.mxu0 %v721
  %1532 = vmatprep.subr.bf16.mxu0 0
  %1533 = vmatpush1.bf16.msra.mxu0 %v720
  %1534 = vmatprep.subr.bf16.mxu0 0
  %1535 = vmatpush1.bf16.msra.mxu0 %v719
  %1536 = vmatprep.subr.bf16.mxu0 0
  %1537 = vmatpush2.bf16.msra.mxu0 %v734
  %1538 = vmatprep.subr.bf16.mxu0 0
  %1539 = vmatpush2.bf16.msra.mxu0 %v733
  %1540 = vmatprep.subr.bf16.mxu0 0
  %1541 = vmatpush2.bf16.msra.mxu0 %v732
  %1542 = vmatprep.subr.bf16.mxu0 0
  %1543 = vmatpush2.bf16.msra.mxu0 %v731
  %1544 = vmatprep.subr.bf16.mxu0 0
  %1545 = vmatpush2.bf16.msra.mxu0 %v730
  %1546 = vmatprep.subr.bf16.mxu0 0
  %1547 = vmatpush2.bf16.msra.mxu0 %v729
  %1548 = vmatprep.subr.bf16.mxu0 0
  %1549 = vmatpush2.bf16.msra.mxu0 %v728
  %1550 = vmatprep.subr.bf16.mxu0 0
  %1551 = vmatpush2.bf16.msra.mxu0 %v727
  %1552 = vmatprep.mubr.bf16.mxu0 %v1409
  %1553 = vmatmul.mubr.bf16.gmra.mxu0 %v1408
  %v1554 = vpop.f32.mrf.mxu0
  %v1555 = vadd.f32 0.0, %v1554
  %v1556 = vpop.f32.mrf.mxu0
  %v1557 = vpop.f32.mrf.mxu0
  %v1558 = vadd.f32 0.0, %v1557
  %v1559 = vpop.f32.mrf.mxu0
  %1560 = vmatprep.mubr.bf16.mxu0 %v1417
  %1561 = vmatmul.mubr.bf16.gmra.mxu0 %v1416
  %v1562 = vpop.f32.mrf.mxu0
  %v1563 = vadd.f32 0.0, %v1562
  %v1564 = vpop.f32.mrf.mxu0
  %v1565 = vpop.f32.mrf.mxu0
  %v1566 = vadd.f32 0.0, %v1565
  %v1567 = vpop.f32.mrf.mxu0
  %1568 = vmatprep.mubr.bf16.mxu0 %v1425
  %1569 = vmatmul.mubr.bf16.gmra.mxu0 %v1424
  %v1570 = vpop.f32.mrf.mxu0
  %v1571 = vadd.f32 0.0, %v1570
  %v1572 = vpop.f32.mrf.mxu0
  %v1573 = vpop.f32.mrf.mxu0
  %v1574 = vadd.f32 0.0, %v1573
  %v1575 = vpop.f32.mrf.mxu0
  %1576 = vmatprep.mubr.bf16.mxu0 %v1433
  %1577 = vmatmul.mubr.bf16.gmra.mxu0 %v1432
  %v1578 = vpop.f32.mrf.mxu0
  %v1579 = vadd.f32 0.0, %v1578
  %v1580 = vpop.f32.mrf.mxu0
  %v1581 = vpop.f32.mrf.mxu0
  %v1582 = vadd.f32 0.0, %v1581
  %v1583 = vpop.f32.mrf.mxu0
  %1584 = vmatprep.mubr.bf16.mxu0 %v1441
  %1585 = vmatmul.mubr.bf16.gmra.mxu0 %v1440
  %v1586 = vpop.f32.mrf.mxu0
  %v1587 = vadd.f32 0.0, %v1586
  %v1588 = vpop.f32.mrf.mxu0
  %v1589 = vpop.f32.mrf.mxu0
  %v1590 = vadd.f32 0.0, %v1589
  %v1591 = vpop.f32.mrf.mxu0
  %1592 = vmatprep.mubr.bf16.mxu0 %v1449
  %1593 = vmatmul.mubr.bf16.gmra.mxu0 %v1448
  %v1594 = vpop.f32.mrf.mxu0
  %v1595 = vadd.f32 0.0, %v1594
  %v1596 = vpop.f32.mrf.mxu0
  %v1597 = vpop.f32.mrf.mxu0
  %v1598 = vadd.f32 0.0, %v1597
  %v1599 = vpop.f32.mrf.mxu0
  %1600 = vmatprep.mubr.bf16.mxu0 %v1457
  %1601 = vmatmul.mubr.bf16.gmra.mxu0 %v1456
  %v1602 = vpop.f32.mrf.mxu0
  %v1603 = vadd.f32 0.0, %v1602
  %v1604 = vpop.f32.mrf.mxu0
  %v1605 = vpop.f32.mrf.mxu0
  %v1606 = vpop.f32.mrf.mxu0
  %1607 = vdwg.mxu0
  %1608 = vmatprep.subr.bf16.mxu0 0
  %1609 = vmatpush1.bf16.msra.mxu0 %v742
  %1610 = vmatprep.subr.bf16.mxu0 0
  %1611 = vmatpush1.bf16.msra.mxu0 %v741
  %1612 = vmatprep.subr.bf16.mxu0 0
  %1613 = vmatpush1.bf16.msra.mxu0 %v740
  %1614 = vmatprep.subr.bf16.mxu0 0
  %1615 = vmatpush1.bf16.msra.mxu0 %v739
  %1616 = vmatprep.subr.bf16.mxu0 0
  %1617 = vmatpush1.bf16.msra.mxu0 %v738
  %1618 = vmatprep.subr.bf16.mxu0 0
  %1619 = vmatpush1.bf16.msra.mxu0 %v737
  %1620 = vmatprep.subr.bf16.mxu0 0
  %1621 = vmatpush1.bf16.msra.mxu0 %v736
  %1622 = vmatprep.subr.bf16.mxu0 0
  %1623 = vmatpush1.bf16.msra.mxu0 %v735
  %1624 = vmatprep.subr.bf16.mxu0 0
  %1625 = vmatpush2.bf16.msra.mxu0 %v750
  %1626 = vmatprep.subr.bf16.mxu0 0
  %1627 = vmatpush2.bf16.msra.mxu0 %v749
  %1628 = vmatprep.subr.bf16.mxu0 0
  %1629 = vmatpush2.bf16.msra.mxu0 %v748
  %1630 = vmatprep.subr.bf16.mxu0 0
  %1631 = vmatpush2.bf16.msra.mxu0 %v747
  %1632 = vmatprep.subr.bf16.mxu0 0
  %1633 = vmatpush2.bf16.msra.mxu0 %v746
  %1634 = vmatprep.subr.bf16.mxu0 0
  %1635 = vmatpush2.bf16.msra.mxu0 %v745
  %1636 = vmatprep.subr.bf16.mxu0 0
  %1637 = vmatpush2.bf16.msra.mxu0 %v744
  %1638 = vmatprep.subr.bf16.mxu0 0
  %1639 = vmatpush2.bf16.msra.mxu0 %v743
  %1640 = vmatprep.mubr.bf16.mxu0 %v1411
  %1641 = vmatmul.mubr.bf16.gmra.mxu0 %v1410
  %v1642 = vpop.f32.mrf.mxu0
  %v1643 = vadd.f32 %v1555, %v1642
  %v1644 = vpop.f32.mrf.mxu0
  %v1645 = vpop.f32.mrf.mxu0
  %v1646 = vadd.f32 %v1558, %v1645
  %v1647 = vpop.f32.mrf.mxu0
  %1648 = vmatprep.mubr.bf16.mxu0 %v1419
  %1649 = vmatmul.mubr.bf16.gmra.mxu0 %v1418
  %v1650 = vpop.f32.mrf.mxu0
  %v1651 = vadd.f32 %v1563, %v1650
  %v1652 = vpop.f32.mrf.mxu0
  %v1653 = vpop.f32.mrf.mxu0
  %v1654 = vadd.f32 %v1566, %v1653
  %v1655 = vpop.f32.mrf.mxu0
  %1656 = vmatprep.mubr.bf16.mxu0 %v1427
  %1657 = vmatmul.mubr.bf16.gmra.mxu0 %v1426
  %v1658 = vpop.f32.mrf.mxu0
  %v1659 = vadd.f32 %v1571, %v1658
  %v1660 = vpop.f32.mrf.mxu0
  %v1661 = vpop.f32.mrf.mxu0
  %v1662 = vadd.f32 %v1574, %v1661
  %v1663 = vpop.f32.mrf.mxu0
  %1664 = vmatprep.mubr.bf16.mxu0 %v1435
  %1665 = vmatmul.mubr.bf16.gmra.mxu0 %v1434
  %v1666 = vpop.f32.mrf.mxu0
  %v1667 = vadd.f32 %v1579, %v1666
  %v1668 = vpop.f32.mrf.mxu0
  %v1669 = vpop.f32.mrf.mxu0
  %v1670 = vadd.f32 %v1582, %v1669
  %v1671 = vpop.f32.mrf.mxu0
  %1672 = vmatprep.mubr.bf16.mxu0 %v1443
  %1673 = vmatmul.mubr.bf16.gmra.mxu0 %v1442
  %v1674 = vpop.f32.mrf.mxu0
  %v1675 = vadd.f32 %v1587, %v1674
  %v1676 = vpop.f32.mrf.mxu0
  %v1677 = vpop.f32.mrf.mxu0
  %v1678 = vadd.f32 %v1590, %v1677
  %v1679 = vpop.f32.mrf.mxu0
  %1680 = vmatprep.mubr.bf16.mxu0 %v1451
  %1681 = vmatmul.mubr.bf16.gmra.mxu0 %v1450
  %v1682 = vpop.f32.mrf.mxu0
  %v1683 = vadd.f32 %v1595, %v1682
  %v1684 = vpop.f32.mrf.mxu0
  %v1685 = vpop.f32.mrf.mxu0
  %v1686 = vadd.f32 %v1598, %v1685
  %v1687 = vpop.f32.mrf.mxu0
  %1688 = vmatprep.mubr.bf16.mxu0 %v1459
  %1689 = vmatmul.mubr.bf16.gmra.mxu0 %v1458
  %v1690 = vpop.f32.mrf.mxu0
  %v1691 = vadd.f32 %v1603, %v1690
  %v1692 = vpop.f32.mrf.mxu0
  %v1693 = vpop.f32.mrf.mxu0
  %v1694 = vpop.f32.mrf.mxu0
  %1695 = vdwg.mxu0
  %1696 = vmatprep.subr.bf16.mxu0 0
  %1697 = vmatpush1.bf16.msra.mxu0 %v758
  %1698 = vmatprep.subr.bf16.mxu0 0
  %1699 = vmatpush1.bf16.msra.mxu0 %v757
  %1700 = vmatprep.subr.bf16.mxu0 0
  %1701 = vmatpush1.bf16.msra.mxu0 %v756
  %1702 = vmatprep.subr.bf16.mxu0 0
  %1703 = vmatpush1.bf16.msra.mxu0 %v755
  %1704 = vmatprep.subr.bf16.mxu0 0
  %1705 = vmatpush1.bf16.msra.mxu0 %v754
  %1706 = vmatprep.subr.bf16.mxu0 0
  %1707 = vmatpush1.bf16.msra.mxu0 %v753
  %1708 = vmatprep.subr.bf16.mxu0 0
  %1709 = vmatpush1.bf16.msra.mxu0 %v752
  %1710 = vmatprep.subr.bf16.mxu0 0
  %1711 = vmatpush1.bf16.msra.mxu0 %v751
  %1712 = vmatprep.subr.bf16.mxu0 0
  %1713 = vmatpush2.bf16.msra.mxu0 %v766
  %1714 = vmatprep.subr.bf16.mxu0 0
  %1715 = vmatpush2.bf16.msra.mxu0 %v765
  %1716 = vmatprep.subr.bf16.mxu0 0
  %1717 = vmatpush2.bf16.msra.mxu0 %v764
  %1718 = vmatprep.subr.bf16.mxu0 0
  %1719 = vmatpush2.bf16.msra.mxu0 %v763
  %1720 = vmatprep.subr.bf16.mxu0 0
  %1721 = vmatpush2.bf16.msra.mxu0 %v762
  %1722 = vmatprep.subr.bf16.mxu0 0
  %1723 = vmatpush2.bf16.msra.mxu0 %v761
  %1724 = vmatprep.subr.bf16.mxu0 0
  %1725 = vmatpush2.bf16.msra.mxu0 %v760
  %1726 = vmatprep.subr.bf16.mxu0 0
  %1727 = vmatpush2.bf16.msra.mxu0 %v759
  %1728 = vmatprep.mubr.bf16.mxu0 %v1413
  %1729 = vmatmul.mubr.bf16.gmra.mxu0 %v1412
  %v1730 = vpop.f32.mrf.mxu0
  %v1731 = vadd.f32 %v1643, %v1730
  %v1732 = vpop.f32.mrf.mxu0
  %v1733 = vpop.f32.mrf.mxu0
  %v1734 = vadd.f32 %v1646, %v1733
  %v1735 = vpop.f32.mrf.mxu0
  %1736 = vmatprep.mubr.bf16.mxu0 %v1421
  %1737 = vmatmul.mubr.bf16.gmra.mxu0 %v1420
  %v1738 = vpop.f32.mrf.mxu0
  %v1739 = vadd.f32 %v1651, %v1738
  %v1740 = vpop.f32.mrf.mxu0
  %v1741 = vpop.f32.mrf.mxu0
  %v1742 = vadd.f32 %v1654, %v1741
  %v1743 = vpop.f32.mrf.mxu0
  %1744 = vmatprep.mubr.bf16.mxu0 %v1429
  %1745 = vmatmul.mubr.bf16.gmra.mxu0 %v1428
  %v1746 = vpop.f32.mrf.mxu0
  %v1747 = vadd.f32 %v1659, %v1746
  %v1748 = vpop.f32.mrf.mxu0
  %v1749 = vpop.f32.mrf.mxu0
  %v1750 = vadd.f32 %v1662, %v1749
  %v1751 = vpop.f32.mrf.mxu0
  %1752 = vmatprep.mubr.bf16.mxu0 %v1437
  %1753 = vmatmul.mubr.bf16.gmra.mxu0 %v1436
  %v1754 = vpop.f32.mrf.mxu0
  %v1755 = vadd.f32 %v1667, %v1754
  %v1756 = vpop.f32.mrf.mxu0
  %v1757 = vpop.f32.mrf.mxu0
  %v1758 = vadd.f32 %v1670, %v1757
  %v1759 = vpop.f32.mrf.mxu0
  %1760 = vmatprep.mubr.bf16.mxu0 %v1445
  %1761 = vmatmul.mubr.bf16.gmra.mxu0 %v1444
  %v1762 = vpop.f32.mrf.mxu0
  %v1763 = vadd.f32 %v1675, %v1762
  %v1764 = vpop.f32.mrf.mxu0
  %v1765 = vpop.f32.mrf.mxu0
  %v1766 = vadd.f32 %v1678, %v1765
  %v1767 = vpop.f32.mrf.mxu0
  %1768 = vmatprep.mubr.bf16.mxu0 %v1453
  %1769 = vmatmul.mubr.bf16.gmra.mxu0 %v1452
  %v1770 = vpop.f32.mrf.mxu0
  %v1771 = vadd.f32 %v1683, %v1770
  %v1772 = vpop.f32.mrf.mxu0
  %v1773 = vpop.f32.mrf.mxu0
  %v1774 = vadd.f32 %v1686, %v1773
  %v1775 = vpop.f32.mrf.mxu0
  %1776 = vmatprep.mubr.bf16.mxu0 %v1461
  %1777 = vmatmul.mubr.bf16.gmra.mxu0 %v1460
  %v1778 = vpop.f32.mrf.mxu0
  %v1779 = vadd.f32 %v1691, %v1778
  %v1780 = vpop.f32.mrf.mxu0
  %v1781 = vpop.f32.mrf.mxu0
  %v1782 = vpop.f32.mrf.mxu0
  %1783 = vdwg.mxu0
  %1784 = vmatprep.subr.bf16.mxu0 0
  %1785 = vmatpush1.bf16.msra.mxu0 %v774
  %1786 = vmatprep.subr.bf16.mxu0 0
  %1787 = vmatpush1.bf16.msra.mxu0 %v773
  %1788 = vmatprep.subr.bf16.mxu0 0
  %1789 = vmatpush1.bf16.msra.mxu0 %v772
  %1790 = vmatprep.subr.bf16.mxu0 0
  %1791 = vmatpush1.bf16.msra.mxu0 %v771
  %1792 = vmatprep.subr.bf16.mxu0 0
  %1793 = vmatpush1.bf16.msra.mxu0 %v770
  %1794 = vmatprep.subr.bf16.mxu0 0
  %1795 = vmatpush1.bf16.msra.mxu0 %v769
  %1796 = vmatprep.subr.bf16.mxu0 0
  %1797 = vmatpush1.bf16.msra.mxu0 %v768
  %1798 = vmatprep.subr.bf16.mxu0 0
  %1799 = vmatpush1.bf16.msra.mxu0 %v767
  %1800 = vmatprep.subr.bf16.mxu0 0
  %1801 = vmatpush2.bf16.msra.mxu0 %v782
  %1802 = vmatprep.subr.bf16.mxu0 0
  %1803 = vmatpush2.bf16.msra.mxu0 %v781
  %1804 = vmatprep.subr.bf16.mxu0 0
  %1805 = vmatpush2.bf16.msra.mxu0 %v780
  %1806 = vmatprep.subr.bf16.mxu0 0
  %1807 = vmatpush2.bf16.msra.mxu0 %v779
  %1808 = vmatprep.subr.bf16.mxu0 0
  %1809 = vmatpush2.bf16.msra.mxu0 %v778
  %1810 = vmatprep.subr.bf16.mxu0 0
  %1811 = vmatpush2.bf16.msra.mxu0 %v777
  %1812 = vmatprep.subr.bf16.mxu0 0
  %1813 = vmatpush2.bf16.msra.mxu0 %v776
  %1814 = vmatprep.subr.bf16.mxu0 0
  %1815 = vmatpush2.bf16.msra.mxu0 %v775
  %1816 = vmatprep.mubr.bf16.mxu0 %v1415
  %1817 = vmatmul.mubr.bf16.gmra.mxu0 %v1414
  %v1818 = vpop.f32.mrf.mxu0
  %v1819 = vadd.f32 %v1731, %v1818
  %v1820 = vpop.f32.mrf.mxu0
  %v1821 = vpop.f32.mrf.mxu0
  %v1822 = vadd.f32 %v1734, %v1821
  %v1823 = vpop.f32.mrf.mxu0
  %1824 = vmatprep.mubr.bf16.mxu0 %v1423
  %1825 = vmatmul.mubr.bf16.gmra.mxu0 %v1422
  %v1826 = vpop.f32.mrf.mxu0
  %v1827 = vadd.f32 %v1739, %v1826
  %v1828 = vpop.f32.mrf.mxu0
  %v1829 = vpop.f32.mrf.mxu0
  %v1830 = vadd.f32 %v1742, %v1829
  %v1831 = vpop.f32.mrf.mxu0
  %1832 = vmatprep.mubr.bf16.mxu0 %v1431
  %1833 = vmatmul.mubr.bf16.gmra.mxu0 %v1430
  %v1834 = vpop.f32.mrf.mxu0
  %v1835 = vadd.f32 %v1747, %v1834
  %v1836 = vpop.f32.mrf.mxu0
  %v1837 = vpop.f32.mrf.mxu0
  %v1838 = vadd.f32 %v1750, %v1837
  %v1839 = vpop.f32.mrf.mxu0
  %1840 = vmatprep.mubr.bf16.mxu0 %v1439
  %1841 = vmatmul.mubr.bf16.gmra.mxu0 %v1438
  %v1842 = vpop.f32.mrf.mxu0
  %v1843 = vadd.f32 %v1755, %v1842
  %v1844 = vpop.f32.mrf.mxu0
  %v1845 = vpop.f32.mrf.mxu0
  %v1846 = vadd.f32 %v1758, %v1845
  %v1847 = vpop.f32.mrf.mxu0
  %1848 = vmatprep.mubr.bf16.mxu0 %v1447
  %1849 = vmatmul.mubr.bf16.gmra.mxu0 %v1446
  %v1850 = vpop.f32.mrf.mxu0
  %v1851 = vadd.f32 %v1763, %v1850
  %v1852 = vpop.f32.mrf.mxu0
  %v1853 = vpop.f32.mrf.mxu0
  %v1854 = vadd.f32 %v1766, %v1853
  %v1855 = vpop.f32.mrf.mxu0
  %1856 = vmatprep.mubr.bf16.mxu0 %v1455
  %1857 = vmatmul.mubr.bf16.gmra.mxu0 %v1454
  %v1858 = vpop.f32.mrf.mxu0
  %v1859 = vadd.f32 %v1771, %v1858
  %v1860 = vpop.f32.mrf.mxu0
  %v1861 = vpop.f32.mrf.mxu0
  %v1862 = vadd.f32 %v1774, %v1861
  %v1863 = vpop.f32.mrf.mxu0
  %1864 = vmatprep.mubr.bf16.mxu0 %v1463
  %1865 = vmatmul.mubr.bf16.gmra.mxu0 %v1462
  %v1866 = vpop.f32.mrf.mxu0
  %v1867 = vadd.f32 %v1779, %v1866
  %v1868 = vpop.f32.mrf.mxu0
  %v1869 = vpop.f32.mrf.mxu0
  %v1870 = vpop.f32.mrf.mxu0
  %1871 = vdwg.mxu0
  %v1872 = vmax.f32 %v1146, %v1819
  %v1873 = vmax.f32 %v1149, %v1822
  %v1874 = vmax.f32 %v1154, %v1827
  %v1875 = vmax.f32 %v1157, %v1830
  %v1876 = vmax.f32 %v1162, %v1835
  %v1877 = vmax.f32 %v1165, %v1838
  %v1878 = vmax.f32 %v1170, %v1843
  %v1879 = vmax.f32 %v1173, %v1846
  %v1880 = vmax.f32 %v1178, %v1851
  %v1881 = vmax.f32 %v1181, %v1854
  %v1882 = vmax.f32 %v1186, %v1859
  %v1883 = vmax.f32 %v1189, %v1862
  %v1884 = vmax.f32 %v1194, %v1867
  %s1885 = scalar_lea.vmem %s0, 832
  %v1886 = vld [vmem:[%s1885] sm:$0xff]
  %v1887 = vld [vmem:[%s1885 + $0x8] sm:$0xff]
  %v1888 = vld [vmem:[%s1885 + $0x10] sm:$0xff]
  %v1889 = vld [vmem:[%s1885 + $0x18] sm:$0xff]
  %v1890 = vld [vmem:[%s1885 + $0x20] sm:$0xff]
  %v1891 = vld [vmem:[%s1885 + $0x28] sm:$0xff]
  %v1892 = vld [vmem:[%s1885 + $0x30] sm:$0xff]
  %v1893 = vld [vmem:[%s1885 + $0x38] sm:$0xff]
  %v1894 = vld [vmem:[%s1885 + $0x40] sm:$0xff]
  %v1895 = vld [vmem:[%s1885 + $0x48] sm:$0xff]
  %v1896 = vld [vmem:[%s1885 + $0x50] sm:$0xff]
  %v1897 = vld [vmem:[%s1885 + $0x58] sm:$0xff]
  %v1898 = vld [vmem:[%s1885 + $0x60] sm:$0xff]
  %v1899 = vld [vmem:[%s1885 + $0x68] sm:$0xff]
  %v1900 = vld [vmem:[%s1885 + $0x70] sm:$0xff]
  %v1901 = vld [vmem:[%s1885 + $0x78] sm:$0xff]
  %v1902 = vld [vmem:[%s1885 + $0x80] sm:$0xff]
  %v1903 = vld [vmem:[%s1885 + $0x88] sm:$0xff]
  %v1904 = vld [vmem:[%s1885 + $0x90] sm:$0xff]
  %v1905 = vld [vmem:[%s1885 + $0x98] sm:$0xff]
  %v1906 = vld [vmem:[%s1885 + $0xa0] sm:$0xff]
  %v1907 = vld [vmem:[%s1885 + $0xa8] sm:$0xff]
  %v1908 = vld [vmem:[%s1885 + $0xb0] sm:$0xff]
  %v1909 = vld [vmem:[%s1885 + $0xb8] sm:$0xff]
  %v1910 = vld [vmem:[%s1885 + $0xc0] sm:$0xff]
  %v1911 = vld [vmem:[%s1885 + $0xc8] sm:$0xff]
  %v1912 = vld [vmem:[%s1885 + $0xd0] sm:$0xff]
  %v1913 = vld [vmem:[%s1885 + $0xd8] sm:$0xff]
  %v1914 = vld [vmem:[%s1885 + $0xe0] sm:$0xff]
  %v1915 = vld [vmem:[%s1885 + $0xe8] sm:$0xff]
  %v1916 = vld [vmem:[%s1885 + $0xf0] sm:$0xff]
  %v1917 = vld [vmem:[%s1885 + $0xf8] sm:$0xff]
  %v1918 = vld [vmem:[%s1885 + $0x100] sm:$0xff]
  %v1919 = vld [vmem:[%s1885 + $0x108] sm:$0xff]
  %v1920 = vld [vmem:[%s1885 + $0x110] sm:$0xff]
  %v1921 = vld [vmem:[%s1885 + $0x118] sm:$0xff]
  %v1922 = vld [vmem:[%s1885 + $0x120] sm:$0xff]
  %v1923 = vld [vmem:[%s1885 + $0x128] sm:$0xff]
  %v1924 = vld [vmem:[%s1885 + $0x130] sm:$0xff]
  %v1925 = vld [vmem:[%s1885 + $0x138] sm:$0xff]
  %v1926 = vld [vmem:[%s1885 + $0x140] sm:$0xff]
  %v1927 = vld [vmem:[%s1885 + $0x148] sm:$0xff]
  %v1928 = vld [vmem:[%s1885 + $0x150] sm:$0xff]
  %v1929 = vld [vmem:[%s1885 + $0x158] sm:$0xff]
  %v1930 = vld [vmem:[%s1885 + $0x160] sm:$0xff]
  %v1931 = vld [vmem:[%s1885 + $0x168] sm:$0xff]
  %v1932 = vld [vmem:[%s1885 + $0x170] sm:$0xff]
  %v1933 = vld [vmem:[%s1885 + $0x178] sm:$0xff]
  %v1934 = vld [vmem:[%s1885 + $0x180] sm:$0xff]
  %v1935 = vld [vmem:[%s1885 + $0x188] sm:$0xff]
  %v1936 = vld [vmem:[%s1885 + $0x190] sm:$0xff]
  %v1937 = vld [vmem:[%s1885 + $0x198] sm:$0xff]
  %v1990 = vunpack.c.l.b16 %v1886
  %v1991 = vunpack.c.h.b16 %v1886
  %v1992 = vunpack.c.l.b16 %v1887
  %v1993 = vunpack.c.h.b16 %v1887
  %v1994 = vunpack.c.l.b16 %v1888
  %v1995 = vunpack.c.h.b16 %v1888
  %v1996 = vunpack.c.l.b16 %v1889
  %v1997 = vunpack.c.h.b16 %v1889
  %v1998 = vunpack.c.l.b16 %v1890
  %v1999 = vunpack.c.h.b16 %v1890
  %v2000 = vunpack.c.l.b16 %v1891
  %v2001 = vunpack.c.h.b16 %v1891
  %v2002 = vunpack.c.l.b16 %v1892
  %v2003 = vunpack.c.h.b16 %v1892
  %v2004 = vunpack.c.l.b16 %v1893
  %v2005 = vunpack.c.h.b16 %v1893
  %v2006 = vunpack.c.l.b16 %v1894
  %v2007 = vunpack.c.h.b16 %v1894
  %v2008 = vunpack.c.l.b16 %v1895
  %v2009 = vunpack.c.h.b16 %v1895
  %v2010 = vunpack.c.l.b16 %v1896
  %v2011 = vunpack.c.h.b16 %v1896
  %v2012 = vunpack.c.l.b16 %v1897
  %v2013 = vunpack.c.h.b16 %v1897
  %v2014 = vunpack.c.l.b16 %v1898
  %v2015 = vunpack.c.h.b16 %v1898
  %v2016 = vunpack.c.l.b16 %v1899
  %v2017 = vunpack.c.h.b16 %v1899
  %v2018 = vunpack.c.l.b16 %v1900
  %v2019 = vunpack.c.h.b16 %v1900
  %v2020 = vunpack.c.l.b16 %v1901
  %v2021 = vunpack.c.h.b16 %v1901
  %v2022 = vunpack.c.l.b16 %v1902
  %v2023 = vunpack.c.h.b16 %v1902
  %v2024 = vunpack.c.l.b16 %v1903
  %v2025 = vunpack.c.h.b16 %v1903
  %v2026 = vunpack.c.l.b16 %v1904
  %v2027 = vunpack.c.h.b16 %v1904
  %v2028 = vunpack.c.l.b16 %v1905
  %v2029 = vunpack.c.h.b16 %v1905
  %v2030 = vunpack.c.l.b16 %v1906
  %v2031 = vunpack.c.h.b16 %v1906
  %v2032 = vunpack.c.l.b16 %v1907
  %v2033 = vunpack.c.h.b16 %v1907
  %v2034 = vunpack.c.l.b16 %v1908
  %v2035 = vunpack.c.h.b16 %v1908
  %v2036 = vunpack.c.l.b16 %v1909
  %v2037 = vunpack.c.h.b16 %v1909
  %v2038 = vunpack.c.l.b16 %v1910
  %v2039 = vunpack.c.h.b16 %v1910
  %v2040 = vunpack.c.l.b16 %v1911
  %v2041 = vunpack.c.h.b16 %v1911
  %v2042 = vunpack.c.l.b16 %v1912
  %v2043 = vunpack.c.h.b16 %v1912
  %v2044 = vunpack.c.l.b16 %v1913
  %v2045 = vunpack.c.h.b16 %v1913
  %v2046 = vunpack.c.l.b16 %v1914
  %v2047 = vunpack.c.h.b16 %v1914
  %v2048 = vunpack.c.l.b16 %v1915
  %v2049 = vunpack.c.h.b16 %v1915
  %v2050 = vunpack.c.l.b16 %v1916
  %v2051 = vunpack.c.h.b16 %v1916
  %v2052 = vunpack.c.l.b16 %v1917
  %v2053 = vunpack.c.h.b16 %v1917
  %v2054 = vunpack.c.l.b16 %v1918
  %v2055 = vunpack.c.h.b16 %v1918
  %v2056 = vunpack.c.l.b16 %v1919
  %v2057 = vunpack.c.h.b16 %v1919
  %v2058 = vunpack.c.l.b16 %v1920
  %v2059 = vunpack.c.h.b16 %v1920
  %v2060 = vunpack.c.l.b16 %v1921
  %v2061 = vunpack.c.h.b16 %v1921
  %v2062 = vunpack.c.l.b16 %v1922
  %v2063 = vunpack.c.h.b16 %v1922
  %v2064 = vunpack.c.l.b16 %v1923
  %v2065 = vunpack.c.h.b16 %v1923
  %v2066 = vunpack.c.l.b16 %v1924
  %v2067 = vunpack.c.h.b16 %v1924
  %v2068 = vunpack.c.l.b16 %v1925
  %v2069 = vunpack.c.h.b16 %v1925
  %v2070 = vunpack.c.l.b16 %v1926
  %v2071 = vunpack.c.h.b16 %v1926
  %v2072 = vunpack.c.l.b16 %v1927
  %v2073 = vunpack.c.h.b16 %v1927
  %v2074 = vunpack.c.l.b16 %v1928
  %v2075 = vunpack.c.h.b16 %v1928
  %v2076 = vunpack.c.l.b16 %v1929
  %v2077 = vunpack.c.h.b16 %v1929
  %v2078 = vunpack.c.l.b16 %v1930
  %v2079 = vunpack.c.h.b16 %v1930
  %v2080 = vunpack.c.l.b16 %v1931
  %v2081 = vunpack.c.h.b16 %v1931
  %v2082 = vunpack.c.l.b16 %v1932
  %v2083 = vunpack.c.h.b16 %v1932
  %v2084 = vunpack.c.l.b16 %v1933
  %v2085 = vunpack.c.h.b16 %v1933
  %v2086 = vunpack.c.l.b16 %v1934
  %v2087 = vunpack.c.h.b16 %v1934
  %v2088 = vunpack.c.l.b16 %v1935
  %v2089 = vunpack.c.h.b16 %v1935
  %v2090 = vunpack.c.l.b16 %v1936
  %v2091 = vunpack.c.h.b16 %v1936
  %v2092 = vunpack.c.l.b16 %v1937
  %v2093 = vunpack.c.h.b16 %v1937
  %v2094 = vpack.c.b16 %v1998, %v1990
  %v2095 = vpack.c.b16 %v1999, %v1991
  %v2096 = vpack.c.b16 %v2000, %v1992
  %v2097 = vpack.c.b16 %v2001, %v1993
  %v2098 = vpack.c.b16 %v2002, %v1994
  %v2099 = vpack.c.b16 %v2003, %v1995
  %v2100 = vpack.c.b16 %v2004, %v1996
  %v2101 = vpack.c.b16 %v2005, %v1997
  %v2102 = vpack.c.b16 %v2014, %v2006
  %v2103 = vpack.c.b16 %v2015, %v2007
  %v2104 = vpack.c.b16 %v2016, %v2008
  %v2105 = vpack.c.b16 %v2017, %v2009
  %v2106 = vpack.c.b16 %v2018, %v2010
  %v2107 = vpack.c.b16 %v2019, %v2011
  %v2108 = vpack.c.b16 %v2020, %v2012
  %v2109 = vpack.c.b16 %v2021, %v2013
  %v2110 = vpack.c.b16 %v2030, %v2022
  %v2111 = vpack.c.b16 %v2031, %v2023
  %v2112 = vpack.c.b16 %v2032, %v2024
  %v2113 = vpack.c.b16 %v2033, %v2025
  %v2114 = vpack.c.b16 %v2034, %v2026
  %v2115 = vpack.c.b16 %v2035, %v2027
  %v2116 = vpack.c.b16 %v2036, %v2028
  %v2117 = vpack.c.b16 %v2037, %v2029
  %v2118 = vpack.c.b16 %v2046, %v2038
  %v2119 = vpack.c.b16 %v2047, %v2039
  %v2120 = vpack.c.b16 %v2048, %v2040
  %v2121 = vpack.c.b16 %v2049, %v2041
  %v2122 = vpack.c.b16 %v2050, %v2042
  %v2123 = vpack.c.b16 %v2051, %v2043
  %v2124 = vpack.c.b16 %v2052, %v2044
  %v2125 = vpack.c.b16 %v2053, %v2045
  %v2126 = vpack.c.b16 %v2062, %v2054
  %v2127 = vpack.c.b16 %v2063, %v2055
  %v2128 = vpack.c.b16 %v2064, %v2056
  %v2129 = vpack.c.b16 %v2065, %v2057
  %v2130 = vpack.c.b16 %v2066, %v2058
  %v2131 = vpack.c.b16 %v2067, %v2059
  %v2132 = vpack.c.b16 %v2068, %v2060
  %v2133 = vpack.c.b16 %v2069, %v2061
  %v2134 = vpack.c.b16 %v2078, %v2070
  %v2135 = vpack.c.b16 %v2079, %v2071
  %v2136 = vpack.c.b16 %v2080, %v2072
  %v2137 = vpack.c.b16 %v2081, %v2073
  %v2138 = vpack.c.b16 %v2082, %v2074
  %v2139 = vpack.c.b16 %v2083, %v2075
  %v2140 = vpack.c.b16 %v2084, %v2076
  %v2141 = vpack.c.b16 %v2085, %v2077
  %v2142 = vpack.c.b16 %v2086, %v2086
  %v2143 = vpack.c.b16 %v2087, %v2087
  %v2144 = vpack.c.b16 %v2088, %v2088
  %v2145 = vpack.c.b16 %v2089, %v2089
  %v2146 = vpack.c.b16 %v2090, %v2090
  %v2147 = vpack.c.b16 %v2091, %v2091
  %v2148 = vpack.c.b16 %v2092, %v2092
  %v2149 = vpack.c.b16 %v2093, %v2093
  %2206 = vmatprep.subr.bf16.mxu0 0
  %2207 = vmatpush1.bf16.msra.mxu0 %v726
  %2208 = vmatprep.subr.bf16.mxu0 0
  %2209 = vmatpush1.bf16.msra.mxu0 %v725
  %2210 = vmatprep.subr.bf16.mxu0 0
  %2211 = vmatpush1.bf16.msra.mxu0 %v724
  %2212 = vmatprep.subr.bf16.mxu0 0
  %2213 = vmatpush1.bf16.msra.mxu0 %v723
  %2214 = vmatprep.subr.bf16.mxu0 0
  %2215 = vmatpush1.bf16.msra.mxu0 %v722
  %2216 = vmatprep.subr.bf16.mxu0 0
  %2217 = vmatpush1.bf16.msra.mxu0 %v721
  %2218 = vmatprep.subr.bf16.mxu0 0
  %2219 = vmatpush1.bf16.msra.mxu0 %v720
  %2220 = vmatprep.subr.bf16.mxu0 0
  %2221 = vmatpush1.bf16.msra.mxu0 %v719
  %2222 = vmatprep.subr.bf16.mxu0 0
  %2223 = vmatpush2.bf16.msra.mxu0 %v734
  %2224 = vmatprep.subr.bf16.mxu0 0
  %2225 = vmatpush2.bf16.msra.mxu0 %v733
  %2226 = vmatprep.subr.bf16.mxu0 0
  %2227 = vmatpush2.bf16.msra.mxu0 %v732
  %2228 = vmatprep.subr.bf16.mxu0 0
  %2229 = vmatpush2.bf16.msra.mxu0 %v731
  %2230 = vmatprep.subr.bf16.mxu0 0
  %2231 = vmatpush2.bf16.msra.mxu0 %v730
  %2232 = vmatprep.subr.bf16.mxu0 0
  %2233 = vmatpush2.bf16.msra.mxu0 %v729
  %2234 = vmatprep.subr.bf16.mxu0 0
  %2235 = vmatpush2.bf16.msra.mxu0 %v728
  %2236 = vmatprep.subr.bf16.mxu0 0
  %2237 = vmatpush2.bf16.msra.mxu0 %v727
  %2238 = vmatprep.mubr.bf16.mxu0 %v2095
  %2239 = vmatmul.mubr.bf16.gmra.mxu0 %v2094
  %v2240 = vpop.f32.mrf.mxu0
  %v2241 = vadd.f32 0.0, %v2240
  %v2242 = vpop.f32.mrf.mxu0
  %v2243 = vpop.f32.mrf.mxu0
  %v2244 = vadd.f32 0.0, %v2243
  %v2245 = vpop.f32.mrf.mxu0
  %2246 = vmatprep.mubr.bf16.mxu0 %v2103
  %2247 = vmatmul.mubr.bf16.gmra.mxu0 %v2102
  %v2248 = vpop.f32.mrf.mxu0
  %v2249 = vadd.f32 0.0, %v2248
  %v2250 = vpop.f32.mrf.mxu0
  %v2251 = vpop.f32.mrf.mxu0
  %v2252 = vadd.f32 0.0, %v2251
  %v2253 = vpop.f32.mrf.mxu0
  %2254 = vmatprep.mubr.bf16.mxu0 %v2111
  %2255 = vmatmul.mubr.bf16.gmra.mxu0 %v2110
  %v2256 = vpop.f32.mrf.mxu0
  %v2257 = vadd.f32 0.0, %v2256
  %v2258 = vpop.f32.mrf.mxu0
  %v2259 = vpop.f32.mrf.mxu0
  %v2260 = vadd.f32 0.0, %v2259
  %v2261 = vpop.f32.mrf.mxu0
  %2262 = vmatprep.mubr.bf16.mxu0 %v2119
  %2263 = vmatmul.mubr.bf16.gmra.mxu0 %v2118
  %v2264 = vpop.f32.mrf.mxu0
  %v2265 = vadd.f32 0.0, %v2264
  %v2266 = vpop.f32.mrf.mxu0
  %v2267 = vpop.f32.mrf.mxu0
  %v2268 = vadd.f32 0.0, %v2267
  %v2269 = vpop.f32.mrf.mxu0
  %2270 = vmatprep.mubr.bf16.mxu0 %v2127
  %2271 = vmatmul.mubr.bf16.gmra.mxu0 %v2126
  %v2272 = vpop.f32.mrf.mxu0
  %v2273 = vadd.f32 0.0, %v2272
  %v2274 = vpop.f32.mrf.mxu0
  %v2275 = vpop.f32.mrf.mxu0
  %v2276 = vadd.f32 0.0, %v2275
  %v2277 = vpop.f32.mrf.mxu0
  %2278 = vmatprep.mubr.bf16.mxu0 %v2135
  %2279 = vmatmul.mubr.bf16.gmra.mxu0 %v2134
  %v2280 = vpop.f32.mrf.mxu0
  %v2281 = vadd.f32 0.0, %v2280
  %v2282 = vpop.f32.mrf.mxu0
  %v2283 = vpop.f32.mrf.mxu0
  %v2284 = vadd.f32 0.0, %v2283
  %v2285 = vpop.f32.mrf.mxu0
  %2286 = vmatprep.mubr.bf16.mxu0 %v2143
  %2287 = vmatmul.mubr.bf16.gmra.mxu0 %v2142
  %v2288 = vpop.f32.mrf.mxu0
  %v2289 = vadd.f32 0.0, %v2288
  %v2290 = vpop.f32.mrf.mxu0
  %v2291 = vpop.f32.mrf.mxu0
  %v2292 = vpop.f32.mrf.mxu0
  %2293 = vdwg.mxu0
  %2294 = vmatprep.subr.bf16.mxu0 0
  %2295 = vmatpush1.bf16.msra.mxu0 %v742
  %2296 = vmatprep.subr.bf16.mxu0 0
  %2297 = vmatpush1.bf16.msra.mxu0 %v741
  %2298 = vmatprep.subr.bf16.mxu0 0
  %2299 = vmatpush1.bf16.msra.mxu0 %v740
  %2300 = vmatprep.subr.bf16.mxu0 0
  %2301 = vmatpush1.bf16.msra.mxu0 %v739
  %2302 = vmatprep.subr.bf16.mxu0 0
  %2303 = vmatpush1.bf16.msra.mxu0 %v738
  %2304 = vmatprep.subr.bf16.mxu0 0
  %2305 = vmatpush1.bf16.msra.mxu0 %v737
  %2306 = vmatprep.subr.bf16.mxu0 0
  %2307 = vmatpush1.bf16.msra.mxu0 %v736
  %2308 = vmatprep.subr.bf16.mxu0 0
  %2309 = vmatpush1.bf16.msra.mxu0 %v735
  %2310 = vmatprep.subr.bf16.mxu0 0
  %2311 = vmatpush2.bf16.msra.mxu0 %v750
  %2312 = vmatprep.subr.bf16.mxu0 0
  %2313 = vmatpush2.bf16.msra.mxu0 %v749
  %2314 = vmatprep.subr.bf16.mxu0 0
  %2315 = vmatpush2.bf16.msra.mxu0 %v748
  %2316 = vmatprep.subr.bf16.mxu0 0
  %2317 = vmatpush2.bf16.msra.mxu0 %v747
  %2318 = vmatprep.subr.bf16.mxu0 0
  %2319 = vmatpush2.bf16.msra.mxu0 %v746
  %2320 = vmatprep.subr.bf16.mxu0 0
  %2321 = vmatpush2.bf16.msra.mxu0 %v745
  %2322 = vmatprep.subr.bf16.mxu0 0
  %2323 = vmatpush2.bf16.msra.mxu0 %v744
  %2324 = vmatprep.subr.bf16.mxu0 0
  %2325 = vmatpush2.bf16.msra.mxu0 %v743
  %2326 = vmatprep.mubr.bf16.mxu0 %v2097
  %2327 = vmatmul.mubr.bf16.gmra.mxu0 %v2096
  %v2328 = vpop.f32.mrf.mxu0
  %v2329 = vadd.f32 %v2241, %v2328
  %v2330 = vpop.f32.mrf.mxu0
  %v2331 = vpop.f32.mrf.mxu0
  %v2332 = vadd.f32 %v2244, %v2331
  %v2333 = vpop.f32.mrf.mxu0
  %2334 = vmatprep.mubr.bf16.mxu0 %v2105
  %2335 = vmatmul.mubr.bf16.gmra.mxu0 %v2104
  %v2336 = vpop.f32.mrf.mxu0
  %v2337 = vadd.f32 %v2249, %v2336
  %v2338 = vpop.f32.mrf.mxu0
  %v2339 = vpop.f32.mrf.mxu0
  %v2340 = vadd.f32 %v2252, %v2339
  %v2341 = vpop.f32.mrf.mxu0
  %2342 = vmatprep.mubr.bf16.mxu0 %v2113
  %2343 = vmatmul.mubr.bf16.gmra.mxu0 %v2112
  %v2344 = vpop.f32.mrf.mxu0
  %v2345 = vadd.f32 %v2257, %v2344
  %v2346 = vpop.f32.mrf.mxu0
  %v2347 = vpop.f32.mrf.mxu0
  %v2348 = vadd.f32 %v2260, %v2347
  %v2349 = vpop.f32.mrf.mxu0
  %2350 = vmatprep.mubr.bf16.mxu0 %v2121
  %2351 = vmatmul.mubr.bf16.gmra.mxu0 %v2120
  %v2352 = vpop.f32.mrf.mxu0
  %v2353 = vadd.f32 %v2265, %v2352
  %v2354 = vpop.f32.mrf.mxu0
  %v2355 = vpop.f32.mrf.mxu0
  %v2356 = vadd.f32 %v2268, %v2355
  %v2357 = vpop.f32.mrf.mxu0
  %2358 = vmatprep.mubr.bf16.mxu0 %v2129
  %2359 = vmatmul.mubr.bf16.gmra.mxu0 %v2128
  %v2360 = vpop.f32.mrf.mxu0
  %v2361 = vadd.f32 %v2273, %v2360
  %v2362 = vpop.f32.mrf.mxu0
  %v2363 = vpop.f32.mrf.mxu0
  %v2364 = vadd.f32 %v2276, %v2363
  %v2365 = vpop.f32.mrf.mxu0
  %2366 = vmatprep.mubr.bf16.mxu0 %v2137
  %2367 = vmatmul.mubr.bf16.gmra.mxu0 %v2136
  %v2368 = vpop.f32.mrf.mxu0
  %v2369 = vadd.f32 %v2281, %v2368
  %v2370 = vpop.f32.mrf.mxu0
  %v2371 = vpop.f32.mrf.mxu0
  %v2372 = vadd.f32 %v2284, %v2371
  %v2373 = vpop.f32.mrf.mxu0
  %2374 = vmatprep.mubr.bf16.mxu0 %v2145
  %2375 = vmatmul.mubr.bf16.gmra.mxu0 %v2144
  %v2376 = vpop.f32.mrf.mxu0
  %v2377 = vadd.f32 %v2289, %v2376
  %v2378 = vpop.f32.mrf.mxu0
  %v2379 = vpop.f32.mrf.mxu0
  %v2380 = vpop.f32.mrf.mxu0
  %2381 = vdwg.mxu0
  %2382 = vmatprep.subr.bf16.mxu0 0
  %2383 = vmatpush1.bf16.msra.mxu0 %v758
  %2384 = vmatprep.subr.bf16.mxu0 0
  %2385 = vmatpush1.bf16.msra.mxu0 %v757
  %2386 = vmatprep.subr.bf16.mxu0 0
  %2387 = vmatpush1.bf16.msra.mxu0 %v756
  %2388 = vmatprep.subr.bf16.mxu0 0
  %2389 = vmatpush1.bf16.msra.mxu0 %v755
  %2390 = vmatprep.subr.bf16.mxu0 0
  %2391 = vmatpush1.bf16.msra.mxu0 %v754
  %2392 = vmatprep.subr.bf16.mxu0 0
  %2393 = vmatpush1.bf16.msra.mxu0 %v753
  %2394 = vmatprep.subr.bf16.mxu0 0
  %2395 = vmatpush1.bf16.msra.mxu0 %v752
  %2396 = vmatprep.subr.bf16.mxu0 0
  %2397 = vmatpush1.bf16.msra.mxu0 %v751
  %2398 = vmatprep.subr.bf16.mxu0 0
  %2399 = vmatpush2.bf16.msra.mxu0 %v766
  %2400 = vmatprep.subr.bf16.mxu0 0
  %2401 = vmatpush2.bf16.msra.mxu0 %v765
  %2402 = vmatprep.subr.bf16.mxu0 0
  %2403 = vmatpush2.bf16.msra.mxu0 %v764
  %2404 = vmatprep.subr.bf16.mxu0 0
  %2405 = vmatpush2.bf16.msra.mxu0 %v763
  %2406 = vmatprep.subr.bf16.mxu0 0
  %2407 = vmatpush2.bf16.msra.mxu0 %v762
  %2408 = vmatprep.subr.bf16.mxu0 0
  %2409 = vmatpush2.bf16.msra.mxu0 %v761
  %2410 = vmatprep.subr.bf16.mxu0 0
  %2411 = vmatpush2.bf16.msra.mxu0 %v760
  %2412 = vmatprep.subr.bf16.mxu0 0
  %2413 = vmatpush2.bf16.msra.mxu0 %v759
  %2414 = vmatprep.mubr.bf16.mxu0 %v2099
  %2415 = vmatmul.mubr.bf16.gmra.mxu0 %v2098
  %v2416 = vpop.f32.mrf.mxu0
  %v2417 = vadd.f32 %v2329, %v2416
  %v2418 = vpop.f32.mrf.mxu0
  %v2419 = vpop.f32.mrf.mxu0
  %v2420 = vadd.f32 %v2332, %v2419
  %v2421 = vpop.f32.mrf.mxu0
  %2422 = vmatprep.mubr.bf16.mxu0 %v2107
  %2423 = vmatmul.mubr.bf16.gmra.mxu0 %v2106
  %v2424 = vpop.f32.mrf.mxu0
  %v2425 = vadd.f32 %v2337, %v2424
  %v2426 = vpop.f32.mrf.mxu0
  %v2427 = vpop.f32.mrf.mxu0
  %v2428 = vadd.f32 %v2340, %v2427
  %v2429 = vpop.f32.mrf.mxu0
  %2430 = vmatprep.mubr.bf16.mxu0 %v2115
  %2431 = vmatmul.mubr.bf16.gmra.mxu0 %v2114
  %v2432 = vpop.f32.mrf.mxu0
  %v2433 = vadd.f32 %v2345, %v2432
  %v2434 = vpop.f32.mrf.mxu0
  %v2435 = vpop.f32.mrf.mxu0
  %v2436 = vadd.f32 %v2348, %v2435
  %v2437 = vpop.f32.mrf.mxu0
  %2438 = vmatprep.mubr.bf16.mxu0 %v2123
  %2439 = vmatmul.mubr.bf16.gmra.mxu0 %v2122
  %v2440 = vpop.f32.mrf.mxu0
  %v2441 = vadd.f32 %v2353, %v2440
  %v2442 = vpop.f32.mrf.mxu0
  %v2443 = vpop.f32.mrf.mxu0
  %v2444 = vadd.f32 %v2356, %v2443
  %v2445 = vpop.f32.mrf.mxu0
  %2446 = vmatprep.mubr.bf16.mxu0 %v2131
  %2447 = vmatmul.mubr.bf16.gmra.mxu0 %v2130
  %v2448 = vpop.f32.mrf.mxu0
  %v2449 = vadd.f32 %v2361, %v2448
  %v2450 = vpop.f32.mrf.mxu0
  %v2451 = vpop.f32.mrf.mxu0
  %v2452 = vadd.f32 %v2364, %v2451
  %v2453 = vpop.f32.mrf.mxu0
  %2454 = vmatprep.mubr.bf16.mxu0 %v2139
  %2455 = vmatmul.mubr.bf16.gmra.mxu0 %v2138
  %v2456 = vpop.f32.mrf.mxu0
  %v2457 = vadd.f32 %v2369, %v2456
  %v2458 = vpop.f32.mrf.mxu0
  %v2459 = vpop.f32.mrf.mxu0
  %v2460 = vadd.f32 %v2372, %v2459
  %v2461 = vpop.f32.mrf.mxu0
  %2462 = vmatprep.mubr.bf16.mxu0 %v2147
  %2463 = vmatmul.mubr.bf16.gmra.mxu0 %v2146
  %v2464 = vpop.f32.mrf.mxu0
  %v2465 = vadd.f32 %v2377, %v2464
  %v2466 = vpop.f32.mrf.mxu0
  %v2467 = vpop.f32.mrf.mxu0
  %v2468 = vpop.f32.mrf.mxu0
  %2469 = vdwg.mxu0
  %2470 = vmatprep.subr.bf16.mxu0 0
  %2471 = vmatpush1.bf16.msra.mxu0 %v774
  %2472 = vmatprep.subr.bf16.mxu0 0
  %2473 = vmatpush1.bf16.msra.mxu0 %v773
  %2474 = vmatprep.subr.bf16.mxu0 0
  %2475 = vmatpush1.bf16.msra.mxu0 %v772
  %2476 = vmatprep.subr.bf16.mxu0 0
  %2477 = vmatpush1.bf16.msra.mxu0 %v771
  %2478 = vmatprep.subr.bf16.mxu0 0
  %2479 = vmatpush1.bf16.msra.mxu0 %v770
  %2480 = vmatprep.subr.bf16.mxu0 0
  %2481 = vmatpush1.bf16.msra.mxu0 %v769
  %2482 = vmatprep.subr.bf16.mxu0 0
  %2483 = vmatpush1.bf16.msra.mxu0 %v768
  %2484 = vmatprep.subr.bf16.mxu0 0
  %2485 = vmatpush1.bf16.msra.mxu0 %v767
  %2486 = vmatprep.subr.bf16.mxu0 0
  %2487 = vmatpush2.bf16.msra.mxu0 %v782
  %2488 = vmatprep.subr.bf16.mxu0 0
  %2489 = vmatpush2.bf16.msra.mxu0 %v781
  %2490 = vmatprep.subr.bf16.mxu0 0
  %2491 = vmatpush2.bf16.msra.mxu0 %v780
  %2492 = vmatprep.subr.bf16.mxu0 0
  %2493 = vmatpush2.bf16.msra.mxu0 %v779
  %2494 = vmatprep.subr.bf16.mxu0 0
  %2495 = vmatpush2.bf16.msra.mxu0 %v778
  %2496 = vmatprep.subr.bf16.mxu0 0
  %2497 = vmatpush2.bf16.msra.mxu0 %v777
  %2498 = vmatprep.subr.bf16.mxu0 0
  %2499 = vmatpush2.bf16.msra.mxu0 %v776
  %2500 = vmatprep.subr.bf16.mxu0 0
  %2501 = vmatpush2.bf16.msra.mxu0 %v775
  %2502 = vmatprep.mubr.bf16.mxu0 %v2101
  %2503 = vmatmul.mubr.bf16.gmra.mxu0 %v2100
  %v2504 = vpop.f32.mrf.mxu0
  %v2505 = vadd.f32 %v2417, %v2504
  %v2506 = vpop.f32.mrf.mxu0
  %v2507 = vpop.f32.mrf.mxu0
  %v2508 = vadd.f32 %v2420, %v2507
  %v2509 = vpop.f32.mrf.mxu0
  %2510 = vmatprep.mubr.bf16.mxu0 %v2109
  %2511 = vmatmul.mubr.bf16.gmra.mxu0 %v2108
  %v2512 = vpop.f32.mrf.mxu0
  %v2513 = vadd.f32 %v2425, %v2512
  %v2514 = vpop.f32.mrf.mxu0
  %v2515 = vpop.f32.mrf.mxu0
  %v2516 = vadd.f32 %v2428, %v2515
  %v2517 = vpop.f32.mrf.mxu0
  %2518 = vmatprep.mubr.bf16.mxu0 %v2117
  %2519 = vmatmul.mubr.bf16.gmra.mxu0 %v2116
  %v2520 = vpop.f32.mrf.mxu0
  %v2521 = vadd.f32 %v2433, %v2520
  %v2522 = vpop.f32.mrf.mxu0
  %v2523 = vpop.f32.mrf.mxu0
  %v2524 = vadd.f32 %v2436, %v2523
  %v2525 = vpop.f32.mrf.mxu0
  %2526 = vmatprep.mubr.bf16.mxu0 %v2125
  %2527 = vmatmul.mubr.bf16.gmra.mxu0 %v2124
  %v2528 = vpop.f32.mrf.mxu0
  %v2529 = vadd.f32 %v2441, %v2528
  %v2530 = vpop.f32.mrf.mxu0
  %v2531 = vpop.f32.mrf.mxu0
  %v2532 = vadd.f32 %v2444, %v2531
  %v2533 = vpop.f32.mrf.mxu0
  %2534 = vmatprep.mubr.bf16.mxu0 %v2133
  %2535 = vmatmul.mubr.bf16.gmra.mxu0 %v2132
  %v2536 = vpop.f32.mrf.mxu0
  %v2537 = vadd.f32 %v2449, %v2536
  %v2538 = vpop.f32.mrf.mxu0
  %v2539 = vpop.f32.mrf.mxu0
  %v2540 = vadd.f32 %v2452, %v2539
  %v2541 = vpop.f32.mrf.mxu0
  %2542 = vmatprep.mubr.bf16.mxu0 %v2141
  %2543 = vmatmul.mubr.bf16.gmra.mxu0 %v2140
  %v2544 = vpop.f32.mrf.mxu0
  %v2545 = vadd.f32 %v2457, %v2544
  %v2546 = vpop.f32.mrf.mxu0
  %v2547 = vpop.f32.mrf.mxu0
  %v2548 = vadd.f32 %v2460, %v2547
  %v2549 = vpop.f32.mrf.mxu0
  %2550 = vmatprep.mubr.bf16.mxu0 %v2149
  %2551 = vmatmul.mubr.bf16.gmra.mxu0 %v2148
  %v2552 = vpop.f32.mrf.mxu0
  %v2553 = vadd.f32 %v2465, %v2552
  %v2554 = vpop.f32.mrf.mxu0
  %v2555 = vpop.f32.mrf.mxu0
  %v2556 = vpop.f32.mrf.mxu0
  %2557 = vdwg.mxu0
  %v2558 = vmax.f32 %v1872, %v2505
  %v2559 = vmax.f32 %v1873, %v2508
  %v2560 = vmax.f32 %v1874, %v2513
  %v2561 = vmax.f32 %v1875, %v2516
  %v2562 = vmax.f32 %v1876, %v2521
  %v2563 = vmax.f32 %v1877, %v2524
  %v2564 = vmax.f32 %v1878, %v2529
  %v2565 = vmax.f32 %v1879, %v2532
  %v2566 = vmax.f32 %v1880, %v2537
  %v2567 = vmax.f32 %v1881, %v2540
  %v2568 = vmax.f32 %v1882, %v2545
  %v2569 = vmax.f32 %v1883, %v2548
  %v2570 = vmax.f32 %v1884, %v2553
  %s2571 = scalar_lea.vmem %s0, 1248
  %v2572 = vld [vmem:[%s2571] sm:$0xff]
  %v2573 = vld [vmem:[%s2571 + $0x8] sm:$0xff]
  %v2574 = vld [vmem:[%s2571 + $0x10] sm:$0xff]
  %v2575 = vld [vmem:[%s2571 + $0x18] sm:$0xff]
  %v2576 = vld [vmem:[%s2571 + $0x20] sm:$0xff]
  %v2577 = vld [vmem:[%s2571 + $0x28] sm:$0xff]
  %v2578 = vld [vmem:[%s2571 + $0x30] sm:$0xff]
  %v2579 = vld [vmem:[%s2571 + $0x38] sm:$0xff]
  %v2580 = vld [vmem:[%s2571 + $0x40] sm:$0xff]
  %v2581 = vld [vmem:[%s2571 + $0x48] sm:$0xff]
  %v2582 = vld [vmem:[%s2571 + $0x50] sm:$0xff]
  %v2583 = vld [vmem:[%s2571 + $0x58] sm:$0xff]
  %v2584 = vld [vmem:[%s2571 + $0x60] sm:$0xff]
  %v2585 = vld [vmem:[%s2571 + $0x68] sm:$0xff]
  %v2586 = vld [vmem:[%s2571 + $0x70] sm:$0xff]
  %v2587 = vld [vmem:[%s2571 + $0x78] sm:$0xff]
  %v2588 = vld [vmem:[%s2571 + $0x80] sm:$0xff]
  %v2589 = vld [vmem:[%s2571 + $0x88] sm:$0xff]
  %v2590 = vld [vmem:[%s2571 + $0x90] sm:$0xff]
  %v2591 = vld [vmem:[%s2571 + $0x98] sm:$0xff]
  %v2592 = vld [vmem:[%s2571 + $0xa0] sm:$0xff]
  %v2593 = vld [vmem:[%s2571 + $0xa8] sm:$0xff]
  %v2594 = vld [vmem:[%s2571 + $0xb0] sm:$0xff]
  %v2595 = vld [vmem:[%s2571 + $0xb8] sm:$0xff]
  %v2596 = vld [vmem:[%s2571 + $0xc0] sm:$0xff]
  %v2597 = vld [vmem:[%s2571 + $0xc8] sm:$0xff]
  %v2598 = vld [vmem:[%s2571 + $0xd0] sm:$0xff]
  %v2599 = vld [vmem:[%s2571 + $0xd8] sm:$0xff]
  %v2600 = vld [vmem:[%s2571 + $0xe0] sm:$0xff]
  %v2601 = vld [vmem:[%s2571 + $0xe8] sm:$0xff]
  %v2602 = vld [vmem:[%s2571 + $0xf0] sm:$0xff]
  %v2603 = vld [vmem:[%s2571 + $0xf8] sm:$0xff]
  %v2604 = vld [vmem:[%s2571 + $0x100] sm:$0xff]
  %v2605 = vld [vmem:[%s2571 + $0x108] sm:$0xff]
  %v2606 = vld [vmem:[%s2571 + $0x110] sm:$0xff]
  %v2607 = vld [vmem:[%s2571 + $0x118] sm:$0xff]
  %v2608 = vld [vmem:[%s2571 + $0x120] sm:$0xff]
  %v2609 = vld [vmem:[%s2571 + $0x128] sm:$0xff]
  %v2610 = vld [vmem:[%s2571 + $0x130] sm:$0xff]
  %v2611 = vld [vmem:[%s2571 + $0x138] sm:$0xff]
  %v2612 = vld [vmem:[%s2571 + $0x140] sm:$0xff]
  %v2613 = vld [vmem:[%s2571 + $0x148] sm:$0xff]
  %v2614 = vld [vmem:[%s2571 + $0x150] sm:$0xff]
  %v2615 = vld [vmem:[%s2571 + $0x158] sm:$0xff]
  %v2616 = vld [vmem:[%s2571 + $0x160] sm:$0xff]
  %v2617 = vld [vmem:[%s2571 + $0x168] sm:$0xff]
  %v2618 = vld [vmem:[%s2571 + $0x170] sm:$0xff]
  %v2619 = vld [vmem:[%s2571 + $0x178] sm:$0xff]
  %v2620 = vld [vmem:[%s2571 + $0x180] sm:$0xff]
  %v2621 = vld [vmem:[%s2571 + $0x188] sm:$0xff]
  %v2622 = vld [vmem:[%s2571 + $0x190] sm:$0xff]
  %v2623 = vld [vmem:[%s2571 + $0x198] sm:$0xff]
  %v2676 = vunpack.c.l.b16 %v2572
  %v2677 = vunpack.c.h.b16 %v2572
  %v2678 = vunpack.c.l.b16 %v2573
  %v2679 = vunpack.c.h.b16 %v2573
  %v2680 = vunpack.c.l.b16 %v2574
  %v2681 = vunpack.c.h.b16 %v2574
  %v2682 = vunpack.c.l.b16 %v2575
  %v2683 = vunpack.c.h.b16 %v2575
  %v2684 = vunpack.c.l.b16 %v2576
  %v2685 = vunpack.c.h.b16 %v2576
  %v2686 = vunpack.c.l.b16 %v2577
  %v2687 = vunpack.c.h.b16 %v2577
  %v2688 = vunpack.c.l.b16 %v2578
  %v2689 = vunpack.c.h.b16 %v2578
  %v2690 = vunpack.c.l.b16 %v2579
  %v2691 = vunpack.c.h.b16 %v2579
  %v2692 = vunpack.c.l.b16 %v2580
  %v2693 = vunpack.c.h.b16 %v2580
  %v2694 = vunpack.c.l.b16 %v2581
  %v2695 = vunpack.c.h.b16 %v2581
  %v2696 = vunpack.c.l.b16 %v2582
  %v2697 = vunpack.c.h.b16 %v2582
  %v2698 = vunpack.c.l.b16 %v2583
  %v2699 = vunpack.c.h.b16 %v2583
  %v2700 = vunpack.c.l.b16 %v2584
  %v2701 = vunpack.c.h.b16 %v2584
  %v2702 = vunpack.c.l.b16 %v2585
  %v2703 = vunpack.c.h.b16 %v2585
  %v2704 = vunpack.c.l.b16 %v2586
  %v2705 = vunpack.c.h.b16 %v2586
  %v2706 = vunpack.c.l.b16 %v2587
  %v2707 = vunpack.c.h.b16 %v2587
  %v2708 = vunpack.c.l.b16 %v2588
  %v2709 = vunpack.c.h.b16 %v2588
  %v2710 = vunpack.c.l.b16 %v2589
  %v2711 = vunpack.c.h.b16 %v2589
  %v2712 = vunpack.c.l.b16 %v2590
  %v2713 = vunpack.c.h.b16 %v2590
  %v2714 = vunpack.c.l.b16 %v2591
  %v2715 = vunpack.c.h.b16 %v2591
  %v2716 = vunpack.c.l.b16 %v2592
  %v2717 = vunpack.c.h.b16 %v2592
  %v2718 = vunpack.c.l.b16 %v2593
  %v2719 = vunpack.c.h.b16 %v2593
  %v2720 = vunpack.c.l.b16 %v2594
  %v2721 = vunpack.c.h.b16 %v2594
  %v2722 = vunpack.c.l.b16 %v2595
  %v2723 = vunpack.c.h.b16 %v2595
  %v2724 = vunpack.c.l.b16 %v2596
  %v2725 = vunpack.c.h.b16 %v2596
  %v2726 = vunpack.c.l.b16 %v2597
  %v2727 = vunpack.c.h.b16 %v2597
  %v2728 = vunpack.c.l.b16 %v2598
  %v2729 = vunpack.c.h.b16 %v2598
  %v2730 = vunpack.c.l.b16 %v2599
  %v2731 = vunpack.c.h.b16 %v2599
  %v2732 = vunpack.c.l.b16 %v2600
  %v2733 = vunpack.c.h.b16 %v2600
  %v2734 = vunpack.c.l.b16 %v2601
  %v2735 = vunpack.c.h.b16 %v2601
  %v2736 = vunpack.c.l.b16 %v2602
  %v2737 = vunpack.c.h.b16 %v2602
  %v2738 = vunpack.c.l.b16 %v2603
  %v2739 = vunpack.c.h.b16 %v2603
  %v2740 = vunpack.c.l.b16 %v2604
  %v2741 = vunpack.c.h.b16 %v2604
  %v2742 = vunpack.c.l.b16 %v2605
  %v2743 = vunpack.c.h.b16 %v2605
  %v2744 = vunpack.c.l.b16 %v2606
  %v2745 = vunpack.c.h.b16 %v2606
  %v2746 = vunpack.c.l.b16 %v2607
  %v2747 = vunpack.c.h.b16 %v2607
  %v2748 = vunpack.c.l.b16 %v2608
  %v2749 = vunpack.c.h.b16 %v2608
  %v2750 = vunpack.c.l.b16 %v2609
  %v2751 = vunpack.c.h.b16 %v2609
  %v2752 = vunpack.c.l.b16 %v2610
  %v2753 = vunpack.c.h.b16 %v2610
  %v2754 = vunpack.c.l.b16 %v2611
  %v2755 = vunpack.c.h.b16 %v2611
  %v2756 = vunpack.c.l.b16 %v2612
  %v2757 = vunpack.c.h.b16 %v2612
  %v2758 = vunpack.c.l.b16 %v2613
  %v2759 = vunpack.c.h.b16 %v2613
  %v2760 = vunpack.c.l.b16 %v2614
  %v2761 = vunpack.c.h.b16 %v2614
  %v2762 = vunpack.c.l.b16 %v2615
  %v2763 = vunpack.c.h.b16 %v2615
  %v2764 = vunpack.c.l.b16 %v2616
  %v2765 = vunpack.c.h.b16 %v2616
  %v2766 = vunpack.c.l.b16 %v2617
  %v2767 = vunpack.c.h.b16 %v2617
  %v2768 = vunpack.c.l.b16 %v2618
  %v2769 = vunpack.c.h.b16 %v2618
  %v2770 = vunpack.c.l.b16 %v2619
  %v2771 = vunpack.c.h.b16 %v2619
  %v2772 = vunpack.c.l.b16 %v2620
  %v2773 = vunpack.c.h.b16 %v2620
  %v2774 = vunpack.c.l.b16 %v2621
  %v2775 = vunpack.c.h.b16 %v2621
  %v2776 = vunpack.c.l.b16 %v2622
  %v2777 = vunpack.c.h.b16 %v2622
  %v2778 = vunpack.c.l.b16 %v2623
  %v2779 = vunpack.c.h.b16 %v2623
  %v2780 = vpack.c.b16 %v2684, %v2676
  %v2781 = vpack.c.b16 %v2685, %v2677
  %v2782 = vpack.c.b16 %v2686, %v2678
  %v2783 = vpack.c.b16 %v2687, %v2679
  %v2784 = vpack.c.b16 %v2688, %v2680
  %v2785 = vpack.c.b16 %v2689, %v2681
  %v2786 = vpack.c.b16 %v2690, %v2682
  %v2787 = vpack.c.b16 %v2691, %v2683
  %v2788 = vpack.c.b16 %v2700, %v2692
  %v2789 = vpack.c.b16 %v2701, %v2693
  %v2790 = vpack.c.b16 %v2702, %v2694
  %v2791 = vpack.c.b16 %v2703, %v2695
  %v2792 = vpack.c.b16 %v2704, %v2696
  %v2793 = vpack.c.b16 %v2705, %v2697
  %v2794 = vpack.c.b16 %v2706, %v2698
  %v2795 = vpack.c.b16 %v2707, %v2699
  %v2796 = vpack.c.b16 %v2716, %v2708
  %v2797 = vpack.c.b16 %v2717, %v2709
  %v2798 = vpack.c.b16 %v2718, %v2710
  %v2799 = vpack.c.b16 %v2719, %v2711
  %v2800 = vpack.c.b16 %v2720, %v2712
  %v2801 = vpack.c.b16 %v2721, %v2713
  %v2802 = vpack.c.b16 %v2722, %v2714
  %v2803 = vpack.c.b16 %v2723, %v2715
  %v2804 = vpack.c.b16 %v2732, %v2724
  %v2805 = vpack.c.b16 %v2733, %v2725
  %v2806 = vpack.c.b16 %v2734, %v2726
  %v2807 = vpack.c.b16 %v2735, %v2727
  %v2808 = vpack.c.b16 %v2736, %v2728
  %v2809 = vpack.c.b16 %v2737, %v2729
  %v2810 = vpack.c.b16 %v2738, %v2730
  %v2811 = vpack.c.b16 %v2739, %v2731
  %v2812 = vpack.c.b16 %v2748, %v2740
  %v2813 = vpack.c.b16 %v2749, %v2741
  %v2814 = vpack.c.b16 %v2750, %v2742
  %v2815 = vpack.c.b16 %v2751, %v2743
  %v2816 = vpack.c.b16 %v2752, %v2744
  %v2817 = vpack.c.b16 %v2753, %v2745
  %v2818 = vpack.c.b16 %v2754, %v2746
  %v2819 = vpack.c.b16 %v2755, %v2747
  %v2820 = vpack.c.b16 %v2764, %v2756
  %v2821 = vpack.c.b16 %v2765, %v2757
  %v2822 = vpack.c.b16 %v2766, %v2758
  %v2823 = vpack.c.b16 %v2767, %v2759
  %v2824 = vpack.c.b16 %v2768, %v2760
  %v2825 = vpack.c.b16 %v2769, %v2761
  %v2826 = vpack.c.b16 %v2770, %v2762
  %v2827 = vpack.c.b16 %v2771, %v2763
  %v2828 = vpack.c.b16 %v2772, %v2772
  %v2829 = vpack.c.b16 %v2773, %v2773
  %v2830 = vpack.c.b16 %v2774, %v2774
  %v2831 = vpack.c.b16 %v2775, %v2775
  %v2832 = vpack.c.b16 %v2776, %v2776
  %v2833 = vpack.c.b16 %v2777, %v2777
  %v2834 = vpack.c.b16 %v2778, %v2778
  %v2835 = vpack.c.b16 %v2779, %v2779
  %2892 = vmatprep.subr.bf16.mxu0 0
  %2893 = vmatpush1.bf16.msra.mxu0 %v726
  %2894 = vmatprep.subr.bf16.mxu0 0
  %2895 = vmatpush1.bf16.msra.mxu0 %v725
  %2896 = vmatprep.subr.bf16.mxu0 0
  %2897 = vmatpush1.bf16.msra.mxu0 %v724
  %2898 = vmatprep.subr.bf16.mxu0 0
  %2899 = vmatpush1.bf16.msra.mxu0 %v723
  %2900 = vmatprep.subr.bf16.mxu0 0
  %2901 = vmatpush1.bf16.msra.mxu0 %v722
  %2902 = vmatprep.subr.bf16.mxu0 0
  %2903 = vmatpush1.bf16.msra.mxu0 %v721
  %2904 = vmatprep.subr.bf16.mxu0 0
  %2905 = vmatpush1.bf16.msra.mxu0 %v720
  %2906 = vmatprep.subr.bf16.mxu0 0
  %2907 = vmatpush1.bf16.msra.mxu0 %v719
  %2908 = vmatprep.subr.bf16.mxu0 0
  %2909 = vmatpush2.bf16.msra.mxu0 %v734
  %2910 = vmatprep.subr.bf16.mxu0 0
  %2911 = vmatpush2.bf16.msra.mxu0 %v733
  %2912 = vmatprep.subr.bf16.mxu0 0
  %2913 = vmatpush2.bf16.msra.mxu0 %v732
  %2914 = vmatprep.subr.bf16.mxu0 0
  %2915 = vmatpush2.bf16.msra.mxu0 %v731
  %2916 = vmatprep.subr.bf16.mxu0 0
  %2917 = vmatpush2.bf16.msra.mxu0 %v730
  %2918 = vmatprep.subr.bf16.mxu0 0
  %2919 = vmatpush2.bf16.msra.mxu0 %v729
  %2920 = vmatprep.subr.bf16.mxu0 0
  %2921 = vmatpush2.bf16.msra.mxu0 %v728
  %2922 = vmatprep.subr.bf16.mxu0 0
  %2923 = vmatpush2.bf16.msra.mxu0 %v727
  %2924 = vmatprep.mubr.bf16.mxu0 %v2781
  %2925 = vmatmul.mubr.bf16.gmra.mxu0 %v2780
  %v2926 = vpop.f32.mrf.mxu0
  %v2927 = vadd.f32 0.0, %v2926
  %v2928 = vpop.f32.mrf.mxu0
  %v2929 = vpop.f32.mrf.mxu0
  %v2930 = vadd.f32 0.0, %v2929
  %v2931 = vpop.f32.mrf.mxu0
  %2932 = vmatprep.mubr.bf16.mxu0 %v2789
  %2933 = vmatmul.mubr.bf16.gmra.mxu0 %v2788
  %v2934 = vpop.f32.mrf.mxu0
  %v2935 = vadd.f32 0.0, %v2934
  %v2936 = vpop.f32.mrf.mxu0
  %v2937 = vpop.f32.mrf.mxu0
  %v2938 = vadd.f32 0.0, %v2937
  %v2939 = vpop.f32.mrf.mxu0
  %2940 = vmatprep.mubr.bf16.mxu0 %v2797
  %2941 = vmatmul.mubr.bf16.gmra.mxu0 %v2796
  %v2942 = vpop.f32.mrf.mxu0
  %v2943 = vadd.f32 0.0, %v2942
  %v2944 = vpop.f32.mrf.mxu0
  %v2945 = vpop.f32.mrf.mxu0
  %v2946 = vadd.f32 0.0, %v2945
  %v2947 = vpop.f32.mrf.mxu0
  %2948 = vmatprep.mubr.bf16.mxu0 %v2805
  %2949 = vmatmul.mubr.bf16.gmra.mxu0 %v2804
  %v2950 = vpop.f32.mrf.mxu0
  %v2951 = vadd.f32 0.0, %v2950
  %v2952 = vpop.f32.mrf.mxu0
  %v2953 = vpop.f32.mrf.mxu0
  %v2954 = vadd.f32 0.0, %v2953
  %v2955 = vpop.f32.mrf.mxu0
  %2956 = vmatprep.mubr.bf16.mxu0 %v2813
  %2957 = vmatmul.mubr.bf16.gmra.mxu0 %v2812
  %v2958 = vpop.f32.mrf.mxu0
  %v2959 = vadd.f32 0.0, %v2958
  %v2960 = vpop.f32.mrf.mxu0
  %v2961 = vpop.f32.mrf.mxu0
  %v2962 = vadd.f32 0.0, %v2961
  %v2963 = vpop.f32.mrf.mxu0
  %2964 = vmatprep.mubr.bf16.mxu0 %v2821
  %2965 = vmatmul.mubr.bf16.gmra.mxu0 %v2820
  %v2966 = vpop.f32.mrf.mxu0
  %v2967 = vadd.f32 0.0, %v2966
  %v2968 = vpop.f32.mrf.mxu0
  %v2969 = vpop.f32.mrf.mxu0
  %v2970 = vadd.f32 0.0, %v2969
  %v2971 = vpop.f32.mrf.mxu0
  %2972 = vmatprep.mubr.bf16.mxu0 %v2829
  %2973 = vmatmul.mubr.bf16.gmra.mxu0 %v2828
  %v2974 = vpop.f32.mrf.mxu0
  %v2975 = vadd.f32 0.0, %v2974
  %v2976 = vpop.f32.mrf.mxu0
  %v2977 = vpop.f32.mrf.mxu0
  %v2978 = vpop.f32.mrf.mxu0
  %2979 = vdwg.mxu0
  %2980 = vmatprep.subr.bf16.mxu0 0
  %2981 = vmatpush1.bf16.msra.mxu0 %v742
  %2982 = vmatprep.subr.bf16.mxu0 0
  %2983 = vmatpush1.bf16.msra.mxu0 %v741
  %2984 = vmatprep.subr.bf16.mxu0 0
  %2985 = vmatpush1.bf16.msra.mxu0 %v740
  %2986 = vmatprep.subr.bf16.mxu0 0
  %2987 = vmatpush1.bf16.msra.mxu0 %v739
  %2988 = vmatprep.subr.bf16.mxu0 0
  %2989 = vmatpush1.bf16.msra.mxu0 %v738
  %2990 = vmatprep.subr.bf16.mxu0 0
  %2991 = vmatpush1.bf16.msra.mxu0 %v737
  %2992 = vmatprep.subr.bf16.mxu0 0
  %2993 = vmatpush1.bf16.msra.mxu0 %v736
  %2994 = vmatprep.subr.bf16.mxu0 0
  %2995 = vmatpush1.bf16.msra.mxu0 %v735
  %2996 = vmatprep.subr.bf16.mxu0 0
  %2997 = vmatpush2.bf16.msra.mxu0 %v750
  %2998 = vmatprep.subr.bf16.mxu0 0
  %2999 = vmatpush2.bf16.msra.mxu0 %v749
  %3000 = vmatprep.subr.bf16.mxu0 0
  %3001 = vmatpush2.bf16.msra.mxu0 %v748
  %3002 = vmatprep.subr.bf16.mxu0 0
  %3003 = vmatpush2.bf16.msra.mxu0 %v747
  %3004 = vmatprep.subr.bf16.mxu0 0
  %3005 = vmatpush2.bf16.msra.mxu0 %v746
  %3006 = vmatprep.subr.bf16.mxu0 0
  %3007 = vmatpush2.bf16.msra.mxu0 %v745
  %3008 = vmatprep.subr.bf16.mxu0 0
  %3009 = vmatpush2.bf16.msra.mxu0 %v744
  %3010 = vmatprep.subr.bf16.mxu0 0
  %3011 = vmatpush2.bf16.msra.mxu0 %v743
  %3012 = vmatprep.mubr.bf16.mxu0 %v2783
  %3013 = vmatmul.mubr.bf16.gmra.mxu0 %v2782
  %v3014 = vpop.f32.mrf.mxu0
  %v3015 = vadd.f32 %v2927, %v3014
  %v3016 = vpop.f32.mrf.mxu0
  %v3017 = vpop.f32.mrf.mxu0
  %v3018 = vadd.f32 %v2930, %v3017
  %v3019 = vpop.f32.mrf.mxu0
  %3020 = vmatprep.mubr.bf16.mxu0 %v2791
  %3021 = vmatmul.mubr.bf16.gmra.mxu0 %v2790
  %v3022 = vpop.f32.mrf.mxu0
  %v3023 = vadd.f32 %v2935, %v3022
  %v3024 = vpop.f32.mrf.mxu0
  %v3025 = vpop.f32.mrf.mxu0
  %v3026 = vadd.f32 %v2938, %v3025
  %v3027 = vpop.f32.mrf.mxu0
  %3028 = vmatprep.mubr.bf16.mxu0 %v2799
  %3029 = vmatmul.mubr.bf16.gmra.mxu0 %v2798
  %v3030 = vpop.f32.mrf.mxu0
  %v3031 = vadd.f32 %v2943, %v3030
  %v3032 = vpop.f32.mrf.mxu0
  %v3033 = vpop.f32.mrf.mxu0
  %v3034 = vadd.f32 %v2946, %v3033
  %v3035 = vpop.f32.mrf.mxu0
  %3036 = vmatprep.mubr.bf16.mxu0 %v2807
  %3037 = vmatmul.mubr.bf16.gmra.mxu0 %v2806
  %v3038 = vpop.f32.mrf.mxu0
  %v3039 = vadd.f32 %v2951, %v3038
  %v3040 = vpop.f32.mrf.mxu0
  %v3041 = vpop.f32.mrf.mxu0
  %v3042 = vadd.f32 %v2954, %v3041
  %v3043 = vpop.f32.mrf.mxu0
  %3044 = vmatprep.mubr.bf16.mxu0 %v2815
  %3045 = vmatmul.mubr.bf16.gmra.mxu0 %v2814
  %v3046 = vpop.f32.mrf.mxu0
  %v3047 = vadd.f32 %v2959, %v3046
  %v3048 = vpop.f32.mrf.mxu0
  %v3049 = vpop.f32.mrf.mxu0
  %v3050 = vadd.f32 %v2962, %v3049
  %v3051 = vpop.f32.mrf.mxu0
  %3052 = vmatprep.mubr.bf16.mxu0 %v2823
  %3053 = vmatmul.mubr.bf16.gmra.mxu0 %v2822
  %v3054 = vpop.f32.mrf.mxu0
  %v3055 = vadd.f32 %v2967, %v3054
  %v3056 = vpop.f32.mrf.mxu0
  %v3057 = vpop.f32.mrf.mxu0
  %v3058 = vadd.f32 %v2970, %v3057
  %v3059 = vpop.f32.mrf.mxu0
  %3060 = vmatprep.mubr.bf16.mxu0 %v2831
  %3061 = vmatmul.mubr.bf16.gmra.mxu0 %v2830
  %v3062 = vpop.f32.mrf.mxu0
  %v3063 = vadd.f32 %v2975, %v3062
  %v3064 = vpop.f32.mrf.mxu0
  %v3065 = vpop.f32.mrf.mxu0
  %v3066 = vpop.f32.mrf.mxu0
  %3067 = vdwg.mxu0
  %3068 = vmatprep.subr.bf16.mxu0 0
  %3069 = vmatpush1.bf16.msra.mxu0 %v758
  %3070 = vmatprep.subr.bf16.mxu0 0
  %3071 = vmatpush1.bf16.msra.mxu0 %v757
  %3072 = vmatprep.subr.bf16.mxu0 0
  %3073 = vmatpush1.bf16.msra.mxu0 %v756
  %3074 = vmatprep.subr.bf16.mxu0 0
  %3075 = vmatpush1.bf16.msra.mxu0 %v755
  %3076 = vmatprep.subr.bf16.mxu0 0
  %3077 = vmatpush1.bf16.msra.mxu0 %v754
  %3078 = vmatprep.subr.bf16.mxu0 0
  %3079 = vmatpush1.bf16.msra.mxu0 %v753
  %3080 = vmatprep.subr.bf16.mxu0 0
  %3081 = vmatpush1.bf16.msra.mxu0 %v752
  %3082 = vmatprep.subr.bf16.mxu0 0
  %3083 = vmatpush1.bf16.msra.mxu0 %v751
  %3084 = vmatprep.subr.bf16.mxu0 0
  %3085 = vmatpush2.bf16.msra.mxu0 %v766
  %3086 = vmatprep.subr.bf16.mxu0 0
  %3087 = vmatpush2.bf16.msra.mxu0 %v765
  %3088 = vmatprep.subr.bf16.mxu0 0
  %3089 = vmatpush2.bf16.msra.mxu0 %v764
  %3090 = vmatprep.subr.bf16.mxu0 0
  %3091 = vmatpush2.bf16.msra.mxu0 %v763
  %3092 = vmatprep.subr.bf16.mxu0 0
  %3093 = vmatpush2.bf16.msra.mxu0 %v762
  %3094 = vmatprep.subr.bf16.mxu0 0
  %3095 = vmatpush2.bf16.msra.mxu0 %v761
  %3096 = vmatprep.subr.bf16.mxu0 0
  %3097 = vmatpush2.bf16.msra.mxu0 %v760
  %3098 = vmatprep.subr.bf16.mxu0 0
  %3099 = vmatpush2.bf16.msra.mxu0 %v759
  %3100 = vmatprep.mubr.bf16.mxu0 %v2785
  %3101 = vmatmul.mubr.bf16.gmra.mxu0 %v2784
  %v3102 = vpop.f32.mrf.mxu0
  %v3103 = vadd.f32 %v3015, %v3102
  %v3104 = vpop.f32.mrf.mxu0
  %v3105 = vpop.f32.mrf.mxu0
  %v3106 = vadd.f32 %v3018, %v3105
  %v3107 = vpop.f32.mrf.mxu0
  %3108 = vmatprep.mubr.bf16.mxu0 %v2793
  %3109 = vmatmul.mubr.bf16.gmra.mxu0 %v2792
  %v3110 = vpop.f32.mrf.mxu0
  %v3111 = vadd.f32 %v3023, %v3110
  %v3112 = vpop.f32.mrf.mxu0
  %v3113 = vpop.f32.mrf.mxu0
  %v3114 = vadd.f32 %v3026, %v3113
  %v3115 = vpop.f32.mrf.mxu0
  %3116 = vmatprep.mubr.bf16.mxu0 %v2801
  %3117 = vmatmul.mubr.bf16.gmra.mxu0 %v2800
  %v3118 = vpop.f32.mrf.mxu0
  %v3119 = vadd.f32 %v3031, %v3118
  %v3120 = vpop.f32.mrf.mxu0
  %v3121 = vpop.f32.mrf.mxu0
  %v3122 = vadd.f32 %v3034, %v3121
  %v3123 = vpop.f32.mrf.mxu0
  %3124 = vmatprep.mubr.bf16.mxu0 %v2809
  %3125 = vmatmul.mubr.bf16.gmra.mxu0 %v2808
  %v3126 = vpop.f32.mrf.mxu0
  %v3127 = vadd.f32 %v3039, %v3126
  %v3128 = vpop.f32.mrf.mxu0
  %v3129 = vpop.f32.mrf.mxu0
  %v3130 = vadd.f32 %v3042, %v3129
  %v3131 = vpop.f32.mrf.mxu0
  %3132 = vmatprep.mubr.bf16.mxu0 %v2817
  %3133 = vmatmul.mubr.bf16.gmra.mxu0 %v2816
  %v3134 = vpop.f32.mrf.mxu0
  %v3135 = vadd.f32 %v3047, %v3134
  %v3136 = vpop.f32.mrf.mxu0
  %v3137 = vpop.f32.mrf.mxu0
  %v3138 = vadd.f32 %v3050, %v3137
  %v3139 = vpop.f32.mrf.mxu0
  %3140 = vmatprep.mubr.bf16.mxu0 %v2825
  %3141 = vmatmul.mubr.bf16.gmra.mxu0 %v2824
  %v3142 = vpop.f32.mrf.mxu0
  %v3143 = vadd.f32 %v3055, %v3142
  %v3144 = vpop.f32.mrf.mxu0
  %v3145 = vpop.f32.mrf.mxu0
  %v3146 = vadd.f32 %v3058, %v3145
  %v3147 = vpop.f32.mrf.mxu0
  %3148 = vmatprep.mubr.bf16.mxu0 %v2833
  %3149 = vmatmul.mubr.bf16.gmra.mxu0 %v2832
  %v3150 = vpop.f32.mrf.mxu0
  %v3151 = vadd.f32 %v3063, %v3150
  %v3152 = vpop.f32.mrf.mxu0
  %v3153 = vpop.f32.mrf.mxu0
  %v3154 = vpop.f32.mrf.mxu0
  %3155 = vdwg.mxu0
  %3156 = vmatprep.subr.bf16.mxu0 0
  %3157 = vmatpush1.bf16.msra.mxu0 %v774
  %3158 = vmatprep.subr.bf16.mxu0 0
  %3159 = vmatpush1.bf16.msra.mxu0 %v773
  %3160 = vmatprep.subr.bf16.mxu0 0
  %3161 = vmatpush1.bf16.msra.mxu0 %v772
  %3162 = vmatprep.subr.bf16.mxu0 0
  %3163 = vmatpush1.bf16.msra.mxu0 %v771
  %3164 = vmatprep.subr.bf16.mxu0 0
  %3165 = vmatpush1.bf16.msra.mxu0 %v770
  %3166 = vmatprep.subr.bf16.mxu0 0
  %3167 = vmatpush1.bf16.msra.mxu0 %v769
  %3168 = vmatprep.subr.bf16.mxu0 0
  %3169 = vmatpush1.bf16.msra.mxu0 %v768
  %3170 = vmatprep.subr.bf16.mxu0 0
  %3171 = vmatpush1.bf16.msra.mxu0 %v767
  %3172 = vmatprep.subr.bf16.mxu0 0
  %3173 = vmatpush2.bf16.msra.mxu0 %v782
  %3174 = vmatprep.subr.bf16.mxu0 0
  %3175 = vmatpush2.bf16.msra.mxu0 %v781
  %3176 = vmatprep.subr.bf16.mxu0 0
  %3177 = vmatpush2.bf16.msra.mxu0 %v780
  %3178 = vmatprep.subr.bf16.mxu0 0
  %3179 = vmatpush2.bf16.msra.mxu0 %v779
  %3180 = vmatprep.subr.bf16.mxu0 0
  %3181 = vmatpush2.bf16.msra.mxu0 %v778
  %3182 = vmatprep.subr.bf16.mxu0 0
  %3183 = vmatpush2.bf16.msra.mxu0 %v777
  %3184 = vmatprep.subr.bf16.mxu0 0
  %3185 = vmatpush2.bf16.msra.mxu0 %v776
  %3186 = vmatprep.subr.bf16.mxu0 0
  %3187 = vmatpush2.bf16.msra.mxu0 %v775
  %3188 = vmatprep.mubr.bf16.mxu0 %v2787
  %3189 = vmatmul.mubr.bf16.gmra.mxu0 %v2786
  %v3190 = vpop.f32.mrf.mxu0
  %v3191 = vadd.f32 %v3103, %v3190
  %v3192 = vpop.f32.mrf.mxu0
  %v3193 = vpop.f32.mrf.mxu0
  %v3194 = vadd.f32 %v3106, %v3193
  %v3195 = vpop.f32.mrf.mxu0
  %3196 = vmatprep.mubr.bf16.mxu0 %v2795
  %3197 = vmatmul.mubr.bf16.gmra.mxu0 %v2794
  %v3198 = vpop.f32.mrf.mxu0
  %v3199 = vadd.f32 %v3111, %v3198
  %v3200 = vpop.f32.mrf.mxu0
  %v3201 = vpop.f32.mrf.mxu0
  %v3202 = vadd.f32 %v3114, %v3201
  %v3203 = vpop.f32.mrf.mxu0
  %3204 = vmatprep.mubr.bf16.mxu0 %v2803
  %3205 = vmatmul.mubr.bf16.gmra.mxu0 %v2802
  %v3206 = vpop.f32.mrf.mxu0
  %v3207 = vadd.f32 %v3119, %v3206
  %v3208 = vpop.f32.mrf.mxu0
  %v3209 = vpop.f32.mrf.mxu0
  %v3210 = vadd.f32 %v3122, %v3209
  %v3211 = vpop.f32.mrf.mxu0
  %3212 = vmatprep.mubr.bf16.mxu0 %v2811
  %3213 = vmatmul.mubr.bf16.gmra.mxu0 %v2810
  %v3214 = vpop.f32.mrf.mxu0
  %v3215 = vadd.f32 %v3127, %v3214
  %v3216 = vpop.f32.mrf.mxu0
  %v3217 = vpop.f32.mrf.mxu0
  %v3218 = vadd.f32 %v3130, %v3217
  %v3219 = vpop.f32.mrf.mxu0
  %3220 = vmatprep.mubr.bf16.mxu0 %v2819
  %3221 = vmatmul.mubr.bf16.gmra.mxu0 %v2818
  %v3222 = vpop.f32.mrf.mxu0
  %v3223 = vadd.f32 %v3135, %v3222
  %v3224 = vpop.f32.mrf.mxu0
  %v3225 = vpop.f32.mrf.mxu0
  %v3226 = vadd.f32 %v3138, %v3225
  %v3227 = vpop.f32.mrf.mxu0
  %3228 = vmatprep.mubr.bf16.mxu0 %v2827
  %3229 = vmatmul.mubr.bf16.gmra.mxu0 %v2826
  %v3230 = vpop.f32.mrf.mxu0
  %v3231 = vadd.f32 %v3143, %v3230
  %v3232 = vpop.f32.mrf.mxu0
  %v3233 = vpop.f32.mrf.mxu0
  %v3234 = vadd.f32 %v3146, %v3233
  %v3235 = vpop.f32.mrf.mxu0
  %3236 = vmatprep.mubr.bf16.mxu0 %v2835
  %3237 = vmatmul.mubr.bf16.gmra.mxu0 %v2834
  %v3238 = vpop.f32.mrf.mxu0
  %v3239 = vadd.f32 %v3151, %v3238
  %v3240 = vpop.f32.mrf.mxu0
  %v3241 = vpop.f32.mrf.mxu0
  %v3242 = vpop.f32.mrf.mxu0
  %3243 = vdwg.mxu0
  %v3244 = vmax.f32 %v2558, %v3191
  %v3245 = vmax.f32 %v2559, %v3194
  %v3246 = vmax.f32 %v2560, %v3199
  %v3247 = vmax.f32 %v2561, %v3202
  %v3248 = vmax.f32 %v2562, %v3207
  %v3249 = vmax.f32 %v2563, %v3210
  %v3250 = vmax.f32 %v2564, %v3215
  %v3251 = vmax.f32 %v2565, %v3218
  %v3252 = vmax.f32 %v2566, %v3223
  %v3253 = vmax.f32 %v2567, %v3226
  %v3254 = vmax.f32 %v2568, %v3231
  %v3255 = vmax.f32 %v2569, %v3234
  %v3256 = vmax.f32 %v2570, %v3239
  %v3257 = vld [vmem:[%s2] sm:$0x1]
  %v3259 = vlaneseq
  %v3260 = vshrl.u32 %v3259, 7
  %v3261 = vsub.s32 0, %v3260
  %v3262 = vrot.slane %v3257, %v3261
  %v3264 = vadd.f32 %v3244, %v3262
  %v3265 = vadd.f32 %v3245, %v3262
  %v3266 = vadd.f32 %v3246, %v3262
  %v3267 = vadd.f32 %v3247, %v3262
  %v3268 = vadd.f32 %v3248, %v3262
  %v3269 = vadd.f32 %v3249, %v3262
  %v3270 = vadd.f32 %v3250, %v3262
  %v3271 = vadd.f32 %v3251, %v3262
  %v3272 = vadd.f32 %v3252, %v3262
  %v3273 = vadd.f32 %v3253, %v3262
  %v3274 = vadd.f32 %v3254, %v3262
  %v3275 = vadd.f32 %v3255, %v3262
  %v3276 = vadd.f32 %v3256, %v3262
  %v3277 = vmax.f32 %v3264, 0.0
  %v3278 = vmax.f32 %v3265, 0.0
  %v3279 = vmax.f32 %v3266, 0.0
  %v3280 = vmax.f32 %v3267, 0.0
  %v3281 = vmax.f32 %v3268, 0.0
  %v3282 = vmax.f32 %v3269, 0.0
  %v3283 = vmax.f32 %v3270, 0.0
  %v3284 = vmax.f32 %v3271, 0.0
  %v3285 = vmax.f32 %v3272, 0.0
  %v3286 = vmax.f32 %v3273, 0.0
  %v3287 = vmax.f32 %v3274, 0.0
  %v3288 = vmax.f32 %v3275, 0.0
  %v3289 = vmax.f32 %v3276, 0.0
  %v3290 = vpack.c.bf16 %v3278, %v3277
  %v3291 = vpack.c.bf16 %v3280, %v3279
  %v3292 = vpack.c.bf16 %v3282, %v3281
  %v3293 = vpack.c.bf16 %v3284, %v3283
  %v3294 = vpack.c.bf16 %v3286, %v3285
  %v3295 = vpack.c.bf16 %v3288, %v3287
  %v3296 = vpack.c.bf16 %v3289, %v3289
  %v3304 = vunpack.c.l.b16 %v3290
  %v3305 = vunpack.c.h.b16 %v3290
  %v3306 = vunpack.c.l.b16 %v3291
  %v3307 = vunpack.c.h.b16 %v3291
  %v3308 = vunpack.c.l.b16 %v3292
  %v3309 = vunpack.c.h.b16 %v3292
  %v3310 = vunpack.c.l.b16 %v3293
  %v3311 = vunpack.c.h.b16 %v3293
  %v3312 = vunpack.c.l.b16 %v3294
  %v3313 = vunpack.c.h.b16 %v3294
  %v3314 = vunpack.c.l.b16 %v3295
  %v3315 = vunpack.c.h.b16 %v3295
  %v3316 = vunpack.c.l.b16 %v3296
  %v3317 = vpack.c.b16 %v3304, %v3304
  %v3318 = vpack.c.b16 %v3305, %v3305
  %v3319 = vpack.c.b16 %v3306, %v3306
  %v3320 = vpack.c.b16 %v3307, %v3307
  %v3321 = vpack.c.b16 %v3308, %v3308
  %v3322 = vpack.c.b16 %v3309, %v3309
  %v3323 = vpack.c.b16 %v3310, %v3310
  %v3324 = vpack.c.b16 %v3311, %v3311
  %v3325 = vpack.c.b16 %v3312, %v3312
  %v3326 = vpack.c.b16 %v3313, %v3313
  %v3327 = vpack.c.b16 %v3314, %v3314
  %v3328 = vpack.c.b16 %v3315, %v3315
  %v3329 = vpack.c.b16 %v3316, %v3316
  %vm3343 = vcmask 519168
  %3344 = vst.msk [vmem:[%s3] sm:$0xf] %vm3343, %v3317
  %3345 = vst.msk [vmem:[%s3 + $0x4] sm:$0xf] %vm3343, %v3318
  %3346 = vst.msk [vmem:[%s3 + $0x8] sm:$0xf] %vm3343, %v3319
  %3347 = vst.msk [vmem:[%s3 + $0xc] sm:$0xf] %vm3343, %v3320
  %3348 = vst.msk [vmem:[%s3 + $0x10] sm:$0xf] %vm3343, %v3321
  %3349 = vst.msk [vmem:[%s3 + $0x14] sm:$0xf] %vm3343, %v3322
  %3350 = vst.msk [vmem:[%s3 + $0x18] sm:$0xf] %vm3343, %v3323
  %3351 = vst.msk [vmem:[%s3 + $0x1c] sm:$0xf] %vm3343, %v3324
  %3352 = vst.msk [vmem:[%s3 + $0x20] sm:$0xf] %vm3343, %v3325
  %3353 = vst.msk [vmem:[%s3 + $0x24] sm:$0xf] %vm3343, %v3326
  %3354 = vst.msk [vmem:[%s3 + $0x28] sm:$0xf] %vm3343, %v3327
  %3355 = vst.msk [vmem:[%s3 + $0x2c] sm:$0xf] %vm3343, %v3328
  %3356 = vst.msk [vmem:[%s3 + $0x30] sm:$0xf] %vm3343, %v3329
  // Predicated region
  $region14: #{simple_cnn_forward.4} parent=0 // pred_check
    _
  $region15: #{simple_cnn_forward.4} parent=0 // pred_check_branch
    %3358 = sbr.rel (0) target = $region17
  $region16: #{simple_cnn_forward.4} parent=0 // pred_region
    _
  $region17: #{simple_cnn_forward.4} parent=0 // pred_fallthru
    _
  // Predicated region
  $region18: #{simple_cnn_forward.4} parent=0 // pred_check
    _
  $region19: #{simple_cnn_forward.4} parent=0 // pred_check_branch
    %3360 = sbr.rel (0) target = $region21
  $region20: #{simple_cnn_forward.4} parent=0 // pred_region
    _
  $region21: #{simple_cnn_forward.4} parent=0 // pred_fallthru
    _

// kernel: simple_cnn_forward.5
$region0: #{simple_cnn_forward.5}
  #allocation0 [shape = 'u32[]', space=smem, size = 0x4, offset = 0x4, fixed_abs, tag = 'smem constant byte address 0x4 - core index']
  #allocation1 [shape = 'u32[144,128]{1,0:T(1,128)}', space=vmem, size = 0x12000, scoped, tag = 'internal scratch']
  #allocation2 [shape = 'f32[2,1024]{1,0:T(2,128)}', space=vmem, size = 0x2000, scoped, tag = 'scratch operand']
  %s0 = inlined_call_operand.vmem [shape: bf16[2,3584], index: 0, kind: input, shape index: {}]
  %s1 = inlined_call_operand.vmem [shape: bf16[3584,1024], index: 1, kind: input, shape index: {}]
  %s2 = inlined_call_operand.vmem [shape: f32[1,1024], index: 2, kind: input, shape index: {}]
  %s3 = inlined_call_operand.vmem [shape: bf16[1024,10], index: 3, kind: input, shape index: {}]
  %s4 = inlined_call_operand.vmem [shape: f32[1,10], index: 4, kind: input, shape index: {}]
  %s5 = inlined_call_operand.hbm [shape: f32[2,10], index: 5, kind: output, shape index: {}]
  %s6 = sld [smem:[#allocation0]]
  $region61: #{simple_cnn_forward.5} parent=0
    _
  %s8 = ssub.s32 1, %s6
  %s9 = scalar_select 0, %s8, %s6
  $region1: #{simple_cnn_forward.5} parent=0
    #allocation3 [shape = 'u8[1024]{0}', space=vmem, size = 0x400, scoped, tag = 'output window, operand 0, single buffered']
    #allocation4 [shape = 's32[2]{0}', space=sflag, size = 0x8, scoped, tag = 'scoped memory for simple_cnn_forward.5']
    %10 = vsyncpa [#allocation4], 0
    loop: start=0, step=1, limit=6
    $region2: #{simple_cnn_forward.5} parent=1 // loop_pre_header
      _
    $region3: #{simple_cnn_forward.5} parent=1 // loop_header
      %s12 = sphi 0, %s16
      %p13 = scmp.ge.s32.totalorder %s12, 6
      %s19 = sphi 0, %s31
      %s20 = sphi 0, %s27
      %s21 = sphi 0, %s19
      %s22 = sphi 0, %s20
      %s23 = sphi 0, %s21
      %s24 = sphi 0, %s22
      %s36 = sphi 0, %s38
      %s39 = sphi 0, %s36
      %s40 = sphi 0, %s39
      %s56 = sphi 0, %s40
      %s62 = sphi 0, %s64
      %s65 = sphi 0, %s62
      %s66 = sphi 0, %s65
      %s82 = sphi 0, %s66
      %s86 = sphi 0, %s86
      %s88 = sphi 0, %s86
      %s89 = sphi 0, %s88
      %s103 = sphi 0, %s89
      %s107 = sphi 0, %s107
      %s109 = sphi 0, %s107
      %s110 = sphi 0, %s109
      %s124 = sphi 0, %s110
      %s128 = sphi 0, %s128
      %s130 = sphi 0, %s128
      %s131 = sphi 0, %s130
      %s145 = sphi 0, %s131
      %s151 = sphi 0, %s153
      %s154 = sphi 0, %s151
      %s155 = sphi 0, %s154
      %s171 = sphi 0, %s155
    $region4: #{simple_cnn_forward.5} parent=1 // loop_header_branch
      %15 = sbr.rel (%p13) target = $region8
    $region5: #{simple_cnn_forward.5} parent=1 // loop_body
      %s17 = ssub.s32 %s12, 1
      %s18 = ssub.s32 %s12, 2
      %s25 = sadd.s32 1, %s20
      %p26 = scmp.ge.s32.totalorder %s25, 4
      %s27 = scalar_select %p26, 0, %s25
      %s28 = sadd.s32 1, %s19
      %s29 = scalar_select %p26, %s28, %s19
      %p30 = scmp.ge.s32.totalorder %s29, 1
      %s31 = scalar_select %p30, 0, %s29
      %s32 = ssub.s32 %s19, %s31
      %s33 = ssub.s32 %s20, %s27
      %s34 = sor.u32 %s32, %s33
      %p35 = scmp.eq.s32.totalorder %s34, 0
      %s37 = sadd.s32 %s36, 1
      %s38 = scalar_select %p35, %s36, %s37
      %p41 = pneg %p35
      %p42 = scmp.eq.s32.totalorder %s12, 3
      %p43 = por %p41, %p42
      %p44 = scmp.ne.s32.totalorder %s36, %s39
      %p45 = scmp.eq.s32.totalorder %s12, 0
      %p46 = por %p44, %p45
      %p47 = scmp.ne.s32.totalorder %s36, %s39
      %p48 = scmp.eq.s32.totalorder %s17, 3
      %p49 = por %p47, %p48
      %p50 = scmp.ne.s32.totalorder %s39, %s40
      %p51 = scmp.eq.s32.totalorder %s17, 0
      %p52 = por %p50, %p51
      %p53 = scmp.ne.s32.totalorder %s39, %s40
      %p54 = scmp.eq.s32.totalorder %s18, 3
      %p55 = por %p53, %p54
      %p57 = scmp.ne.s32.totalorder %s40, %s56
      %p58 = scmp.eq.s32.totalorder %s18, 0
      %p59 = por %p57, %p58
      %s60 = ssub.s32 %s20, %s27
      %p61 = scmp.eq.s32.totalorder %s60, 0
      %s63 = sadd.s32 %s62, 1
      %s64 = scalar_select %p61, %s62, %s63
      %p67 = pneg %p61
      %p68 = scmp.eq.s32.totalorder %s12, 3
      %p69 = por %p67, %p68
      %p70 = scmp.ne.s32.totalorder %s62, %s65
      %p71 = scmp.eq.s32.totalorder %s12, 0
      %p72 = por %p70, %p71
      %p73 = scmp.ne.s32.totalorder %s62, %s65
      %p74 = scmp.eq.s32.totalorder %s17, 3
      %p75 = por %p73, %p74
      %p76 = scmp.ne.s32.totalorder %s65, %s66
      %p77 = scmp.eq.s32.totalorder %s17, 0
      %p78 = por %p76, %p77
      %p79 = scmp.ne.s32.totalorder %s65, %s66
      %p80 = scmp.eq.s32.totalorder %s18, 3
      %p81 = por %p79, %p80
      %p83 = scmp.ne.s32.totalorder %s66, %s82
      %p84 = scmp.eq.s32.totalorder %s18, 0
      %p85 = por %p83, %p84
      %s87 = sadd.s32 %s86, 1
      %p90 = scmp.eq.s32.totalorder %s12, 3
      %p91 = scmp.ne.s32.totalorder %s86, %s88
      %p92 = scmp.eq.s32.totalorder %s12, 0
      %p93 = por %p91, %p92
      %p94 = scmp.ne.s32.totalorder %s86, %s88
      %p95 = scmp.eq.s32.totalorder %s17, 3
      %p96 = por %p94, %p95
      %p97 = scmp.ne.s32.totalorder %s88, %s89
      %p98 = scmp.eq.s32.totalorder %s17, 0
      %p99 = por %p97, %p98
      %p100 = scmp.ne.s32.totalorder %s88, %s89
      %p101 = scmp.eq.s32.totalorder %s18, 3
      %p102 = por %p100, %p101
      %p104 = scmp.ne.s32.totalorder %s89, %s103
      %p105 = scmp.eq.s32.totalorder %s18, 0
      %p106 = por %p104, %p105
      %s108 = sadd.s32 %s107, 1
      %p111 = scmp.eq.s32.totalorder %s12, 3
      %p112 = scmp.ne.s32.totalorder %s107, %s109
      %p113 = scmp.eq.s32.totalorder %s12, 0
      %p114 = por %p112, %p113
      %p115 = scmp.ne.s32.totalorder %s107, %s109
      %p116 = scmp.eq.s32.totalorder %s17, 3
      %p117 = por %p115, %p116
      %p118 = scmp.ne.s32.totalorder %s109, %s110
      %p119 = scmp.eq.s32.totalorder %s17, 0
      %p120 = por %p118, %p119
      %p121 = scmp.ne.s32.totalorder %s109, %s110
      %p122 = scmp.eq.s32.totalorder %s18, 3
      %p123 = por %p121, %p122
      %p125 = scmp.ne.s32.totalorder %s110, %s124
      %p126 = scmp.eq.s32.totalorder %s18, 0
      %p127 = por %p125, %p126
      %s129 = sadd.s32 %s128, 1
      %p132 = scmp.eq.s32.totalorder %s12, 3
      %p133 = scmp.ne.s32.totalorder %s128, %s130
      %p134 = scmp.eq.s32.totalorder %s12, 0
      %p135 = por %p133, %p134
      %p136 = scmp.ne.s32.totalorder %s128, %s130
      %p137 = scmp.eq.s32.totalorder %s17, 3
      %p138 = por %p136, %p137
      %p139 = scmp.ne.s32.totalorder %s130, %s131
      %p140 = scmp.eq.s32.totalorder %s17, 0
      %p141 = por %p139, %p140
      %p142 = scmp.ne.s32.totalorder %s130, %s131
      %p143 = scmp.eq.s32.totalorder %s18, 3
      %p144 = por %p142, %p143
      %p146 = scmp.ne.s32.totalorder %s131, %s145
      %p147 = scmp.eq.s32.totalorder %s18, 0
      %p148 = por %p146, %p147
      %s149 = ssub.s32 %s19, %s31
      %p150 = scmp.eq.s32.totalorder %s149, 0
      %s152 = sadd.s32 %s151, 1
      %s153 = scalar_select %p150, %s151, %s152
      %p156 = pneg %p150
      %p157 = scmp.eq.s32.totalorder %s12, 3
      %p158 = por %p156, %p157
      %p159 = scmp.ne.s32.totalorder %s151, %s154
      %p160 = scmp.eq.s32.totalorder %s12, 0
      %p161 = por %p159, %p160
      %p162 = scmp.ne.s32.totalorder %s151, %s154
      %p163 = scmp.eq.s32.totalorder %s17, 3
      %p164 = por %p162, %p163
      %p165 = scmp.ne.s32.totalorder %s154, %s155
      %p166 = scmp.eq.s32.totalorder %s17, 0
      %p167 = por %p165, %p166
      %p168 = scmp.ne.s32.totalorder %s154, %s155
      %p169 = scmp.eq.s32.totalorder %s18, 3
      %p170 = por %p168, %p169
      %p172 = scmp.ne.s32.totalorder %s155, %s171
      %p173 = scmp.eq.s32.totalorder %s18, 0
      %p174 = por %p172, %p173
      %p175 = scmp.le.s32.totalorder 1, %s12
      %p176 = scmp.lt.s32.totalorder %s12, 5
      %p177 = pnand %p175, %p176
      %p178 = pneg %p177
      // Predicated region
      $region9: #{simple_cnn_forward.5} parent=5 // pred_check
        _
      $region10: #{simple_cnn_forward.5} parent=5 // pred_check_branch
        %180 = sbr.rel (%p177) target = $region12
      $region11: #{simple_cnn_forward.5} parent=5 // pred_region
        %s181 = ssub.s32 %s12, 1
        // Predicated region
        $region13: #{simple_cnn_forward.5} parent=11 // pred_check
          %p182 = pneg %p99
        $region14: #{simple_cnn_forward.5} parent=11 // pred_check_branch
          %184 = sbr.rel (%p182) target = $region16
        $region15: #{simple_cnn_forward.5} parent=11 // pred_region
          _
        $region16: #{simple_cnn_forward.5} parent=11 // pred_fallthru
          _
        // Predicated region
        $region17: #{simple_cnn_forward.5} parent=11 // pred_check
          %p185 = pneg %p120
        $region18: #{simple_cnn_forward.5} parent=11 // pred_check_branch
          %187 = sbr.rel (%p185) target = $region20
        $region19: #{simple_cnn_forward.5} parent=11 // pred_region
          _
        $region20: #{simple_cnn_forward.5} parent=11 // pred_fallthru
          _
        // Predicated region
        $region21: #{simple_cnn_forward.5} parent=11 // pred_check
          %p188 = pneg %p141
        $region22: #{simple_cnn_forward.5} parent=11 // pred_check_branch
          %190 = sbr.rel (%p188) target = $region24
        $region23: #{simple_cnn_forward.5} parent=11 // pred_region
          _
        $region24: #{simple_cnn_forward.5} parent=11 // pred_fallthru
          _
      $region12: #{simple_cnn_forward.5} parent=5 // pred_fallthru
        _
      %p191 = scmp.lt.s32.totalorder %s12, 4
      // Predicated region
      $region25: #{simple_cnn_forward.5} parent=5 // pred_check
        %p192 = pneg %p191
      $region26: #{simple_cnn_forward.5} parent=5 // pred_check_branch
        %194 = sbr.rel (%p192) target = $region28
      $region27: #{simple_cnn_forward.5} parent=5 // pred_region
        // Predicated region
        $region29: #{simple_cnn_forward.5} parent=27 // pred_check
          %p195 = pneg %p46
        $region30: #{simple_cnn_forward.5} parent=27 // pred_check_branch
          %197 = sbr.rel (%p195) target = $region32
        $region31: #{simple_cnn_forward.5} parent=27 // pred_region
          %s198 = smul.u32 7, %s20
          %p199 = scmp.lt.s32.totalorder %s19, 0
          %s200 = scalar_select %p199, %s19, 0
          %p201 = scmp.lt.s32.totalorder %s198, 27
          %s202 = scalar_select %p201, %s198, 27
          %s203 = smul.addr %s200, 28
          %s204 = sadd.s32 %s202, %s203
          %s205 = scalar_lea.vmem %s0, %s204
          %s206 = smul.u32 7, %s20
        $region32: #{simple_cnn_forward.5} parent=27 // pred_fallthru
          _
        // Predicated region
        $region33: #{simple_cnn_forward.5} parent=27 // pred_check
          %p207 = pneg %p72
        $region34: #{simple_cnn_forward.5} parent=27 // pred_check_branch
          %209 = sbr.rel (%p207) target = $region36
        $region35: #{simple_cnn_forward.5} parent=27 // pred_region
          %s210 = smul.u32 112, %s20
          %p211 = scmp.lt.s32.totalorder %s210, 447
          %s212 = scalar_select %p211, %s210, 447
          %s213 = smul.addr %s212, 8
          %s214 = smul.addr %s213, 4
          %s215 = scalar_lea.vmem %s1, %s214
          %s216 = smul.u32 112, %s20
        $region36: #{simple_cnn_forward.5} parent=27 // pred_fallthru
          _
      $region28: #{simple_cnn_forward.5} parent=5 // pred_fallthru
        _
      %p217 = scmp.le.s32.totalorder 1, %s12
      %p218 = scmp.lt.s32.totalorder %s12, 5
      %p219 = pnand %p217, %p218
      %p220 = pneg %p219
      // Predicated region
      $region37: #{simple_cnn_forward.5} parent=5 // pred_check
        _
      $region38: #{simple_cnn_forward.5} parent=5 // pred_check_branch
        %222 = sbr.rel (%p219) target = $region40
      $region39: #{simple_cnn_forward.5} parent=5 // pred_region
        %s223 = ssub.s32 %s12, 1
        %s224 = smul.u32 7, %s22
        %p225 = scmp.lt.s32.totalorder %s21, 0
        %s226 = scalar_select %p225, %s21, 0
        %p227 = scmp.lt.s32.totalorder %s224, 27
        %s228 = scalar_select %p227, %s224, 27
        %s229 = smul.addr %s226, 28
        %s230 = sadd.s32 %s228, %s229
        %s231 = scalar_lea.vmem %s0, %s230
        %p232 = pneg %p52
        %p233 = pneg %p49
        %s234 = smul.u32 112, %s22
        %p235 = scmp.lt.s32.totalorder %s234, 447
        %s236 = scalar_select %p235, %s234, 447
        %s237 = smul.addr %s236, 8
        %s238 = smul.addr %s237, 4
        %s239 = scalar_lea.vmem %s1, %s238
        %p240 = pneg %p78
        %p241 = pneg %p75
        %p242 = pneg %p99
        %p243 = pneg %p96
        %p244 = pneg %p120
        %p245 = pneg %p117
        %p246 = pneg %p141
        %p247 = pneg %p138
        %p248 = pneg %p167
        %p249 = pneg %p164
        %s250 = smul.u32 7, %s22
        %p251 = scmp.lt.s32.totalorder %s21, 0
        %s252 = scalar_select %p251, %s21, 0
        %p253 = scmp.lt.s32.totalorder %s250, 27
        %s254 = scalar_select %p253, %s250, 27
        %s255 = smul.addr %s252, 28
        %s256 = sadd.s32 %s254, %s255
        %s257 = scalar_lea.vmem %s0, %s256
        %s258 = smul.u32 7, %s22
        %s259 = smul.u32 112, %s22
        %p260 = scmp.lt.s32.totalorder %s259, 447
        %s261 = scalar_select %p260, %s259, 447
        %s262 = smul.addr %s261, 8
        %s263 = smul.addr %s262, 4
        %s264 = scalar_lea.vmem %s1, %s263
        %s265 = smul.u32 112, %s22
        %p267 = scmp.eq.s32.totalorder %s22, 0
        // Predicated region
        $region41: #{simple_cnn_forward.5} parent=39 // pred_check
          %p268 = pneg %p267
        $region42: #{simple_cnn_forward.5} parent=39 // pred_check_branch
          %270 = sbr.rel (%p268) target = $region44
        $region43: #{simple_cnn_forward.5} parent=39 // pred_region
          %271 = vst [vmem:[#allocation2] sm:$0xff] 0.0
          %272 = vst [vmem:[#allocation2 + $0x8] sm:$0xff] 0.0
        $region44: #{simple_cnn_forward.5} parent=39 // pred_fallthru
          _
        %v273 = vld [vmem:[#allocation2] sm:$0xff]
        %v274 = vld [vmem:[#allocation2 + $0x8] sm:$0xff]
        %v275 = vld [vmem:[%s257] sm:$0x7f]
        %v276 = vld [vmem:[%s264] sm:$0xff]
        %v277 = vld [vmem:[%s264 + $0x8] sm:$0xff]
        %v278 = vld [vmem:[%s264 + $0x10] sm:$0xff]
        %v279 = vld [vmem:[%s264 + $0x18] sm:$0xff]
        %v280 = vld [vmem:[%s264 + $0x20] sm:$0xff]
        %v281 = vld [vmem:[%s264 + $0x28] sm:$0xff]
        %v282 = vld [vmem:[%s264 + $0x30] sm:$0xff]
        %v283 = vld [vmem:[%s264 + $0x38] sm:$0xff]
        %v284 = vld [vmem:[%s264 + $0x40] sm:$0xff]
        %v285 = vld [vmem:[%s264 + $0x48] sm:$0xff]
        %v286 = vld [vmem:[%s264 + $0x50] sm:$0xff]
        %v287 = vld [vmem:[%s264 + $0x58] sm:$0xff]
        %v288 = vld [vmem:[%s264 + $0x60] sm:$0xff]
        %v289 = vld [vmem:[%s264 + $0x68] sm:$0xff]
        %v290 = vld [vmem:[%s264 + $0x70] sm:$0xff]
        %v291 = vld [vmem:[%s264 + $0x78] sm:$0xff]
        %v292 = vld [vmem:[%s264 + $0x80] sm:$0xff]
        %v293 = vld [vmem:[%s264 + $0x88] sm:$0xff]
        %v294 = vld [vmem:[%s264 + $0x90] sm:$0xff]
        %v295 = vld [vmem:[%s264 + $0x98] sm:$0xff]
        %v296 = vld [vmem:[%s264 + $0xa0] sm:$0xff]
        %v297 = vld [vmem:[%s264 + $0xa8] sm:$0xff]
        %v298 = vld [vmem:[%s264 + $0xb0] sm:$0xff]
        %v299 = vld [vmem:[%s264 + $0xb8] sm:$0xff]
        %v300 = vld [vmem:[%s264 + $0xc0] sm:$0xff]
        %v301 = vld [vmem:[%s264 + $0xc8] sm:$0xff]
        %v302 = vld [vmem:[%s264 + $0xd0] sm:$0xff]
        %v303 = vld [vmem:[%s264 + $0xd8] sm:$0xff]
        %v304 = vld [vmem:[%s264 + $0xe0] sm:$0xff]
        %v305 = vld [vmem:[%s264 + $0xe8] sm:$0xff]
        %v306 = vld [vmem:[%s264 + $0xf0] sm:$0xff]
        %v307 = vld [vmem:[%s264 + $0xf8] sm:$0xff]
        %v308 = vld [vmem:[%s264 + $0x100] sm:$0xff]
        %v309 = vld [vmem:[%s264 + $0x108] sm:$0xff]
        %v310 = vld [vmem:[%s264 + $0x110] sm:$0xff]
        %v311 = vld [vmem:[%s264 + $0x118] sm:$0xff]
        %v312 = vld [vmem:[%s264 + $0x120] sm:$0xff]
        %v313 = vld [vmem:[%s264 + $0x128] sm:$0xff]
        %v314 = vld [vmem:[%s264 + $0x130] sm:$0xff]
        %v315 = vld [vmem:[%s264 + $0x138] sm:$0xff]
        %v316 = vld [vmem:[%s264 + $0x140] sm:$0xff]
        %v317 = vld [vmem:[%s264 + $0x148] sm:$0xff]
        %v318 = vld [vmem:[%s264 + $0x150] sm:$0xff]
        %v319 = vld [vmem:[%s264 + $0x158] sm:$0xff]
        %v320 = vld [vmem:[%s264 + $0x160] sm:$0xff]
        %v321 = vld [vmem:[%s264 + $0x168] sm:$0xff]
        %v322 = vld [vmem:[%s264 + $0x170] sm:$0xff]
        %v323 = vld [vmem:[%s264 + $0x178] sm:$0xff]
        %v324 = vld [vmem:[%s264 + $0x180] sm:$0xff]
        %v325 = vld [vmem:[%s264 + $0x188] sm:$0xff]
        %v326 = vld [vmem:[%s264 + $0x190] sm:$0xff]
        %v327 = vld [vmem:[%s264 + $0x198] sm:$0xff]
        %v328 = vld [vmem:[%s264 + $0x1a0] sm:$0xff]
        %v329 = vld [vmem:[%s264 + $0x1a8] sm:$0xff]
        %v330 = vld [vmem:[%s264 + $0x1b0] sm:$0xff]
        %v331 = vld [vmem:[%s264 + $0x1b8] sm:$0xff]
        %v332 = vld [vmem:[%s264 + $0x1c0] sm:$0xff]
        %v333 = vld [vmem:[%s264 + $0x1c8] sm:$0xff]
        %v334 = vld [vmem:[%s264 + $0x1d0] sm:$0xff]
        %v335 = vld [vmem:[%s264 + $0x1d8] sm:$0xff]
        %v336 = vld [vmem:[%s264 + $0x1e0] sm:$0xff]
        %v337 = vld [vmem:[%s264 + $0x1e8] sm:$0xff]
        %v338 = vld [vmem:[%s264 + $0x1f0] sm:$0xff]
        %v339 = vld [vmem:[%s264 + $0x1f8] sm:$0xff]
        %v340 = vld [vmem:[%s264 + $0x200] sm:$0xff]
        %v341 = vld [vmem:[%s264 + $0x208] sm:$0xff]
        %v342 = vld [vmem:[%s264 + $0x210] sm:$0xff]
        %v343 = vld [vmem:[%s264 + $0x218] sm:$0xff]
        %v344 = vld [vmem:[%s264 + $0x220] sm:$0xff]
        %v345 = vld [vmem:[%s264 + $0x228] sm:$0xff]
        %v346 = vld [vmem:[%s264 + $0x230] sm:$0xff]
        %v347 = vld [vmem:[%s264 + $0x238] sm:$0xff]
        %v348 = vld [vmem:[%s264 + $0x240] sm:$0xff]
        %v349 = vld [vmem:[%s264 + $0x248] sm:$0xff]
        %v350 = vld [vmem:[%s264 + $0x250] sm:$0xff]
        %v351 = vld [vmem:[%s264 + $0x258] sm:$0xff]
        %v352 = vld [vmem:[%s264 + $0x260] sm:$0xff]
        %v353 = vld [vmem:[%s264 + $0x268] sm:$0xff]
        %v354 = vld [vmem:[%s264 + $0x270] sm:$0xff]
        %v355 = vld [vmem:[%s264 + $0x278] sm:$0xff]
        %v356 = vld [vmem:[%s264 + $0x280] sm:$0xff]
        %v357 = vld [vmem:[%s264 + $0x288] sm:$0xff]
        %v358 = vld [vmem:[%s264 + $0x290] sm:$0xff]
        %v359 = vld [vmem:[%s264 + $0x298] sm:$0xff]
        %v360 = vld [vmem:[%s264 + $0x2a0] sm:$0xff]
        %v361 = vld [vmem:[%s264 + $0x2a8] sm:$0xff]
        %v362 = vld [vmem:[%s264 + $0x2b0] sm:$0xff]
        %v363 = vld [vmem:[%s264 + $0x2b8] sm:$0xff]
        %v364 = vld [vmem:[%s264 + $0x2c0] sm:$0xff]
        %v365 = vld [vmem:[%s264 + $0x2c8] sm:$0xff]
        %v366 = vld [vmem:[%s264 + $0x2d0] sm:$0xff]
        %v367 = vld [vmem:[%s264 + $0x2d8] sm:$0xff]
        %v368 = vld [vmem:[%s264 + $0x2e0] sm:$0xff]
        %v369 = vld [vmem:[%s264 + $0x2e8] sm:$0xff]
        %v370 = vld [vmem:[%s264 + $0x2f0] sm:$0xff]
        %v371 = vld [vmem:[%s264 + $0x2f8] sm:$0xff]
        %v372 = vld [vmem:[%s264 + $0x300] sm:$0xff]
        %v373 = vld [vmem:[%s264 + $0x308] sm:$0xff]
        %v374 = vld [vmem:[%s264 + $0x310] sm:$0xff]
        %v375 = vld [vmem:[%s264 + $0x318] sm:$0xff]
        %v376 = vld [vmem:[%s264 + $0x320] sm:$0xff]
        %v377 = vld [vmem:[%s264 + $0x328] sm:$0xff]
        %v378 = vld [vmem:[%s264 + $0x330] sm:$0xff]
        %v379 = vld [vmem:[%s264 + $0x338] sm:$0xff]
        %v380 = vld [vmem:[%s264 + $0x340] sm:$0xff]
        %v381 = vld [vmem:[%s264 + $0x348] sm:$0xff]
        %v382 = vld [vmem:[%s264 + $0x350] sm:$0xff]
        %v383 = vld [vmem:[%s264 + $0x358] sm:$0xff]
        %v384 = vld [vmem:[%s264 + $0x360] sm:$0xff]
        %v385 = vld [vmem:[%s264 + $0x368] sm:$0xff]
        %v386 = vld [vmem:[%s264 + $0x370] sm:$0xff]
        %v387 = vld [vmem:[%s264 + $0x378] sm:$0xff]
        %v388 = vld [vmem:[%s264 + $0x380] sm:$0xff]
        %v389 = vld [vmem:[%s264 + $0x388] sm:$0xff]
        %v390 = vld [vmem:[%s264 + $0x390] sm:$0xff]
        %v391 = vld [vmem:[%s264 + $0x398] sm:$0xff]
        %v392 = vld [vmem:[%s264 + $0x3a0] sm:$0xff]
        %v393 = vld [vmem:[%s264 + $0x3a8] sm:$0xff]
        %v394 = vld [vmem:[%s264 + $0x3b0] sm:$0xff]
        %v395 = vld [vmem:[%s264 + $0x3b8] sm:$0xff]
        %v396 = vld [vmem:[%s264 + $0x3c0] sm:$0xff]
        %v397 = vld [vmem:[%s264 + $0x3c8] sm:$0xff]
        %v398 = vld [vmem:[%s264 + $0x3d0] sm:$0xff]
        %v399 = vld [vmem:[%s264 + $0x3d8] sm:$0xff]
        %v400 = vld [vmem:[%s264 + $0x3e0] sm:$0xff]
        %v401 = vld [vmem:[%s264 + $0x3e8] sm:$0xff]
        %v402 = vld [vmem:[%s264 + $0x3f0] sm:$0xff]
        %v403 = vld [vmem:[%s264 + $0x3f8] sm:$0xff]
        %v404 = vld [vmem:[%s264 + $0x400] sm:$0xff]
        %v405 = vld [vmem:[%s264 + $0x408] sm:$0xff]
        %v406 = vld [vmem:[%s264 + $0x410] sm:$0xff]
        %v407 = vld [vmem:[%s264 + $0x418] sm:$0xff]
        %v408 = vld [vmem:[%s264 + $0x420] sm:$0xff]
        %v409 = vld [vmem:[%s264 + $0x428] sm:$0xff]
        %v410 = vld [vmem:[%s264 + $0x430] sm:$0xff]
        %v411 = vld [vmem:[%s264 + $0x438] sm:$0xff]
        %v412 = vld [vmem:[%s264 + $0x440] sm:$0xff]
        %v413 = vld [vmem:[%s264 + $0x448] sm:$0xff]
        %v414 = vld [vmem:[%s264 + $0x450] sm:$0xff]
        %v415 = vld [vmem:[%s264 + $0x458] sm:$0xff]
        %v416 = vld [vmem:[%s264 + $0x460] sm:$0xff]
        %v417 = vld [vmem:[%s264 + $0x468] sm:$0xff]
        %v418 = vld [vmem:[%s264 + $0x470] sm:$0xff]
        %v419 = vld [vmem:[%s264 + $0x478] sm:$0xff]
        %v420 = vld [vmem:[%s264 + $0x480] sm:$0xff]
        %v421 = vld [vmem:[%s264 + $0x488] sm:$0xff]
        %v422 = vld [vmem:[%s264 + $0x490] sm:$0xff]
        %v423 = vld [vmem:[%s264 + $0x498] sm:$0xff]
        %v424 = vld [vmem:[%s264 + $0x4a0] sm:$0xff]
        %v425 = vld [vmem:[%s264 + $0x4a8] sm:$0xff]
        %v426 = vld [vmem:[%s264 + $0x4b0] sm:$0xff]
        %v427 = vld [vmem:[%s264 + $0x4b8] sm:$0xff]
        %v428 = vld [vmem:[%s264 + $0x4c0] sm:$0xff]
        %v429 = vld [vmem:[%s264 + $0x4c8] sm:$0xff]
        %v430 = vld [vmem:[%s264 + $0x4d0] sm:$0xff]
        %v431 = vld [vmem:[%s264 + $0x4d8] sm:$0xff]
        %v432 = vld [vmem:[%s264 + $0x4e0] sm:$0xff]
        %v433 = vld [vmem:[%s264 + $0x4e8] sm:$0xff]
        %v434 = vld [vmem:[%s264 + $0x4f0] sm:$0xff]
        %v435 = vld [vmem:[%s264 + $0x4f8] sm:$0xff]
        %v436 = vld [vmem:[%s264 + $0x500] sm:$0xff]
        %v437 = vld [vmem:[%s264 + $0x508] sm:$0xff]
        %v438 = vld [vmem:[%s264 + $0x510] sm:$0xff]
        %v439 = vld [vmem:[%s264 + $0x518] sm:$0xff]
        %v440 = vld [vmem:[%s264 + $0x520] sm:$0xff]
        %v441 = vld [vmem:[%s264 + $0x528] sm:$0xff]
        %v442 = vld [vmem:[%s264 + $0x530] sm:$0xff]
        %v443 = vld [vmem:[%s264 + $0x538] sm:$0xff]
        %v444 = vld [vmem:[%s264 + $0x540] sm:$0xff]
        %v445 = vld [vmem:[%s264 + $0x548] sm:$0xff]
        %v446 = vld [vmem:[%s264 + $0x550] sm:$0xff]
        %v447 = vld [vmem:[%s264 + $0x558] sm:$0xff]
        %v448 = vld [vmem:[%s264 + $0x560] sm:$0xff]
        %v449 = vld [vmem:[%s264 + $0x568] sm:$0xff]
        %v450 = vld [vmem:[%s264 + $0x570] sm:$0xff]
        %v451 = vld [vmem:[%s264 + $0x578] sm:$0xff]
        %v452 = vld [vmem:[%s264 + $0x580] sm:$0xff]
        %v453 = vld [vmem:[%s264 + $0x588] sm:$0xff]
        %v454 = vld [vmem:[%s264 + $0x590] sm:$0xff]
        %v455 = vld [vmem:[%s264 + $0x598] sm:$0xff]
        %v456 = vld [vmem:[%s264 + $0x5a0] sm:$0xff]
        %v457 = vld [vmem:[%s264 + $0x5a8] sm:$0xff]
        %v458 = vld [vmem:[%s264 + $0x5b0] sm:$0xff]
        %v459 = vld [vmem:[%s264 + $0x5b8] sm:$0xff]
        %v460 = vld [vmem:[%s264 + $0x5c0] sm:$0xff]
        %v461 = vld [vmem:[%s264 + $0x5c8] sm:$0xff]
        %v462 = vld [vmem:[%s264 + $0x5d0] sm:$0xff]
        %v463 = vld [vmem:[%s264 + $0x5d8] sm:$0xff]
        %v464 = vld [vmem:[%s264 + $0x5e0] sm:$0xff]
        %v465 = vld [vmem:[%s264 + $0x5e8] sm:$0xff]
        %v466 = vld [vmem:[%s264 + $0x5f0] sm:$0xff]
        %v467 = vld [vmem:[%s264 + $0x5f8] sm:$0xff]
        %v468 = vld [vmem:[%s264 + $0x600] sm:$0xff]
        %v469 = vld [vmem:[%s264 + $0x608] sm:$0xff]
        %v470 = vld [vmem:[%s264 + $0x610] sm:$0xff]
        %v471 = vld [vmem:[%s264 + $0x618] sm:$0xff]
        %v472 = vld [vmem:[%s264 + $0x620] sm:$0xff]
        %v473 = vld [vmem:[%s264 + $0x628] sm:$0xff]
        %v474 = vld [vmem:[%s264 + $0x630] sm:$0xff]
        %v475 = vld [vmem:[%s264 + $0x638] sm:$0xff]
        %v476 = vld [vmem:[%s264 + $0x640] sm:$0xff]
        %v477 = vld [vmem:[%s264 + $0x648] sm:$0xff]
        %v478 = vld [vmem:[%s264 + $0x650] sm:$0xff]
        %v479 = vld [vmem:[%s264 + $0x658] sm:$0xff]
        %v480 = vld [vmem:[%s264 + $0x660] sm:$0xff]
        %v481 = vld [vmem:[%s264 + $0x668] sm:$0xff]
        %v482 = vld [vmem:[%s264 + $0x670] sm:$0xff]
        %v483 = vld [vmem:[%s264 + $0x678] sm:$0xff]
        %v484 = vld [vmem:[%s264 + $0x680] sm:$0xff]
        %v485 = vld [vmem:[%s264 + $0x688] sm:$0xff]
        %v486 = vld [vmem:[%s264 + $0x690] sm:$0xff]
        %v487 = vld [vmem:[%s264 + $0x698] sm:$0xff]
        %v488 = vld [vmem:[%s264 + $0x6a0] sm:$0xff]
        %v489 = vld [vmem:[%s264 + $0x6a8] sm:$0xff]
        %v490 = vld [vmem:[%s264 + $0x6b0] sm:$0xff]
        %v491 = vld [vmem:[%s264 + $0x6b8] sm:$0xff]
        %v492 = vld [vmem:[%s264 + $0x6c0] sm:$0xff]
        %v493 = vld [vmem:[%s264 + $0x6c8] sm:$0xff]
        %v494 = vld [vmem:[%s264 + $0x6d0] sm:$0xff]
        %v495 = vld [vmem:[%s264 + $0x6d8] sm:$0xff]
        %v496 = vld [vmem:[%s264 + $0x6e0] sm:$0xff]
        %v497 = vld [vmem:[%s264 + $0x6e8] sm:$0xff]
        %v498 = vld [vmem:[%s264 + $0x6f0] sm:$0xff]
        %v499 = vld [vmem:[%s264 + $0x6f8] sm:$0xff]
        %v500 = vld [vmem:[%s264 + $0x700] sm:$0xff]
        %v501 = vld [vmem:[%s264 + $0x708] sm:$0xff]
        %v502 = vld [vmem:[%s264 + $0x710] sm:$0xff]
        %v503 = vld [vmem:[%s264 + $0x718] sm:$0xff]
        %v504 = vld [vmem:[%s264 + $0x720] sm:$0xff]
        %v505 = vld [vmem:[%s264 + $0x728] sm:$0xff]
        %v506 = vld [vmem:[%s264 + $0x730] sm:$0xff]
        %v507 = vld [vmem:[%s264 + $0x738] sm:$0xff]
        %v508 = vld [vmem:[%s264 + $0x740] sm:$0xff]
        %v509 = vld [vmem:[%s264 + $0x748] sm:$0xff]
        %v510 = vld [vmem:[%s264 + $0x750] sm:$0xff]
        %v511 = vld [vmem:[%s264 + $0x758] sm:$0xff]
        %v512 = vld [vmem:[%s264 + $0x760] sm:$0xff]
        %v513 = vld [vmem:[%s264 + $0x768] sm:$0xff]
        %v514 = vld [vmem:[%s264 + $0x770] sm:$0xff]
        %v515 = vld [vmem:[%s264 + $0x778] sm:$0xff]
        %v516 = vld [vmem:[%s264 + $0x780] sm:$0xff]
        %v517 = vld [vmem:[%s264 + $0x788] sm:$0xff]
        %v518 = vld [vmem:[%s264 + $0x790] sm:$0xff]
        %v519 = vld [vmem:[%s264 + $0x798] sm:$0xff]
        %v520 = vld [vmem:[%s264 + $0x7a0] sm:$0xff]
        %v521 = vld [vmem:[%s264 + $0x7a8] sm:$0xff]
        %v522 = vld [vmem:[%s264 + $0x7b0] sm:$0xff]
        %v523 = vld [vmem:[%s264 + $0x7b8] sm:$0xff]
        %v524 = vld [vmem:[%s264 + $0x7c0] sm:$0xff]
        %v525 = vld [vmem:[%s264 + $0x7c8] sm:$0xff]
        %v526 = vld [vmem:[%s264 + $0x7d0] sm:$0xff]
        %v527 = vld [vmem:[%s264 + $0x7d8] sm:$0xff]
        %v528 = vld [vmem:[%s264 + $0x7e0] sm:$0xff]
        %v529 = vld [vmem:[%s264 + $0x7e8] sm:$0xff]
        %v530 = vld [vmem:[%s264 + $0x7f0] sm:$0xff]
        %v531 = vld [vmem:[%s264 + $0x7f8] sm:$0xff]
        %v532 = vld [vmem:[%s264 + $0x800] sm:$0xff]
        %v533 = vld [vmem:[%s264 + $0x808] sm:$0xff]
        %v534 = vld [vmem:[%s264 + $0x810] sm:$0xff]
        %v535 = vld [vmem:[%s264 + $0x818] sm:$0xff]
        %v536 = vld [vmem:[%s264 + $0x820] sm:$0xff]
        %v537 = vld [vmem:[%s264 + $0x828] sm:$0xff]
        %v538 = vld [vmem:[%s264 + $0x830] sm:$0xff]
        %v539 = vld [vmem:[%s264 + $0x838] sm:$0xff]
        %v540 = vld [vmem:[%s264 + $0x840] sm:$0xff]
        %v541 = vld [vmem:[%s264 + $0x848] sm:$0xff]
        %v542 = vld [vmem:[%s264 + $0x850] sm:$0xff]
        %v543 = vld [vmem:[%s264 + $0x858] sm:$0xff]
        %v544 = vld [vmem:[%s264 + $0x860] sm:$0xff]
        %v545 = vld [vmem:[%s264 + $0x868] sm:$0xff]
        %v546 = vld [vmem:[%s264 + $0x870] sm:$0xff]
        %v547 = vld [vmem:[%s264 + $0x878] sm:$0xff]
        %v548 = vld [vmem:[%s264 + $0x880] sm:$0xff]
        %v549 = vld [vmem:[%s264 + $0x888] sm:$0xff]
        %v550 = vld [vmem:[%s264 + $0x890] sm:$0xff]
        %v551 = vld [vmem:[%s264 + $0x898] sm:$0xff]
        %v552 = vld [vmem:[%s264 + $0x8a0] sm:$0xff]
        %v553 = vld [vmem:[%s264 + $0x8a8] sm:$0xff]
        %v554 = vld [vmem:[%s264 + $0x8b0] sm:$0xff]
        %v555 = vld [vmem:[%s264 + $0x8b8] sm:$0xff]
        %v556 = vld [vmem:[%s264 + $0x8c0] sm:$0xff]
        %v557 = vld [vmem:[%s264 + $0x8c8] sm:$0xff]
        %v558 = vld [vmem:[%s264 + $0x8d0] sm:$0xff]
        %v559 = vld [vmem:[%s264 + $0x8d8] sm:$0xff]
        %v560 = vld [vmem:[%s264 + $0x8e0] sm:$0xff]
        %v561 = vld [vmem:[%s264 + $0x8e8] sm:$0xff]
        %v562 = vld [vmem:[%s264 + $0x8f0] sm:$0xff]
        %v563 = vld [vmem:[%s264 + $0x8f8] sm:$0xff]
        %v564 = vld [vmem:[%s264 + $0x900] sm:$0xff]
        %v565 = vld [vmem:[%s264 + $0x908] sm:$0xff]
        %v566 = vld [vmem:[%s264 + $0x910] sm:$0xff]
        %v567 = vld [vmem:[%s264 + $0x918] sm:$0xff]
        %v568 = vld [vmem:[%s264 + $0x920] sm:$0xff]
        %v569 = vld [vmem:[%s264 + $0x928] sm:$0xff]
        %v570 = vld [vmem:[%s264 + $0x930] sm:$0xff]
        %v571 = vld [vmem:[%s264 + $0x938] sm:$0xff]
        %v572 = vld [vmem:[%s264 + $0x940] sm:$0xff]
        %v573 = vld [vmem:[%s264 + $0x948] sm:$0xff]
        %v574 = vld [vmem:[%s264 + $0x950] sm:$0xff]
        %v575 = vld [vmem:[%s264 + $0x958] sm:$0xff]
        %v576 = vld [vmem:[%s264 + $0x960] sm:$0xff]
        %v577 = vld [vmem:[%s264 + $0x968] sm:$0xff]
        %v578 = vld [vmem:[%s264 + $0x970] sm:$0xff]
        %v579 = vld [vmem:[%s264 + $0x978] sm:$0xff]
        %v580 = vld [vmem:[%s264 + $0x980] sm:$0xff]
        %v581 = vld [vmem:[%s264 + $0x988] sm:$0xff]
        %v582 = vld [vmem:[%s264 + $0x990] sm:$0xff]
        %v583 = vld [vmem:[%s264 + $0x998] sm:$0xff]
        %v584 = vld [vmem:[%s264 + $0x9a0] sm:$0xff]
        %v585 = vld [vmem:[%s264 + $0x9a8] sm:$0xff]
        %v586 = vld [vmem:[%s264 + $0x9b0] sm:$0xff]
        %v587 = vld [vmem:[%s264 + $0x9b8] sm:$0xff]
        %v588 = vld [vmem:[%s264 + $0x9c0] sm:$0xff]
        %v589 = vld [vmem:[%s264 + $0x9c8] sm:$0xff]
        %v590 = vld [vmem:[%s264 + $0x9d0] sm:$0xff]
        %v591 = vld [vmem:[%s264 + $0x9d8] sm:$0xff]
        %v592 = vld [vmem:[%s264 + $0x9e0] sm:$0xff]
        %v593 = vld [vmem:[%s264 + $0x9e8] sm:$0xff]
        %v594 = vld [vmem:[%s264 + $0x9f0] sm:$0xff]
        %v595 = vld [vmem:[%s264 + $0x9f8] sm:$0xff]
        %v596 = vld [vmem:[%s264 + $0xa00] sm:$0xff]
        %v597 = vld [vmem:[%s264 + $0xa08] sm:$0xff]
        %v598 = vld [vmem:[%s264 + $0xa10] sm:$0xff]
        %v599 = vld [vmem:[%s264 + $0xa18] sm:$0xff]
        %v600 = vld [vmem:[%s264 + $0xa20] sm:$0xff]
        %v601 = vld [vmem:[%s264 + $0xa28] sm:$0xff]
        %v602 = vld [vmem:[%s264 + $0xa30] sm:$0xff]
        %v603 = vld [vmem:[%s264 + $0xa38] sm:$0xff]
        %v604 = vld [vmem:[%s264 + $0xa40] sm:$0xff]
        %v605 = vld [vmem:[%s264 + $0xa48] sm:$0xff]
        %v606 = vld [vmem:[%s264 + $0xa50] sm:$0xff]
        %v607 = vld [vmem:[%s264 + $0xa58] sm:$0xff]
        %v608 = vld [vmem:[%s264 + $0xa60] sm:$0xff]
        %v609 = vld [vmem:[%s264 + $0xa68] sm:$0xff]
        %v610 = vld [vmem:[%s264 + $0xa70] sm:$0xff]
        %v611 = vld [vmem:[%s264 + $0xa78] sm:$0xff]
        %v612 = vld [vmem:[%s264 + $0xa80] sm:$0xff]
        %v613 = vld [vmem:[%s264 + $0xa88] sm:$0xff]
        %v614 = vld [vmem:[%s264 + $0xa90] sm:$0xff]
        %v615 = vld [vmem:[%s264 + $0xa98] sm:$0xff]
        %v616 = vld [vmem:[%s264 + $0xaa0] sm:$0xff]
        %v617 = vld [vmem:[%s264 + $0xaa8] sm:$0xff]
        %v618 = vld [vmem:[%s264 + $0xab0] sm:$0xff]
        %v619 = vld [vmem:[%s264 + $0xab8] sm:$0xff]
        %v620 = vld [vmem:[%s264 + $0xac0] sm:$0xff]
        %v621 = vld [vmem:[%s264 + $0xac8] sm:$0xff]
        %v622 = vld [vmem:[%s264 + $0xad0] sm:$0xff]
        %v623 = vld [vmem:[%s264 + $0xad8] sm:$0xff]
        %v624 = vld [vmem:[%s264 + $0xae0] sm:$0xff]
        %v625 = vld [vmem:[%s264 + $0xae8] sm:$0xff]
        %v626 = vld [vmem:[%s264 + $0xaf0] sm:$0xff]
        %v627 = vld [vmem:[%s264 + $0xaf8] sm:$0xff]
        %v628 = vld [vmem:[%s264 + $0xb00] sm:$0xff]
        %v629 = vld [vmem:[%s264 + $0xb08] sm:$0xff]
        %v630 = vld [vmem:[%s264 + $0xb10] sm:$0xff]
        %v631 = vld [vmem:[%s264 + $0xb18] sm:$0xff]
        %v632 = vld [vmem:[%s264 + $0xb20] sm:$0xff]
        %v633 = vld [vmem:[%s264 + $0xb28] sm:$0xff]
        %v634 = vld [vmem:[%s264 + $0xb30] sm:$0xff]
        %v635 = vld [vmem:[%s264 + $0xb38] sm:$0xff]
        %v636 = vld [vmem:[%s264 + $0xb40] sm:$0xff]
        %v637 = vld [vmem:[%s264 + $0xb48] sm:$0xff]
        %v638 = vld [vmem:[%s264 + $0xb50] sm:$0xff]
        %v639 = vld [vmem:[%s264 + $0xb58] sm:$0xff]
        %v640 = vld [vmem:[%s264 + $0xb60] sm:$0xff]
        %v641 = vld [vmem:[%s264 + $0xb68] sm:$0xff]
        %v642 = vld [vmem:[%s264 + $0xb70] sm:$0xff]
        %v643 = vld [vmem:[%s264 + $0xb78] sm:$0xff]
        %v644 = vld [vmem:[%s264 + $0xb80] sm:$0xff]
        %v645 = vld [vmem:[%s264 + $0xb88] sm:$0xff]
        %v646 = vld [vmem:[%s264 + $0xb90] sm:$0xff]
        %v647 = vld [vmem:[%s264 + $0xb98] sm:$0xff]
        %v648 = vld [vmem:[%s264 + $0xba0] sm:$0xff]
        %v649 = vld [vmem:[%s264 + $0xba8] sm:$0xff]
        %v650 = vld [vmem:[%s264 + $0xbb0] sm:$0xff]
        %v651 = vld [vmem:[%s264 + $0xbb8] sm:$0xff]
        %v652 = vld [vmem:[%s264 + $0xbc0] sm:$0xff]
        %v653 = vld [vmem:[%s264 + $0xbc8] sm:$0xff]
        %v654 = vld [vmem:[%s264 + $0xbd0] sm:$0xff]
        %v655 = vld [vmem:[%s264 + $0xbd8] sm:$0xff]
        %v656 = vld [vmem:[%s264 + $0xbe0] sm:$0xff]
        %v657 = vld [vmem:[%s264 + $0xbe8] sm:$0xff]
        %v658 = vld [vmem:[%s264 + $0xbf0] sm:$0xff]
        %v659 = vld [vmem:[%s264 + $0xbf8] sm:$0xff]
        %v660 = vld [vmem:[%s264 + $0xc00] sm:$0xff]
        %v661 = vld [vmem:[%s264 + $0xc08] sm:$0xff]
        %v662 = vld [vmem:[%s264 + $0xc10] sm:$0xff]
        %v663 = vld [vmem:[%s264 + $0xc18] sm:$0xff]
        %v664 = vld [vmem:[%s264 + $0xc20] sm:$0xff]
        %v665 = vld [vmem:[%s264 + $0xc28] sm:$0xff]
        %v666 = vld [vmem:[%s264 + $0xc30] sm:$0xff]
        %v667 = vld [vmem:[%s264 + $0xc38] sm:$0xff]
        %v668 = vld [vmem:[%s264 + $0xc40] sm:$0xff]
        %v669 = vld [vmem:[%s264 + $0xc48] sm:$0xff]
        %v670 = vld [vmem:[%s264 + $0xc50] sm:$0xff]
        %v671 = vld [vmem:[%s264 + $0xc58] sm:$0xff]
        %v672 = vld [vmem:[%s264 + $0xc60] sm:$0xff]
        %v673 = vld [vmem:[%s264 + $0xc68] sm:$0xff]
        %v674 = vld [vmem:[%s264 + $0xc70] sm:$0xff]
        %v675 = vld [vmem:[%s264 + $0xc78] sm:$0xff]
        %v676 = vld [vmem:[%s264 + $0xc80] sm:$0xff]
        %v677 = vld [vmem:[%s264 + $0xc88] sm:$0xff]
        %v678 = vld [vmem:[%s264 + $0xc90] sm:$0xff]
        %v679 = vld [vmem:[%s264 + $0xc98] sm:$0xff]
        %v680 = vld [vmem:[%s264 + $0xca0] sm:$0xff]
        %v681 = vld [vmem:[%s264 + $0xca8] sm:$0xff]
        %v682 = vld [vmem:[%s264 + $0xcb0] sm:$0xff]
        %v683 = vld [vmem:[%s264 + $0xcb8] sm:$0xff]
        %v684 = vld [vmem:[%s264 + $0xcc0] sm:$0xff]
        %v685 = vld [vmem:[%s264 + $0xcc8] sm:$0xff]
        %v686 = vld [vmem:[%s264 + $0xcd0] sm:$0xff]
        %v687 = vld [vmem:[%s264 + $0xcd8] sm:$0xff]
        %v688 = vld [vmem:[%s264 + $0xce0] sm:$0xff]
        %v689 = vld [vmem:[%s264 + $0xce8] sm:$0xff]
        %v690 = vld [vmem:[%s264 + $0xcf0] sm:$0xff]
        %v691 = vld [vmem:[%s264 + $0xcf8] sm:$0xff]
        %v692 = vld [vmem:[%s264 + $0xd00] sm:$0xff]
        %v693 = vld [vmem:[%s264 + $0xd08] sm:$0xff]
        %v694 = vld [vmem:[%s264 + $0xd10] sm:$0xff]
        %v695 = vld [vmem:[%s264 + $0xd18] sm:$0xff]
        %v696 = vld [vmem:[%s264 + $0xd20] sm:$0xff]
        %v697 = vld [vmem:[%s264 + $0xd28] sm:$0xff]
        %v698 = vld [vmem:[%s264 + $0xd30] sm:$0xff]
        %v699 = vld [vmem:[%s264 + $0xd38] sm:$0xff]
        %v700 = vld [vmem:[%s264 + $0xd40] sm:$0xff]
        %v701 = vld [vmem:[%s264 + $0xd48] sm:$0xff]
        %v702 = vld [vmem:[%s264 + $0xd50] sm:$0xff]
        %v703 = vld [vmem:[%s264 + $0xd58] sm:$0xff]
        %v704 = vld [vmem:[%s264 + $0xd60] sm:$0xff]
        %v705 = vld [vmem:[%s264 + $0xd68] sm:$0xff]
        %v706 = vld [vmem:[%s264 + $0xd70] sm:$0xff]
        %v707 = vld [vmem:[%s264 + $0xd78] sm:$0xff]
        %v708 = vld [vmem:[%s264 + $0xd80] sm:$0xff]
        %v709 = vld [vmem:[%s264 + $0xd88] sm:$0xff]
        %v710 = vld [vmem:[%s264 + $0xd90] sm:$0xff]
        %v711 = vld [vmem:[%s264 + $0xd98] sm:$0xff]
        %v712 = vld [vmem:[%s264 + $0xda0] sm:$0xff]
        %v713 = vld [vmem:[%s264 + $0xda8] sm:$0xff]
        %v714 = vld [vmem:[%s264 + $0xdb0] sm:$0xff]
        %v715 = vld [vmem:[%s264 + $0xdb8] sm:$0xff]
        %v716 = vld [vmem:[%s264 + $0xdc0] sm:$0xff]
        %v717 = vld [vmem:[%s264 + $0xdc8] sm:$0xff]
        %v718 = vld [vmem:[%s264 + $0xdd0] sm:$0xff]
        %v719 = vld [vmem:[%s264 + $0xdd8] sm:$0xff]
        %v720 = vld [vmem:[%s264 + $0xde0] sm:$0xff]
        %v721 = vld [vmem:[%s264 + $0xde8] sm:$0xff]
        %v722 = vld [vmem:[%s264 + $0xdf0] sm:$0xff]
        %v723 = vld [vmem:[%s264 + $0xdf8] sm:$0xff]
        %v725 = vcombine.high %v275, %v275
        %v727 = vunpack.c.l.s4 1966171168
        %v728 = vunpack.c.0.s8 %v727
        %v729 = vlaneseq
        %v730 = vshrl.u32 %v729, 7
        %v731 = vsub.s32 %v728, %v730
        %v732 = vrot.slane %v275, %v731
        %v734 = vunpack.c.l.s4 1966171168
        %v735 = vunpack.c.0.s8 %v734
        %v736 = vlaneseq
        %v737 = vshrl.u32 %v736, 7
        %v738 = vsub.s32 %v735, %v737
        %v739 = vrot.slane %v725, %v738
        %v740 = vcombine.high %v732, %v732
        %v741 = vcombine.high %v739, %v739
        %v743 = vunpack.c.l.s4 1966171168
        %v744 = vunpack.c.0.s8 %v743
        %v745 = vlaneseq
        %v746 = vshrl.u32 %v745, 7
        %v747 = vsub.s32 %v744, %v746
        %v748 = vrot.slane %v732, %v747
        %v750 = vunpack.c.l.s4 1966171168
        %v751 = vunpack.c.0.s8 %v750
        %v752 = vlaneseq
        %v753 = vshrl.u32 %v752, 7
        %v754 = vsub.s32 %v751, %v753
        %v755 = vrot.slane %v739, %v754
        %v757 = vunpack.c.l.s4 1966171168
        %v758 = vunpack.c.0.s8 %v757
        %v759 = vlaneseq
        %v760 = vshrl.u32 %v759, 7
        %v761 = vsub.s32 %v758, %v760
        %v762 = vrot.slane %v740, %v761
        %v764 = vunpack.c.l.s4 1966171168
        %v765 = vunpack.c.0.s8 %v764
        %v766 = vlaneseq
        %v767 = vshrl.u32 %v766, 7
        %v768 = vsub.s32 %v765, %v767
        %v769 = vrot.slane %v741, %v768
        %v770 = vcombine.high %v748, %v748
        %v771 = vcombine.high %v755, %v755
        %v772 = vcombine.high %v762, %v762
        %v1228 = vunpack.c.l.b16 %v276
        %v1229 = vunpack.c.h.b16 %v276
        %v1230 = vunpack.c.l.b16 %v277
        %v1231 = vunpack.c.h.b16 %v277
        %v1232 = vunpack.c.l.b16 %v278
        %v1233 = vunpack.c.h.b16 %v278
        %v1234 = vunpack.c.l.b16 %v279
        %v1235 = vunpack.c.h.b16 %v279
        %v1236 = vunpack.c.l.b16 %v280
        %v1237 = vunpack.c.h.b16 %v280
        %v1238 = vunpack.c.l.b16 %v281
        %v1239 = vunpack.c.h.b16 %v281
        %v1240 = vunpack.c.l.b16 %v282
        %v1241 = vunpack.c.h.b16 %v282
        %v1242 = vunpack.c.l.b16 %v283
        %v1243 = vunpack.c.h.b16 %v283
        %v1244 = vunpack.c.l.b16 %v284
        %v1245 = vunpack.c.h.b16 %v284
        %v1246 = vunpack.c.l.b16 %v285
        %v1247 = vunpack.c.h.b16 %v285
        %v1248 = vunpack.c.l.b16 %v286
        %v1249 = vunpack.c.h.b16 %v286
        %v1250 = vunpack.c.l.b16 %v287
        %v1251 = vunpack.c.h.b16 %v287
        %v1252 = vunpack.c.l.b16 %v288
        %v1253 = vunpack.c.h.b16 %v288
        %v1254 = vunpack.c.l.b16 %v289
        %v1255 = vunpack.c.h.b16 %v289
        %v1256 = vunpack.c.l.b16 %v290
        %v1257 = vunpack.c.h.b16 %v290
        %v1258 = vunpack.c.l.b16 %v291
        %v1259 = vunpack.c.h.b16 %v291
        %v1260 = vunpack.c.l.b16 %v292
        %v1261 = vunpack.c.h.b16 %v292
        %v1262 = vunpack.c.l.b16 %v293
        %v1263 = vunpack.c.h.b16 %v293
        %v1264 = vunpack.c.l.b16 %v294
        %v1265 = vunpack.c.h.b16 %v294
        %v1266 = vunpack.c.l.b16 %v295
        %v1267 = vunpack.c.h.b16 %v295
        %v1268 = vunpack.c.l.b16 %v296
        %v1269 = vunpack.c.h.b16 %v296
        %v1270 = vunpack.c.l.b16 %v297
        %v1271 = vunpack.c.h.b16 %v297
        %v1272 = vunpack.c.l.b16 %v298
        %v1273 = vunpack.c.h.b16 %v298
        %v1274 = vunpack.c.l.b16 %v299
        %v1275 = vunpack.c.h.b16 %v299
        %v1276 = vunpack.c.l.b16 %v300
        %v1277 = vunpack.c.h.b16 %v300
        %v1278 = vunpack.c.l.b16 %v301
        %v1279 = vunpack.c.h.b16 %v301
        %v1280 = vunpack.c.l.b16 %v302
        %v1281 = vunpack.c.h.b16 %v302
        %v1282 = vunpack.c.l.b16 %v303
        %v1283 = vunpack.c.h.b16 %v303
        %v1284 = vunpack.c.l.b16 %v304
        %v1285 = vunpack.c.h.b16 %v304
        %v1286 = vunpack.c.l.b16 %v305
        %v1287 = vunpack.c.h.b16 %v305
        %v1288 = vunpack.c.l.b16 %v306
        %v1289 = vunpack.c.h.b16 %v306
        %v1290 = vunpack.c.l.b16 %v307
        %v1291 = vunpack.c.h.b16 %v307
        %v1292 = vunpack.c.l.b16 %v308
        %v1293 = vunpack.c.h.b16 %v308
        %v1294 = vunpack.c.l.b16 %v309
        %v1295 = vunpack.c.h.b16 %v309
        %v1296 = vunpack.c.l.b16 %v310
        %v1297 = vunpack.c.h.b16 %v310
        %v1298 = vunpack.c.l.b16 %v311
        %v1299 = vunpack.c.h.b16 %v311
        %v1300 = vunpack.c.l.b16 %v312
        %v1301 = vunpack.c.h.b16 %v312
        %v1302 = vunpack.c.l.b16 %v313
        %v1303 = vunpack.c.h.b16 %v313
        %v1304 = vunpack.c.l.b16 %v314
        %v1305 = vunpack.c.h.b16 %v314
        %v1306 = vunpack.c.l.b16 %v315
        %v1307 = vunpack.c.h.b16 %v315
        %v1308 = vunpack.c.l.b16 %v316
        %v1309 = vunpack.c.h.b16 %v316
        %v1310 = vunpack.c.l.b16 %v317
        %v1311 = vunpack.c.h.b16 %v317
        %v1312 = vunpack.c.l.b16 %v318
        %v1313 = vunpack.c.h.b16 %v318
        %v1314 = vunpack.c.l.b16 %v319
        %v1315 = vunpack.c.h.b16 %v319
        %v1316 = vunpack.c.l.b16 %v320
        %v1317 = vunpack.c.h.b16 %v320
        %v1318 = vunpack.c.l.b16 %v321
        %v1319 = vunpack.c.h.b16 %v321
        %v1320 = vunpack.c.l.b16 %v322
        %v1321 = vunpack.c.h.b16 %v322
        %v1322 = vunpack.c.l.b16 %v323
        %v1323 = vunpack.c.h.b16 %v323
        %v1324 = vunpack.c.l.b16 %v324
        %v1325 = vunpack.c.h.b16 %v324
        %v1326 = vunpack.c.l.b16 %v325
        %v1327 = vunpack.c.h.b16 %v325
        %v1328 = vunpack.c.l.b16 %v326
        %v1329 = vunpack.c.h.b16 %v326
        %v1330 = vunpack.c.l.b16 %v327
        %v1331 = vunpack.c.h.b16 %v327
        %v1332 = vunpack.c.l.b16 %v328
        %v1333 = vunpack.c.h.b16 %v328
        %v1334 = vunpack.c.l.b16 %v329
        %v1335 = vunpack.c.h.b16 %v329
        %v1336 = vunpack.c.l.b16 %v330
        %v1337 = vunpack.c.h.b16 %v330
        %v1338 = vunpack.c.l.b16 %v331
        %v1339 = vunpack.c.h.b16 %v331
        %v1340 = vunpack.c.l.b16 %v332
        %v1341 = vunpack.c.h.b16 %v332
        %v1342 = vunpack.c.l.b16 %v333
        %v1343 = vunpack.c.h.b16 %v333
        %v1344 = vunpack.c.l.b16 %v334
        %v1345 = vunpack.c.h.b16 %v334
        %v1346 = vunpack.c.l.b16 %v335
        %v1347 = vunpack.c.h.b16 %v335
        %v1348 = vunpack.c.l.b16 %v336
        %v1349 = vunpack.c.h.b16 %v336
        %v1350 = vunpack.c.l.b16 %v337
        %v1351 = vunpack.c.h.b16 %v337
        %v1352 = vunpack.c.l.b16 %v338
        %v1353 = vunpack.c.h.b16 %v338
        %v1354 = vunpack.c.l.b16 %v339
        %v1355 = vunpack.c.h.b16 %v339
        %v1356 = vunpack.c.l.b16 %v340
        %v1357 = vunpack.c.h.b16 %v340
        %v1358 = vunpack.c.l.b16 %v341
        %v1359 = vunpack.c.h.b16 %v341
        %v1360 = vunpack.c.l.b16 %v342
        %v1361 = vunpack.c.h.b16 %v342
        %v1362 = vunpack.c.l.b16 %v343
        %v1363 = vunpack.c.h.b16 %v343
        %v1364 = vunpack.c.l.b16 %v344
        %v1365 = vunpack.c.h.b16 %v344
        %v1366 = vunpack.c.l.b16 %v345
        %v1367 = vunpack.c.h.b16 %v345
        %v1368 = vunpack.c.l.b16 %v346
        %v1369 = vunpack.c.h.b16 %v346
        %v1370 = vunpack.c.l.b16 %v347
        %v1371 = vunpack.c.h.b16 %v347
        %v1372 = vunpack.c.l.b16 %v348
        %v1373 = vunpack.c.h.b16 %v348
        %v1374 = vunpack.c.l.b16 %v349
        %v1375 = vunpack.c.h.b16 %v349
        %v1376 = vunpack.c.l.b16 %v350
        %v1377 = vunpack.c.h.b16 %v350
        %v1378 = vunpack.c.l.b16 %v351
        %v1379 = vunpack.c.h.b16 %v351
        %v1380 = vunpack.c.l.b16 %v352
        %v1381 = vunpack.c.h.b16 %v352
        %v1382 = vunpack.c.l.b16 %v353
        %v1383 = vunpack.c.h.b16 %v353
        %v1384 = vunpack.c.l.b16 %v354
        %v1385 = vunpack.c.h.b16 %v354
        %v1386 = vunpack.c.l.b16 %v355
        %v1387 = vunpack.c.h.b16 %v355
        %v1388 = vunpack.c.l.b16 %v356
        %v1389 = vunpack.c.h.b16 %v356
        %v1390 = vunpack.c.l.b16 %v357
        %v1391 = vunpack.c.h.b16 %v357
        %v1392 = vunpack.c.l.b16 %v358
        %v1393 = vunpack.c.h.b16 %v358
        %v1394 = vunpack.c.l.b16 %v359
        %v1395 = vunpack.c.h.b16 %v359
        %v1396 = vunpack.c.l.b16 %v360
        %v1397 = vunpack.c.h.b16 %v360
        %v1398 = vunpack.c.l.b16 %v361
        %v1399 = vunpack.c.h.b16 %v361
        %v1400 = vunpack.c.l.b16 %v362
        %v1401 = vunpack.c.h.b16 %v362
        %v1402 = vunpack.c.l.b16 %v363
        %v1403 = vunpack.c.h.b16 %v363
        %v1404 = vunpack.c.l.b16 %v364
        %v1405 = vunpack.c.h.b16 %v364
        %v1406 = vunpack.c.l.b16 %v365
        %v1407 = vunpack.c.h.b16 %v365
        %v1408 = vunpack.c.l.b16 %v366
        %v1409 = vunpack.c.h.b16 %v366
        %v1410 = vunpack.c.l.b16 %v367
        %v1411 = vunpack.c.h.b16 %v367
        %v1412 = vunpack.c.l.b16 %v368
        %v1413 = vunpack.c.h.b16 %v368
        %v1414 = vunpack.c.l.b16 %v369
        %v1415 = vunpack.c.h.b16 %v369
        %v1416 = vunpack.c.l.b16 %v370
        %v1417 = vunpack.c.h.b16 %v370
        %v1418 = vunpack.c.l.b16 %v371
        %v1419 = vunpack.c.h.b16 %v371
        %v1420 = vunpack.c.l.b16 %v372
        %v1421 = vunpack.c.h.b16 %v372
        %v1422 = vunpack.c.l.b16 %v373
        %v1423 = vunpack.c.h.b16 %v373
        %v1424 = vunpack.c.l.b16 %v374
        %v1425 = vunpack.c.h.b16 %v374
        %v1426 = vunpack.c.l.b16 %v375
        %v1427 = vunpack.c.h.b16 %v375
        %v1428 = vunpack.c.l.b16 %v376
        %v1429 = vunpack.c.h.b16 %v376
        %v1430 = vunpack.c.l.b16 %v377
        %v1431 = vunpack.c.h.b16 %v377
        %v1432 = vunpack.c.l.b16 %v378
        %v1433 = vunpack.c.h.b16 %v378
        %v1434 = vunpack.c.l.b16 %v379
        %v1435 = vunpack.c.h.b16 %v379
        %v1436 = vunpack.c.l.b16 %v380
        %v1437 = vunpack.c.h.b16 %v380
        %v1438 = vunpack.c.l.b16 %v381
        %v1439 = vunpack.c.h.b16 %v381
        %v1440 = vunpack.c.l.b16 %v382
        %v1441 = vunpack.c.h.b16 %v382
        %v1442 = vunpack.c.l.b16 %v383
        %v1443 = vunpack.c.h.b16 %v383
        %v1444 = vunpack.c.l.b16 %v384
        %v1445 = vunpack.c.h.b16 %v384
        %v1446 = vunpack.c.l.b16 %v385
        %v1447 = vunpack.c.h.b16 %v385
        %v1448 = vunpack.c.l.b16 %v386
        %v1449 = vunpack.c.h.b16 %v386
        %v1450 = vunpack.c.l.b16 %v387
        %v1451 = vunpack.c.h.b16 %v387
        %v1452 = vunpack.c.l.b16 %v388
        %v1453 = vunpack.c.h.b16 %v388
        %v1454 = vunpack.c.l.b16 %v389
        %v1455 = vunpack.c.h.b16 %v389
        %v1456 = vunpack.c.l.b16 %v390
        %v1457 = vunpack.c.h.b16 %v390
        %v1458 = vunpack.c.l.b16 %v391
        %v1459 = vunpack.c.h.b16 %v391
        %v1460 = vunpack.c.l.b16 %v392
        %v1461 = vunpack.c.h.b16 %v392
        %v1462 = vunpack.c.l.b16 %v393
        %v1463 = vunpack.c.h.b16 %v393
        %v1464 = vunpack.c.l.b16 %v394
        %v1465 = vunpack.c.h.b16 %v394
        %v1466 = vunpack.c.l.b16 %v395
        %v1467 = vunpack.c.h.b16 %v395
        %v1468 = vunpack.c.l.b16 %v396
        %v1469 = vunpack.c.h.b16 %v396
        %v1470 = vunpack.c.l.b16 %v397
        %v1471 = vunpack.c.h.b16 %v397
        %v1472 = vunpack.c.l.b16 %v398
        %v1473 = vunpack.c.h.b16 %v398
        %v1474 = vunpack.c.l.b16 %v399
        %v1475 = vunpack.c.h.b16 %v399
        %v1476 = vunpack.c.l.b16 %v400
        %v1477 = vunpack.c.h.b16 %v400
        %v1478 = vunpack.c.l.b16 %v401
        %v1479 = vunpack.c.h.b16 %v401
        %v1480 = vunpack.c.l.b16 %v402
        %v1481 = vunpack.c.h.b16 %v402
        %v1482 = vunpack.c.l.b16 %v403
        %v1483 = vunpack.c.h.b16 %v403
        %v1484 = vunpack.c.l.b16 %v404
        %v1485 = vunpack.c.h.b16 %v404
        %v1486 = vunpack.c.l.b16 %v405
        %v1487 = vunpack.c.h.b16 %v405
        %v1488 = vunpack.c.l.b16 %v406
        %v1489 = vunpack.c.h.b16 %v406
        %v1490 = vunpack.c.l.b16 %v407
        %v1491 = vunpack.c.h.b16 %v407
        %v1492 = vunpack.c.l.b16 %v408
        %v1493 = vunpack.c.h.b16 %v408
        %v1494 = vunpack.c.l.b16 %v409
        %v1495 = vunpack.c.h.b16 %v409
        %v1496 = vunpack.c.l.b16 %v410
        %v1497 = vunpack.c.h.b16 %v410
        %v1498 = vunpack.c.l.b16 %v411
        %v1499 = vunpack.c.h.b16 %v411
        %v1500 = vunpack.c.l.b16 %v412
        %v1501 = vunpack.c.h.b16 %v412
        %v1502 = vunpack.c.l.b16 %v413
        %v1503 = vunpack.c.h.b16 %v413
        %v1504 = vunpack.c.l.b16 %v414
        %v1505 = vunpack.c.h.b16 %v414
        %v1506 = vunpack.c.l.b16 %v415
        %v1507 = vunpack.c.h.b16 %v415
        %v1508 = vunpack.c.l.b16 %v416
        %v1509 = vunpack.c.h.b16 %v416
        %v1510 = vunpack.c.l.b16 %v417
        %v1511 = vunpack.c.h.b16 %v417
        %v1512 = vunpack.c.l.b16 %v418
        %v1513 = vunpack.c.h.b16 %v418
        %v1514 = vunpack.c.l.b16 %v419
        %v1515 = vunpack.c.h.b16 %v419
        %v1516 = vunpack.c.l.b16 %v420
        %v1517 = vunpack.c.h.b16 %v420
        %v1518 = vunpack.c.l.b16 %v421
        %v1519 = vunpack.c.h.b16 %v421
        %v1520 = vunpack.c.l.b16 %v422
        %v1521 = vunpack.c.h.b16 %v422
        %v1522 = vunpack.c.l.b16 %v423
        %v1523 = vunpack.c.h.b16 %v423
        %v1524 = vunpack.c.l.b16 %v424
        %v1525 = vunpack.c.h.b16 %v424
        %v1526 = vunpack.c.l.b16 %v425
        %v1527 = vunpack.c.h.b16 %v425
        %v1528 = vunpack.c.l.b16 %v426
        %v1529 = vunpack.c.h.b16 %v426
        %v1530 = vunpack.c.l.b16 %v427
        %v1531 = vunpack.c.h.b16 %v427
        %v1532 = vunpack.c.l.b16 %v428
        %v1533 = vunpack.c.h.b16 %v428
        %v1534 = vunpack.c.l.b16 %v429
        %v1535 = vunpack.c.h.b16 %v429
        %v1536 = vunpack.c.l.b16 %v430
        %v1537 = vunpack.c.h.b16 %v430
        %v1538 = vunpack.c.l.b16 %v431
        %v1539 = vunpack.c.h.b16 %v431
        %v1540 = vunpack.c.l.b16 %v432
        %v1541 = vunpack.c.h.b16 %v432
        %v1542 = vunpack.c.l.b16 %v433
        %v1543 = vunpack.c.h.b16 %v433
        %v1544 = vunpack.c.l.b16 %v434
        %v1545 = vunpack.c.h.b16 %v434
        %v1546 = vunpack.c.l.b16 %v435
        %v1547 = vunpack.c.h.b16 %v435
        %v1548 = vunpack.c.l.b16 %v436
        %v1549 = vunpack.c.h.b16 %v436
        %v1550 = vunpack.c.l.b16 %v437
        %v1551 = vunpack.c.h.b16 %v437
        %v1552 = vunpack.c.l.b16 %v438
        %v1553 = vunpack.c.h.b16 %v438
        %v1554 = vunpack.c.l.b16 %v439
        %v1555 = vunpack.c.h.b16 %v439
        %v1556 = vunpack.c.l.b16 %v440
        %v1557 = vunpack.c.h.b16 %v440
        %v1558 = vunpack.c.l.b16 %v441
        %v1559 = vunpack.c.h.b16 %v441
        %v1560 = vunpack.c.l.b16 %v442
        %v1561 = vunpack.c.h.b16 %v442
        %v1562 = vunpack.c.l.b16 %v443
        %v1563 = vunpack.c.h.b16 %v443
        %v1564 = vunpack.c.l.b16 %v444
        %v1565 = vunpack.c.h.b16 %v444
        %v1566 = vunpack.c.l.b16 %v445
        %v1567 = vunpack.c.h.b16 %v445
        %v1568 = vunpack.c.l.b16 %v446
        %v1569 = vunpack.c.h.b16 %v446
        %v1570 = vunpack.c.l.b16 %v447
        %v1571 = vunpack.c.h.b16 %v447
        %v1572 = vunpack.c.l.b16 %v448
        %v1573 = vunpack.c.h.b16 %v448
        %v1574 = vunpack.c.l.b16 %v449
        %v1575 = vunpack.c.h.b16 %v449
        %v1576 = vunpack.c.l.b16 %v450
        %v1577 = vunpack.c.h.b16 %v450
        %v1578 = vunpack.c.l.b16 %v451
        %v1579 = vunpack.c.h.b16 %v451
        %v1580 = vunpack.c.l.b16 %v452
        %v1581 = vunpack.c.h.b16 %v452
        %v1582 = vunpack.c.l.b16 %v453
        %v1583 = vunpack.c.h.b16 %v453
        %v1584 = vunpack.c.l.b16 %v454
        %v1585 = vunpack.c.h.b16 %v454
        %v1586 = vunpack.c.l.b16 %v455
        %v1587 = vunpack.c.h.b16 %v455
        %v1588 = vunpack.c.l.b16 %v456
        %v1589 = vunpack.c.h.b16 %v456
        %v1590 = vunpack.c.l.b16 %v457
        %v1591 = vunpack.c.h.b16 %v457
        %v1592 = vunpack.c.l.b16 %v458
        %v1593 = vunpack.c.h.b16 %v458
        %v1594 = vunpack.c.l.b16 %v459
        %v1595 = vunpack.c.h.b16 %v459
        %v1596 = vunpack.c.l.b16 %v460
        %v1597 = vunpack.c.h.b16 %v460
        %v1598 = vunpack.c.l.b16 %v461
        %v1599 = vunpack.c.h.b16 %v461
        %v1600 = vunpack.c.l.b16 %v462
        %v1601 = vunpack.c.h.b16 %v462
        %v1602 = vunpack.c.l.b16 %v463
        %v1603 = vunpack.c.h.b16 %v463
        %v1604 = vunpack.c.l.b16 %v464
        %v1605 = vunpack.c.h.b16 %v464
        %v1606 = vunpack.c.l.b16 %v465
        %v1607 = vunpack.c.h.b16 %v465
        %v1608 = vunpack.c.l.b16 %v466
        %v1609 = vunpack.c.h.b16 %v466
        %v1610 = vunpack.c.l.b16 %v467
        %v1611 = vunpack.c.h.b16 %v467
        %v1612 = vunpack.c.l.b16 %v468
        %v1613 = vunpack.c.h.b16 %v468
        %v1614 = vunpack.c.l.b16 %v469
        %v1615 = vunpack.c.h.b16 %v469
        %v1616 = vunpack.c.l.b16 %v470
        %v1617 = vunpack.c.h.b16 %v470
        %v1618 = vunpack.c.l.b16 %v471
        %v1619 = vunpack.c.h.b16 %v471
        %v1620 = vunpack.c.l.b16 %v472
        %v1621 = vunpack.c.h.b16 %v472
        %v1622 = vunpack.c.l.b16 %v473
        %v1623 = vunpack.c.h.b16 %v473
        %v1624 = vunpack.c.l.b16 %v474
        %v1625 = vunpack.c.h.b16 %v474
        %v1626 = vunpack.c.l.b16 %v475
        %v1627 = vunpack.c.h.b16 %v475
        %v1628 = vunpack.c.l.b16 %v476
        %v1629 = vunpack.c.h.b16 %v476
        %v1630 = vunpack.c.l.b16 %v477
        %v1631 = vunpack.c.h.b16 %v477
        %v1632 = vunpack.c.l.b16 %v478
        %v1633 = vunpack.c.h.b16 %v478
        %v1634 = vunpack.c.l.b16 %v479
        %v1635 = vunpack.c.h.b16 %v479
        %v1636 = vunpack.c.l.b16 %v480
        %v1637 = vunpack.c.h.b16 %v480
        %v1638 = vunpack.c.l.b16 %v481
        %v1639 = vunpack.c.h.b16 %v481
        %v1640 = vunpack.c.l.b16 %v482
        %v1641 = vunpack.c.h.b16 %v482
        %v1642 = vunpack.c.l.b16 %v483
        %v1643 = vunpack.c.h.b16 %v483
        %v1644 = vunpack.c.l.b16 %v484
        %v1645 = vunpack.c.h.b16 %v484
        %v1646 = vunpack.c.l.b16 %v485
        %v1647 = vunpack.c.h.b16 %v485
        %v1648 = vunpack.c.l.b16 %v486
        %v1649 = vunpack.c.h.b16 %v486
        %v1650 = vunpack.c.l.b16 %v487
        %v1651 = vunpack.c.h.b16 %v487
        %v1652 = vunpack.c.l.b16 %v488
        %v1653 = vunpack.c.h.b16 %v488
        %v1654 = vunpack.c.l.b16 %v489
        %v1655 = vunpack.c.h.b16 %v489
        %v1656 = vunpack.c.l.b16 %v490
        %v1657 = vunpack.c.h.b16 %v490
        %v1658 = vunpack.c.l.b16 %v491
        %v1659 = vunpack.c.h.b16 %v491
        %v1660 = vunpack.c.l.b16 %v492
        %v1661 = vunpack.c.h.b16 %v492
        %v1662 = vunpack.c.l.b16 %v493
        %v1663 = vunpack.c.h.b16 %v493
        %v1664 = vunpack.c.l.b16 %v494
        %v1665 = vunpack.c.h.b16 %v494
        %v1666 = vunpack.c.l.b16 %v495
        %v1667 = vunpack.c.h.b16 %v495
        %v1668 = vunpack.c.l.b16 %v496
        %v1669 = vunpack.c.h.b16 %v496
        %v1670 = vunpack.c.l.b16 %v497
        %v1671 = vunpack.c.h.b16 %v497
        %v1672 = vunpack.c.l.b16 %v498
        %v1673 = vunpack.c.h.b16 %v498
        %v1674 = vunpack.c.l.b16 %v499
        %v1675 = vunpack.c.h.b16 %v499
        %v1676 = vunpack.c.l.b16 %v500
        %v1677 = vunpack.c.h.b16 %v500
        %v1678 = vunpack.c.l.b16 %v501
        %v1679 = vunpack.c.h.b16 %v501
        %v1680 = vunpack.c.l.b16 %v502
        %v1681 = vunpack.c.h.b16 %v502
        %v1682 = vunpack.c.l.b16 %v503
        %v1683 = vunpack.c.h.b16 %v503
        %v1684 = vunpack.c.l.b16 %v504
        %v1685 = vunpack.c.h.b16 %v504
        %v1686 = vunpack.c.l.b16 %v505
        %v1687 = vunpack.c.h.b16 %v505
        %v1688 = vunpack.c.l.b16 %v506
        %v1689 = vunpack.c.h.b16 %v506
        %v1690 = vunpack.c.l.b16 %v507
        %v1691 = vunpack.c.h.b16 %v507
        %v1692 = vunpack.c.l.b16 %v508
        %v1693 = vunpack.c.h.b16 %v508
        %v1694 = vunpack.c.l.b16 %v509
        %v1695 = vunpack.c.h.b16 %v509
        %v1696 = vunpack.c.l.b16 %v510
        %v1697 = vunpack.c.h.b16 %v510
        %v1698 = vunpack.c.l.b16 %v511
        %v1699 = vunpack.c.h.b16 %v511
        %v1700 = vunpack.c.l.b16 %v512
        %v1701 = vunpack.c.h.b16 %v512
        %v1702 = vunpack.c.l.b16 %v513
        %v1703 = vunpack.c.h.b16 %v513
        %v1704 = vunpack.c.l.b16 %v514
        %v1705 = vunpack.c.h.b16 %v514
        %v1706 = vunpack.c.l.b16 %v515
        %v1707 = vunpack.c.h.b16 %v515
        %v1708 = vunpack.c.l.b16 %v516
        %v1709 = vunpack.c.h.b16 %v516
        %v1710 = vunpack.c.l.b16 %v517
        %v1711 = vunpack.c.h.b16 %v517
        %v1712 = vunpack.c.l.b16 %v518
        %v1713 = vunpack.c.h.b16 %v518
        %v1714 = vunpack.c.l.b16 %v519
        %v1715 = vunpack.c.h.b16 %v519
        %v1716 = vunpack.c.l.b16 %v520
        %v1717 = vunpack.c.h.b16 %v520
        %v1718 = vunpack.c.l.b16 %v521
        %v1719 = vunpack.c.h.b16 %v521
        %v1720 = vunpack.c.l.b16 %v522
        %v1721 = vunpack.c.h.b16 %v522
        %v1722 = vunpack.c.l.b16 %v523
        %v1723 = vunpack.c.h.b16 %v523
        %v1724 = vunpack.c.l.b16 %v524
        %v1725 = vunpack.c.h.b16 %v524
        %v1726 = vunpack.c.l.b16 %v525
        %v1727 = vunpack.c.h.b16 %v525
        %v1728 = vunpack.c.l.b16 %v526
        %v1729 = vunpack.c.h.b16 %v526
        %v1730 = vunpack.c.l.b16 %v527
        %v1731 = vunpack.c.h.b16 %v527
        %v1732 = vunpack.c.l.b16 %v528
        %v1733 = vunpack.c.h.b16 %v528
        %v1734 = vunpack.c.l.b16 %v529
        %v1735 = vunpack.c.h.b16 %v529
        %v1736 = vunpack.c.l.b16 %v530
        %v1737 = vunpack.c.h.b16 %v530
        %v1738 = vunpack.c.l.b16 %v531
        %v1739 = vunpack.c.h.b16 %v531
        %v1740 = vunpack.c.l.b16 %v532
        %v1741 = vunpack.c.h.b16 %v532
        %v1742 = vunpack.c.l.b16 %v533
        %v1743 = vunpack.c.h.b16 %v533
        %v1744 = vunpack.c.l.b16 %v534
        %v1745 = vunpack.c.h.b16 %v534
        %v1746 = vunpack.c.l.b16 %v535
        %v1747 = vunpack.c.h.b16 %v535
        %v1748 = vunpack.c.l.b16 %v536
        %v1749 = vunpack.c.h.b16 %v536
        %v1750 = vunpack.c.l.b16 %v537
        %v1751 = vunpack.c.h.b16 %v537
        %v1752 = vunpack.c.l.b16 %v538
        %v1753 = vunpack.c.h.b16 %v538
        %v1754 = vunpack.c.l.b16 %v539
        %v1755 = vunpack.c.h.b16 %v539
        %v1756 = vunpack.c.l.b16 %v540
        %v1757 = vunpack.c.h.b16 %v540
        %v1758 = vunpack.c.l.b16 %v541
        %v1759 = vunpack.c.h.b16 %v541
        %v1760 = vunpack.c.l.b16 %v542
        %v1761 = vunpack.c.h.b16 %v542
        %v1762 = vunpack.c.l.b16 %v543
        %v1763 = vunpack.c.h.b16 %v543
        %v1764 = vunpack.c.l.b16 %v544
        %v1765 = vunpack.c.h.b16 %v544
        %v1766 = vunpack.c.l.b16 %v545
        %v1767 = vunpack.c.h.b16 %v545
        %v1768 = vunpack.c.l.b16 %v546
        %v1769 = vunpack.c.h.b16 %v546
        %v1770 = vunpack.c.l.b16 %v547
        %v1771 = vunpack.c.h.b16 %v547
        %v1772 = vunpack.c.l.b16 %v548
        %v1773 = vunpack.c.h.b16 %v548
        %v1774 = vunpack.c.l.b16 %v549
        %v1775 = vunpack.c.h.b16 %v549
        %v1776 = vunpack.c.l.b16 %v550
        %v1777 = vunpack.c.h.b16 %v550
        %v1778 = vunpack.c.l.b16 %v551
        %v1779 = vunpack.c.h.b16 %v551
        %v1780 = vunpack.c.l.b16 %v552
        %v1781 = vunpack.c.h.b16 %v552
        %v1782 = vunpack.c.l.b16 %v553
        %v1783 = vunpack.c.h.b16 %v553
        %v1784 = vunpack.c.l.b16 %v554
        %v1785 = vunpack.c.h.b16 %v554
        %v1786 = vunpack.c.l.b16 %v555
        %v1787 = vunpack.c.h.b16 %v555
        %v1788 = vunpack.c.l.b16 %v556
        %v1789 = vunpack.c.h.b16 %v556
        %v1790 = vunpack.c.l.b16 %v557
        %v1791 = vunpack.c.h.b16 %v557
        %v1792 = vunpack.c.l.b16 %v558
        %v1793 = vunpack.c.h.b16 %v558
        %v1794 = vunpack.c.l.b16 %v559
        %v1795 = vunpack.c.h.b16 %v559
        %v1796 = vunpack.c.l.b16 %v560
        %v1797 = vunpack.c.h.b16 %v560
        %v1798 = vunpack.c.l.b16 %v561
        %v1799 = vunpack.c.h.b16 %v561
        %v1800 = vunpack.c.l.b16 %v562
        %v1801 = vunpack.c.h.b16 %v562
        %v1802 = vunpack.c.l.b16 %v563
        %v1803 = vunpack.c.h.b16 %v563
        %v1804 = vunpack.c.l.b16 %v564
        %v1805 = vunpack.c.h.b16 %v564
        %v1806 = vunpack.c.l.b16 %v565
        %v1807 = vunpack.c.h.b16 %v565
        %v1808 = vunpack.c.l.b16 %v566
        %v1809 = vunpack.c.h.b16 %v566
        %v1810 = vunpack.c.l.b16 %v567
        %v1811 = vunpack.c.h.b16 %v567
        %v1812 = vunpack.c.l.b16 %v568
        %v1813 = vunpack.c.h.b16 %v568
        %v1814 = vunpack.c.l.b16 %v569
        %v1815 = vunpack.c.h.b16 %v569
        %v1816 = vunpack.c.l.b16 %v570
        %v1817 = vunpack.c.h.b16 %v570
        %v1818 = vunpack.c.l.b16 %v571
        %v1819 = vunpack.c.h.b16 %v571
        %v1820 = vunpack.c.l.b16 %v572
        %v1821 = vunpack.c.h.b16 %v572
        %v1822 = vunpack.c.l.b16 %v573
        %v1823 = vunpack.c.h.b16 %v573
        %v1824 = vunpack.c.l.b16 %v574
        %v1825 = vunpack.c.h.b16 %v574
        %v1826 = vunpack.c.l.b16 %v575
        %v1827 = vunpack.c.h.b16 %v575
        %v1828 = vunpack.c.l.b16 %v576
        %v1829 = vunpack.c.h.b16 %v576
        %v1830 = vunpack.c.l.b16 %v577
        %v1831 = vunpack.c.h.b16 %v577
        %v1832 = vunpack.c.l.b16 %v578
        %v1833 = vunpack.c.h.b16 %v578
        %v1834 = vunpack.c.l.b16 %v579
        %v1835 = vunpack.c.h.b16 %v579
        %v1836 = vunpack.c.l.b16 %v580
        %v1837 = vunpack.c.h.b16 %v580
        %v1838 = vunpack.c.l.b16 %v581
        %v1839 = vunpack.c.h.b16 %v581
        %v1840 = vunpack.c.l.b16 %v582
        %v1841 = vunpack.c.h.b16 %v582
        %v1842 = vunpack.c.l.b16 %v583
        %v1843 = vunpack.c.h.b16 %v583
        %v1844 = vunpack.c.l.b16 %v584
        %v1845 = vunpack.c.h.b16 %v584
        %v1846 = vunpack.c.l.b16 %v585
        %v1847 = vunpack.c.h.b16 %v585
        %v1848 = vunpack.c.l.b16 %v586
        %v1849 = vunpack.c.h.b16 %v586
        %v1850 = vunpack.c.l.b16 %v587
        %v1851 = vunpack.c.h.b16 %v587
        %v1852 = vunpack.c.l.b16 %v588
        %v1853 = vunpack.c.h.b16 %v588
        %v1854 = vunpack.c.l.b16 %v589
        %v1855 = vunpack.c.h.b16 %v589
        %v1856 = vunpack.c.l.b16 %v590
        %v1857 = vunpack.c.h.b16 %v590
        %v1858 = vunpack.c.l.b16 %v591
        %v1859 = vunpack.c.h.b16 %v591
        %v1860 = vunpack.c.l.b16 %v592
        %v1861 = vunpack.c.h.b16 %v592
        %v1862 = vunpack.c.l.b16 %v593
        %v1863 = vunpack.c.h.b16 %v593
        %v1864 = vunpack.c.l.b16 %v594
        %v1865 = vunpack.c.h.b16 %v594
        %v1866 = vunpack.c.l.b16 %v595
        %v1867 = vunpack.c.h.b16 %v595
        %v1868 = vunpack.c.l.b16 %v596
        %v1869 = vunpack.c.h.b16 %v596
        %v1870 = vunpack.c.l.b16 %v597
        %v1871 = vunpack.c.h.b16 %v597
        %v1872 = vunpack.c.l.b16 %v598
        %v1873 = vunpack.c.h.b16 %v598
        %v1874 = vunpack.c.l.b16 %v599
        %v1875 = vunpack.c.h.b16 %v599
        %v1876 = vunpack.c.l.b16 %v600
        %v1877 = vunpack.c.h.b16 %v600
        %v1878 = vunpack.c.l.b16 %v601
        %v1879 = vunpack.c.h.b16 %v601
        %v1880 = vunpack.c.l.b16 %v602
        %v1881 = vunpack.c.h.b16 %v602
        %v1882 = vunpack.c.l.b16 %v603
        %v1883 = vunpack.c.h.b16 %v603
        %v1884 = vunpack.c.l.b16 %v604
        %v1885 = vunpack.c.h.b16 %v604
        %v1886 = vunpack.c.l.b16 %v605
        %v1887 = vunpack.c.h.b16 %v605
        %v1888 = vunpack.c.l.b16 %v606
        %v1889 = vunpack.c.h.b16 %v606
        %v1890 = vunpack.c.l.b16 %v607
        %v1891 = vunpack.c.h.b16 %v607
        %v1892 = vunpack.c.l.b16 %v608
        %v1893 = vunpack.c.h.b16 %v608
        %v1894 = vunpack.c.l.b16 %v609
        %v1895 = vunpack.c.h.b16 %v609
        %v1896 = vunpack.c.l.b16 %v610
        %v1897 = vunpack.c.h.b16 %v610
        %v1898 = vunpack.c.l.b16 %v611
        %v1899 = vunpack.c.h.b16 %v611
        %v1900 = vunpack.c.l.b16 %v612
        %v1901 = vunpack.c.h.b16 %v612
        %v1902 = vunpack.c.l.b16 %v613
        %v1903 = vunpack.c.h.b16 %v613
        %v1904 = vunpack.c.l.b16 %v614
        %v1905 = vunpack.c.h.b16 %v614
        %v1906 = vunpack.c.l.b16 %v615
        %v1907 = vunpack.c.h.b16 %v615
        %v1908 = vunpack.c.l.b16 %v616
        %v1909 = vunpack.c.h.b16 %v616
        %v1910 = vunpack.c.l.b16 %v617
        %v1911 = vunpack.c.h.b16 %v617
        %v1912 = vunpack.c.l.b16 %v618
        %v1913 = vunpack.c.h.b16 %v618
        %v1914 = vunpack.c.l.b16 %v619
        %v1915 = vunpack.c.h.b16 %v619
        %v1916 = vunpack.c.l.b16 %v620
        %v1917 = vunpack.c.h.b16 %v620
        %v1918 = vunpack.c.l.b16 %v621
        %v1919 = vunpack.c.h.b16 %v621
        %v1920 = vunpack.c.l.b16 %v622
        %v1921 = vunpack.c.h.b16 %v622
        %v1922 = vunpack.c.l.b16 %v623
        %v1923 = vunpack.c.h.b16 %v623
        %v1924 = vunpack.c.l.b16 %v624
        %v1925 = vunpack.c.h.b16 %v624
        %v1926 = vunpack.c.l.b16 %v625
        %v1927 = vunpack.c.h.b16 %v625
        %v1928 = vunpack.c.l.b16 %v626
        %v1929 = vunpack.c.h.b16 %v626
        %v1930 = vunpack.c.l.b16 %v627
        %v1931 = vunpack.c.h.b16 %v627
        %v1932 = vunpack.c.l.b16 %v628
        %v1933 = vunpack.c.h.b16 %v628
        %v1934 = vunpack.c.l.b16 %v629
        %v1935 = vunpack.c.h.b16 %v629
        %v1936 = vunpack.c.l.b16 %v630
        %v1937 = vunpack.c.h.b16 %v630
        %v1938 = vunpack.c.l.b16 %v631
        %v1939 = vunpack.c.h.b16 %v631
        %v1940 = vunpack.c.l.b16 %v632
        %v1941 = vunpack.c.h.b16 %v632
        %v1942 = vunpack.c.l.b16 %v633
        %v1943 = vunpack.c.h.b16 %v633
        %v1944 = vunpack.c.l.b16 %v634
        %v1945 = vunpack.c.h.b16 %v634
        %v1946 = vunpack.c.l.b16 %v635
        %v1947 = vunpack.c.h.b16 %v635
        %v1948 = vunpack.c.l.b16 %v636
        %v1949 = vunpack.c.h.b16 %v636
        %v1950 = vunpack.c.l.b16 %v637
        %v1951 = vunpack.c.h.b16 %v637
        %v1952 = vunpack.c.l.b16 %v638
        %v1953 = vunpack.c.h.b16 %v638
        %v1954 = vunpack.c.l.b16 %v639
        %v1955 = vunpack.c.h.b16 %v639
        %v1956 = vunpack.c.l.b16 %v640
        %v1957 = vunpack.c.h.b16 %v640
        %v1958 = vunpack.c.l.b16 %v641
        %v1959 = vunpack.c.h.b16 %v641
        %v1960 = vunpack.c.l.b16 %v642
        %v1961 = vunpack.c.h.b16 %v642
        %v1962 = vunpack.c.l.b16 %v643
        %v1963 = vunpack.c.h.b16 %v643
        %v1964 = vunpack.c.l.b16 %v644
        %v1965 = vunpack.c.h.b16 %v644
        %v1966 = vunpack.c.l.b16 %v645
        %v1967 = vunpack.c.h.b16 %v645
        %v1968 = vunpack.c.l.b16 %v646
        %v1969 = vunpack.c.h.b16 %v646
        %v1970 = vunpack.c.l.b16 %v647
        %v1971 = vunpack.c.h.b16 %v647
        %v1972 = vunpack.c.l.b16 %v648
        %v1973 = vunpack.c.h.b16 %v648
        %v1974 = vunpack.c.l.b16 %v649
        %v1975 = vunpack.c.h.b16 %v649
        %v1976 = vunpack.c.l.b16 %v650
        %v1977 = vunpack.c.h.b16 %v650
        %v1978 = vunpack.c.l.b16 %v651
        %v1979 = vunpack.c.h.b16 %v651
        %v1980 = vunpack.c.l.b16 %v652
        %v1981 = vunpack.c.h.b16 %v652
        %v1982 = vunpack.c.l.b16 %v653
        %v1983 = vunpack.c.h.b16 %v653
        %v1984 = vunpack.c.l.b16 %v654
        %v1985 = vunpack.c.h.b16 %v654
        %v1986 = vunpack.c.l.b16 %v655
        %v1987 = vunpack.c.h.b16 %v655
        %v1988 = vunpack.c.l.b16 %v656
        %v1989 = vunpack.c.h.b16 %v656
        %v1990 = vunpack.c.l.b16 %v657
        %v1991 = vunpack.c.h.b16 %v657
        %v1992 = vunpack.c.l.b16 %v658
        %v1993 = vunpack.c.h.b16 %v658
        %v1994 = vunpack.c.l.b16 %v659
        %v1995 = vunpack.c.h.b16 %v659
        %v1996 = vunpack.c.l.b16 %v660
        %v1997 = vunpack.c.h.b16 %v660
        %v1998 = vunpack.c.l.b16 %v661
        %v1999 = vunpack.c.h.b16 %v661
        %v2000 = vunpack.c.l.b16 %v662
        %v2001 = vunpack.c.h.b16 %v662
        %v2002 = vunpack.c.l.b16 %v663
        %v2003 = vunpack.c.h.b16 %v663
        %v2004 = vunpack.c.l.b16 %v664
        %v2005 = vunpack.c.h.b16 %v664
        %v2006 = vunpack.c.l.b16 %v665
        %v2007 = vunpack.c.h.b16 %v665
        %v2008 = vunpack.c.l.b16 %v666
        %v2009 = vunpack.c.h.b16 %v666
        %v2010 = vunpack.c.l.b16 %v667
        %v2011 = vunpack.c.h.b16 %v667
        %v2012 = vunpack.c.l.b16 %v668
        %v2013 = vunpack.c.h.b16 %v668
        %v2014 = vunpack.c.l.b16 %v669
        %v2015 = vunpack.c.h.b16 %v669
        %v2016 = vunpack.c.l.b16 %v670
        %v2017 = vunpack.c.h.b16 %v670
        %v2018 = vunpack.c.l.b16 %v671
        %v2019 = vunpack.c.h.b16 %v671
        %v2020 = vunpack.c.l.b16 %v672
        %v2021 = vunpack.c.h.b16 %v672
        %v2022 = vunpack.c.l.b16 %v673
        %v2023 = vunpack.c.h.b16 %v673
        %v2024 = vunpack.c.l.b16 %v674
        %v2025 = vunpack.c.h.b16 %v674
        %v2026 = vunpack.c.l.b16 %v675
        %v2027 = vunpack.c.h.b16 %v675
        %v2028 = vunpack.c.l.b16 %v676
        %v2029 = vunpack.c.h.b16 %v676
        %v2030 = vunpack.c.l.b16 %v677
        %v2031 = vunpack.c.h.b16 %v677
        %v2032 = vunpack.c.l.b16 %v678
        %v2033 = vunpack.c.h.b16 %v678
        %v2034 = vunpack.c.l.b16 %v679
        %v2035 = vunpack.c.h.b16 %v679
        %v2036 = vunpack.c.l.b16 %v680
        %v2037 = vunpack.c.h.b16 %v680
        %v2038 = vunpack.c.l.b16 %v681
        %v2039 = vunpack.c.h.b16 %v681
        %v2040 = vunpack.c.l.b16 %v682
        %v2041 = vunpack.c.h.b16 %v682
        %v2042 = vunpack.c.l.b16 %v683
        %v2043 = vunpack.c.h.b16 %v683
        %v2044 = vunpack.c.l.b16 %v684
        %v2045 = vunpack.c.h.b16 %v684
        %v2046 = vunpack.c.l.b16 %v685
        %v2047 = vunpack.c.h.b16 %v685
        %v2048 = vunpack.c.l.b16 %v686
        %v2049 = vunpack.c.h.b16 %v686
        %v2050 = vunpack.c.l.b16 %v687
        %v2051 = vunpack.c.h.b16 %v687
        %v2052 = vunpack.c.l.b16 %v688
        %v2053 = vunpack.c.h.b16 %v688
        %v2054 = vunpack.c.l.b16 %v689
        %v2055 = vunpack.c.h.b16 %v689
        %v2056 = vunpack.c.l.b16 %v690
        %v2057 = vunpack.c.h.b16 %v690
        %v2058 = vunpack.c.l.b16 %v691
        %v2059 = vunpack.c.h.b16 %v691
        %v2060 = vunpack.c.l.b16 %v692
        %v2061 = vunpack.c.h.b16 %v692
        %v2062 = vunpack.c.l.b16 %v693
        %v2063 = vunpack.c.h.b16 %v693
        %v2064 = vunpack.c.l.b16 %v694
        %v2065 = vunpack.c.h.b16 %v694
        %v2066 = vunpack.c.l.b16 %v695
        %v2067 = vunpack.c.h.b16 %v695
        %v2068 = vunpack.c.l.b16 %v696
        %v2069 = vunpack.c.h.b16 %v696
        %v2070 = vunpack.c.l.b16 %v697
        %v2071 = vunpack.c.h.b16 %v697
        %v2072 = vunpack.c.l.b16 %v698
        %v2073 = vunpack.c.h.b16 %v698
        %v2074 = vunpack.c.l.b16 %v699
        %v2075 = vunpack.c.h.b16 %v699
        %v2076 = vunpack.c.l.b16 %v700
        %v2077 = vunpack.c.h.b16 %v700
        %v2078 = vunpack.c.l.b16 %v701
        %v2079 = vunpack.c.h.b16 %v701
        %v2080 = vunpack.c.l.b16 %v702
        %v2081 = vunpack.c.h.b16 %v702
        %v2082 = vunpack.c.l.b16 %v703
        %v2083 = vunpack.c.h.b16 %v703
        %v2084 = vunpack.c.l.b16 %v704
        %v2085 = vunpack.c.h.b16 %v704
        %v2086 = vunpack.c.l.b16 %v705
        %v2087 = vunpack.c.h.b16 %v705
        %v2088 = vunpack.c.l.b16 %v706
        %v2089 = vunpack.c.h.b16 %v706
        %v2090 = vunpack.c.l.b16 %v707
        %v2091 = vunpack.c.h.b16 %v707
        %v2092 = vunpack.c.l.b16 %v708
        %v2093 = vunpack.c.h.b16 %v708
        %v2094 = vunpack.c.l.b16 %v709
        %v2095 = vunpack.c.h.b16 %v709
        %v2096 = vunpack.c.l.b16 %v710
        %v2097 = vunpack.c.h.b16 %v710
        %v2098 = vunpack.c.l.b16 %v711
        %v2099 = vunpack.c.h.b16 %v711
        %v2100 = vunpack.c.l.b16 %v712
        %v2101 = vunpack.c.h.b16 %v712
        %v2102 = vunpack.c.l.b16 %v713
        %v2103 = vunpack.c.h.b16 %v713
        %v2104 = vunpack.c.l.b16 %v714
        %v2105 = vunpack.c.h.b16 %v714
        %v2106 = vunpack.c.l.b16 %v715
        %v2107 = vunpack.c.h.b16 %v715
        %v2108 = vunpack.c.l.b16 %v716
        %v2109 = vunpack.c.h.b16 %v716
        %v2110 = vunpack.c.l.b16 %v717
        %v2111 = vunpack.c.h.b16 %v717
        %v2112 = vunpack.c.l.b16 %v718
        %v2113 = vunpack.c.h.b16 %v718
        %v2114 = vunpack.c.l.b16 %v719
        %v2115 = vunpack.c.h.b16 %v719
        %v2116 = vunpack.c.l.b16 %v720
        %v2117 = vunpack.c.h.b16 %v720
        %v2118 = vunpack.c.l.b16 %v721
        %v2119 = vunpack.c.h.b16 %v721
        %v2120 = vunpack.c.l.b16 %v722
        %v2121 = vunpack.c.h.b16 %v722
        %v2122 = vunpack.c.l.b16 %v723
        %v2123 = vunpack.c.h.b16 %v723
        %v2124 = vpack.c.b16 %v1236, %v1228
        %v2125 = vpack.c.b16 %v1237, %v1229
        %v2126 = vpack.c.b16 %v1238, %v1230
        %v2127 = vpack.c.b16 %v1239, %v1231
        %v2128 = vpack.c.b16 %v1240, %v1232
        %v2129 = vpack.c.b16 %v1241, %v1233
        %v2130 = vpack.c.b16 %v1242, %v1234
        %v2131 = vpack.c.b16 %v1243, %v1235
        %v2132 = vpack.c.b16 %v1252, %v1244
        %v2133 = vpack.c.b16 %v1253, %v1245
        %v2134 = vpack.c.b16 %v1254, %v1246
        %v2135 = vpack.c.b16 %v1255, %v1247
        %v2136 = vpack.c.b16 %v1256, %v1248
        %v2137 = vpack.c.b16 %v1257, %v1249
        %v2138 = vpack.c.b16 %v1258, %v1250
        %v2139 = vpack.c.b16 %v1259, %v1251
        %v2140 = vpack.c.b16 %v1268, %v1260
        %v2141 = vpack.c.b16 %v1269, %v1261
        %v2142 = vpack.c.b16 %v1270, %v1262
        %v2143 = vpack.c.b16 %v1271, %v1263
        %v2144 = vpack.c.b16 %v1272, %v1264
        %v2145 = vpack.c.b16 %v1273, %v1265
        %v2146 = vpack.c.b16 %v1274, %v1266
        %v2147 = vpack.c.b16 %v1275, %v1267
        %v2148 = vpack.c.b16 %v1284, %v1276
        %v2149 = vpack.c.b16 %v1285, %v1277
        %v2150 = vpack.c.b16 %v1286, %v1278
        %v2151 = vpack.c.b16 %v1287, %v1279
        %v2152 = vpack.c.b16 %v1288, %v1280
        %v2153 = vpack.c.b16 %v1289, %v1281
        %v2154 = vpack.c.b16 %v1290, %v1282
        %v2155 = vpack.c.b16 %v1291, %v1283
        %v2156 = vpack.c.b16 %v1300, %v1292
        %v2157 = vpack.c.b16 %v1301, %v1293
        %v2158 = vpack.c.b16 %v1302, %v1294
        %v2159 = vpack.c.b16 %v1303, %v1295
        %v2160 = vpack.c.b16 %v1304, %v1296
        %v2161 = vpack.c.b16 %v1305, %v1297
        %v2162 = vpack.c.b16 %v1306, %v1298
        %v2163 = vpack.c.b16 %v1307, %v1299
        %v2164 = vpack.c.b16 %v1316, %v1308
        %v2165 = vpack.c.b16 %v1317, %v1309
        %v2166 = vpack.c.b16 %v1318, %v1310
        %v2167 = vpack.c.b16 %v1319, %v1311
        %v2168 = vpack.c.b16 %v1320, %v1312
        %v2169 = vpack.c.b16 %v1321, %v1313
        %v2170 = vpack.c.b16 %v1322, %v1314
        %v2171 = vpack.c.b16 %v1323, %v1315
        %v2172 = vpack.c.b16 %v1332, %v1324
        %v2173 = vpack.c.b16 %v1333, %v1325
        %v2174 = vpack.c.b16 %v1334, %v1326
        %v2175 = vpack.c.b16 %v1335, %v1327
        %v2176 = vpack.c.b16 %v1336, %v1328
        %v2177 = vpack.c.b16 %v1337, %v1329
        %v2178 = vpack.c.b16 %v1338, %v1330
        %v2179 = vpack.c.b16 %v1339, %v1331
        %v2180 = vpack.c.b16 %v1348, %v1340
        %v2181 = vpack.c.b16 %v1349, %v1341
        %v2182 = vpack.c.b16 %v1350, %v1342
        %v2183 = vpack.c.b16 %v1351, %v1343
        %v2184 = vpack.c.b16 %v1352, %v1344
        %v2185 = vpack.c.b16 %v1353, %v1345
        %v2186 = vpack.c.b16 %v1354, %v1346
        %v2187 = vpack.c.b16 %v1355, %v1347
        %v2188 = vpack.c.b16 %v1364, %v1356
        %v2189 = vpack.c.b16 %v1365, %v1357
        %v2190 = vpack.c.b16 %v1366, %v1358
        %v2191 = vpack.c.b16 %v1367, %v1359
        %v2192 = vpack.c.b16 %v1368, %v1360
        %v2193 = vpack.c.b16 %v1369, %v1361
        %v2194 = vpack.c.b16 %v1370, %v1362
        %v2195 = vpack.c.b16 %v1371, %v1363
        %v2196 = vpack.c.b16 %v1380, %v1372
        %v2197 = vpack.c.b16 %v1381, %v1373
        %v2198 = vpack.c.b16 %v1382, %v1374
        %v2199 = vpack.c.b16 %v1383, %v1375
        %v2200 = vpack.c.b16 %v1384, %v1376
        %v2201 = vpack.c.b16 %v1385, %v1377
        %v2202 = vpack.c.b16 %v1386, %v1378
        %v2203 = vpack.c.b16 %v1387, %v1379
        %v2204 = vpack.c.b16 %v1396, %v1388
        %v2205 = vpack.c.b16 %v1397, %v1389
        %v2206 = vpack.c.b16 %v1398, %v1390
        %v2207 = vpack.c.b16 %v1399, %v1391
        %v2208 = vpack.c.b16 %v1400, %v1392
        %v2209 = vpack.c.b16 %v1401, %v1393
        %v2210 = vpack.c.b16 %v1402, %v1394
        %v2211 = vpack.c.b16 %v1403, %v1395
        %v2212 = vpack.c.b16 %v1412, %v1404
        %v2213 = vpack.c.b16 %v1413, %v1405
        %v2214 = vpack.c.b16 %v1414, %v1406
        %v2215 = vpack.c.b16 %v1415, %v1407
        %v2216 = vpack.c.b16 %v1416, %v1408
        %v2217 = vpack.c.b16 %v1417, %v1409
        %v2218 = vpack.c.b16 %v1418, %v1410
        %v2219 = vpack.c.b16 %v1419, %v1411
        %v2220 = vpack.c.b16 %v1428, %v1420
        %v2221 = vpack.c.b16 %v1429, %v1421
        %v2222 = vpack.c.b16 %v1430, %v1422
        %v2223 = vpack.c.b16 %v1431, %v1423
        %v2224 = vpack.c.b16 %v1432, %v1424
        %v2225 = vpack.c.b16 %v1433, %v1425
        %v2226 = vpack.c.b16 %v1434, %v1426
        %v2227 = vpack.c.b16 %v1435, %v1427
        %v2228 = vpack.c.b16 %v1444, %v1436
        %v2229 = vpack.c.b16 %v1445, %v1437
        %v2230 = vpack.c.b16 %v1446, %v1438
        %v2231 = vpack.c.b16 %v1447, %v1439
        %v2232 = vpack.c.b16 %v1448, %v1440
        %v2233 = vpack.c.b16 %v1449, %v1441
        %v2234 = vpack.c.b16 %v1450, %v1442
        %v2235 = vpack.c.b16 %v1451, %v1443
        %v2236 = vpack.c.b16 %v1460, %v1452
        %v2237 = vpack.c.b16 %v1461, %v1453
        %v2238 = vpack.c.b16 %v1462, %v1454
        %v2239 = vpack.c.b16 %v1463, %v1455
        %v2240 = vpack.c.b16 %v1464, %v1456
        %v2241 = vpack.c.b16 %v1465, %v1457
        %v2242 = vpack.c.b16 %v1466, %v1458
        %v2243 = vpack.c.b16 %v1467, %v1459
        %v2244 = vpack.c.b16 %v1476, %v1468
        %v2245 = vpack.c.b16 %v1477, %v1469
        %v2246 = vpack.c.b16 %v1478, %v1470
        %v2247 = vpack.c.b16 %v1479, %v1471
        %v2248 = vpack.c.b16 %v1480, %v1472
        %v2249 = vpack.c.b16 %v1481, %v1473
        %v2250 = vpack.c.b16 %v1482, %v1474
        %v2251 = vpack.c.b16 %v1483, %v1475
        %v2252 = vpack.c.b16 %v1492, %v1484
        %v2253 = vpack.c.b16 %v1493, %v1485
        %v2254 = vpack.c.b16 %v1494, %v1486
        %v2255 = vpack.c.b16 %v1495, %v1487
        %v2256 = vpack.c.b16 %v1496, %v1488
        %v2257 = vpack.c.b16 %v1497, %v1489
        %v2258 = vpack.c.b16 %v1498, %v1490
        %v2259 = vpack.c.b16 %v1499, %v1491
        %v2260 = vpack.c.b16 %v1508, %v1500
        %v2261 = vpack.c.b16 %v1509, %v1501
        %v2262 = vpack.c.b16 %v1510, %v1502
        %v2263 = vpack.c.b16 %v1511, %v1503
        %v2264 = vpack.c.b16 %v1512, %v1504
        %v2265 = vpack.c.b16 %v1513, %v1505
        %v2266 = vpack.c.b16 %v1514, %v1506
        %v2267 = vpack.c.b16 %v1515, %v1507
        %v2268 = vpack.c.b16 %v1524, %v1516
        %v2269 = vpack.c.b16 %v1525, %v1517
        %v2270 = vpack.c.b16 %v1526, %v1518
        %v2271 = vpack.c.b16 %v1527, %v1519
        %v2272 = vpack.c.b16 %v1528, %v1520
        %v2273 = vpack.c.b16 %v1529, %v1521
        %v2274 = vpack.c.b16 %v1530, %v1522
        %v2275 = vpack.c.b16 %v1531, %v1523
        %v2276 = vpack.c.b16 %v1540, %v1532
        %v2277 = vpack.c.b16 %v1541, %v1533
        %v2278 = vpack.c.b16 %v1542, %v1534
        %v2279 = vpack.c.b16 %v1543, %v1535
        %v2280 = vpack.c.b16 %v1544, %v1536
        %v2281 = vpack.c.b16 %v1545, %v1537
        %v2282 = vpack.c.b16 %v1546, %v1538
        %v2283 = vpack.c.b16 %v1547, %v1539
        %v2284 = vpack.c.b16 %v1556, %v1548
        %v2285 = vpack.c.b16 %v1557, %v1549
        %v2286 = vpack.c.b16 %v1558, %v1550
        %v2287 = vpack.c.b16 %v1559, %v1551
        %v2288 = vpack.c.b16 %v1560, %v1552
        %v2289 = vpack.c.b16 %v1561, %v1553
        %v2290 = vpack.c.b16 %v1562, %v1554
        %v2291 = vpack.c.b16 %v1563, %v1555
        %v2292 = vpack.c.b16 %v1572, %v1564
        %v2293 = vpack.c.b16 %v1573, %v1565
        %v2294 = vpack.c.b16 %v1574, %v1566
        %v2295 = vpack.c.b16 %v1575, %v1567
        %v2296 = vpack.c.b16 %v1576, %v1568
        %v2297 = vpack.c.b16 %v1577, %v1569
        %v2298 = vpack.c.b16 %v1578, %v1570
        %v2299 = vpack.c.b16 %v1579, %v1571
        %v2300 = vpack.c.b16 %v1588, %v1580
        %v2301 = vpack.c.b16 %v1589, %v1581
        %v2302 = vpack.c.b16 %v1590, %v1582
        %v2303 = vpack.c.b16 %v1591, %v1583
        %v2304 = vpack.c.b16 %v1592, %v1584
        %v2305 = vpack.c.b16 %v1593, %v1585
        %v2306 = vpack.c.b16 %v1594, %v1586
        %v2307 = vpack.c.b16 %v1595, %v1587
        %v2308 = vpack.c.b16 %v1604, %v1596
        %v2309 = vpack.c.b16 %v1605, %v1597
        %v2310 = vpack.c.b16 %v1606, %v1598
        %v2311 = vpack.c.b16 %v1607, %v1599
        %v2312 = vpack.c.b16 %v1608, %v1600
        %v2313 = vpack.c.b16 %v1609, %v1601
        %v2314 = vpack.c.b16 %v1610, %v1602
        %v2315 = vpack.c.b16 %v1611, %v1603
        %v2316 = vpack.c.b16 %v1620, %v1612
        %v2317 = vpack.c.b16 %v1621, %v1613
        %v2318 = vpack.c.b16 %v1622, %v1614
        %v2319 = vpack.c.b16 %v1623, %v1615
        %v2320 = vpack.c.b16 %v1624, %v1616
        %v2321 = vpack.c.b16 %v1625, %v1617
        %v2322 = vpack.c.b16 %v1626, %v1618
        %v2323 = vpack.c.b16 %v1627, %v1619
        %v2324 = vpack.c.b16 %v1636, %v1628
        %v2325 = vpack.c.b16 %v1637, %v1629
        %v2326 = vpack.c.b16 %v1638, %v1630
        %v2327 = vpack.c.b16 %v1639, %v1631
        %v2328 = vpack.c.b16 %v1640, %v1632
        %v2329 = vpack.c.b16 %v1641, %v1633
        %v2330 = vpack.c.b16 %v1642, %v1634
        %v2331 = vpack.c.b16 %v1643, %v1635
        %v2332 = vpack.c.b16 %v1652, %v1644
        %v2333 = vpack.c.b16 %v1653, %v1645
        %v2334 = vpack.c.b16 %v1654, %v1646
        %v2335 = vpack.c.b16 %v1655, %v1647
        %v2336 = vpack.c.b16 %v1656, %v1648
        %v2337 = vpack.c.b16 %v1657, %v1649
        %v2338 = vpack.c.b16 %v1658, %v1650
        %v2339 = vpack.c.b16 %v1659, %v1651
        %v2340 = vpack.c.b16 %v1668, %v1660
        %v2341 = vpack.c.b16 %v1669, %v1661
        %v2342 = vpack.c.b16 %v1670, %v1662
        %v2343 = vpack.c.b16 %v1671, %v1663
        %v2344 = vpack.c.b16 %v1672, %v1664
        %v2345 = vpack.c.b16 %v1673, %v1665
        %v2346 = vpack.c.b16 %v1674, %v1666
        %v2347 = vpack.c.b16 %v1675, %v1667
        %v2348 = vpack.c.b16 %v1684, %v1676
        %v2349 = vpack.c.b16 %v1685, %v1677
        %v2350 = vpack.c.b16 %v1686, %v1678
        %v2351 = vpack.c.b16 %v1687, %v1679
        %v2352 = vpack.c.b16 %v1688, %v1680
        %v2353 = vpack.c.b16 %v1689, %v1681
        %v2354 = vpack.c.b16 %v1690, %v1682
        %v2355 = vpack.c.b16 %v1691, %v1683
        %v2356 = vpack.c.b16 %v1700, %v1692
        %v2357 = vpack.c.b16 %v1701, %v1693
        %v2358 = vpack.c.b16 %v1702, %v1694
        %v2359 = vpack.c.b16 %v1703, %v1695
        %v2360 = vpack.c.b16 %v1704, %v1696
        %v2361 = vpack.c.b16 %v1705, %v1697
        %v2362 = vpack.c.b16 %v1706, %v1698
        %v2363 = vpack.c.b16 %v1707, %v1699
        %v2364 = vpack.c.b16 %v1716, %v1708
        %v2365 = vpack.c.b16 %v1717, %v1709
        %v2366 = vpack.c.b16 %v1718, %v1710
        %v2367 = vpack.c.b16 %v1719, %v1711
        %v2368 = vpack.c.b16 %v1720, %v1712
        %v2369 = vpack.c.b16 %v1721, %v1713
        %v2370 = vpack.c.b16 %v1722, %v1714
        %v2371 = vpack.c.b16 %v1723, %v1715
        %v2372 = vpack.c.b16 %v1732, %v1724
        %v2373 = vpack.c.b16 %v1733, %v1725
        %v2374 = vpack.c.b16 %v1734, %v1726
        %v2375 = vpack.c.b16 %v1735, %v1727
        %v2376 = vpack.c.b16 %v1736, %v1728
        %v2377 = vpack.c.b16 %v1737, %v1729
        %v2378 = vpack.c.b16 %v1738, %v1730
        %v2379 = vpack.c.b16 %v1739, %v1731
        %v2380 = vpack.c.b16 %v1748, %v1740
        %v2381 = vpack.c.b16 %v1749, %v1741
        %v2382 = vpack.c.b16 %v1750, %v1742
        %v2383 = vpack.c.b16 %v1751, %v1743
        %v2384 = vpack.c.b16 %v1752, %v1744
        %v2385 = vpack.c.b16 %v1753, %v1745
        %v2386 = vpack.c.b16 %v1754, %v1746
        %v2387 = vpack.c.b16 %v1755, %v1747
        %v2388 = vpack.c.b16 %v1764, %v1756
        %v2389 = vpack.c.b16 %v1765, %v1757
        %v2390 = vpack.c.b16 %v1766, %v1758
        %v2391 = vpack.c.b16 %v1767, %v1759
        %v2392 = vpack.c.b16 %v1768, %v1760
        %v2393 = vpack.c.b16 %v1769, %v1761
        %v2394 = vpack.c.b16 %v1770, %v1762
        %v2395 = vpack.c.b16 %v1771, %v1763
        %v2396 = vpack.c.b16 %v1780, %v1772
        %v2397 = vpack.c.b16 %v1781, %v1773
        %v2398 = vpack.c.b16 %v1782, %v1774
        %v2399 = vpack.c.b16 %v1783, %v1775
        %v2400 = vpack.c.b16 %v1784, %v1776
        %v2401 = vpack.c.b16 %v1785, %v1777
        %v2402 = vpack.c.b16 %v1786, %v1778
        %v2403 = vpack.c.b16 %v1787, %v1779
        %v2404 = vpack.c.b16 %v1796, %v1788
        %v2405 = vpack.c.b16 %v1797, %v1789
        %v2406 = vpack.c.b16 %v1798, %v1790
        %v2407 = vpack.c.b16 %v1799, %v1791
        %v2408 = vpack.c.b16 %v1800, %v1792
        %v2409 = vpack.c.b16 %v1801, %v1793
        %v2410 = vpack.c.b16 %v1802, %v1794
        %v2411 = vpack.c.b16 %v1803, %v1795
        %v2412 = vpack.c.b16 %v1812, %v1804
        %v2413 = vpack.c.b16 %v1813, %v1805
        %v2414 = vpack.c.b16 %v1814, %v1806
        %v2415 = vpack.c.b16 %v1815, %v1807
        %v2416 = vpack.c.b16 %v1816, %v1808
        %v2417 = vpack.c.b16 %v1817, %v1809
        %v2418 = vpack.c.b16 %v1818, %v1810
        %v2419 = vpack.c.b16 %v1819, %v1811
        %v2420 = vpack.c.b16 %v1828, %v1820
        %v2421 = vpack.c.b16 %v1829, %v1821
        %v2422 = vpack.c.b16 %v1830, %v1822
        %v2423 = vpack.c.b16 %v1831, %v1823
        %v2424 = vpack.c.b16 %v1832, %v1824
        %v2425 = vpack.c.b16 %v1833, %v1825
        %v2426 = vpack.c.b16 %v1834, %v1826
        %v2427 = vpack.c.b16 %v1835, %v1827
        %v2428 = vpack.c.b16 %v1844, %v1836
        %v2429 = vpack.c.b16 %v1845, %v1837
        %v2430 = vpack.c.b16 %v1846, %v1838
        %v2431 = vpack.c.b16 %v1847, %v1839
        %v2432 = vpack.c.b16 %v1848, %v1840
        %v2433 = vpack.c.b16 %v1849, %v1841
        %v2434 = vpack.c.b16 %v1850, %v1842
        %v2435 = vpack.c.b16 %v1851, %v1843
        %v2436 = vpack.c.b16 %v1860, %v1852
        %v2437 = vpack.c.b16 %v1861, %v1853
        %v2438 = vpack.c.b16 %v1862, %v1854
        %v2439 = vpack.c.b16 %v1863, %v1855
        %v2440 = vpack.c.b16 %v1864, %v1856
        %v2441 = vpack.c.b16 %v1865, %v1857
        %v2442 = vpack.c.b16 %v1866, %v1858
        %v2443 = vpack.c.b16 %v1867, %v1859
        %v2444 = vpack.c.b16 %v1876, %v1868
        %v2445 = vpack.c.b16 %v1877, %v1869
        %v2446 = vpack.c.b16 %v1878, %v1870
        %v2447 = vpack.c.b16 %v1879, %v1871
        %v2448 = vpack.c.b16 %v1880, %v1872
        %v2449 = vpack.c.b16 %v1881, %v1873
        %v2450 = vpack.c.b16 %v1882, %v1874
        %v2451 = vpack.c.b16 %v1883, %v1875
        %v2452 = vpack.c.b16 %v1892, %v1884
        %v2453 = vpack.c.b16 %v1893, %v1885
        %v2454 = vpack.c.b16 %v1894, %v1886
        %v2455 = vpack.c.b16 %v1895, %v1887
        %v2456 = vpack.c.b16 %v1896, %v1888
        %v2457 = vpack.c.b16 %v1897, %v1889
        %v2458 = vpack.c.b16 %v1898, %v1890
        %v2459 = vpack.c.b16 %v1899, %v1891
        %v2460 = vpack.c.b16 %v1908, %v1900
        %v2461 = vpack.c.b16 %v1909, %v1901
        %v2462 = vpack.c.b16 %v1910, %v1902
        %v2463 = vpack.c.b16 %v1911, %v1903
        %v2464 = vpack.c.b16 %v1912, %v1904
        %v2465 = vpack.c.b16 %v1913, %v1905
        %v2466 = vpack.c.b16 %v1914, %v1906
        %v2467 = vpack.c.b16 %v1915, %v1907
        %v2468 = vpack.c.b16 %v1924, %v1916
        %v2469 = vpack.c.b16 %v1925, %v1917
        %v2470 = vpack.c.b16 %v1926, %v1918
        %v2471 = vpack.c.b16 %v1927, %v1919
        %v2472 = vpack.c.b16 %v1928, %v1920
        %v2473 = vpack.c.b16 %v1929, %v1921
        %v2474 = vpack.c.b16 %v1930, %v1922
        %v2475 = vpack.c.b16 %v1931, %v1923
        %v2476 = vpack.c.b16 %v1940, %v1932
        %v2477 = vpack.c.b16 %v1941, %v1933
        %v2478 = vpack.c.b16 %v1942, %v1934
        %v2479 = vpack.c.b16 %v1943, %v1935
        %v2480 = vpack.c.b16 %v1944, %v1936
        %v2481 = vpack.c.b16 %v1945, %v1937
        %v2482 = vpack.c.b16 %v1946, %v1938
        %v2483 = vpack.c.b16 %v1947, %v1939
        %v2484 = vpack.c.b16 %v1956, %v1948
        %v2485 = vpack.c.b16 %v1957, %v1949
        %v2486 = vpack.c.b16 %v1958, %v1950
        %v2487 = vpack.c.b16 %v1959, %v1951
        %v2488 = vpack.c.b16 %v1960, %v1952
        %v2489 = vpack.c.b16 %v1961, %v1953
        %v2490 = vpack.c.b16 %v1962, %v1954
        %v2491 = vpack.c.b16 %v1963, %v1955
        %v2492 = vpack.c.b16 %v1972, %v1964
        %v2493 = vpack.c.b16 %v1973, %v1965
        %v2494 = vpack.c.b16 %v1974, %v1966
        %v2495 = vpack.c.b16 %v1975, %v1967
        %v2496 = vpack.c.b16 %v1976, %v1968
        %v2497 = vpack.c.b16 %v1977, %v1969
        %v2498 = vpack.c.b16 %v1978, %v1970
        %v2499 = vpack.c.b16 %v1979, %v1971
        %v2500 = vpack.c.b16 %v1988, %v1980
        %v2501 = vpack.c.b16 %v1989, %v1981
        %v2502 = vpack.c.b16 %v1990, %v1982
        %v2503 = vpack.c.b16 %v1991, %v1983
        %v2504 = vpack.c.b16 %v1992, %v1984
        %v2505 = vpack.c.b16 %v1993, %v1985
        %v2506 = vpack.c.b16 %v1994, %v1986
        %v2507 = vpack.c.b16 %v1995, %v1987
        %v2508 = vpack.c.b16 %v2004, %v1996
        %v2509 = vpack.c.b16 %v2005, %v1997
        %v2510 = vpack.c.b16 %v2006, %v1998
        %v2511 = vpack.c.b16 %v2007, %v1999
        %v2512 = vpack.c.b16 %v2008, %v2000
        %v2513 = vpack.c.b16 %v2009, %v2001
        %v2514 = vpack.c.b16 %v2010, %v2002
        %v2515 = vpack.c.b16 %v2011, %v2003
        %v2516 = vpack.c.b16 %v2020, %v2012
        %v2517 = vpack.c.b16 %v2021, %v2013
        %v2518 = vpack.c.b16 %v2022, %v2014
        %v2519 = vpack.c.b16 %v2023, %v2015
        %v2520 = vpack.c.b16 %v2024, %v2016
        %v2521 = vpack.c.b16 %v2025, %v2017
        %v2522 = vpack.c.b16 %v2026, %v2018
        %v2523 = vpack.c.b16 %v2027, %v2019
        %v2524 = vpack.c.b16 %v2036, %v2028
        %v2525 = vpack.c.b16 %v2037, %v2029
        %v2526 = vpack.c.b16 %v2038, %v2030
        %v2527 = vpack.c.b16 %v2039, %v2031
        %v2528 = vpack.c.b16 %v2040, %v2032
        %v2529 = vpack.c.b16 %v2041, %v2033
        %v2530 = vpack.c.b16 %v2042, %v2034
        %v2531 = vpack.c.b16 %v2043, %v2035
        %v2532 = vpack.c.b16 %v2052, %v2044
        %v2533 = vpack.c.b16 %v2053, %v2045
        %v2534 = vpack.c.b16 %v2054, %v2046
        %v2535 = vpack.c.b16 %v2055, %v2047
        %v2536 = vpack.c.b16 %v2056, %v2048
        %v2537 = vpack.c.b16 %v2057, %v2049
        %v2538 = vpack.c.b16 %v2058, %v2050
        %v2539 = vpack.c.b16 %v2059, %v2051
        %v2540 = vpack.c.b16 %v2068, %v2060
        %v2541 = vpack.c.b16 %v2069, %v2061
        %v2542 = vpack.c.b16 %v2070, %v2062
        %v2543 = vpack.c.b16 %v2071, %v2063
        %v2544 = vpack.c.b16 %v2072, %v2064
        %v2545 = vpack.c.b16 %v2073, %v2065
        %v2546 = vpack.c.b16 %v2074, %v2066
        %v2547 = vpack.c.b16 %v2075, %v2067
        %v2548 = vpack.c.b16 %v2084, %v2076
        %v2549 = vpack.c.b16 %v2085, %v2077
        %v2550 = vpack.c.b16 %v2086, %v2078
        %v2551 = vpack.c.b16 %v2087, %v2079
        %v2552 = vpack.c.b16 %v2088, %v2080
        %v2553 = vpack.c.b16 %v2089, %v2081
        %v2554 = vpack.c.b16 %v2090, %v2082
        %v2555 = vpack.c.b16 %v2091, %v2083
        %v2556 = vpack.c.b16 %v2100, %v2092
        %v2557 = vpack.c.b16 %v2101, %v2093
        %v2558 = vpack.c.b16 %v2102, %v2094
        %v2559 = vpack.c.b16 %v2103, %v2095
        %v2560 = vpack.c.b16 %v2104, %v2096
        %v2561 = vpack.c.b16 %v2105, %v2097
        %v2562 = vpack.c.b16 %v2106, %v2098
        %v2563 = vpack.c.b16 %v2107, %v2099
        %v2564 = vpack.c.b16 %v2116, %v2108
        %v2565 = vpack.c.b16 %v2117, %v2109
        %v2566 = vpack.c.b16 %v2118, %v2110
        %v2567 = vpack.c.b16 %v2119, %v2111
        %v2568 = vpack.c.b16 %v2120, %v2112
        %v2569 = vpack.c.b16 %v2121, %v2113
        %v2570 = vpack.c.b16 %v2122, %v2114
        %v2571 = vpack.c.b16 %v2123, %v2115
        %3020 = vmatprep.subr.bf16.mxu0 %v2181
        %3021 = vmatpush1.bf16.msra.mxu0 %v2180
        %3022 = vmatprep.subr.bf16.mxu0 %v2173
        %3023 = vmatpush1.bf16.msra.mxu0 %v2172
        %3024 = vmatprep.subr.bf16.mxu0 %v2165
        %3025 = vmatpush1.bf16.msra.mxu0 %v2164
        %3026 = vmatprep.subr.bf16.mxu0 %v2157
        %3027 = vmatpush1.bf16.msra.mxu0 %v2156
        %3028 = vmatprep.subr.bf16.mxu0 %v2149
        %3029 = vmatpush1.bf16.msra.mxu0 %v2148
        %3030 = vmatprep.subr.bf16.mxu0 %v2141
        %3031 = vmatpush1.bf16.msra.mxu0 %v2140
        %3032 = vmatprep.subr.bf16.mxu0 %v2133
        %3033 = vmatpush1.bf16.msra.mxu0 %v2132
        %3034 = vmatprep.subr.bf16.mxu0 %v2125
        %3035 = vmatpush1.bf16.msra.mxu0 %v2124
        %3036 = vmatprep.subr.bf16.mxu0 %v2245
        %3037 = vmatpush2.bf16.msra.mxu0 %v2244
        %3038 = vmatprep.subr.bf16.mxu0 %v2237
        %3039 = vmatpush2.bf16.msra.mxu0 %v2236
        %3040 = vmatprep.subr.bf16.mxu0 %v2229
        %3041 = vmatpush2.bf16.msra.mxu0 %v2228
        %3042 = vmatprep.subr.bf16.mxu0 %v2221
        %3043 = vmatpush2.bf16.msra.mxu0 %v2220
        %3044 = vmatprep.subr.bf16.mxu0 %v2213
        %3045 = vmatpush2.bf16.msra.mxu0 %v2212
        %3046 = vmatprep.subr.bf16.mxu0 %v2205
        %3047 = vmatpush2.bf16.msra.mxu0 %v2204
        %3048 = vmatprep.subr.bf16.mxu0 %v2197
        %3049 = vmatpush2.bf16.msra.mxu0 %v2196
        %3050 = vmatprep.subr.bf16.mxu0 %v2189
        %3051 = vmatpush2.bf16.msra.mxu0 %v2188
        %3052 = vmatprep.mubr.bf16.mxu0 %v762
        %3053 = vmatmul.mubr.bf16.gmra.mxu0 %v748
        %v3054 = vpop.f32.mrf.mxu0
        %v3055 = vadd.f32 0.0, %v3054
        %v3056 = vpop.f32.mrf.mxu0
        %v3057 = vadd.f32 0.0, %v3056
        %v3058 = vpop.f32.mrf.mxu0
        %v3059 = vpop.f32.mrf.mxu0
        %3060 = vdwg.mxu0
        %3061 = vmatprep.subr.bf16.mxu0 %v2309
        %3062 = vmatpush1.bf16.msra.mxu0 %v2308
        %3063 = vmatprep.subr.bf16.mxu0 %v2301
        %3064 = vmatpush1.bf16.msra.mxu0 %v2300
        %3065 = vmatprep.subr.bf16.mxu0 %v2293
        %3066 = vmatpush1.bf16.msra.mxu0 %v2292
        %3067 = vmatprep.subr.bf16.mxu0 %v2285
        %3068 = vmatpush1.bf16.msra.mxu0 %v2284
        %3069 = vmatprep.subr.bf16.mxu0 %v2277
        %3070 = vmatpush1.bf16.msra.mxu0 %v2276
        %3071 = vmatprep.subr.bf16.mxu0 %v2269
        %3072 = vmatpush1.bf16.msra.mxu0 %v2268
        %3073 = vmatprep.subr.bf16.mxu0 %v2261
        %3074 = vmatpush1.bf16.msra.mxu0 %v2260
        %3075 = vmatprep.subr.bf16.mxu0 %v2253
        %3076 = vmatpush1.bf16.msra.mxu0 %v2252
        %3077 = vmatprep.subr.bf16.mxu0 %v2373
        %3078 = vmatpush2.bf16.msra.mxu0 %v2372
        %3079 = vmatprep.subr.bf16.mxu0 %v2365
        %3080 = vmatpush2.bf16.msra.mxu0 %v2364
        %3081 = vmatprep.subr.bf16.mxu0 %v2357
        %3082 = vmatpush2.bf16.msra.mxu0 %v2356
        %3083 = vmatprep.subr.bf16.mxu0 %v2349
        %3084 = vmatpush2.bf16.msra.mxu0 %v2348
        %3085 = vmatprep.subr.bf16.mxu0 %v2341
        %3086 = vmatpush2.bf16.msra.mxu0 %v2340
        %3087 = vmatprep.subr.bf16.mxu0 %v2333
        %3088 = vmatpush2.bf16.msra.mxu0 %v2332
        %3089 = vmatprep.subr.bf16.mxu0 %v2325
        %3090 = vmatpush2.bf16.msra.mxu0 %v2324
        %3091 = vmatprep.subr.bf16.mxu0 %v2317
        %3092 = vmatpush2.bf16.msra.mxu0 %v2316
        %3093 = vmatprep.mubr.bf16.mxu0 %v772
        %3094 = vmatmul.mubr.bf16.gmra.mxu0 %v770
        %v3095 = vpop.f32.mrf.mxu0
        %v3096 = vadd.f32 %v3055, %v3095
        %v3097 = vpop.f32.mrf.mxu0
        %v3098 = vadd.f32 %v3057, %v3097
        %v3099 = vpop.f32.mrf.mxu0
        %v3100 = vpop.f32.mrf.mxu0
        %3101 = vdwg.mxu0
        %3102 = vmatprep.subr.bf16.mxu0 %v2437
        %3103 = vmatpush1.bf16.msra.mxu0 %v2436
        %3104 = vmatprep.subr.bf16.mxu0 %v2429
        %3105 = vmatpush1.bf16.msra.mxu0 %v2428
        %3106 = vmatprep.subr.bf16.mxu0 %v2421
        %3107 = vmatpush1.bf16.msra.mxu0 %v2420
        %3108 = vmatprep.subr.bf16.mxu0 %v2413
        %3109 = vmatpush1.bf16.msra.mxu0 %v2412
        %3110 = vmatprep.subr.bf16.mxu0 %v2405
        %3111 = vmatpush1.bf16.msra.mxu0 %v2404
        %3112 = vmatprep.subr.bf16.mxu0 %v2397
        %3113 = vmatpush1.bf16.msra.mxu0 %v2396
        %3114 = vmatprep.subr.bf16.mxu0 %v2389
        %3115 = vmatpush1.bf16.msra.mxu0 %v2388
        %3116 = vmatprep.subr.bf16.mxu0 %v2381
        %3117 = vmatpush1.bf16.msra.mxu0 %v2380
        %3118 = vmatprep.subr.bf16.mxu0 %v2501
        %3119 = vmatpush2.bf16.msra.mxu0 %v2500
        %3120 = vmatprep.subr.bf16.mxu0 %v2493
        %3121 = vmatpush2.bf16.msra.mxu0 %v2492
        %3122 = vmatprep.subr.bf16.mxu0 %v2485
        %3123 = vmatpush2.bf16.msra.mxu0 %v2484
        %3124 = vmatprep.subr.bf16.mxu0 %v2477
        %3125 = vmatpush2.bf16.msra.mxu0 %v2476
        %3126 = vmatprep.subr.bf16.mxu0 %v2469
        %3127 = vmatpush2.bf16.msra.mxu0 %v2468
        %3128 = vmatprep.subr.bf16.mxu0 %v2461
        %3129 = vmatpush2.bf16.msra.mxu0 %v2460
        %3130 = vmatprep.subr.bf16.mxu0 %v2453
        %3131 = vmatpush2.bf16.msra.mxu0 %v2452
        %3132 = vmatprep.subr.bf16.mxu0 %v2445
        %3133 = vmatpush2.bf16.msra.mxu0 %v2444
        %3134 = vmatprep.mubr.bf16.mxu0 %v769
        %3135 = vmatmul.mubr.bf16.gmra.mxu0 %v755
        %v3136 = vpop.f32.mrf.mxu0
        %v3137 = vadd.f32 %v3096, %v3136
        %v3138 = vpop.f32.mrf.mxu0
        %v3139 = vadd.f32 %v3098, %v3138
        %v3140 = vpop.f32.mrf.mxu0
        %v3141 = vpop.f32.mrf.mxu0
        %3142 = vdwg.mxu0
        %3143 = vmatprep.subr.bf16.mxu0 %v2565
        %3144 = vmatpush1.bf16.msra.mxu0 %v2564
        %3145 = vmatprep.subr.bf16.mxu0 %v2557
        %3146 = vmatpush1.bf16.msra.mxu0 %v2556
        %3147 = vmatprep.subr.bf16.mxu0 %v2549
        %3148 = vmatpush1.bf16.msra.mxu0 %v2548
        %3149 = vmatprep.subr.bf16.mxu0 %v2541
        %3150 = vmatpush1.bf16.msra.mxu0 %v2540
        %3151 = vmatprep.subr.bf16.mxu0 %v2533
        %3152 = vmatpush1.bf16.msra.mxu0 %v2532
        %3153 = vmatprep.subr.bf16.mxu0 %v2525
        %3154 = vmatpush1.bf16.msra.mxu0 %v2524
        %3155 = vmatprep.subr.bf16.mxu0 %v2517
        %3156 = vmatpush1.bf16.msra.mxu0 %v2516
        %3157 = vmatprep.subr.bf16.mxu0 %v2509
        %3158 = vmatpush1.bf16.msra.mxu0 %v2508
        %3159 = vmatprep.subr.bf16.mxu0 0
        %3160 = vmatpush2.bf16.msra.mxu0 0
        %3161 = vmatprep.subr.bf16.mxu0 0
        %3162 = vmatpush2.bf16.msra.mxu0 0
        %3163 = vmatprep.subr.bf16.mxu0 0
        %3164 = vmatpush2.bf16.msra.mxu0 0
        %3165 = vmatprep.subr.bf16.mxu0 0
        %3166 = vmatpush2.bf16.msra.mxu0 0
        %3167 = vmatprep.subr.bf16.mxu0 0
        %3168 = vmatpush2.bf16.msra.mxu0 0
        %3169 = vmatprep.subr.bf16.mxu0 0
        %3170 = vmatpush2.bf16.msra.mxu0 0
        %3171 = vmatprep.subr.bf16.mxu0 0
        %3172 = vmatpush2.bf16.msra.mxu0 0
        %3173 = vmatprep.subr.bf16.mxu0 0
        %3174 = vmatpush2.bf16.msra.mxu0 0
        %3175 = vmatprep.mubr.bf16.mxu0 0
        %3176 = vmatmul.mubr.bf16.gmra.mxu0 %v771
        %v3177 = vpop.f32.mrf.mxu0
        %v3178 = vadd.f32 %v3137, %v3177
        %v3179 = vpop.f32.mrf.mxu0
        %v3180 = vadd.f32 %v3139, %v3179
        %v3181 = vpop.f32.mrf.mxu0
        %v3182 = vpop.f32.mrf.mxu0
        %3183 = vdwg.mxu0
        %3184 = vmatprep.subr.bf16.mxu0 %v2183
        %3185 = vmatpush1.bf16.msra.mxu0 %v2182
        %3186 = vmatprep.subr.bf16.mxu0 %v2175
        %3187 = vmatpush1.bf16.msra.mxu0 %v2174
        %3188 = vmatprep.subr.bf16.mxu0 %v2167
        %3189 = vmatpush1.bf16.msra.mxu0 %v2166
        %3190 = vmatprep.subr.bf16.mxu0 %v2159
        %3191 = vmatpush1.bf16.msra.mxu0 %v2158
        %3192 = vmatprep.subr.bf16.mxu0 %v2151
        %3193 = vmatpush1.bf16.msra.mxu0 %v2150
        %3194 = vmatprep.subr.bf16.mxu0 %v2143
        %3195 = vmatpush1.bf16.msra.mxu0 %v2142
        %3196 = vmatprep.subr.bf16.mxu0 %v2135
        %3197 = vmatpush1.bf16.msra.mxu0 %v2134
        %3198 = vmatprep.subr.bf16.mxu0 %v2127
        %3199 = vmatpush1.bf16.msra.mxu0 %v2126
        %3200 = vmatprep.subr.bf16.mxu0 %v2247
        %3201 = vmatpush2.bf16.msra.mxu0 %v2246
        %3202 = vmatprep.subr.bf16.mxu0 %v2239
        %3203 = vmatpush2.bf16.msra.mxu0 %v2238
        %3204 = vmatprep.subr.bf16.mxu0 %v2231
        %3205 = vmatpush2.bf16.msra.mxu0 %v2230
        %3206 = vmatprep.subr.bf16.mxu0 %v2223
        %3207 = vmatpush2.bf16.msra.mxu0 %v2222
        %3208 = vmatprep.subr.bf16.mxu0 %v2215
        %3209 = vmatpush2.bf16.msra.mxu0 %v2214
        %3210 = vmatprep.subr.bf16.mxu0 %v2207
        %3211 = vmatpush2.bf16.msra.mxu0 %v2206
        %3212 = vmatprep.subr.bf16.mxu0 %v2199
        %3213 = vmatpush2.bf16.msra.mxu0 %v2198
        %3214 = vmatprep.subr.bf16.mxu0 %v2191
        %3215 = vmatpush2.bf16.msra.mxu0 %v2190
        %3216 = vmatprep.mubr.bf16.mxu0 %v762
        %3217 = vmatmul.mubr.bf16.gmra.mxu0 %v748
        %v3218 = vpop.f32.mrf.mxu0
        %v3219 = vadd.f32 0.0, %v3218
        %v3220 = vpop.f32.mrf.mxu0
        %v3221 = vadd.f32 0.0, %v3220
        %v3222 = vpop.f32.mrf.mxu0
        %v3223 = vpop.f32.mrf.mxu0
        %3224 = vdwg.mxu0
        %3225 = vmatprep.subr.bf16.mxu0 %v2311
        %3226 = vmatpush1.bf16.msra.mxu0 %v2310
        %3227 = vmatprep.subr.bf16.mxu0 %v2303
        %3228 = vmatpush1.bf16.msra.mxu0 %v2302
        %3229 = vmatprep.subr.bf16.mxu0 %v2295
        %3230 = vmatpush1.bf16.msra.mxu0 %v2294
        %3231 = vmatprep.subr.bf16.mxu0 %v2287
        %3232 = vmatpush1.bf16.msra.mxu0 %v2286
        %3233 = vmatprep.subr.bf16.mxu0 %v2279
        %3234 = vmatpush1.bf16.msra.mxu0 %v2278
        %3235 = vmatprep.subr.bf16.mxu0 %v2271
        %3236 = vmatpush1.bf16.msra.mxu0 %v2270
        %3237 = vmatprep.subr.bf16.mxu0 %v2263
        %3238 = vmatpush1.bf16.msra.mxu0 %v2262
        %3239 = vmatprep.subr.bf16.mxu0 %v2255
        %3240 = vmatpush1.bf16.msra.mxu0 %v2254
        %3241 = vmatprep.subr.bf16.mxu0 %v2375
        %3242 = vmatpush2.bf16.msra.mxu0 %v2374
        %3243 = vmatprep.subr.bf16.mxu0 %v2367
        %3244 = vmatpush2.bf16.msra.mxu0 %v2366
        %3245 = vmatprep.subr.bf16.mxu0 %v2359
        %3246 = vmatpush2.bf16.msra.mxu0 %v2358
        %3247 = vmatprep.subr.bf16.mxu0 %v2351
        %3248 = vmatpush2.bf16.msra.mxu0 %v2350
        %3249 = vmatprep.subr.bf16.mxu0 %v2343
        %3250 = vmatpush2.bf16.msra.mxu0 %v2342
        %3251 = vmatprep.subr.bf16.mxu0 %v2335
        %3252 = vmatpush2.bf16.msra.mxu0 %v2334
        %3253 = vmatprep.subr.bf16.mxu0 %v2327
        %3254 = vmatpush2.bf16.msra.mxu0 %v2326
        %3255 = vmatprep.subr.bf16.mxu0 %v2319
        %3256 = vmatpush2.bf16.msra.mxu0 %v2318
        %3257 = vmatprep.mubr.bf16.mxu0 %v772
        %3258 = vmatmul.mubr.bf16.gmra.mxu0 %v770
        %v3259 = vpop.f32.mrf.mxu0
        %v3260 = vadd.f32 %v3219, %v3259
        %v3261 = vpop.f32.mrf.mxu0
        %v3262 = vadd.f32 %v3221, %v3261
        %v3263 = vpop.f32.mrf.mxu0
        %v3264 = vpop.f32.mrf.mxu0
        %3265 = vdwg.mxu0
        %3266 = vmatprep.subr.bf16.mxu0 %v2439
        %3267 = vmatpush1.bf16.msra.mxu0 %v2438
        %3268 = vmatprep.subr.bf16.mxu0 %v2431
        %3269 = vmatpush1.bf16.msra.mxu0 %v2430
        %3270 = vmatprep.subr.bf16.mxu0 %v2423
        %3271 = vmatpush1.bf16.msra.mxu0 %v2422
        %3272 = vmatprep.subr.bf16.mxu0 %v2415
        %3273 = vmatpush1.bf16.msra.mxu0 %v2414
        %3274 = vmatprep.subr.bf16.mxu0 %v2407
        %3275 = vmatpush1.bf16.msra.mxu0 %v2406
        %3276 = vmatprep.subr.bf16.mxu0 %v2399
        %3277 = vmatpush1.bf16.msra.mxu0 %v2398
        %3278 = vmatprep.subr.bf16.mxu0 %v2391
        %3279 = vmatpush1.bf16.msra.mxu0 %v2390
        %3280 = vmatprep.subr.bf16.mxu0 %v2383
        %3281 = vmatpush1.bf16.msra.mxu0 %v2382
        %3282 = vmatprep.subr.bf16.mxu0 %v2503
        %3283 = vmatpush2.bf16.msra.mxu0 %v2502
        %3284 = vmatprep.subr.bf16.mxu0 %v2495
        %3285 = vmatpush2.bf16.msra.mxu0 %v2494
        %3286 = vmatprep.subr.bf16.mxu0 %v2487
        %3287 = vmatpush2.bf16.msra.mxu0 %v2486
        %3288 = vmatprep.subr.bf16.mxu0 %v2479
        %3289 = vmatpush2.bf16.msra.mxu0 %v2478
        %3290 = vmatprep.subr.bf16.mxu0 %v2471
        %3291 = vmatpush2.bf16.msra.mxu0 %v2470
        %3292 = vmatprep.subr.bf16.mxu0 %v2463
        %3293 = vmatpush2.bf16.msra.mxu0 %v2462
        %3294 = vmatprep.subr.bf16.mxu0 %v2455
        %3295 = vmatpush2.bf16.msra.mxu0 %v2454
        %3296 = vmatprep.subr.bf16.mxu0 %v2447
        %3297 = vmatpush2.bf16.msra.mxu0 %v2446
        %3298 = vmatprep.mubr.bf16.mxu0 %v769
        %3299 = vmatmul.mubr.bf16.gmra.mxu0 %v755
        %v3300 = vpop.f32.mrf.mxu0
        %v3301 = vadd.f32 %v3260, %v3300
        %v3302 = vpop.f32.mrf.mxu0
        %v3303 = vadd.f32 %v3262, %v3302
        %v3304 = vpop.f32.mrf.mxu0
        %v3305 = vpop.f32.mrf.mxu0
        %3306 = vdwg.mxu0
        %3307 = vmatprep.subr.bf16.mxu0 %v2567
        %3308 = vmatpush1.bf16.msra.mxu0 %v2566
        %3309 = vmatprep.subr.bf16.mxu0 %v2559
        %3310 = vmatpush1.bf16.msra.mxu0 %v2558
        %3311 = vmatprep.subr.bf16.mxu0 %v2551
        %3312 = vmatpush1.bf16.msra.mxu0 %v2550
        %3313 = vmatprep.subr.bf16.mxu0 %v2543
        %3314 = vmatpush1.bf16.msra.mxu0 %v2542
        %3315 = vmatprep.subr.bf16.mxu0 %v2535
        %3316 = vmatpush1.bf16.msra.mxu0 %v2534
        %3317 = vmatprep.subr.bf16.mxu0 %v2527
        %3318 = vmatpush1.bf16.msra.mxu0 %v2526
        %3319 = vmatprep.subr.bf16.mxu0 %v2519
        %3320 = vmatpush1.bf16.msra.mxu0 %v2518
        %3321 = vmatprep.subr.bf16.mxu0 %v2511
        %3322 = vmatpush1.bf16.msra.mxu0 %v2510
        %3323 = vmatprep.subr.bf16.mxu0 0
        %3324 = vmatpush2.bf16.msra.mxu0 0
        %3325 = vmatprep.subr.bf16.mxu0 0
        %3326 = vmatpush2.bf16.msra.mxu0 0
        %3327 = vmatprep.subr.bf16.mxu0 0
        %3328 = vmatpush2.bf16.msra.mxu0 0
        %3329 = vmatprep.subr.bf16.mxu0 0
        %3330 = vmatpush2.bf16.msra.mxu0 0
        %3331 = vmatprep.subr.bf16.mxu0 0
        %3332 = vmatpush2.bf16.msra.mxu0 0
        %3333 = vmatprep.subr.bf16.mxu0 0
        %3334 = vmatpush2.bf16.msra.mxu0 0
        %3335 = vmatprep.subr.bf16.mxu0 0
        %3336 = vmatpush2.bf16.msra.mxu0 0
        %3337 = vmatprep.subr.bf16.mxu0 0
        %3338 = vmatpush2.bf16.msra.mxu0 0
        %3339 = vmatprep.mubr.bf16.mxu0 0
        %3340 = vmatmul.mubr.bf16.gmra.mxu0 %v771
        %v3341 = vpop.f32.mrf.mxu0
        %v3342 = vadd.f32 %v3301, %v3341
        %v3343 = vpop.f32.mrf.mxu0
        %v3344 = vadd.f32 %v3303, %v3343
        %v3345 = vpop.f32.mrf.mxu0
        %v3346 = vpop.f32.mrf.mxu0
        %3347 = vdwg.mxu0
        %3348 = vmatprep.subr.bf16.mxu0 %v2185
        %3349 = vmatpush1.bf16.msra.mxu0 %v2184
        %3350 = vmatprep.subr.bf16.mxu0 %v2177
        %3351 = vmatpush1.bf16.msra.mxu0 %v2176
        %3352 = vmatprep.subr.bf16.mxu0 %v2169
        %3353 = vmatpush1.bf16.msra.mxu0 %v2168
        %3354 = vmatprep.subr.bf16.mxu0 %v2161
        %3355 = vmatpush1.bf16.msra.mxu0 %v2160
        %3356 = vmatprep.subr.bf16.mxu0 %v2153
        %3357 = vmatpush1.bf16.msra.mxu0 %v2152
        %3358 = vmatprep.subr.bf16.mxu0 %v2145
        %3359 = vmatpush1.bf16.msra.mxu0 %v2144
        %3360 = vmatprep.subr.bf16.mxu0 %v2137
        %3361 = vmatpush1.bf16.msra.mxu0 %v2136
        %3362 = vmatprep.subr.bf16.mxu0 %v2129
        %3363 = vmatpush1.bf16.msra.mxu0 %v2128
        %3364 = vmatprep.subr.bf16.mxu0 %v2249
        %3365 = vmatpush2.bf16.msra.mxu0 %v2248
        %3366 = vmatprep.subr.bf16.mxu0 %v2241
        %3367 = vmatpush2.bf16.msra.mxu0 %v2240
        %3368 = vmatprep.subr.bf16.mxu0 %v2233
        %3369 = vmatpush2.bf16.msra.mxu0 %v2232
        %3370 = vmatprep.subr.bf16.mxu0 %v2225
        %3371 = vmatpush2.bf16.msra.mxu0 %v2224
        %3372 = vmatprep.subr.bf16.mxu0 %v2217
        %3373 = vmatpush2.bf16.msra.mxu0 %v2216
        %3374 = vmatprep.subr.bf16.mxu0 %v2209
        %3375 = vmatpush2.bf16.msra.mxu0 %v2208
        %3376 = vmatprep.subr.bf16.mxu0 %v2201
        %3377 = vmatpush2.bf16.msra.mxu0 %v2200
        %3378 = vmatprep.subr.bf16.mxu0 %v2193
        %3379 = vmatpush2.bf16.msra.mxu0 %v2192
        %3380 = vmatprep.mubr.bf16.mxu0 %v762
        %3381 = vmatmul.mubr.bf16.gmra.mxu0 %v748
        %v3382 = vpop.f32.mrf.mxu0
        %v3383 = vadd.f32 0.0, %v3382
        %v3384 = vpop.f32.mrf.mxu0
        %v3385 = vadd.f32 0.0, %v3384
        %v3386 = vpop.f32.mrf.mxu0
        %v3387 = vpop.f32.mrf.mxu0
        %3388 = vdwg.mxu0
        %3389 = vmatprep.subr.bf16.mxu0 %v2313
        %3390 = vmatpush1.bf16.msra.mxu0 %v2312
        %3391 = vmatprep.subr.bf16.mxu0 %v2305
        %3392 = vmatpush1.bf16.msra.mxu0 %v2304
        %3393 = vmatprep.subr.bf16.mxu0 %v2297
        %3394 = vmatpush1.bf16.msra.mxu0 %v2296
        %3395 = vmatprep.subr.bf16.mxu0 %v2289
        %3396 = vmatpush1.bf16.msra.mxu0 %v2288
        %3397 = vmatprep.subr.bf16.mxu0 %v2281
        %3398 = vmatpush1.bf16.msra.mxu0 %v2280
        %3399 = vmatprep.subr.bf16.mxu0 %v2273
        %3400 = vmatpush1.bf16.msra.mxu0 %v2272
        %3401 = vmatprep.subr.bf16.mxu0 %v2265
        %3402 = vmatpush1.bf16.msra.mxu0 %v2264
        %3403 = vmatprep.subr.bf16.mxu0 %v2257
        %3404 = vmatpush1.bf16.msra.mxu0 %v2256
        %3405 = vmatprep.subr.bf16.mxu0 %v2377
        %3406 = vmatpush2.bf16.msra.mxu0 %v2376
        %3407 = vmatprep.subr.bf16.mxu0 %v2369
        %3408 = vmatpush2.bf16.msra.mxu0 %v2368
        %3409 = vmatprep.subr.bf16.mxu0 %v2361
        %3410 = vmatpush2.bf16.msra.mxu0 %v2360
        %3411 = vmatprep.subr.bf16.mxu0 %v2353
        %3412 = vmatpush2.bf16.msra.mxu0 %v2352
        %3413 = vmatprep.subr.bf16.mxu0 %v2345
        %3414 = vmatpush2.bf16.msra.mxu0 %v2344
        %3415 = vmatprep.subr.bf16.mxu0 %v2337
        %3416 = vmatpush2.bf16.msra.mxu0 %v2336
        %3417 = vmatprep.subr.bf16.mxu0 %v2329
        %3418 = vmatpush2.bf16.msra.mxu0 %v2328
        %3419 = vmatprep.subr.bf16.mxu0 %v2321
        %3420 = vmatpush2.bf16.msra.mxu0 %v2320
        %3421 = vmatprep.mubr.bf16.mxu0 %v772
        %3422 = vmatmul.mubr.bf16.gmra.mxu0 %v770
        %v3423 = vpop.f32.mrf.mxu0
        %v3424 = vadd.f32 %v3383, %v3423
        %v3425 = vpop.f32.mrf.mxu0
        %v3426 = vadd.f32 %v3385, %v3425
        %v3427 = vpop.f32.mrf.mxu0
        %v3428 = vpop.f32.mrf.mxu0
        %3429 = vdwg.mxu0
        %3430 = vmatprep.subr.bf16.mxu0 %v2441
        %3431 = vmatpush1.bf16.msra.mxu0 %v2440
        %3432 = vmatprep.subr.bf16.mxu0 %v2433
        %3433 = vmatpush1.bf16.msra.mxu0 %v2432
        %3434 = vmatprep.subr.bf16.mxu0 %v2425
        %3435 = vmatpush1.bf16.msra.mxu0 %v2424
        %3436 = vmatprep.subr.bf16.mxu0 %v2417
        %3437 = vmatpush1.bf16.msra.mxu0 %v2416
        %3438 = vmatprep.subr.bf16.mxu0 %v2409
        %3439 = vmatpush1.bf16.msra.mxu0 %v2408
        %3440 = vmatprep.subr.bf16.mxu0 %v2401
        %3441 = vmatpush1.bf16.msra.mxu0 %v2400
        %3442 = vmatprep.subr.bf16.mxu0 %v2393
        %3443 = vmatpush1.bf16.msra.mxu0 %v2392
        %3444 = vmatprep.subr.bf16.mxu0 %v2385
        %3445 = vmatpush1.bf16.msra.mxu0 %v2384
        %3446 = vmatprep.subr.bf16.mxu0 %v2505
        %3447 = vmatpush2.bf16.msra.mxu0 %v2504
        %3448 = vmatprep.subr.bf16.mxu0 %v2497
        %3449 = vmatpush2.bf16.msra.mxu0 %v2496
        %3450 = vmatprep.subr.bf16.mxu0 %v2489
        %3451 = vmatpush2.bf16.msra.mxu0 %v2488
        %3452 = vmatprep.subr.bf16.mxu0 %v2481
        %3453 = vmatpush2.bf16.msra.mxu0 %v2480
        %3454 = vmatprep.subr.bf16.mxu0 %v2473
        %3455 = vmatpush2.bf16.msra.mxu0 %v2472
        %3456 = vmatprep.subr.bf16.mxu0 %v2465
        %3457 = vmatpush2.bf16.msra.mxu0 %v2464
        %3458 = vmatprep.subr.bf16.mxu0 %v2457
        %3459 = vmatpush2.bf16.msra.mxu0 %v2456
        %3460 = vmatprep.subr.bf16.mxu0 %v2449
        %3461 = vmatpush2.bf16.msra.mxu0 %v2448
        %3462 = vmatprep.mubr.bf16.mxu0 %v769
        %3463 = vmatmul.mubr.bf16.gmra.mxu0 %v755
        %v3464 = vpop.f32.mrf.mxu0
        %v3465 = vadd.f32 %v3424, %v3464
        %v3466 = vpop.f32.mrf.mxu0
        %v3467 = vadd.f32 %v3426, %v3466
        %v3468 = vpop.f32.mrf.mxu0
        %v3469 = vpop.f32.mrf.mxu0
        %3470 = vdwg.mxu0
        %3471 = vmatprep.subr.bf16.mxu0 %v2569
        %3472 = vmatpush1.bf16.msra.mxu0 %v2568
        %3473 = vmatprep.subr.bf16.mxu0 %v2561
        %3474 = vmatpush1.bf16.msra.mxu0 %v2560
        %3475 = vmatprep.subr.bf16.mxu0 %v2553
        %3476 = vmatpush1.bf16.msra.mxu0 %v2552
        %3477 = vmatprep.subr.bf16.mxu0 %v2545
        %3478 = vmatpush1.bf16.msra.mxu0 %v2544
        %3479 = vmatprep.subr.bf16.mxu0 %v2537
        %3480 = vmatpush1.bf16.msra.mxu0 %v2536
        %3481 = vmatprep.subr.bf16.mxu0 %v2529
        %3482 = vmatpush1.bf16.msra.mxu0 %v2528
        %3483 = vmatprep.subr.bf16.mxu0 %v2521
        %3484 = vmatpush1.bf16.msra.mxu0 %v2520
        %3485 = vmatprep.subr.bf16.mxu0 %v2513
        %3486 = vmatpush1.bf16.msra.mxu0 %v2512
        %3487 = vmatprep.subr.bf16.mxu0 0
        %3488 = vmatpush2.bf16.msra.mxu0 0
        %3489 = vmatprep.subr.bf16.mxu0 0
        %3490 = vmatpush2.bf16.msra.mxu0 0
        %3491 = vmatprep.subr.bf16.mxu0 0
        %3492 = vmatpush2.bf16.msra.mxu0 0
        %3493 = vmatprep.subr.bf16.mxu0 0
        %3494 = vmatpush2.bf16.msra.mxu0 0
        %3495 = vmatprep.subr.bf16.mxu0 0
        %3496 = vmatpush2.bf16.msra.mxu0 0
        %3497 = vmatprep.subr.bf16.mxu0 0
        %3498 = vmatpush2.bf16.msra.mxu0 0
        %3499 = vmatprep.subr.bf16.mxu0 0
        %3500 = vmatpush2.bf16.msra.mxu0 0
        %3501 = vmatprep.subr.bf16.mxu0 0
        %3502 = vmatpush2.bf16.msra.mxu0 0
        %3503 = vmatprep.mubr.bf16.mxu0 0
        %3504 = vmatmul.mubr.bf16.gmra.mxu0 %v771
        %v3505 = vpop.f32.mrf.mxu0
        %v3506 = vadd.f32 %v3465, %v3505
        %v3507 = vpop.f32.mrf.mxu0
        %v3508 = vadd.f32 %v3467, %v3507
        %v3509 = vpop.f32.mrf.mxu0
        %v3510 = vpop.f32.mrf.mxu0
        %3511 = vdwg.mxu0
        %3512 = vmatprep.subr.bf16.mxu0 %v2187
        %3513 = vmatpush1.bf16.msra.mxu0 %v2186
        %3514 = vmatprep.subr.bf16.mxu0 %v2179
        %3515 = vmatpush1.bf16.msra.mxu0 %v2178
        %3516 = vmatprep.subr.bf16.mxu0 %v2171
        %3517 = vmatpush1.bf16.msra.mxu0 %v2170
        %3518 = vmatprep.subr.bf16.mxu0 %v2163
        %3519 = vmatpush1.bf16.msra.mxu0 %v2162
        %3520 = vmatprep.subr.bf16.mxu0 %v2155
        %3521 = vmatpush1.bf16.msra.mxu0 %v2154
        %3522 = vmatprep.subr.bf16.mxu0 %v2147
        %3523 = vmatpush1.bf16.msra.mxu0 %v2146
        %3524 = vmatprep.subr.bf16.mxu0 %v2139
        %3525 = vmatpush1.bf16.msra.mxu0 %v2138
        %3526 = vmatprep.subr.bf16.mxu0 %v2131
        %3527 = vmatpush1.bf16.msra.mxu0 %v2130
        %3528 = vmatprep.subr.bf16.mxu0 %v2251
        %3529 = vmatpush2.bf16.msra.mxu0 %v2250
        %3530 = vmatprep.subr.bf16.mxu0 %v2243
        %3531 = vmatpush2.bf16.msra.mxu0 %v2242
        %3532 = vmatprep.subr.bf16.mxu0 %v2235
        %3533 = vmatpush2.bf16.msra.mxu0 %v2234
        %3534 = vmatprep.subr.bf16.mxu0 %v2227
        %3535 = vmatpush2.bf16.msra.mxu0 %v2226
        %3536 = vmatprep.subr.bf16.mxu0 %v2219
        %3537 = vmatpush2.bf16.msra.mxu0 %v2218
        %3538 = vmatprep.subr.bf16.mxu0 %v2211
        %3539 = vmatpush2.bf16.msra.mxu0 %v2210
        %3540 = vmatprep.subr.bf16.mxu0 %v2203
        %3541 = vmatpush2.bf16.msra.mxu0 %v2202
        %3542 = vmatprep.subr.bf16.mxu0 %v2195
        %3543 = vmatpush2.bf16.msra.mxu0 %v2194
        %3544 = vmatprep.mubr.bf16.mxu0 %v762
        %3545 = vmatmul.mubr.bf16.gmra.mxu0 %v748
        %v3546 = vpop.f32.mrf.mxu0
        %v3547 = vadd.f32 0.0, %v3546
        %v3548 = vpop.f32.mrf.mxu0
        %v3549 = vadd.f32 0.0, %v3548
        %v3550 = vpop.f32.mrf.mxu0
        %v3551 = vpop.f32.mrf.mxu0
        %3552 = vdwg.mxu0
        %3553 = vmatprep.subr.bf16.mxu0 %v2315
        %3554 = vmatpush1.bf16.msra.mxu0 %v2314
        %3555 = vmatprep.subr.bf16.mxu0 %v2307
        %3556 = vmatpush1.bf16.msra.mxu0 %v2306
        %3557 = vmatprep.subr.bf16.mxu0 %v2299
        %3558 = vmatpush1.bf16.msra.mxu0 %v2298
        %3559 = vmatprep.subr.bf16.mxu0 %v2291
        %3560 = vmatpush1.bf16.msra.mxu0 %v2290
        %3561 = vmatprep.subr.bf16.mxu0 %v2283
        %3562 = vmatpush1.bf16.msra.mxu0 %v2282
        %3563 = vmatprep.subr.bf16.mxu0 %v2275
        %3564 = vmatpush1.bf16.msra.mxu0 %v2274
        %3565 = vmatprep.subr.bf16.mxu0 %v2267
        %3566 = vmatpush1.bf16.msra.mxu0 %v2266
        %3567 = vmatprep.subr.bf16.mxu0 %v2259
        %3568 = vmatpush1.bf16.msra.mxu0 %v2258
        %3569 = vmatprep.subr.bf16.mxu0 %v2379
        %3570 = vmatpush2.bf16.msra.mxu0 %v2378
        %3571 = vmatprep.subr.bf16.mxu0 %v2371
        %3572 = vmatpush2.bf16.msra.mxu0 %v2370
        %3573 = vmatprep.subr.bf16.mxu0 %v2363
        %3574 = vmatpush2.bf16.msra.mxu0 %v2362
        %3575 = vmatprep.subr.bf16.mxu0 %v2355
        %3576 = vmatpush2.bf16.msra.mxu0 %v2354
        %3577 = vmatprep.subr.bf16.mxu0 %v2347
        %3578 = vmatpush2.bf16.msra.mxu0 %v2346
        %3579 = vmatprep.subr.bf16.mxu0 %v2339
        %3580 = vmatpush2.bf16.msra.mxu0 %v2338
        %3581 = vmatprep.subr.bf16.mxu0 %v2331
        %3582 = vmatpush2.bf16.msra.mxu0 %v2330
        %3583 = vmatprep.subr.bf16.mxu0 %v2323
        %3584 = vmatpush2.bf16.msra.mxu0 %v2322
        %3585 = vmatprep.mubr.bf16.mxu0 %v772
        %3586 = vmatmul.mubr.bf16.gmra.mxu0 %v770
        %v3587 = vpop.f32.mrf.mxu0
        %v3588 = vadd.f32 %v3547, %v3587
        %v3589 = vpop.f32.mrf.mxu0
        %v3590 = vadd.f32 %v3549, %v3589
        %v3591 = vpop.f32.mrf.mxu0
        %v3592 = vpop.f32.mrf.mxu0
        %3593 = vdwg.mxu0
        %3594 = vmatprep.subr.bf16.mxu0 %v2443
        %3595 = vmatpush1.bf16.msra.mxu0 %v2442
        %3596 = vmatprep.subr.bf16.mxu0 %v2435
        %3597 = vmatpush1.bf16.msra.mxu0 %v2434
        %3598 = vmatprep.subr.bf16.mxu0 %v2427
        %3599 = vmatpush1.bf16.msra.mxu0 %v2426
        %3600 = vmatprep.subr.bf16.mxu0 %v2419
        %3601 = vmatpush1.bf16.msra.mxu0 %v2418
        %3602 = vmatprep.subr.bf16.mxu0 %v2411
        %3603 = vmatpush1.bf16.msra.mxu0 %v2410
        %3604 = vmatprep.subr.bf16.mxu0 %v2403
        %3605 = vmatpush1.bf16.msra.mxu0 %v2402
        %3606 = vmatprep.subr.bf16.mxu0 %v2395
        %3607 = vmatpush1.bf16.msra.mxu0 %v2394
        %3608 = vmatprep.subr.bf16.mxu0 %v2387
        %3609 = vmatpush1.bf16.msra.mxu0 %v2386
        %3610 = vmatprep.subr.bf16.mxu0 %v2507
        %3611 = vmatpush2.bf16.msra.mxu0 %v2506
        %3612 = vmatprep.subr.bf16.mxu0 %v2499
        %3613 = vmatpush2.bf16.msra.mxu0 %v2498
        %3614 = vmatprep.subr.bf16.mxu0 %v2491
        %3615 = vmatpush2.bf16.msra.mxu0 %v2490
        %3616 = vmatprep.subr.bf16.mxu0 %v2483
        %3617 = vmatpush2.bf16.msra.mxu0 %v2482
        %3618 = vmatprep.subr.bf16.mxu0 %v2475
        %3619 = vmatpush2.bf16.msra.mxu0 %v2474
        %3620 = vmatprep.subr.bf16.mxu0 %v2467
        %3621 = vmatpush2.bf16.msra.mxu0 %v2466
        %3622 = vmatprep.subr.bf16.mxu0 %v2459
        %3623 = vmatpush2.bf16.msra.mxu0 %v2458
        %3624 = vmatprep.subr.bf16.mxu0 %v2451
        %3625 = vmatpush2.bf16.msra.mxu0 %v2450
        %3626 = vmatprep.mubr.bf16.mxu0 %v769
        %3627 = vmatmul.mubr.bf16.gmra.mxu0 %v755
        %v3628 = vpop.f32.mrf.mxu0
        %v3629 = vadd.f32 %v3588, %v3628
        %v3630 = vpop.f32.mrf.mxu0
        %v3631 = vadd.f32 %v3590, %v3630
        %v3632 = vpop.f32.mrf.mxu0
        %v3633 = vpop.f32.mrf.mxu0
        %3634 = vdwg.mxu0
        %3635 = vmatprep.subr.bf16.mxu0 %v2571
        %3636 = vmatpush1.bf16.msra.mxu0 %v2570
        %3637 = vmatprep.subr.bf16.mxu0 %v2563
        %3638 = vmatpush1.bf16.msra.mxu0 %v2562
        %3639 = vmatprep.subr.bf16.mxu0 %v2555
        %3640 = vmatpush1.bf16.msra.mxu0 %v2554
        %3641 = vmatprep.subr.bf16.mxu0 %v2547
        %3642 = vmatpush1.bf16.msra.mxu0 %v2546
        %3643 = vmatprep.subr.bf16.mxu0 %v2539
        %3644 = vmatpush1.bf16.msra.mxu0 %v2538
        %3645 = vmatprep.subr.bf16.mxu0 %v2531
        %3646 = vmatpush1.bf16.msra.mxu0 %v2530
        %3647 = vmatprep.subr.bf16.mxu0 %v2523
        %3648 = vmatpush1.bf16.msra.mxu0 %v2522
        %3649 = vmatprep.subr.bf16.mxu0 %v2515
        %3650 = vmatpush1.bf16.msra.mxu0 %v2514
        %3651 = vmatprep.subr.bf16.mxu0 0
        %3652 = vmatpush2.bf16.msra.mxu0 0
        %3653 = vmatprep.subr.bf16.mxu0 0
        %3654 = vmatpush2.bf16.msra.mxu0 0
        %3655 = vmatprep.subr.bf16.mxu0 0
        %3656 = vmatpush2.bf16.msra.mxu0 0
        %3657 = vmatprep.subr.bf16.mxu0 0
        %3658 = vmatpush2.bf16.msra.mxu0 0
        %3659 = vmatprep.subr.bf16.mxu0 0
        %3660 = vmatpush2.bf16.msra.mxu0 0
        %3661 = vmatprep.subr.bf16.mxu0 0
        %3662 = vmatpush2.bf16.msra.mxu0 0
        %3663 = vmatprep.subr.bf16.mxu0 0
        %3664 = vmatpush2.bf16.msra.mxu0 0
        %3665 = vmatprep.subr.bf16.mxu0 0
        %3666 = vmatpush2.bf16.msra.mxu0 0
        %3667 = vmatprep.mubr.bf16.mxu0 0
        %3668 = vmatmul.mubr.bf16.gmra.mxu0 %v771
        %v3669 = vpop.f32.mrf.mxu0
        %v3670 = vadd.f32 %v3629, %v3669
        %v3671 = vpop.f32.mrf.mxu0
        %v3672 = vadd.f32 %v3631, %v3671
        %v3673 = vpop.f32.mrf.mxu0
        %v3674 = vpop.f32.mrf.mxu0
        %3675 = vdwg.mxu0
        %v3684 = vcombine.low %v3178, %v3180
        %v3685 = vcombine.low %v3342, %v3344
        %v3687 = vunpack.c.l.s4 1983009808
        %v3688 = vunpack.c.0.s8 %v3687
        %v3689 = vlaneseq
        %v3690 = vshrl.u32 %v3689, 7
        %v3691 = vsub.s32 %v3688, %v3690
        %v3692 = vrot.slane %v3684, %v3691
        %v3694 = vunpack.c.l.s4 1983009808
        %v3695 = vunpack.c.0.s8 %v3694
        %v3696 = vlaneseq
        %v3697 = vshrl.u32 %v3696, 7
        %v3698 = vsub.s32 %v3695, %v3697
        %v3699 = vrot.slane %v3685, %v3698
        %v3700 = vcombine.low %v3692, %v3699
        %v3701 = vcombine.low %v3506, %v3508
        %v3702 = vcombine.low %v3670, %v3672
        %v3704 = vunpack.c.l.s4 1983009808
        %v3705 = vunpack.c.0.s8 %v3704
        %v3706 = vlaneseq
        %v3707 = vshrl.u32 %v3706, 7
        %v3708 = vsub.s32 %v3705, %v3707
        %v3709 = vrot.slane %v3701, %v3708
        %v3711 = vunpack.c.l.s4 1983009808
        %v3712 = vunpack.c.0.s8 %v3711
        %v3713 = vlaneseq
        %v3714 = vshrl.u32 %v3713, 7
        %v3715 = vsub.s32 %v3712, %v3714
        %v3716 = vrot.slane %v3702, %v3715
        %v3717 = vcombine.low %v3709, %v3716
        %v3720 = vadd.f32 %v273, %v3700
        %v3721 = vadd.f32 %v274, %v3717
        %3722 = vst [vmem:[#allocation2] sm:$0xff] %v3720
        %3723 = vst [vmem:[#allocation2 + $0x8] sm:$0xff] %v3721
        %p3724 = scmp.eq.s32.totalorder %s22, 3
        // Predicated region
        $region45: #{simple_cnn_forward.5} parent=39 // pred_check
          %p3725 = pneg %p3724
        $region46: #{simple_cnn_forward.5} parent=39 // pred_check_branch
          %3727 = sbr.rel (%p3725) target = $region48
        $region47: #{simple_cnn_forward.5} parent=39 // pred_region
          %v3728 = vld [vmem:[#allocation2] sm:$0xff]
          %v3729 = vld [vmem:[#allocation2 + $0x8] sm:$0xff]
          %v3730 = vld [vmem:[%s2] sm:$0xff]
          %v3732 = vlaneseq
          %v3733 = vshrl.u32 %v3732, 7
          %v3734 = vsub.s32 0, %v3733
          %v3735 = vrot.slane %v3730, %v3734
          %v3736 = vlaneseq
          %v3737 = vshrl.u32 %v3736, 7
          %v3738 = vsub.s32 1, %v3737
          %v3739 = vrot.slane %v3730, %v3738
          %v3740 = vlaneseq
          %v3741 = vshrl.u32 %v3740, 7
          %v3742 = vsub.s32 2, %v3741
          %v3743 = vrot.slane %v3730, %v3742
          %v3744 = vlaneseq
          %v3745 = vshrl.u32 %v3744, 7
          %v3746 = vsub.s32 3, %v3745
          %v3747 = vrot.slane %v3730, %v3746
          %v3748 = vlaneseq
          %v3749 = vshrl.u32 %v3748, 7
          %v3750 = vsub.s32 4, %v3749
          %v3751 = vrot.slane %v3730, %v3750
          %v3752 = vlaneseq
          %v3753 = vshrl.u32 %v3752, 7
          %v3754 = vsub.s32 5, %v3753
          %v3755 = vrot.slane %v3730, %v3754
          %v3756 = vlaneseq
          %v3757 = vshrl.u32 %v3756, 7
          %v3758 = vsub.s32 6, %v3757
          %v3759 = vrot.slane %v3730, %v3758
          %v3760 = vlaneseq
          %v3761 = vshrl.u32 %v3760, 7
          %v3762 = vsub.s32 7, %v3761
          %v3763 = vrot.slane %v3730, %v3762
          %v3764 = vcombine.low %v3735, %v3739
          %v3765 = vcombine.low %v3743, %v3747
          %v3767 = vunpack.c.l.s4 1983009808
          %v3768 = vunpack.c.0.s8 %v3767
          %v3769 = vlaneseq
          %v3770 = vshrl.u32 %v3769, 7
          %v3771 = vsub.s32 %v3768, %v3770
          %v3772 = vrot.slane %v3764, %v3771
          %v3774 = vunpack.c.l.s4 1983009808
          %v3775 = vunpack.c.0.s8 %v3774
          %v3776 = vlaneseq
          %v3777 = vshrl.u32 %v3776, 7
          %v3778 = vsub.s32 %v3775, %v3777
          %v3779 = vrot.slane %v3765, %v3778
          %v3780 = vcombine.low %v3772, %v3779
          %v3781 = vcombine.low %v3751, %v3755
          %v3782 = vcombine.low %v3759, %v3763
          %v3784 = vunpack.c.l.s4 1983009808
          %v3785 = vunpack.c.0.s8 %v3784
          %v3786 = vlaneseq
          %v3787 = vshrl.u32 %v3786, 7
          %v3788 = vsub.s32 %v3785, %v3787
          %v3789 = vrot.slane %v3781, %v3788
          %v3791 = vunpack.c.l.s4 1983009808
          %v3792 = vunpack.c.0.s8 %v3791
          %v3793 = vlaneseq
          %v3794 = vshrl.u32 %v3793, 7
          %v3795 = vsub.s32 %v3792, %v3794
          %v3796 = vrot.slane %v3782, %v3795
          %v3797 = vcombine.low %v3789, %v3796
          %v3800 = vadd.f32 %v3728, %v3780
          %v3801 = vadd.f32 %v3729, %v3797
          %v3802 = vmax.f32 %v3800, 0.0
          %v3803 = vmax.f32 %v3801, 0.0
          %v3806 = vcombine.high %v3802, %v3802
          %v3808 = vunpack.c.l.s4 1983009808
          %v3809 = vunpack.c.0.s8 %v3808
          %v3810 = vlaneseq
          %v3811 = vshrl.u32 %v3810, 7
          %v3812 = vsub.s32 %v3809, %v3811
          %v3813 = vrot.slane %v3802, %v3812
          %v3815 = vunpack.c.l.s4 1983009808
          %v3816 = vunpack.c.0.s8 %v3815
          %v3817 = vlaneseq
          %v3818 = vshrl.u32 %v3817, 7
          %v3819 = vsub.s32 %v3816, %v3818
          %v3820 = vrot.slane %v3806, %v3819
          %v3821 = vcombine.high %v3813, %v3813
          %v3822 = vcombine.high %v3820, %v3820
          %v3823 = vcombine.high %v3803, %v3803
          %v3825 = vunpack.c.l.s4 1983009808
          %v3826 = vunpack.c.0.s8 %v3825
          %v3827 = vlaneseq
          %v3828 = vshrl.u32 %v3827, 7
          %v3829 = vsub.s32 %v3826, %v3828
          %v3830 = vrot.slane %v3803, %v3829
          %v3832 = vunpack.c.l.s4 1983009808
          %v3833 = vunpack.c.0.s8 %v3832
          %v3834 = vlaneseq
          %v3835 = vshrl.u32 %v3834, 7
          %v3836 = vsub.s32 %v3833, %v3835
          %v3837 = vrot.slane %v3823, %v3836
          %v3838 = vcombine.high %v3830, %v3830
          %v3839 = vcombine.high %v3837, %v3837
          %v3848 = vpack.c.bf16 %v3813, %v3813
          %v3849 = vpack.c.bf16 %v3821, %v3821
          %v3850 = vpack.c.bf16 %v3820, %v3820
          %v3851 = vpack.c.bf16 %v3822, %v3822
          %v3852 = vpack.c.bf16 %v3830, %v3830
          %v3853 = vpack.c.bf16 %v3838, %v3838
          %v3854 = vpack.c.bf16 %v3837, %v3837
          %v3855 = vpack.c.bf16 %v3839, %v3839
          %v3856 = vld [vmem:[%s3] sm:$0xf]
          %v3857 = vld [vmem:[%s3 + $0x4] sm:$0xf]
          %v3858 = vld [vmem:[%s3 + $0x8] sm:$0xf]
          %v3859 = vld [vmem:[%s3 + $0xc] sm:$0xf]
          %v3860 = vld [vmem:[%s3 + $0x10] sm:$0xf]
          %v3861 = vld [vmem:[%s3 + $0x14] sm:$0xf]
          %v3862 = vld [vmem:[%s3 + $0x18] sm:$0xf]
          %v3863 = vld [vmem:[%s3 + $0x1c] sm:$0xf]
          %v3864 = vld [vmem:[%s3 + $0x20] sm:$0xf]
          %v3865 = vld [vmem:[%s3 + $0x24] sm:$0xf]
          %v3866 = vld [vmem:[%s3 + $0x28] sm:$0xf]
          %v3867 = vld [vmem:[%s3 + $0x2c] sm:$0xf]
          %v3868 = vld [vmem:[%s3 + $0x30] sm:$0xf]
          %v3869 = vld [vmem:[%s3 + $0x34] sm:$0xf]
          %v3870 = vld [vmem:[%s3 + $0x38] sm:$0xf]
          %v3871 = vld [vmem:[%s3 + $0x3c] sm:$0xf]
          %v3872 = vld [vmem:[%s3 + $0x40] sm:$0xf]
          %v3873 = vld [vmem:[%s3 + $0x44] sm:$0xf]
          %v3874 = vld [vmem:[%s3 + $0x48] sm:$0xf]
          %v3875 = vld [vmem:[%s3 + $0x4c] sm:$0xf]
          %v3876 = vld [vmem:[%s3 + $0x50] sm:$0xf]
          %v3877 = vld [vmem:[%s3 + $0x54] sm:$0xf]
          %v3878 = vld [vmem:[%s3 + $0x58] sm:$0xf]
          %v3879 = vld [vmem:[%s3 + $0x5c] sm:$0xf]
          %v3880 = vld [vmem:[%s3 + $0x60] sm:$0xf]
          %v3881 = vld [vmem:[%s3 + $0x64] sm:$0xf]
          %v3882 = vld [vmem:[%s3 + $0x68] sm:$0xf]
          %v3883 = vld [vmem:[%s3 + $0x6c] sm:$0xf]
          %v3884 = vld [vmem:[%s3 + $0x70] sm:$0xf]
          %v3885 = vld [vmem:[%s3 + $0x74] sm:$0xf]
          %v3886 = vld [vmem:[%s3 + $0x78] sm:$0xf]
          %v3887 = vld [vmem:[%s3 + $0x7c] sm:$0xf]
          %v3888 = vld [vmem:[%s3 + $0x80] sm:$0xf]
          %v3889 = vld [vmem:[%s3 + $0x84] sm:$0xf]
          %v3890 = vld [vmem:[%s3 + $0x88] sm:$0xf]
          %v3891 = vld [vmem:[%s3 + $0x8c] sm:$0xf]
          %v3892 = vld [vmem:[%s3 + $0x90] sm:$0xf]
          %v3893 = vld [vmem:[%s3 + $0x94] sm:$0xf]
          %v3894 = vld [vmem:[%s3 + $0x98] sm:$0xf]
          %v3895 = vld [vmem:[%s3 + $0x9c] sm:$0xf]
          %v3896 = vld [vmem:[%s3 + $0xa0] sm:$0xf]
          %v3897 = vld [vmem:[%s3 + $0xa4] sm:$0xf]
          %v3898 = vld [vmem:[%s3 + $0xa8] sm:$0xf]
          %v3899 = vld [vmem:[%s3 + $0xac] sm:$0xf]
          %v3900 = vld [vmem:[%s3 + $0xb0] sm:$0xf]
          %v3901 = vld [vmem:[%s3 + $0xb4] sm:$0xf]
          %v3902 = vld [vmem:[%s3 + $0xb8] sm:$0xf]
          %v3903 = vld [vmem:[%s3 + $0xbc] sm:$0xf]
          %v3904 = vld [vmem:[%s3 + $0xc0] sm:$0xf]
          %v3905 = vld [vmem:[%s3 + $0xc4] sm:$0xf]
          %v3906 = vld [vmem:[%s3 + $0xc8] sm:$0xf]
          %v3907 = vld [vmem:[%s3 + $0xcc] sm:$0xf]
          %v3908 = vld [vmem:[%s3 + $0xd0] sm:$0xf]
          %v3909 = vld [vmem:[%s3 + $0xd4] sm:$0xf]
          %v3910 = vld [vmem:[%s3 + $0xd8] sm:$0xf]
          %v3911 = vld [vmem:[%s3 + $0xdc] sm:$0xf]
          %v3912 = vld [vmem:[%s3 + $0xe0] sm:$0xf]
          %v3913 = vld [vmem:[%s3 + $0xe4] sm:$0xf]
          %v3914 = vld [vmem:[%s3 + $0xe8] sm:$0xf]
          %v3915 = vld [vmem:[%s3 + $0xec] sm:$0xf]
          %v3916 = vld [vmem:[%s3 + $0xf0] sm:$0xf]
          %v3917 = vld [vmem:[%s3 + $0xf4] sm:$0xf]
          %v3918 = vld [vmem:[%s3 + $0xf8] sm:$0xf]
          %v3919 = vld [vmem:[%s3 + $0xfc] sm:$0xf]
          %v3920 = vld [vmem:[%s3 + $0x100] sm:$0xf]
          %v3921 = vld [vmem:[%s3 + $0x104] sm:$0xf]
          %v3922 = vld [vmem:[%s3 + $0x108] sm:$0xf]
          %v3923 = vld [vmem:[%s3 + $0x10c] sm:$0xf]
          %v3924 = vld [vmem:[%s3 + $0x110] sm:$0xf]
          %v3925 = vld [vmem:[%s3 + $0x114] sm:$0xf]
          %v3926 = vld [vmem:[%s3 + $0x118] sm:$0xf]
          %v3927 = vld [vmem:[%s3 + $0x11c] sm:$0xf]
          %v3928 = vld [vmem:[%s3 + $0x120] sm:$0xf]
          %v3929 = vld [vmem:[%s3 + $0x124] sm:$0xf]
          %v3930 = vld [vmem:[%s3 + $0x128] sm:$0xf]
          %v3931 = vld [vmem:[%s3 + $0x12c] sm:$0xf]
          %v3932 = vld [vmem:[%s3 + $0x130] sm:$0xf]
          %v3933 = vld [vmem:[%s3 + $0x134] sm:$0xf]
          %v3934 = vld [vmem:[%s3 + $0x138] sm:$0xf]
          %v3935 = vld [vmem:[%s3 + $0x13c] sm:$0xf]
          %v3936 = vld [vmem:[%s3 + $0x140] sm:$0xf]
          %v3937 = vld [vmem:[%s3 + $0x144] sm:$0xf]
          %v3938 = vld [vmem:[%s3 + $0x148] sm:$0xf]
          %v3939 = vld [vmem:[%s3 + $0x14c] sm:$0xf]
          %v3940 = vld [vmem:[%s3 + $0x150] sm:$0xf]
          %v3941 = vld [vmem:[%s3 + $0x154] sm:$0xf]
          %v3942 = vld [vmem:[%s3 + $0x158] sm:$0xf]
          %v3943 = vld [vmem:[%s3 + $0x15c] sm:$0xf]
          %v3944 = vld [vmem:[%s3 + $0x160] sm:$0xf]
          %v3945 = vld [vmem:[%s3 + $0x164] sm:$0xf]
          %v3946 = vld [vmem:[%s3 + $0x168] sm:$0xf]
          %v3947 = vld [vmem:[%s3 + $0x16c] sm:$0xf]
          %v3948 = vld [vmem:[%s3 + $0x170] sm:$0xf]
          %v3949 = vld [vmem:[%s3 + $0x174] sm:$0xf]
          %v3950 = vld [vmem:[%s3 + $0x178] sm:$0xf]
          %v3951 = vld [vmem:[%s3 + $0x17c] sm:$0xf]
          %v3952 = vld [vmem:[%s3 + $0x180] sm:$0xf]
          %v3953 = vld [vmem:[%s3 + $0x184] sm:$0xf]
          %v3954 = vld [vmem:[%s3 + $0x188] sm:$0xf]
          %v3955 = vld [vmem:[%s3 + $0x18c] sm:$0xf]
          %v3956 = vld [vmem:[%s3 + $0x190] sm:$0xf]
          %v3957 = vld [vmem:[%s3 + $0x194] sm:$0xf]
          %v3958 = vld [vmem:[%s3 + $0x198] sm:$0xf]
          %v3959 = vld [vmem:[%s3 + $0x19c] sm:$0xf]
          %v3960 = vld [vmem:[%s3 + $0x1a0] sm:$0xf]
          %v3961 = vld [vmem:[%s3 + $0x1a4] sm:$0xf]
          %v3962 = vld [vmem:[%s3 + $0x1a8] sm:$0xf]
          %v3963 = vld [vmem:[%s3 + $0x1ac] sm:$0xf]
          %v3964 = vld [vmem:[%s3 + $0x1b0] sm:$0xf]
          %v3965 = vld [vmem:[%s3 + $0x1b4] sm:$0xf]
          %v3966 = vld [vmem:[%s3 + $0x1b8] sm:$0xf]
          %v3967 = vld [vmem:[%s3 + $0x1bc] sm:$0xf]
          %v3968 = vld [vmem:[%s3 + $0x1c0] sm:$0xf]
          %v3969 = vld [vmem:[%s3 + $0x1c4] sm:$0xf]
          %v3970 = vld [vmem:[%s3 + $0x1c8] sm:$0xf]
          %v3971 = vld [vmem:[%s3 + $0x1cc] sm:$0xf]
          %v3972 = vld [vmem:[%s3 + $0x1d0] sm:$0xf]
          %v3973 = vld [vmem:[%s3 + $0x1d4] sm:$0xf]
          %v3974 = vld [vmem:[%s3 + $0x1d8] sm:$0xf]
          %v3975 = vld [vmem:[%s3 + $0x1dc] sm:$0xf]
          %v3976 = vld [vmem:[%s3 + $0x1e0] sm:$0xf]
          %v3977 = vld [vmem:[%s3 + $0x1e4] sm:$0xf]
          %v3978 = vld [vmem:[%s3 + $0x1e8] sm:$0xf]
          %v3979 = vld [vmem:[%s3 + $0x1ec] sm:$0xf]
          %v3980 = vld [vmem:[%s3 + $0x1f0] sm:$0xf]
          %v3981 = vld [vmem:[%s3 + $0x1f4] sm:$0xf]
          %v3982 = vld [vmem:[%s3 + $0x1f8] sm:$0xf]
          %v3983 = vld [vmem:[%s3 + $0x1fc] sm:$0xf]
          %v3984 = vld [vmem:[%s4] sm:$0x1]
          %v3986 = vlaneseq
          %v3987 = vshrl.u32 %v3986, 7
          %v3988 = vsub.s32 0, %v3987
          %v3989 = vrot.slane %v3984, %v3988
          %v4119 = vunpack.c.l.b16 %v3856
          %v4120 = vunpack.c.l.b16 %v3857
          %v4121 = vunpack.c.l.b16 %v3858
          %v4122 = vunpack.c.l.b16 %v3859
          %v4123 = vunpack.c.l.b16 %v3860
          %v4124 = vunpack.c.l.b16 %v3861
          %v4125 = vunpack.c.l.b16 %v3862
          %v4126 = vunpack.c.l.b16 %v3863
          %v4127 = vunpack.c.l.b16 %v3864
          %v4128 = vunpack.c.l.b16 %v3865
          %v4129 = vunpack.c.l.b16 %v3866
          %v4130 = vunpack.c.l.b16 %v3867
          %v4131 = vunpack.c.l.b16 %v3868
          %v4132 = vunpack.c.l.b16 %v3869
          %v4133 = vunpack.c.l.b16 %v3870
          %v4134 = vunpack.c.l.b16 %v3871
          %v4135 = vunpack.c.l.b16 %v3872
          %v4136 = vunpack.c.l.b16 %v3873
          %v4137 = vunpack.c.l.b16 %v3874
          %v4138 = vunpack.c.l.b16 %v3875
          %v4139 = vunpack.c.l.b16 %v3876
          %v4140 = vunpack.c.l.b16 %v3877
          %v4141 = vunpack.c.l.b16 %v3878
          %v4142 = vunpack.c.l.b16 %v3879
          %v4143 = vunpack.c.l.b16 %v3880
          %v4144 = vunpack.c.l.b16 %v3881
          %v4145 = vunpack.c.l.b16 %v3882
          %v4146 = vunpack.c.l.b16 %v3883
          %v4147 = vunpack.c.l.b16 %v3884
          %v4148 = vunpack.c.l.b16 %v3885
          %v4149 = vunpack.c.l.b16 %v3886
          %v4150 = vunpack.c.l.b16 %v3887
          %v4151 = vunpack.c.l.b16 %v3888
          %v4152 = vunpack.c.l.b16 %v3889
          %v4153 = vunpack.c.l.b16 %v3890
          %v4154 = vunpack.c.l.b16 %v3891
          %v4155 = vunpack.c.l.b16 %v3892
          %v4156 = vunpack.c.l.b16 %v3893
          %v4157 = vunpack.c.l.b16 %v3894
          %v4158 = vunpack.c.l.b16 %v3895
          %v4159 = vunpack.c.l.b16 %v3896
          %v4160 = vunpack.c.l.b16 %v3897
          %v4161 = vunpack.c.l.b16 %v3898
          %v4162 = vunpack.c.l.b16 %v3899
          %v4163 = vunpack.c.l.b16 %v3900
          %v4164 = vunpack.c.l.b16 %v3901
          %v4165 = vunpack.c.l.b16 %v3902
          %v4166 = vunpack.c.l.b16 %v3903
          %v4167 = vunpack.c.l.b16 %v3904
          %v4168 = vunpack.c.l.b16 %v3905
          %v4169 = vunpack.c.l.b16 %v3906
          %v4170 = vunpack.c.l.b16 %v3907
          %v4171 = vunpack.c.l.b16 %v3908
          %v4172 = vunpack.c.l.b16 %v3909
          %v4173 = vunpack.c.l.b16 %v3910
          %v4174 = vunpack.c.l.b16 %v3911
          %v4175 = vunpack.c.l.b16 %v3912
          %v4176 = vunpack.c.l.b16 %v3913
          %v4177 = vunpack.c.l.b16 %v3914
          %v4178 = vunpack.c.l.b16 %v3915
          %v4179 = vunpack.c.l.b16 %v3916
          %v4180 = vunpack.c.l.b16 %v3917
          %v4181 = vunpack.c.l.b16 %v3918
          %v4182 = vunpack.c.l.b16 %v3919
          %v4183 = vunpack.c.l.b16 %v3920
          %v4184 = vunpack.c.l.b16 %v3921
          %v4185 = vunpack.c.l.b16 %v3922
          %v4186 = vunpack.c.l.b16 %v3923
          %v4187 = vunpack.c.l.b16 %v3924
          %v4188 = vunpack.c.l.b16 %v3925
          %v4189 = vunpack.c.l.b16 %v3926
          %v4190 = vunpack.c.l.b16 %v3927
          %v4191 = vunpack.c.l.b16 %v3928
          %v4192 = vunpack.c.l.b16 %v3929
          %v4193 = vunpack.c.l.b16 %v3930
          %v4194 = vunpack.c.l.b16 %v3931
          %v4195 = vunpack.c.l.b16 %v3932
          %v4196 = vunpack.c.l.b16 %v3933
          %v4197 = vunpack.c.l.b16 %v3934
          %v4198 = vunpack.c.l.b16 %v3935
          %v4199 = vunpack.c.l.b16 %v3936
          %v4200 = vunpack.c.l.b16 %v3937
          %v4201 = vunpack.c.l.b16 %v3938
          %v4202 = vunpack.c.l.b16 %v3939
          %v4203 = vunpack.c.l.b16 %v3940
          %v4204 = vunpack.c.l.b16 %v3941
          %v4205 = vunpack.c.l.b16 %v3942
          %v4206 = vunpack.c.l.b16 %v3943
          %v4207 = vunpack.c.l.b16 %v3944
          %v4208 = vunpack.c.l.b16 %v3945
          %v4209 = vunpack.c.l.b16 %v3946
          %v4210 = vunpack.c.l.b16 %v3947
          %v4211 = vunpack.c.l.b16 %v3948
          %v4212 = vunpack.c.l.b16 %v3949
          %v4213 = vunpack.c.l.b16 %v3950
          %v4214 = vunpack.c.l.b16 %v3951
          %v4215 = vunpack.c.l.b16 %v3952
          %v4216 = vunpack.c.l.b16 %v3953
          %v4217 = vunpack.c.l.b16 %v3954
          %v4218 = vunpack.c.l.b16 %v3955
          %v4219 = vunpack.c.l.b16 %v3956
          %v4220 = vunpack.c.l.b16 %v3957
          %v4221 = vunpack.c.l.b16 %v3958
          %v4222 = vunpack.c.l.b16 %v3959
          %v4223 = vunpack.c.l.b16 %v3960
          %v4224 = vunpack.c.l.b16 %v3961
          %v4225 = vunpack.c.l.b16 %v3962
          %v4226 = vunpack.c.l.b16 %v3963
          %v4227 = vunpack.c.l.b16 %v3964
          %v4228 = vunpack.c.l.b16 %v3965
          %v4229 = vunpack.c.l.b16 %v3966
          %v4230 = vunpack.c.l.b16 %v3967
          %v4231 = vunpack.c.l.b16 %v3968
          %v4232 = vunpack.c.l.b16 %v3969
          %v4233 = vunpack.c.l.b16 %v3970
          %v4234 = vunpack.c.l.b16 %v3971
          %v4235 = vunpack.c.l.b16 %v3972
          %v4236 = vunpack.c.l.b16 %v3973
          %v4237 = vunpack.c.l.b16 %v3974
          %v4238 = vunpack.c.l.b16 %v3975
          %v4239 = vunpack.c.l.b16 %v3976
          %v4240 = vunpack.c.l.b16 %v3977
          %v4241 = vunpack.c.l.b16 %v3978
          %v4242 = vunpack.c.l.b16 %v3979
          %v4243 = vunpack.c.l.b16 %v3980
          %v4244 = vunpack.c.l.b16 %v3981
          %v4245 = vunpack.c.l.b16 %v3982
          %v4246 = vunpack.c.l.b16 %v3983
          %v4247 = vpack.c.b16 %v4120, %v4119
          %v4248 = vpack.c.b16 %v4122, %v4121
          %v4249 = vpack.c.b16 %v4124, %v4123
          %v4250 = vpack.c.b16 %v4126, %v4125
          %v4251 = vpack.c.b16 %v4128, %v4127
          %v4252 = vpack.c.b16 %v4130, %v4129
          %v4253 = vpack.c.b16 %v4132, %v4131
          %v4254 = vpack.c.b16 %v4134, %v4133
          %v4255 = vpack.c.b16 %v4136, %v4135
          %v4256 = vpack.c.b16 %v4138, %v4137
          %v4257 = vpack.c.b16 %v4140, %v4139
          %v4258 = vpack.c.b16 %v4142, %v4141
          %v4259 = vpack.c.b16 %v4144, %v4143
          %v4260 = vpack.c.b16 %v4146, %v4145
          %v4261 = vpack.c.b16 %v4148, %v4147
          %v4262 = vpack.c.b16 %v4150, %v4149
          %v4263 = vpack.c.b16 %v4152, %v4151
          %v4264 = vpack.c.b16 %v4154, %v4153
          %v4265 = vpack.c.b16 %v4156, %v4155
          %v4266 = vpack.c.b16 %v4158, %v4157
          %v4267 = vpack.c.b16 %v4160, %v4159
          %v4268 = vpack.c.b16 %v4162, %v4161
          %v4269 = vpack.c.b16 %v4164, %v4163
          %v4270 = vpack.c.b16 %v4166, %v4165
          %v4271 = vpack.c.b16 %v4168, %v4167
          %v4272 = vpack.c.b16 %v4170, %v4169
          %v4273 = vpack.c.b16 %v4172, %v4171
          %v4274 = vpack.c.b16 %v4174, %v4173
          %v4275 = vpack.c.b16 %v4176, %v4175
          %v4276 = vpack.c.b16 %v4178, %v4177
          %v4277 = vpack.c.b16 %v4180, %v4179
          %v4278 = vpack.c.b16 %v4182, %v4181
          %v4279 = vpack.c.b16 %v4184, %v4183
          %v4280 = vpack.c.b16 %v4186, %v4185
          %v4281 = vpack.c.b16 %v4188, %v4187
          %v4282 = vpack.c.b16 %v4190, %v4189
          %v4283 = vpack.c.b16 %v4192, %v4191
          %v4284 = vpack.c.b16 %v4194, %v4193
          %v4285 = vpack.c.b16 %v4196, %v4195
          %v4286 = vpack.c.b16 %v4198, %v4197
          %v4287 = vpack.c.b16 %v4200, %v4199
          %v4288 = vpack.c.b16 %v4202, %v4201
          %v4289 = vpack.c.b16 %v4204, %v4203
          %v4290 = vpack.c.b16 %v4206, %v4205
          %v4291 = vpack.c.b16 %v4208, %v4207
          %v4292 = vpack.c.b16 %v4210, %v4209
          %v4293 = vpack.c.b16 %v4212, %v4211
          %v4294 = vpack.c.b16 %v4214, %v4213
          %v4295 = vpack.c.b16 %v4216, %v4215
          %v4296 = vpack.c.b16 %v4218, %v4217
          %v4297 = vpack.c.b16 %v4220, %v4219
          %v4298 = vpack.c.b16 %v4222, %v4221
          %v4299 = vpack.c.b16 %v4224, %v4223
          %v4300 = vpack.c.b16 %v4226, %v4225
          %v4301 = vpack.c.b16 %v4228, %v4227
          %v4302 = vpack.c.b16 %v4230, %v4229
          %v4303 = vpack.c.b16 %v4232, %v4231
          %v4304 = vpack.c.b16 %v4234, %v4233
          %v4305 = vpack.c.b16 %v4236, %v4235
          %v4306 = vpack.c.b16 %v4238, %v4237
          %v4307 = vpack.c.b16 %v4240, %v4239
          %v4308 = vpack.c.b16 %v4242, %v4241
          %v4309 = vpack.c.b16 %v4244, %v4243
          %v4310 = vpack.c.b16 %v4246, %v4245
          %4375 = vmatprep.subr.bf16.mxu0 0
          %4376 = vmatpush1.bf16.msra.mxu0 %v4254
          %4377 = vmatprep.subr.bf16.mxu0 0
          %4378 = vmatpush1.bf16.msra.mxu0 %v4253
          %4379 = vmatprep.subr.bf16.mxu0 0
          %4380 = vmatpush1.bf16.msra.mxu0 %v4252
          %4381 = vmatprep.subr.bf16.mxu0 0
          %4382 = vmatpush1.bf16.msra.mxu0 %v4251
          %4383 = vmatprep.subr.bf16.mxu0 0
          %4384 = vmatpush1.bf16.msra.mxu0 %v4250
          %4385 = vmatprep.subr.bf16.mxu0 0
          %4386 = vmatpush1.bf16.msra.mxu0 %v4249
          %4387 = vmatprep.subr.bf16.mxu0 0
          %4388 = vmatpush1.bf16.msra.mxu0 %v4248
          %4389 = vmatprep.subr.bf16.mxu0 0
          %4390 = vmatpush1.bf16.msra.mxu0 %v4247
          %4391 = vmatprep.subr.bf16.mxu0 0
          %4392 = vmatpush2.bf16.msra.mxu0 %v4262
          %4393 = vmatprep.subr.bf16.mxu0 0
          %4394 = vmatpush2.bf16.msra.mxu0 %v4261
          %4395 = vmatprep.subr.bf16.mxu0 0
          %4396 = vmatpush2.bf16.msra.mxu0 %v4260
          %4397 = vmatprep.subr.bf16.mxu0 0
          %4398 = vmatpush2.bf16.msra.mxu0 %v4259
          %4399 = vmatprep.subr.bf16.mxu0 0
          %4400 = vmatpush2.bf16.msra.mxu0 %v4258
          %4401 = vmatprep.subr.bf16.mxu0 0
          %4402 = vmatpush2.bf16.msra.mxu0 %v4257
          %4403 = vmatprep.subr.bf16.mxu0 0
          %4404 = vmatpush2.bf16.msra.mxu0 %v4256
          %4405 = vmatprep.subr.bf16.mxu0 0
          %4406 = vmatpush2.bf16.msra.mxu0 %v4255
          %4407 = vmatprep.mubr.bf16.mxu0 %v3849
          %4408 = vmatmul.mubr.bf16.gmra.mxu0 %v3848
          %v4409 = vpop.f32.mrf.mxu0
          %v4410 = vadd.f32 %v3989, %v4409
          %v4411 = vpop.f32.mrf.mxu0
          %v4412 = vpop.f32.mrf.mxu0
          %v4413 = vpop.f32.mrf.mxu0
          %4414 = vdwg.mxu0
          %4415 = vmatprep.subr.bf16.mxu0 0
          %4416 = vmatpush1.bf16.msra.mxu0 %v4270
          %4417 = vmatprep.subr.bf16.mxu0 0
          %4418 = vmatpush1.bf16.msra.mxu0 %v4269
          %4419 = vmatprep.subr.bf16.mxu0 0
          %4420 = vmatpush1.bf16.msra.mxu0 %v4268
          %4421 = vmatprep.subr.bf16.mxu0 0
          %4422 = vmatpush1.bf16.msra.mxu0 %v4267
          %4423 = vmatprep.subr.bf16.mxu0 0
          %4424 = vmatpush1.bf16.msra.mxu0 %v4266
          %4425 = vmatprep.subr.bf16.mxu0 0
          %4426 = vmatpush1.bf16.msra.mxu0 %v4265
          %4427 = vmatprep.subr.bf16.mxu0 0
          %4428 = vmatpush1.bf16.msra.mxu0 %v4264
          %4429 = vmatprep.subr.bf16.mxu0 0
          %4430 = vmatpush1.bf16.msra.mxu0 %v4263
          %4431 = vmatprep.subr.bf16.mxu0 0
          %4432 = vmatpush2.bf16.msra.mxu0 %v4278
          %4433 = vmatprep.subr.bf16.mxu0 0
          %4434 = vmatpush2.bf16.msra.mxu0 %v4277
          %4435 = vmatprep.subr.bf16.mxu0 0
          %4436 = vmatpush2.bf16.msra.mxu0 %v4276
          %4437 = vmatprep.subr.bf16.mxu0 0
          %4438 = vmatpush2.bf16.msra.mxu0 %v4275
          %4439 = vmatprep.subr.bf16.mxu0 0
          %4440 = vmatpush2.bf16.msra.mxu0 %v4274
          %4441 = vmatprep.subr.bf16.mxu0 0
          %4442 = vmatpush2.bf16.msra.mxu0 %v4273
          %4443 = vmatprep.subr.bf16.mxu0 0
          %4444 = vmatpush2.bf16.msra.mxu0 %v4272
          %4445 = vmatprep.subr.bf16.mxu0 0
          %4446 = vmatpush2.bf16.msra.mxu0 %v4271
          %4447 = vmatprep.mubr.bf16.mxu0 %v3851
          %4448 = vmatmul.mubr.bf16.gmra.mxu0 %v3850
          %v4449 = vpop.f32.mrf.mxu0
          %v4450 = vadd.f32 %v4410, %v4449
          %v4451 = vpop.f32.mrf.mxu0
          %v4452 = vpop.f32.mrf.mxu0
          %v4453 = vpop.f32.mrf.mxu0
          %4454 = vdwg.mxu0
          %4455 = vmatprep.subr.bf16.mxu0 0
          %4456 = vmatpush1.bf16.msra.mxu0 %v4286
          %4457 = vmatprep.subr.bf16.mxu0 0
          %4458 = vmatpush1.bf16.msra.mxu0 %v4285
          %4459 = vmatprep.subr.bf16.mxu0 0
          %4460 = vmatpush1.bf16.msra.mxu0 %v4284
          %4461 = vmatprep.subr.bf16.mxu0 0
          %4462 = vmatpush1.bf16.msra.mxu0 %v4283
          %4463 = vmatprep.subr.bf16.mxu0 0
          %4464 = vmatpush1.bf16.msra.mxu0 %v4282
          %4465 = vmatprep.subr.bf16.mxu0 0
          %4466 = vmatpush1.bf16.msra.mxu0 %v4281
          %4467 = vmatprep.subr.bf16.mxu0 0
          %4468 = vmatpush1.bf16.msra.mxu0 %v4280
          %4469 = vmatprep.subr.bf16.mxu0 0
          %4470 = vmatpush1.bf16.msra.mxu0 %v4279
          %4471 = vmatprep.subr.bf16.mxu0 0
          %4472 = vmatpush2.bf16.msra.mxu0 %v4294
          %4473 = vmatprep.subr.bf16.mxu0 0
          %4474 = vmatpush2.bf16.msra.mxu0 %v4293
          %4475 = vmatprep.subr.bf16.mxu0 0
          %4476 = vmatpush2.bf16.msra.mxu0 %v4292
          %4477 = vmatprep.subr.bf16.mxu0 0
          %4478 = vmatpush2.bf16.msra.mxu0 %v4291
          %4479 = vmatprep.subr.bf16.mxu0 0
          %4480 = vmatpush2.bf16.msra.mxu0 %v4290
          %4481 = vmatprep.subr.bf16.mxu0 0
          %4482 = vmatpush2.bf16.msra.mxu0 %v4289
          %4483 = vmatprep.subr.bf16.mxu0 0
          %4484 = vmatpush2.bf16.msra.mxu0 %v4288
          %4485 = vmatprep.subr.bf16.mxu0 0
          %4486 = vmatpush2.bf16.msra.mxu0 %v4287
          %4487 = vmatprep.mubr.bf16.mxu0 %v3853
          %4488 = vmatmul.mubr.bf16.gmra.mxu0 %v3852
          %v4489 = vpop.f32.mrf.mxu0
          %v4490 = vadd.f32 %v4450, %v4489
          %v4491 = vpop.f32.mrf.mxu0
          %v4492 = vpop.f32.mrf.mxu0
          %v4493 = vpop.f32.mrf.mxu0
          %4494 = vdwg.mxu0
          %4495 = vmatprep.subr.bf16.mxu0 0
          %4496 = vmatpush1.bf16.msra.mxu0 %v4302
          %4497 = vmatprep.subr.bf16.mxu0 0
          %4498 = vmatpush1.bf16.msra.mxu0 %v4301
          %4499 = vmatprep.subr.bf16.mxu0 0
          %4500 = vmatpush1.bf16.msra.mxu0 %v4300
          %4501 = vmatprep.subr.bf16.mxu0 0
          %4502 = vmatpush1.bf16.msra.mxu0 %v4299
          %4503 = vmatprep.subr.bf16.mxu0 0
          %4504 = vmatpush1.bf16.msra.mxu0 %v4298
          %4505 = vmatprep.subr.bf16.mxu0 0
          %4506 = vmatpush1.bf16.msra.mxu0 %v4297
          %4507 = vmatprep.subr.bf16.mxu0 0
          %4508 = vmatpush1.bf16.msra.mxu0 %v4296
          %4509 = vmatprep.subr.bf16.mxu0 0
          %4510 = vmatpush1.bf16.msra.mxu0 %v4295
          %4511 = vmatprep.subr.bf16.mxu0 0
          %4512 = vmatpush2.bf16.msra.mxu0 %v4310
          %4513 = vmatprep.subr.bf16.mxu0 0
          %4514 = vmatpush2.bf16.msra.mxu0 %v4309
          %4515 = vmatprep.subr.bf16.mxu0 0
          %4516 = vmatpush2.bf16.msra.mxu0 %v4308
          %4517 = vmatprep.subr.bf16.mxu0 0
          %4518 = vmatpush2.bf16.msra.mxu0 %v4307
          %4519 = vmatprep.subr.bf16.mxu0 0
          %4520 = vmatpush2.bf16.msra.mxu0 %v4306
          %4521 = vmatprep.subr.bf16.mxu0 0
          %4522 = vmatpush2.bf16.msra.mxu0 %v4305
          %4523 = vmatprep.subr.bf16.mxu0 0
          %4524 = vmatpush2.bf16.msra.mxu0 %v4304
          %4525 = vmatprep.subr.bf16.mxu0 0
          %4526 = vmatpush2.bf16.msra.mxu0 %v4303
          %4527 = vmatprep.mubr.bf16.mxu0 %v3855
          %4528 = vmatmul.mubr.bf16.gmra.mxu0 %v3854
          %v4529 = vpop.f32.mrf.mxu0
          %v4530 = vadd.f32 %v4490, %v4529
          %v4531 = vpop.f32.mrf.mxu0
          %v4532 = vpop.f32.mrf.mxu0
          %v4533 = vpop.f32.mrf.mxu0
          %4534 = vdwg.mxu0
          %vm4535 = vcmask 74752
          %v4536 = vsel %vm4535, %v4530, -inf
          %4537 = vmax.xlane.f32.xlu0 %v4536
          %v4538 = vpop.xlane.xlu0 %4537
          %v4539 = vsub.f32 %v4530, %v4538
          %v4540 = vmul.f32 %v4539, 1.442695
          %v4541 = vpow.pop %v4540
          %v4542 = vsel %vm4535, %v4541, 0.0
          %4543 = vadd.xlane.f32.xlu0 %v4542
          %v4544 = vpop.xlane.xlu0 %4543
          %v4545 = vlog2.pop %v4544
          %v4546 = vmul.f32 %v4545, 0.6931472
          %v4547 = vadd.f32 %v4546, %v4538
          %v4548 = vsub.f32 %v4530, %v4547
          %4549 = vst.msk [vmem:[#allocation3] sm:$0x3] %vm4535, %v4548
        $region48: #{simple_cnn_forward.5} parent=39 // pred_fallthru
          _
        // Predicated region
        $region49: #{simple_cnn_forward.5} parent=39 // pred_check
          %p4550 = pneg %p164
        $region50: #{simple_cnn_forward.5} parent=39 // pred_check_branch
          %4552 = sbr.rel (%p4550) target = $region52
        $region51: #{simple_cnn_forward.5} parent=39 // pred_region
          %s4554 = ssub.s32 32, 32
          %4555 = vsyncadd [#allocation4], %s4554
          %s4556 = smul.addr %s21, 32
          %s4557 = scalar_lea.hbm %s5, %s4556
          %s4559 = sshll.u32 [#allocation3], 4
          %s4560 = int_to_ptr.vmem [resolvable:$true] %s4559
          %4562 = dma.vmem_to_hbm [thread:$0]  %s4560, 32, %s4557, [#allocation4]
        $region52: #{simple_cnn_forward.5} parent=39 // pred_fallthru
          _
        // Predicated region
        $region53: #{simple_cnn_forward.5} parent=39 // pred_check
          %p4563 = pneg %p164
        $region54: #{simple_cnn_forward.5} parent=39 // pred_check_branch
          %4565 = sbr.rel (%p4563) target = $region56
        $region55: #{simple_cnn_forward.5} parent=39 // pred_region
          %4566 = dma.done [#allocation4], 32
        $region56: #{simple_cnn_forward.5} parent=39 // pred_fallthru
          _
      $region40: #{simple_cnn_forward.5} parent=5 // pred_fallthru
        _
      %p4567 = scmp.le.s32.totalorder 2, %s12
      // Predicated region
      $region57: #{simple_cnn_forward.5} parent=5 // pred_check
        %p4568 = pneg %p4567
      $region58: #{simple_cnn_forward.5} parent=5 // pred_check_branch
        %4570 = sbr.rel (%p4568) target = $region60
      $region59: #{simple_cnn_forward.5} parent=5 // pred_region
        %s4571 = ssub.s32 %s12, 2
      $region60: #{simple_cnn_forward.5} parent=5 // pred_fallthru
        _
    $region6: #{simple_cnn_forward.5} parent=1 // loop_footer
      %s16 = sadd.s32 1, %s12
    $region7: #{simple_cnn_forward.5} parent=1 // loop_footer_branch
      %11 = sbr.rel target = $region3
    $region8: #{simple_cnn_forward.5} parent=1 // loop_exit
      _
    %4572 = vsyncpa [#allocation4], 1
    %s4573 = scalar_lea.sflag [#allocation4], 1
    %4574 = vsyncpa %s4573, 1

</llo_original>
